<compile_context>
chip_gen: v6e
topology: v6e:2x2x1
jax: 0.10.0
libtpu: 0.0.40
codegen_flags: <defaults>
</compile_context>

<pallas_src>
import functools
import math

import jax
import jax.numpy as jnp
from jax.experimental import pallas as pl
from jax.experimental.pallas import tpu as pltpu

# ----------------------- model hyper-parameters (small) ----------------------
INPUT_DIM = 5
HIDDEN_DIM = 32
LATENT_DIM = 32
N_HEADS = 4            # head_dim = 8
FF_DIM = 64
OUTPUT_DIM = 5
TRANSFORMER_LAYERS = 2
LN_EPS = 1e-5

BATCH = 2
N_PARTICLES = 8

M_TOKENS = BATCH * N_PARTICLES          # 16 tokens total
HM_ROWS = N_HEADS * M_TOKENS            # 64 head-stacked score rows
OUT_PAD = 128                           # lane-dense output width
SLAB_W = 128                            # lane width of both parameter slabs

_VMEM = pl.BlockSpec(memory_space=pltpu.MemorySpace.VMEM)


# ------------------------------ fused kernel ---------------------------------
def _fused_kernel(x_ref, w_ref, b_ref, out_ref, *, woff, boff):
    f32 = jnp.float32
    D = LATENT_DIM
    M = M_TOKENS
    H = N_HEADS
    L = TRANSFORMER_LAYERS

    def W(name):
        r, nr, nc = woff[name]
        return w_ref[r:r + nr, 0:nc]

    def Bv(name):
        r, _, nc = boff[name]
        return b_ref[r:r + 1, 0:nc]

    def mm(a, b):
        return jnp.dot(a, b, preferred_element_type=f32)

    def layer_norm(y, gname, bname):
        mu = jnp.mean(y, axis=-1, keepdims=True)
        var = jnp.mean(jnp.square(y - mu), axis=-1, keepdims=True)
        return (y - mu) * jax.lax.rsqrt(var + LN_EPS) * Bv(gname) + Bv(bname)

    # Attention constants (precomputed on host, resident in the weight slab).
    head_mask = W("head_mask")      # (H*M, D)  0/1: head ownership of lanes
    score_bias = W("score_bias")    # (H*M, M)  0 / -1e30 cross-batch mask
    rep_q = W("rep_q")              # (H*M, M)  0/1 sublane replication matrix

    def attention(q, k, v, o_w_name, o_b_name):
        """Multi-head attention; all heads + batches share one softmax.

        Heads are stacked along the sublane axis: row (h*M + t) of the score
        matrix holds head-h scores of token t.  `q` already carries the
        1/sqrt(head_dim) scale (folded into w_q/b_q at init).
        """
        q_big = mm(rep_q, q) * head_mask                          # (H*M, D)
        s = jax.lax.dot_general(q_big, k, (((1,), (1,)), ((), ())),
                                preferred_element_type=f32)       # (H*M, M)
        s = s + score_bias
        s = s - jnp.max(s, axis=-1, keepdims=True)
        e = jnp.exp(s)
        pr = e * pl.reciprocal(jnp.sum(e, axis=-1, keepdims=True), approx=True)
        o = mm(pr, v) * head_mask                                 # (H*M, D)
        merged = o[0:M]                                           # concat-heads
        for h in range(1, H):
            merged = merged + o[h * M:(h + 1) * M]                # (M, D)
        return mm(merged, W(o_w_name)) + Bv(o_b_name)

    # ---- embedding MLP (Dropout = identity in eval) ----
    x = x_ref[...].astype(f32)                                    # (M, INPUT_DIM)
    h = jnp.maximum(mm(x, W("emb0_w")) + Bv("emb0_b"), 0.0)
    h = jnp.maximum(mm(h, W("emb1_w")) + Bv("emb1_b"), 0.0)       # (M, D)

    # ---- encoder (post-norm): x = LN1(x + SA(x)); x = LN2(x + FF(x)) ----
    for l in range(L):
        qkv = mm(h, W(f"enc{l}_qkv_w")) + Bv(f"enc{l}_qkv_b")     # (M, 3D)
        a = attention(qkv[:, 0:D], qkv[:, D:2 * D], qkv[:, 2 * D:3 * D],
                      f"enc{l}_o_w", f"enc{l}_o_b")
        h = layer_norm(h + a, f"enc{l}_ln1_g", f"enc{l}_ln1_b")
        f = jnp.maximum(mm(h, W(f"enc{l}_ff1_w")) + Bv(f"enc{l}_ff1_b"), 0.0)
        f = mm(f, W(f"enc{l}_ff2_w")) + Bv(f"enc{l}_ff2_b")
        h = layer_norm(h + f, f"enc{l}_ln2_g", f"enc{l}_ln2_b")

    memory = h

    # ---- decoder (post-norm): LN1(y+SA); LN2(y+CA(y,mem)); LN3(y+FF) ----
    y = memory
    for l in range(L):
        qkv = mm(y, W(f"dec{l}_sa_qkv_w")) + Bv(f"dec{l}_sa_qkv_b")
        a = attention(qkv[:, 0:D], qkv[:, D:2 * D], qkv[:, 2 * D:3 * D],
                      f"dec{l}_sa_o_w", f"dec{l}_sa_o_b")
        y = layer_norm(y + a, f"dec{l}_ln1_g", f"dec{l}_ln1_b")

        q = mm(y, W(f"dec{l}_ca_q_w")) + Bv(f"dec{l}_ca_q_b")     # (M, D) scaled
        kv = mm(memory, W(f"dec{l}_ca_kv_w")) + Bv(f"dec{l}_ca_kv_b")  # (M, 2D)
        c = attention(q, kv[:, 0:D], kv[:, D:2 * D],
                      f"dec{l}_ca_o_w", f"dec{l}_ca_o_b")
        y = layer_norm(y + c, f"dec{l}_ln2_g", f"dec{l}_ln2_b")

        f = jnp.maximum(mm(y, W(f"dec{l}_ff1_w")) + Bv(f"dec{l}_ff1_b"), 0.0)
        f = mm(f, W(f"dec{l}_ff2_w")) + Bv(f"dec{l}_ff2_b")
        y = layer_norm(y + f, f"dec{l}_ln3_g", f"dec{l}_ln3_b")

    # ---- final projection, lane-dense store (padded to OUT_PAD lanes) ----
    out_ref[...] = (mm(y, W("proj_w")) + Bv("proj_b")).astype(out_ref.dtype)


# --------------------------------- wrapper ------------------------------------
def forward(slabs, offsets, x):
    """x: (batch, n_particles, input_dim) -> (batch, n_particles, output_dim)."""
    B, N, Din = x.shape
    assert (B, N, Din) == (BATCH, N_PARTICLES, INPUT_DIM)
    x2d = x.reshape(B * N, Din)

    kernel = functools.partial(_fused_kernel, woff=offsets["w"], boff=offsets["b"])
    out = pl.pallas_call(
        kernel,
        out_shape=jax.ShapeDtypeStruct((B * N, OUT_PAD), jnp.float32),
        in_specs=[_VMEM, _VMEM, _VMEM],
        out_specs=_VMEM,
    )(x2d, slabs["w"], slabs["b"])

    return out[:, :OUTPUT_DIM].reshape(B, N, OUTPUT_DIM)


# ------------------------------ parameter packing ------------------------------
class _SlabPacker:
    """Packs many small (r, c<=128) f32 matrices into one lane-dense VMEM slab."""

    def __init__(self, width=SLAB_W, row_align=8):
        self.width = width
        self.row_align = row_align
        self._blocks = []
        self._off = {}
        self._cur = 0

    def add(self, name, arr):
        arr = jnp.asarray(arr, jnp.float32)
        r, c = arr.shape
        assert c <= self.width and name not in self._off
        rp = -(-r // self.row_align) * self.row_align
        blk = jnp.zeros((rp, self.width), jnp.float32).at[:r, :c].set(arr)
        self._blocks.append(blk)
        self._off[name] = (self._cur, r, c)
        self._cur += rp

    def pack(self):
        return jnp.concatenate(self._blocks, axis=0), self._off


def _attention_constants():
    rows = jnp.arange(HM_ROWS)
    h_of_row = rows // M_TOKENS
    t_of_row = rows % M_TOKENS
    lanes = jnp.arange(LATENT_DIM)
    head_dim = LATENT_DIM // N_HEADS
    head_mask = (h_of_row[:, None] == lanes[None, :] // head_dim).astype(jnp.float32)

    cols = jnp.arange(M_TOKENS)
    same_batch = (t_of_row[:, None] // N_PARTICLES) == (cols[None, :] // N_PARTICLES)
    score_bias = jnp.where(same_batch, 0.0, -1e30).astype(jnp.float32)

    rep_q = (t_of_row[:, None] == cols[None, :]).astype(jnp.float32)
    return head_mask, score_bias, rep_q


def init_params(key):
    D, F, L = LATENT_DIM, FF_DIM, TRANSFORMER_LAYERS
    scale = 1.0 / math.sqrt(D // N_HEADS)

    keys = iter(jax.random.split(key, 128))

    def lin(din, dout):
        kw, kb = jax.random.split(next(keys))
        return (jax.random.normal(kw, (din, dout), jnp.float32) * 0.05,
                jax.random.normal(kb, (1, dout), jnp.float32) * 0.01)

    wp = _SlabPacker(row_align=8)   # matmul weights + attention constants
    bp = _SlabPacker(row_align=1)   # biases / LN vectors (1 row each)

    def add_linear(name, din, dout):
        w, b = lin(din, dout)
        wp.add(name + "_w", w)
        bp.add(name + "_b", b)

    def add_qkv(name):
        # fused [wq*scale | wk | wv]; scale folded at init (free at runtime)
        wq, bq = lin(D, D); wk, bk = lin(D, D); wv, bv = lin(D, D)
        wp.add(name + "_qkv_w", jnp.concatenate([wq * scale, wk, wv], axis=1))
        bp.add(name + "_qkv_b", jnp.concatenate([bq * scale, bk, bv], axis=1))

    def add_ln(name):
        bp.add(name + "_g", jnp.ones((1, D), jnp.float32))
        bp.add(name + "_b", jnp.zeros((1, D), jnp.float32))

    # embedding MLP
    add_linear("emb0", INPUT_DIM, HIDDEN_DIM)
    add_linear("emb1", HIDDEN_DIM, D)

    # encoder layers
    for l in range(L):
        add_qkv(f"enc{l}")
        add_linear(f"enc{l}_o", D, D)
        add_ln(f"enc{l}_ln1"); add_ln(f"enc{l}_ln2")
        add_linear(f"enc{l}_ff1", D, F)
        add_linear(f"enc{l}_ff2", F, D)

    # decoder layers
    for l in range(L):
        add_qkv(f"dec{l}_sa")
        add_linear(f"dec{l}_sa_o", D, D)
        wq, bq = lin(D, D); wk, bk = lin(D, D); wv, bv = lin(D, D)
        wp.add(f"dec{l}_ca_q_w", wq * scale)
        bp.add(f"dec{l}_ca_q_b", bq * scale)
        wp.add(f"dec{l}_ca_kv_w", jnp.concatenate([wk, wv], axis=1))
        bp.add(f"dec{l}_ca_kv_b", jnp.concatenate([bk, bv], axis=1))
        add_linear(f"dec{l}_ca_o", D, D)
        add_ln(f"dec{l}_ln1"); add_ln(f"dec{l}_ln2"); add_ln(f"dec{l}_ln3")
        add_linear(f"dec{l}_ff1", D, F)
        add_linear(f"dec{l}_ff2", F, D)

    # final projection, zero-padded to OUT_PAD lanes (wrapper slices it back)
    w, b = lin(D, OUTPUT_DIM)
    wp.add("proj_w", jnp.zeros((D, OUT_PAD), jnp.float32).at[:, :OUTPUT_DIM].set(w))
    bp.add("proj_b", jnp.zeros((1, OUT_PAD), jnp.float32).at[:, :OUTPUT_DIM].set(b))

    # attention constants live in the weight slab (no iota/compare in-kernel,
    # no hard-coded BATCH literal)
    head_mask, score_bias, rep_q = _attention_constants()
    wp.add("head_mask", head_mask)
    wp.add("score_bias", score_bias)
    wp.add("rep_q", rep_q)

    w_slab, w_off = wp.pack()
    b_slab, b_off = bp.pack()
    return {"w": w_slab, "b": b_slab}, {"w": w_off, "b": b_off}


# ----------------------------------- main --------------------------------------
if __name__ == "__main__":
    key = jax.random.PRNGKey(0)
    pkey, xkey = jax.random.split(key)
    slabs, offsets = init_params(pkey)
    x = jax.random.normal(xkey, (BATCH, N_PARTICLES, INPUT_DIM), jnp.float32)

    fwd = jax.jit(lambda s, xin: forward(s, offsets, xin))
    out = fwd(slabs, x)
    jax.block_until_ready(out)

    assert out.shape == (BATCH, N_PARTICLES, OUTPUT_DIM)
    assert bool(jnp.all(jnp.isfinite(out)))
    print("KERNEL_OK")
</pallas_src>

<mosaic_0001>
module attributes {stable_mosaic.version = 11 : i64} {
  func.func @_fused_kernel(%arg0: memref<16x5xf32, #tpu.memory_space<vmem>>, %arg1: memref<1096x128xf32, #tpu.memory_space<vmem>>, %arg2: memref<45x128xf32, #tpu.memory_space<vmem>>, %arg3: memref<16x128xf32, #tpu.memory_space<vmem>>) attributes {dimension_semantics = [], scalar_prefetch = 0 : i64, scratch_operands = 0 : i64, tpu.core_type = #tpu.core_type<tc>} {
    %c904 = arith.constant 904 : index
    %c0 = arith.constant 0 : index
    %0 = vector.load %arg1[%c904, %c0] : memref<1096x128xf32, #tpu.memory_space<vmem>>, vector<64x32xf32>
    %c968 = arith.constant 968 : index
    %c0_0 = arith.constant 0 : index
    %1 = vector.load %arg1[%c968, %c0_0] : memref<1096x128xf32, #tpu.memory_space<vmem>>, vector<64x16xf32>
    %c1032 = arith.constant 1032 : index
    %c0_1 = arith.constant 0 : index
    %2 = vector.load %arg1[%c1032, %c0_1] : memref<1096x128xf32, #tpu.memory_space<vmem>>, vector<64x16xf32>
    %c0_2 = arith.constant 0 : index
    %c0_3 = arith.constant 0 : index
    %3 = vector.load %arg0[%c0_2, %c0_3] : memref<16x5xf32, #tpu.memory_space<vmem>>, vector<16x5xf32>
    %c0_4 = arith.constant 0 : index
    %c0_5 = arith.constant 0 : index
    %4 = vector.load %arg1[%c0_4, %c0_5] : memref<1096x128xf32, #tpu.memory_space<vmem>>, vector<5x32xf32>
    %cst = arith.constant dense<0.000000e+00> : vector<16x32xf32>
    %5 = tpu.matmul %3, %4, %cst {dimension_numbers = #tpu.dot_dimension_numbers<[1], [0], [0], [1], [0, 0, 1, 1], [], []>} : vector<16x5xf32>, vector<5x32xf32>, vector<16x32xf32> -> vector<16x32xf32>
    %c0_6 = arith.constant 0 : index
    %c0_7 = arith.constant 0 : index
    %6 = vector.load %arg2[%c0_6, %c0_7] : memref<45x128xf32, #tpu.memory_space<vmem>>, vector<1x32xf32>
    %7 = vector.broadcast %6 : vector<1x32xf32> to vector<16x32xf32>
    %8 = arith.addf %5, %7 : vector<16x32xf32>
    %cst_8 = arith.constant 0.000000e+00 : f32
    %9 = vector.broadcast %cst_8 : f32 to vector<16x32xf32>
    %10 = arith.maximumf %8, %9 : vector<16x32xf32>
    %c8 = arith.constant 8 : index
    %c0_9 = arith.constant 0 : index
    %11 = vector.load %arg1[%c8, %c0_9] : memref<1096x128xf32, #tpu.memory_space<vmem>>, vector<32x32xf32>
    %cst_10 = arith.constant dense<0.000000e+00> : vector<16x32xf32>
    %12 = tpu.matmul %10, %11, %cst_10 {dimension_numbers = #tpu.dot_dimension_numbers<[1], [0], [0], [1], [0, 0, 1, 1], [], []>} : vector<16x32xf32>, vector<32x32xf32>, vector<16x32xf32> -> vector<16x32xf32>
    %c1 = arith.constant 1 : index
    %c0_11 = arith.constant 0 : index
    %13 = vector.load %arg2[%c1, %c0_11] : memref<45x128xf32, #tpu.memory_space<vmem>>, vector<1x32xf32>
    %14 = vector.broadcast %13 : vector<1x32xf32> to vector<16x32xf32>
    %15 = arith.addf %12, %14 : vector<16x32xf32>
    %cst_12 = arith.constant 0.000000e+00 : f32
    %16 = vector.broadcast %cst_12 : f32 to vector<16x32xf32>
    %17 = arith.maximumf %15, %16 : vector<16x32xf32>
    %c40 = arith.constant 40 : index
    %c0_13 = arith.constant 0 : index
    %18 = vector.load %arg1[%c40, %c0_13] : memref<1096x128xf32, #tpu.memory_space<vmem>>, vector<32x96xf32>
    %cst_14 = arith.constant dense<0.000000e+00> : vector<16x96xf32>
    %19 = tpu.matmul %17, %18, %cst_14 {dimension_numbers = #tpu.dot_dimension_numbers<[1], [0], [0], [1], [0, 0, 1, 1], [], []>} : vector<16x32xf32>, vector<32x96xf32>, vector<16x96xf32> -> vector<16x96xf32>
    %c2 = arith.constant 2 : index
    %c0_15 = arith.constant 0 : index
    %20 = vector.load %arg2[%c2, %c0_15] : memref<45x128xf32, #tpu.memory_space<vmem>>, vector<1x96xf32>
    %21 = vector.broadcast %20 : vector<1x96xf32> to vector<16x96xf32>
    %22 = arith.addf %19, %21 : vector<16x96xf32>
    %23 = vector.extract_strided_slice %22 {offsets = [0, 0], sizes = [16, 32], strides = [1, 1]} : vector<16x96xf32> to vector<16x32xf32>
    %24 = vector.extract_strided_slice %22 {offsets = [0, 32], sizes = [16, 32], strides = [1, 1]} : vector<16x96xf32> to vector<16x32xf32>
    %25 = vector.extract_strided_slice %22 {offsets = [0, 64], sizes = [16, 32], strides = [1, 1]} : vector<16x96xf32> to vector<16x32xf32>
    %cst_16 = arith.constant dense<0.000000e+00> : vector<64x32xf32>
    %26 = tpu.matmul %2, %23, %cst_16 {dimension_numbers = #tpu.dot_dimension_numbers<[1], [0], [0], [1], [0, 0, 1, 1], [], []>} : vector<64x16xf32>, vector<16x32xf32>, vector<64x32xf32> -> vector<64x32xf32>
    %27 = arith.mulf %26, %0 : vector<64x32xf32>
    %cst_17 = arith.constant dense<0.000000e+00> : vector<64x16xf32>
    %28 = tpu.matmul %27, %24, %cst_17 {dimension_numbers = #tpu.dot_dimension_numbers<[1], [1], [0], [0], [0, 0, 1, 0], [], []>} : vector<64x32xf32>, vector<16x32xf32>, vector<64x16xf32> -> vector<64x16xf32>
    %29 = arith.addf %28, %1 : vector<64x16xf32>
    %cst_18 = arith.constant dense<0xFF800000> : vector<64xf32>
    %30 = vector.multi_reduction <maximumf>, %29, %cst_18 [1] : vector<64x16xf32> to vector<64xf32>
    %31 = vector.shape_cast %30 : vector<64xf32> to vector<64x1xf32>
    %32 = vector.broadcast %31 : vector<64x1xf32> to vector<64x16xf32>
    %33 = arith.subf %29, %32 : vector<64x16xf32>
    %34 = math.exp %33 : vector<64x16xf32>
    %cst_19 = arith.constant dense<0.000000e+00> : vector<64xf32>
    %35 = vector.multi_reduction <add>, %34, %cst_19 [1] : vector<64x16xf32> to vector<64xf32>
    %36 = vector.shape_cast %35 : vector<64xf32> to vector<64x1xf32>
    %37 = tpu.reciprocal %36 {approx = true} : vector<64x1xf32> -> vector<64x1xf32>
    %38 = vector.broadcast %37 : vector<64x1xf32> to vector<64x16xf32>
    %39 = arith.mulf %34, %38 : vector<64x16xf32>
    %cst_20 = arith.constant dense<0.000000e+00> : vector<64x32xf32>
    %40 = tpu.matmul %39, %25, %cst_20 {dimension_numbers = #tpu.dot_dimension_numbers<[1], [0], [0], [1], [0, 0, 1, 1], [], []>} : vector<64x16xf32>, vector<16x32xf32>, vector<64x32xf32> -> vector<64x32xf32>
    %41 = arith.mulf %40, %0 : vector<64x32xf32>
    %42 = vector.extract_strided_slice %41 {offsets = [0, 0], sizes = [16, 32], strides = [1, 1]} : vector<64x32xf32> to vector<16x32xf32>
    %43 = vector.extract_strided_slice %41 {offsets = [16, 0], sizes = [16, 32], strides = [1, 1]} : vector<64x32xf32> to vector<16x32xf32>
    %44 = arith.addf %42, %43 : vector<16x32xf32>
    %45 = vector.extract_strided_slice %41 {offsets = [32, 0], sizes = [16, 32], strides = [1, 1]} : vector<64x32xf32> to vector<16x32xf32>
    %46 = arith.addf %44, %45 : vector<16x32xf32>
    %47 = vector.extract_strided_slice %41 {offsets = [48, 0], sizes = [16, 32], strides = [1, 1]} : vector<64x32xf32> to vector<16x32xf32>
    %48 = arith.addf %46, %47 : vector<16x32xf32>
    %c72 = arith.constant 72 : index
    %c0_21 = arith.constant 0 : index
    %49 = vector.load %arg1[%c72, %c0_21] : memref<1096x128xf32, #tpu.memory_space<vmem>>, vector<32x32xf32>
    %cst_22 = arith.constant dense<0.000000e+00> : vector<16x32xf32>
    %50 = tpu.matmul %48, %49, %cst_22 {dimension_numbers = #tpu.dot_dimension_numbers<[1], [0], [0], [1], [0, 0, 1, 1], [], []>} : vector<16x32xf32>, vector<32x32xf32>, vector<16x32xf32> -> vector<16x32xf32>
    %c3 = arith.constant 3 : index
    %c0_23 = arith.constant 0 : index
    %51 = vector.load %arg2[%c3, %c0_23] : memref<45x128xf32, #tpu.memory_space<vmem>>, vector<1x32xf32>
    %52 = vector.broadcast %51 : vector<1x32xf32> to vector<16x32xf32>
    %53 = arith.addf %50, %52 : vector<16x32xf32>
    %54 = arith.addf %17, %53 : vector<16x32xf32>
    %cst_24 = arith.constant dense<0.000000e+00> : vector<16xf32>
    %55 = vector.multi_reduction <add>, %54, %cst_24 [1] : vector<16x32xf32> to vector<16xf32>
    %56 = vector.shape_cast %55 : vector<16xf32> to vector<16x1xf32>
    %cst_25 = arith.constant 3.200000e+01 : f32
    %57 = vector.broadcast %cst_25 : f32 to vector<16x1xf32>
    %58 = arith.divf %56, %57 : vector<16x1xf32>
    %59 = vector.broadcast %58 : vector<16x1xf32> to vector<16x32xf32>
    %60 = arith.subf %54, %59 : vector<16x32xf32>
    %61 = arith.mulf %60, %60 : vector<16x32xf32>
    %cst_26 = arith.constant dense<0.000000e+00> : vector<16xf32>
    %62 = vector.multi_reduction <add>, %61, %cst_26 [1] : vector<16x32xf32> to vector<16xf32>
    %63 = vector.shape_cast %62 : vector<16xf32> to vector<16x1xf32>
    %cst_27 = arith.constant 3.200000e+01 : f32
    %64 = vector.broadcast %cst_27 : f32 to vector<16x1xf32>
    %65 = arith.divf %63, %64 : vector<16x1xf32>
    %66 = vector.broadcast %58 : vector<16x1xf32> to vector<16x32xf32>
    %67 = arith.subf %54, %66 : vector<16x32xf32>
    %cst_28 = arith.constant 9.99999974E-6 : f32
    %68 = vector.broadcast %cst_28 : f32 to vector<16x1xf32>
    %69 = arith.addf %65, %68 : vector<16x1xf32>
    %70 = math.rsqrt %69 : vector<16x1xf32>
    %71 = vector.broadcast %70 : vector<16x1xf32> to vector<16x32xf32>
    %72 = arith.mulf %67, %71 : vector<16x32xf32>
    %c4 = arith.constant 4 : index
    %c0_29 = arith.constant 0 : index
    %73 = vector.load %arg2[%c4, %c0_29] : memref<45x128xf32, #tpu.memory_space<vmem>>, vector<1x32xf32>
    %74 = vector.broadcast %73 : vector<1x32xf32> to vector<16x32xf32>
    %75 = arith.mulf %72, %74 : vector<16x32xf32>
    %c5 = arith.constant 5 : index
    %c0_30 = arith.constant 0 : index
    %76 = vector.load %arg2[%c5, %c0_30] : memref<45x128xf32, #tpu.memory_space<vmem>>, vector<1x32xf32>
    %77 = vector.broadcast %76 : vector<1x32xf32> to vector<16x32xf32>
    %78 = arith.addf %75, %77 : vector<16x32xf32>
    %c104 = arith.constant 104 : index
    %c0_31 = arith.constant 0 : index
    %79 = vector.load %arg1[%c104, %c0_31] : memref<1096x128xf32, #tpu.memory_space<vmem>>, vector<32x64xf32>
    %cst_32 = arith.constant dense<0.000000e+00> : vector<16x64xf32>
    %80 = tpu.matmul %78, %79, %cst_32 {dimension_numbers = #tpu.dot_dimension_numbers<[1], [0], [0], [1], [0, 0, 1, 1], [], []>} : vector<16x32xf32>, vector<32x64xf32>, vector<16x64xf32> -> vector<16x64xf32>
    %c8_33 = arith.constant 8 : index
    %c0_34 = arith.constant 0 : index
    %81 = vector.load %arg2[%c8_33, %c0_34] : memref<45x128xf32, #tpu.memory_space<vmem>>, vector<1x64xf32>
    %82 = vector.broadcast %81 : vector<1x64xf32> to vector<16x64xf32>
    %83 = arith.addf %80, %82 : vector<16x64xf32>
    %cst_35 = arith.constant 0.000000e+00 : f32
    %84 = vector.broadcast %cst_35 : f32 to vector<16x64xf32>
    %85 = arith.maximumf %83, %84 : vector<16x64xf32>
    %c136 = arith.constant 136 : index
    %c0_36 = arith.constant 0 : index
    %86 = vector.load %arg1[%c136, %c0_36] : memref<1096x128xf32, #tpu.memory_space<vmem>>, vector<64x32xf32>
    %cst_37 = arith.constant dense<0.000000e+00> : vector<16x32xf32>
    %87 = tpu.matmul %85, %86, %cst_37 {dimension_numbers = #tpu.dot_dimension_numbers<[1], [0], [0], [1], [0, 0, 1, 1], [], []>} : vector<16x64xf32>, vector<64x32xf32>, vector<16x32xf32> -> vector<16x32xf32>
    %c9 = arith.constant 9 : index
    %c0_38 = arith.constant 0 : index
    %88 = vector.load %arg2[%c9, %c0_38] : memref<45x128xf32, #tpu.memory_space<vmem>>, vector<1x32xf32>
    %89 = vector.broadcast %88 : vector<1x32xf32> to vector<16x32xf32>
    %90 = arith.addf %87, %89 : vector<16x32xf32>
    %91 = arith.addf %78, %90 : vector<16x32xf32>
    %cst_39 = arith.constant dense<0.000000e+00> : vector<16xf32>
    %92 = vector.multi_reduction <add>, %91, %cst_39 [1] : vector<16x32xf32> to vector<16xf32>
    %93 = vector.shape_cast %92 : vector<16xf32> to vector<16x1xf32>
    %cst_40 = arith.constant 3.200000e+01 : f32
    %94 = vector.broadcast %cst_40 : f32 to vector<16x1xf32>
    %95 = arith.divf %93, %94 : vector<16x1xf32>
    %96 = vector.broadcast %95 : vector<16x1xf32> to vector<16x32xf32>
    %97 = arith.subf %91, %96 : vector<16x32xf32>
    %98 = arith.mulf %97, %97 : vector<16x32xf32>
    %cst_41 = arith.constant dense<0.000000e+00> : vector<16xf32>
    %99 = vector.multi_reduction <add>, %98, %cst_41 [1] : vector<16x32xf32> to vector<16xf32>
    %100 = vector.shape_cast %99 : vector<16xf32> to vector<16x1xf32>
    %cst_42 = arith.constant 3.200000e+01 : f32
    %101 = vector.broadcast %cst_42 : f32 to vector<16x1xf32>
    %102 = arith.divf %100, %101 : vector<16x1xf32>
    %103 = vector.broadcast %95 : vector<16x1xf32> to vector<16x32xf32>
    %104 = arith.subf %91, %103 : vector<16x32xf32>
    %cst_43 = arith.constant 9.99999974E-6 : f32
    %105 = vector.broadcast %cst_43 : f32 to vector<16x1xf32>
    %106 = arith.addf %102, %105 : vector<16x1xf32>
    %107 = math.rsqrt %106 : vector<16x1xf32>
    %108 = vector.broadcast %107 : vector<16x1xf32> to vector<16x32xf32>
    %109 = arith.mulf %104, %108 : vector<16x32xf32>
    %c6 = arith.constant 6 : index
    %c0_44 = arith.constant 0 : index
    %110 = vector.load %arg2[%c6, %c0_44] : memref<45x128xf32, #tpu.memory_space<vmem>>, vector<1x32xf32>
    %111 = vector.broadcast %110 : vector<1x32xf32> to vector<16x32xf32>
    %112 = arith.mulf %109, %111 : vector<16x32xf32>
    %c7 = arith.constant 7 : index
    %c0_45 = arith.constant 0 : index
    %113 = vector.load %arg2[%c7, %c0_45] : memref<45x128xf32, #tpu.memory_space<vmem>>, vector<1x32xf32>
    %114 = vector.broadcast %113 : vector<1x32xf32> to vector<16x32xf32>
    %115 = arith.addf %112, %114 : vector<16x32xf32>
    %c200 = arith.constant 200 : index
    %c0_46 = arith.constant 0 : index
    %116 = vector.load %arg1[%c200, %c0_46] : memref<1096x128xf32, #tpu.memory_space<vmem>>, vector<32x96xf32>
    %cst_47 = arith.constant dense<0.000000e+00> : vector<16x96xf32>
    %117 = tpu.matmul %115, %116, %cst_47 {dimension_numbers = #tpu.dot_dimension_numbers<[1], [0], [0], [1], [0, 0, 1, 1], [], []>} : vector<16x32xf32>, vector<32x96xf32>, vector<16x96xf32> -> vector<16x96xf32>
    %c10 = arith.constant 10 : index
    %c0_48 = arith.constant 0 : index
    %118 = vector.load %arg2[%c10, %c0_48] : memref<45x128xf32, #tpu.memory_space<vmem>>, vector<1x96xf32>
    %119 = vector.broadcast %118 : vector<1x96xf32> to vector<16x96xf32>
    %120 = arith.addf %117, %119 : vector<16x96xf32>
    %121 = vector.extract_strided_slice %120 {offsets = [0, 0], sizes = [16, 32], strides = [1, 1]} : vector<16x96xf32> to vector<16x32xf32>
    %122 = vector.extract_strided_slice %120 {offsets = [0, 32], sizes = [16, 32], strides = [1, 1]} : vector<16x96xf32> to vector<16x32xf32>
    %123 = vector.extract_strided_slice %120 {offsets = [0, 64], sizes = [16, 32], strides = [1, 1]} : vector<16x96xf32> to vector<16x32xf32>
    %cst_49 = arith.constant dense<0.000000e+00> : vector<64x32xf32>
    %124 = tpu.matmul %2, %121, %cst_49 {dimension_numbers = #tpu.dot_dimension_numbers<[1], [0], [0], [1], [0, 0, 1, 1], [], []>} : vector<64x16xf32>, vector<16x32xf32>, vector<64x32xf32> -> vector<64x32xf32>
    %125 = arith.mulf %124, %0 : vector<64x32xf32>
    %cst_50 = arith.constant dense<0.000000e+00> : vector<64x16xf32>
    %126 = tpu.matmul %125, %122, %cst_50 {dimension_numbers = #tpu.dot_dimension_numbers<[1], [1], [0], [0], [0, 0, 1, 0], [], []>} : vector<64x32xf32>, vector<16x32xf32>, vector<64x16xf32> -> vector<64x16xf32>
    %127 = arith.addf %126, %1 : vector<64x16xf32>
    %cst_51 = arith.constant dense<0xFF800000> : vector<64xf32>
    %128 = vector.multi_reduction <maximumf>, %127, %cst_51 [1] : vector<64x16xf32> to vector<64xf32>
    %129 = vector.shape_cast %128 : vector<64xf32> to vector<64x1xf32>
    %130 = vector.broadcast %129 : vector<64x1xf32> to vector<64x16xf32>
    %131 = arith.subf %127, %130 : vector<64x16xf32>
    %132 = math.exp %131 : vector<64x16xf32>
    %cst_52 = arith.constant dense<0.000000e+00> : vector<64xf32>
    %133 = vector.multi_reduction <add>, %132, %cst_52 [1] : vector<64x16xf32> to vector<64xf32>
    %134 = vector.shape_cast %133 : vector<64xf32> to vector<64x1xf32>
    %135 = tpu.reciprocal %134 {approx = true} : vector<64x1xf32> -> vector<64x1xf32>
    %136 = vector.broadcast %135 : vector<64x1xf32> to vector<64x16xf32>
    %137 = arith.mulf %132, %136 : vector<64x16xf32>
    %cst_53 = arith.constant dense<0.000000e+00> : vector<64x32xf32>
    %138 = tpu.matmul %137, %123, %cst_53 {dimension_numbers = #tpu.dot_dimension_numbers<[1], [0], [0], [1], [0, 0, 1, 1], [], []>} : vector<64x16xf32>, vector<16x32xf32>, vector<64x32xf32> -> vector<64x32xf32>
    %139 = arith.mulf %138, %0 : vector<64x32xf32>
    %140 = vector.extract_strided_slice %139 {offsets = [0, 0], sizes = [16, 32], strides = [1, 1]} : vector<64x32xf32> to vector<16x32xf32>
    %141 = vector.extract_strided_slice %139 {offsets = [16, 0], sizes = [16, 32], strides = [1, 1]} : vector<64x32xf32> to vector<16x32xf32>
    %142 = arith.addf %140, %141 : vector<16x32xf32>
    %143 = vector.extract_strided_slice %139 {offsets = [32, 0], sizes = [16, 32], strides = [1, 1]} : vector<64x32xf32> to vector<16x32xf32>
    %144 = arith.addf %142, %143 : vector<16x32xf32>
    %145 = vector.extract_strided_slice %139 {offsets = [48, 0], sizes = [16, 32], strides = [1, 1]} : vector<64x32xf32> to vector<16x32xf32>
    %146 = arith.addf %144, %145 : vector<16x32xf32>
    %c232 = arith.constant 232 : index
    %c0_54 = arith.constant 0 : index
    %147 = vector.load %arg1[%c232, %c0_54] : memref<1096x128xf32, #tpu.memory_space<vmem>>, vector<32x32xf32>
    %cst_55 = arith.constant dense<0.000000e+00> : vector<16x32xf32>
    %148 = tpu.matmul %146, %147, %cst_55 {dimension_numbers = #tpu.dot_dimension_numbers<[1], [0], [0], [1], [0, 0, 1, 1], [], []>} : vector<16x32xf32>, vector<32x32xf32>, vector<16x32xf32> -> vector<16x32xf32>
    %c11 = arith.constant 11 : index
    %c0_56 = arith.constant 0 : index
    %149 = vector.load %arg2[%c11, %c0_56] : memref<45x128xf32, #tpu.memory_space<vmem>>, vector<1x32xf32>
    %150 = vector.broadcast %149 : vector<1x32xf32> to vector<16x32xf32>
    %151 = arith.addf %148, %150 : vector<16x32xf32>
    %152 = arith.addf %115, %151 : vector<16x32xf32>
    %cst_57 = arith.constant dense<0.000000e+00> : vector<16xf32>
    %153 = vector.multi_reduction <add>, %152, %cst_57 [1] : vector<16x32xf32> to vector<16xf32>
    %154 = vector.shape_cast %153 : vector<16xf32> to vector<16x1xf32>
    %cst_58 = arith.constant 3.200000e+01 : f32
    %155 = vector.broadcast %cst_58 : f32 to vector<16x1xf32>
    %156 = arith.divf %154, %155 : vector<16x1xf32>
    %157 = vector.broadcast %156 : vector<16x1xf32> to vector<16x32xf32>
    %158 = arith.subf %152, %157 : vector<16x32xf32>
    %159 = arith.mulf %158, %158 : vector<16x32xf32>
    %cst_59 = arith.constant dense<0.000000e+00> : vector<16xf32>
    %160 = vector.multi_reduction <add>, %159, %cst_59 [1] : vector<16x32xf32> to vector<16xf32>
    %161 = vector.shape_cast %160 : vector<16xf32> to vector<16x1xf32>
    %cst_60 = arith.constant 3.200000e+01 : f32
    %162 = vector.broadcast %cst_60 : f32 to vector<16x1xf32>
    %163 = arith.divf %161, %162 : vector<16x1xf32>
    %164 = vector.broadcast %156 : vector<16x1xf32> to vector<16x32xf32>
    %165 = arith.subf %152, %164 : vector<16x32xf32>
    %cst_61 = arith.constant 9.99999974E-6 : f32
    %166 = vector.broadcast %cst_61 : f32 to vector<16x1xf32>
    %167 = arith.addf %163, %166 : vector<16x1xf32>
    %168 = math.rsqrt %167 : vector<16x1xf32>
    %169 = vector.broadcast %168 : vector<16x1xf32> to vector<16x32xf32>
    %170 = arith.mulf %165, %169 : vector<16x32xf32>
    %c12 = arith.constant 12 : index
    %c0_62 = arith.constant 0 : index
    %171 = vector.load %arg2[%c12, %c0_62] : memref<45x128xf32, #tpu.memory_space<vmem>>, vector<1x32xf32>
    %172 = vector.broadcast %171 : vector<1x32xf32> to vector<16x32xf32>
    %173 = arith.mulf %170, %172 : vector<16x32xf32>
    %c13 = arith.constant 13 : index
    %c0_63 = arith.constant 0 : index
    %174 = vector.load %arg2[%c13, %c0_63] : memref<45x128xf32, #tpu.memory_space<vmem>>, vector<1x32xf32>
    %175 = vector.broadcast %174 : vector<1x32xf32> to vector<16x32xf32>
    %176 = arith.addf %173, %175 : vector<16x32xf32>
    %c264 = arith.constant 264 : index
    %c0_64 = arith.constant 0 : index
    %177 = vector.load %arg1[%c264, %c0_64] : memref<1096x128xf32, #tpu.memory_space<vmem>>, vector<32x64xf32>
    %cst_65 = arith.constant dense<0.000000e+00> : vector<16x64xf32>
    %178 = tpu.matmul %176, %177, %cst_65 {dimension_numbers = #tpu.dot_dimension_numbers<[1], [0], [0], [1], [0, 0, 1, 1], [], []>} : vector<16x32xf32>, vector<32x64xf32>, vector<16x64xf32> -> vector<16x64xf32>
    %c16 = arith.constant 16 : index
    %c0_66 = arith.constant 0 : index
    %179 = vector.load %arg2[%c16, %c0_66] : memref<45x128xf32, #tpu.memory_space<vmem>>, vector<1x64xf32>
    %180 = vector.broadcast %179 : vector<1x64xf32> to vector<16x64xf32>
    %181 = arith.addf %178, %180 : vector<16x64xf32>
    %cst_67 = arith.constant 0.000000e+00 : f32
    %182 = vector.broadcast %cst_67 : f32 to vector<16x64xf32>
    %183 = arith.maximumf %181, %182 : vector<16x64xf32>
    %c296 = arith.constant 296 : index
    %c0_68 = arith.constant 0 : index
    %184 = vector.load %arg1[%c296, %c0_68] : memref<1096x128xf32, #tpu.memory_space<vmem>>, vector<64x32xf32>
    %cst_69 = arith.constant dense<0.000000e+00> : vector<16x32xf32>
    %185 = tpu.matmul %183, %184, %cst_69 {dimension_numbers = #tpu.dot_dimension_numbers<[1], [0], [0], [1], [0, 0, 1, 1], [], []>} : vector<16x64xf32>, vector<64x32xf32>, vector<16x32xf32> -> vector<16x32xf32>
    %c17 = arith.constant 17 : index
    %c0_70 = arith.constant 0 : index
    %186 = vector.load %arg2[%c17, %c0_70] : memref<45x128xf32, #tpu.memory_space<vmem>>, vector<1x32xf32>
    %187 = vector.broadcast %186 : vector<1x32xf32> to vector<16x32xf32>
    %188 = arith.addf %185, %187 : vector<16x32xf32>
    %189 = arith.addf %176, %188 : vector<16x32xf32>
    %cst_71 = arith.constant dense<0.000000e+00> : vector<16xf32>
    %190 = vector.multi_reduction <add>, %189, %cst_71 [1] : vector<16x32xf32> to vector<16xf32>
    %191 = vector.shape_cast %190 : vector<16xf32> to vector<16x1xf32>
    %cst_72 = arith.constant 3.200000e+01 : f32
    %192 = vector.broadcast %cst_72 : f32 to vector<16x1xf32>
    %193 = arith.divf %191, %192 : vector<16x1xf32>
    %194 = vector.broadcast %193 : vector<16x1xf32> to vector<16x32xf32>
    %195 = arith.subf %189, %194 : vector<16x32xf32>
    %196 = arith.mulf %195, %195 : vector<16x32xf32>
    %cst_73 = arith.constant dense<0.000000e+00> : vector<16xf32>
    %197 = vector.multi_reduction <add>, %196, %cst_73 [1] : vector<16x32xf32> to vector<16xf32>
    %198 = vector.shape_cast %197 : vector<16xf32> to vector<16x1xf32>
    %cst_74 = arith.constant 3.200000e+01 : f32
    %199 = vector.broadcast %cst_74 : f32 to vector<16x1xf32>
    %200 = arith.divf %198, %199 : vector<16x1xf32>
    %201 = vector.broadcast %193 : vector<16x1xf32> to vector<16x32xf32>
    %202 = arith.subf %189, %201 : vector<16x32xf32>
    %cst_75 = arith.constant 9.99999974E-6 : f32
    %203 = vector.broadcast %cst_75 : f32 to vector<16x1xf32>
    %204 = arith.addf %200, %203 : vector<16x1xf32>
    %205 = math.rsqrt %204 : vector<16x1xf32>
    %206 = vector.broadcast %205 : vector<16x1xf32> to vector<16x32xf32>
    %207 = arith.mulf %202, %206 : vector<16x32xf32>
    %c14 = arith.constant 14 : index
    %c0_76 = arith.constant 0 : index
    %208 = vector.load %arg2[%c14, %c0_76] : memref<45x128xf32, #tpu.memory_space<vmem>>, vector<1x32xf32>
    %209 = vector.broadcast %208 : vector<1x32xf32> to vector<16x32xf32>
    %210 = arith.mulf %207, %209 : vector<16x32xf32>
    %c15 = arith.constant 15 : index
    %c0_77 = arith.constant 0 : index
    %211 = vector.load %arg2[%c15, %c0_77] : memref<45x128xf32, #tpu.memory_space<vmem>>, vector<1x32xf32>
    %212 = vector.broadcast %211 : vector<1x32xf32> to vector<16x32xf32>
    %213 = arith.addf %210, %212 : vector<16x32xf32>
    %c360 = arith.constant 360 : index
    %c0_78 = arith.constant 0 : index
    %214 = vector.load %arg1[%c360, %c0_78] : memref<1096x128xf32, #tpu.memory_space<vmem>>, vector<32x96xf32>
    %cst_79 = arith.constant dense<0.000000e+00> : vector<16x96xf32>
    %215 = tpu.matmul %213, %214, %cst_79 {dimension_numbers = #tpu.dot_dimension_numbers<[1], [0], [0], [1], [0, 0, 1, 1], [], []>} : vector<16x32xf32>, vector<32x96xf32>, vector<16x96xf32> -> vector<16x96xf32>
    %c18 = arith.constant 18 : index
    %c0_80 = arith.constant 0 : index
    %216 = vector.load %arg2[%c18, %c0_80] : memref<45x128xf32, #tpu.memory_space<vmem>>, vector<1x96xf32>
    %217 = vector.broadcast %216 : vector<1x96xf32> to vector<16x96xf32>
    %218 = arith.addf %215, %217 : vector<16x96xf32>
    %219 = vector.extract_strided_slice %218 {offsets = [0, 0], sizes = [16, 32], strides = [1, 1]} : vector<16x96xf32> to vector<16x32xf32>
    %220 = vector.extract_strided_slice %218 {offsets = [0, 32], sizes = [16, 32], strides = [1, 1]} : vector<16x96xf32> to vector<16x32xf32>
    %221 = vector.extract_strided_slice %218 {offsets = [0, 64], sizes = [16, 32], strides = [1, 1]} : vector<16x96xf32> to vector<16x32xf32>
    %cst_81 = arith.constant dense<0.000000e+00> : vector<64x32xf32>
    %222 = tpu.matmul %2, %219, %cst_81 {dimension_numbers = #tpu.dot_dimension_numbers<[1], [0], [0], [1], [0, 0, 1, 1], [], []>} : vector<64x16xf32>, vector<16x32xf32>, vector<64x32xf32> -> vector<64x32xf32>
    %223 = arith.mulf %222, %0 : vector<64x32xf32>
    %cst_82 = arith.constant dense<0.000000e+00> : vector<64x16xf32>
    %224 = tpu.matmul %223, %220, %cst_82 {dimension_numbers = #tpu.dot_dimension_numbers<[1], [1], [0], [0], [0, 0, 1, 0], [], []>} : vector<64x32xf32>, vector<16x32xf32>, vector<64x16xf32> -> vector<64x16xf32>
    %225 = arith.addf %224, %1 : vector<64x16xf32>
    %cst_83 = arith.constant dense<0xFF800000> : vector<64xf32>
    %226 = vector.multi_reduction <maximumf>, %225, %cst_83 [1] : vector<64x16xf32> to vector<64xf32>
    %227 = vector.shape_cast %226 : vector<64xf32> to vector<64x1xf32>
    %228 = vector.broadcast %227 : vector<64x1xf32> to vector<64x16xf32>
    %229 = arith.subf %225, %228 : vector<64x16xf32>
    %230 = math.exp %229 : vector<64x16xf32>
    %cst_84 = arith.constant dense<0.000000e+00> : vector<64xf32>
    %231 = vector.multi_reduction <add>, %230, %cst_84 [1] : vector<64x16xf32> to vector<64xf32>
    %232 = vector.shape_cast %231 : vector<64xf32> to vector<64x1xf32>
    %233 = tpu.reciprocal %232 {approx = true} : vector<64x1xf32> -> vector<64x1xf32>
    %234 = vector.broadcast %233 : vector<64x1xf32> to vector<64x16xf32>
    %235 = arith.mulf %230, %234 : vector<64x16xf32>
    %cst_85 = arith.constant dense<0.000000e+00> : vector<64x32xf32>
    %236 = tpu.matmul %235, %221, %cst_85 {dimension_numbers = #tpu.dot_dimension_numbers<[1], [0], [0], [1], [0, 0, 1, 1], [], []>} : vector<64x16xf32>, vector<16x32xf32>, vector<64x32xf32> -> vector<64x32xf32>
    %237 = arith.mulf %236, %0 : vector<64x32xf32>
    %238 = vector.extract_strided_slice %237 {offsets = [0, 0], sizes = [16, 32], strides = [1, 1]} : vector<64x32xf32> to vector<16x32xf32>
    %239 = vector.extract_strided_slice %237 {offsets = [16, 0], sizes = [16, 32], strides = [1, 1]} : vector<64x32xf32> to vector<16x32xf32>
    %240 = arith.addf %238, %239 : vector<16x32xf32>
    %241 = vector.extract_strided_slice %237 {offsets = [32, 0], sizes = [16, 32], strides = [1, 1]} : vector<64x32xf32> to vector<16x32xf32>
    %242 = arith.addf %240, %241 : vector<16x32xf32>
    %243 = vector.extract_strided_slice %237 {offsets = [48, 0], sizes = [16, 32], strides = [1, 1]} : vector<64x32xf32> to vector<16x32xf32>
    %244 = arith.addf %242, %243 : vector<16x32xf32>
    %c392 = arith.constant 392 : index
    %c0_86 = arith.constant 0 : index
    %245 = vector.load %arg1[%c392, %c0_86] : memref<1096x128xf32, #tpu.memory_space<vmem>>, vector<32x32xf32>
    %cst_87 = arith.constant dense<0.000000e+00> : vector<16x32xf32>
    %246 = tpu.matmul %244, %245, %cst_87 {dimension_numbers = #tpu.dot_dimension_numbers<[1], [0], [0], [1], [0, 0, 1, 1], [], []>} : vector<16x32xf32>, vector<32x32xf32>, vector<16x32xf32> -> vector<16x32xf32>
    %c19 = arith.constant 19 : index
    %c0_88 = arith.constant 0 : index
    %247 = vector.load %arg2[%c19, %c0_88] : memref<45x128xf32, #tpu.memory_space<vmem>>, vector<1x32xf32>
    %248 = vector.broadcast %247 : vector<1x32xf32> to vector<16x32xf32>
    %249 = arith.addf %246, %248 : vector<16x32xf32>
    %250 = arith.addf %213, %249 : vector<16x32xf32>
    %cst_89 = arith.constant dense<0.000000e+00> : vector<16xf32>
    %251 = vector.multi_reduction <add>, %250, %cst_89 [1] : vector<16x32xf32> to vector<16xf32>
    %252 = vector.shape_cast %251 : vector<16xf32> to vector<16x1xf32>
    %cst_90 = arith.constant 3.200000e+01 : f32
    %253 = vector.broadcast %cst_90 : f32 to vector<16x1xf32>
    %254 = arith.divf %252, %253 : vector<16x1xf32>
    %255 = vector.broadcast %254 : vector<16x1xf32> to vector<16x32xf32>
    %256 = arith.subf %250, %255 : vector<16x32xf32>
    %257 = arith.mulf %256, %256 : vector<16x32xf32>
    %cst_91 = arith.constant dense<0.000000e+00> : vector<16xf32>
    %258 = vector.multi_reduction <add>, %257, %cst_91 [1] : vector<16x32xf32> to vector<16xf32>
    %259 = vector.shape_cast %258 : vector<16xf32> to vector<16x1xf32>
    %cst_92 = arith.constant 3.200000e+01 : f32
    %260 = vector.broadcast %cst_92 : f32 to vector<16x1xf32>
    %261 = arith.divf %259, %260 : vector<16x1xf32>
    %262 = vector.broadcast %254 : vector<16x1xf32> to vector<16x32xf32>
    %263 = arith.subf %250, %262 : vector<16x32xf32>
    %cst_93 = arith.constant 9.99999974E-6 : f32
    %264 = vector.broadcast %cst_93 : f32 to vector<16x1xf32>
    %265 = arith.addf %261, %264 : vector<16x1xf32>
    %266 = math.rsqrt %265 : vector<16x1xf32>
    %267 = vector.broadcast %266 : vector<16x1xf32> to vector<16x32xf32>
    %268 = arith.mulf %263, %267 : vector<16x32xf32>
    %c23 = arith.constant 23 : index
    %c0_94 = arith.constant 0 : index
    %269 = vector.load %arg2[%c23, %c0_94] : memref<45x128xf32, #tpu.memory_space<vmem>>, vector<1x32xf32>
    %270 = vector.broadcast %269 : vector<1x32xf32> to vector<16x32xf32>
    %271 = arith.mulf %268, %270 : vector<16x32xf32>
    %c24 = arith.constant 24 : index
    %c0_95 = arith.constant 0 : index
    %272 = vector.load %arg2[%c24, %c0_95] : memref<45x128xf32, #tpu.memory_space<vmem>>, vector<1x32xf32>
    %273 = vector.broadcast %272 : vector<1x32xf32> to vector<16x32xf32>
    %274 = arith.addf %271, %273 : vector<16x32xf32>
    %c424 = arith.constant 424 : index
    %c0_96 = arith.constant 0 : index
    %275 = vector.load %arg1[%c424, %c0_96] : memref<1096x128xf32, #tpu.memory_space<vmem>>, vector<32x32xf32>
    %cst_97 = arith.constant dense<0.000000e+00> : vector<16x32xf32>
    %276 = tpu.matmul %274, %275, %cst_97 {dimension_numbers = #tpu.dot_dimension_numbers<[1], [0], [0], [1], [0, 0, 1, 1], [], []>} : vector<16x32xf32>, vector<32x32xf32>, vector<16x32xf32> -> vector<16x32xf32>
    %c20 = arith.constant 20 : index
    %c0_98 = arith.constant 0 : index
    %277 = vector.load %arg2[%c20, %c0_98] : memref<45x128xf32, #tpu.memory_space<vmem>>, vector<1x32xf32>
    %278 = vector.broadcast %277 : vector<1x32xf32> to vector<16x32xf32>
    %279 = arith.addf %276, %278 : vector<16x32xf32>
    %c456 = arith.constant 456 : index
    %c0_99 = arith.constant 0 : index
    %280 = vector.load %arg1[%c456, %c0_99] : memref<1096x128xf32, #tpu.memory_space<vmem>>, vector<32x64xf32>
    %cst_100 = arith.constant dense<0.000000e+00> : vector<16x64xf32>
    %281 = tpu.matmul %213, %280, %cst_100 {dimension_numbers = #tpu.dot_dimension_numbers<[1], [0], [0], [1], [0, 0, 1, 1], [], []>} : vector<16x32xf32>, vector<32x64xf32>, vector<16x64xf32> -> vector<16x64xf32>
    %c21 = arith.constant 21 : index
    %c0_101 = arith.constant 0 : index
    %282 = vector.load %arg2[%c21, %c0_101] : memref<45x128xf32, #tpu.memory_space<vmem>>, vector<1x64xf32>
    %283 = vector.broadcast %282 : vector<1x64xf32> to vector<16x64xf32>
    %284 = arith.addf %281, %283 : vector<16x64xf32>
    %285 = vector.extract_strided_slice %284 {offsets = [0, 0], sizes = [16, 32], strides = [1, 1]} : vector<16x64xf32> to vector<16x32xf32>
    %286 = vector.extract_strided_slice %284 {offsets = [0, 32], sizes = [16, 32], strides = [1, 1]} : vector<16x64xf32> to vector<16x32xf32>
    %cst_102 = arith.constant dense<0.000000e+00> : vector<64x32xf32>
    %287 = tpu.matmul %2, %279, %cst_102 {dimension_numbers = #tpu.dot_dimension_numbers<[1], [0], [0], [1], [0, 0, 1, 1], [], []>} : vector<64x16xf32>, vector<16x32xf32>, vector<64x32xf32> -> vector<64x32xf32>
    %288 = arith.mulf %287, %0 : vector<64x32xf32>
    %cst_103 = arith.constant dense<0.000000e+00> : vector<64x16xf32>
    %289 = tpu.matmul %288, %285, %cst_103 {dimension_numbers = #tpu.dot_dimension_numbers<[1], [1], [0], [0], [0, 0, 1, 0], [], []>} : vector<64x32xf32>, vector<16x32xf32>, vector<64x16xf32> -> vector<64x16xf32>
    %290 = arith.addf %289, %1 : vector<64x16xf32>
    %cst_104 = arith.constant dense<0xFF800000> : vector<64xf32>
    %291 = vector.multi_reduction <maximumf>, %290, %cst_104 [1] : vector<64x16xf32> to vector<64xf32>
    %292 = vector.shape_cast %291 : vector<64xf32> to vector<64x1xf32>
    %293 = vector.broadcast %292 : vector<64x1xf32> to vector<64x16xf32>
    %294 = arith.subf %290, %293 : vector<64x16xf32>
    %295 = math.exp %294 : vector<64x16xf32>
    %cst_105 = arith.constant dense<0.000000e+00> : vector<64xf32>
    %296 = vector.multi_reduction <add>, %295, %cst_105 [1] : vector<64x16xf32> to vector<64xf32>
    %297 = vector.shape_cast %296 : vector<64xf32> to vector<64x1xf32>
    %298 = tpu.reciprocal %297 {approx = true} : vector<64x1xf32> -> vector<64x1xf32>
    %299 = vector.broadcast %298 : vector<64x1xf32> to vector<64x16xf32>
    %300 = arith.mulf %295, %299 : vector<64x16xf32>
    %cst_106 = arith.constant dense<0.000000e+00> : vector<64x32xf32>
    %301 = tpu.matmul %300, %286, %cst_106 {dimension_numbers = #tpu.dot_dimension_numbers<[1], [0], [0], [1], [0, 0, 1, 1], [], []>} : vector<64x16xf32>, vector<16x32xf32>, vector<64x32xf32> -> vector<64x32xf32>
    %302 = arith.mulf %301, %0 : vector<64x32xf32>
    %303 = vector.extract_strided_slice %302 {offsets = [0, 0], sizes = [16, 32], strides = [1, 1]} : vector<64x32xf32> to vector<16x32xf32>
    %304 = vector.extract_strided_slice %302 {offsets = [16, 0], sizes = [16, 32], strides = [1, 1]} : vector<64x32xf32> to vector<16x32xf32>
    %305 = arith.addf %303, %304 : vector<16x32xf32>
    %306 = vector.extract_strided_slice %302 {offsets = [32, 0], sizes = [16, 32], strides = [1, 1]} : vector<64x32xf32> to vector<16x32xf32>
    %307 = arith.addf %305, %306 : vector<16x32xf32>
    %308 = vector.extract_strided_slice %302 {offsets = [48, 0], sizes = [16, 32], strides = [1, 1]} : vector<64x32xf32> to vector<16x32xf32>
    %309 = arith.addf %307, %308 : vector<16x32xf32>
    %c488 = arith.constant 488 : index
    %c0_107 = arith.constant 0 : index
    %310 = vector.load %arg1[%c488, %c0_107] : memref<1096x128xf32, #tpu.memory_space<vmem>>, vector<32x32xf32>
    %cst_108 = arith.constant dense<0.000000e+00> : vector<16x32xf32>
    %311 = tpu.matmul %309, %310, %cst_108 {dimension_numbers = #tpu.dot_dimension_numbers<[1], [0], [0], [1], [0, 0, 1, 1], [], []>} : vector<16x32xf32>, vector<32x32xf32>, vector<16x32xf32> -> vector<16x32xf32>
    %c22 = arith.constant 22 : index
    %c0_109 = arith.constant 0 : index
    %312 = vector.load %arg2[%c22, %c0_109] : memref<45x128xf32, #tpu.memory_space<vmem>>, vector<1x32xf32>
    %313 = vector.broadcast %312 : vector<1x32xf32> to vector<16x32xf32>
    %314 = arith.addf %311, %313 : vector<16x32xf32>
    %315 = arith.addf %274, %314 : vector<16x32xf32>
    %cst_110 = arith.constant dense<0.000000e+00> : vector<16xf32>
    %316 = vector.multi_reduction <add>, %315, %cst_110 [1] : vector<16x32xf32> to vector<16xf32>
    %317 = vector.shape_cast %316 : vector<16xf32> to vector<16x1xf32>
    %cst_111 = arith.constant 3.200000e+01 : f32
    %318 = vector.broadcast %cst_111 : f32 to vector<16x1xf32>
    %319 = arith.divf %317, %318 : vector<16x1xf32>
    %320 = vector.broadcast %319 : vector<16x1xf32> to vector<16x32xf32>
    %321 = arith.subf %315, %320 : vector<16x32xf32>
    %322 = arith.mulf %321, %321 : vector<16x32xf32>
    %cst_112 = arith.constant dense<0.000000e+00> : vector<16xf32>
    %323 = vector.multi_reduction <add>, %322, %cst_112 [1] : vector<16x32xf32> to vector<16xf32>
    %324 = vector.shape_cast %323 : vector<16xf32> to vector<16x1xf32>
    %cst_113 = arith.constant 3.200000e+01 : f32
    %325 = vector.broadcast %cst_113 : f32 to vector<16x1xf32>
    %326 = arith.divf %324, %325 : vector<16x1xf32>
    %327 = vector.broadcast %319 : vector<16x1xf32> to vector<16x32xf32>
    %328 = arith.subf %315, %327 : vector<16x32xf32>
    %cst_114 = arith.constant 9.99999974E-6 : f32
    %329 = vector.broadcast %cst_114 : f32 to vector<16x1xf32>
    %330 = arith.addf %326, %329 : vector<16x1xf32>
    %331 = math.rsqrt %330 : vector<16x1xf32>
    %332 = vector.broadcast %331 : vector<16x1xf32> to vector<16x32xf32>
    %333 = arith.mulf %328, %332 : vector<16x32xf32>
    %c25 = arith.constant 25 : index
    %c0_115 = arith.constant 0 : index
    %334 = vector.load %arg2[%c25, %c0_115] : memref<45x128xf32, #tpu.memory_space<vmem>>, vector<1x32xf32>
    %335 = vector.broadcast %334 : vector<1x32xf32> to vector<16x32xf32>
    %336 = arith.mulf %333, %335 : vector<16x32xf32>
    %c26 = arith.constant 26 : index
    %c0_116 = arith.constant 0 : index
    %337 = vector.load %arg2[%c26, %c0_116] : memref<45x128xf32, #tpu.memory_space<vmem>>, vector<1x32xf32>
    %338 = vector.broadcast %337 : vector<1x32xf32> to vector<16x32xf32>
    %339 = arith.addf %336, %338 : vector<16x32xf32>
    %c520 = arith.constant 520 : index
    %c0_117 = arith.constant 0 : index
    %340 = vector.load %arg1[%c520, %c0_117] : memref<1096x128xf32, #tpu.memory_space<vmem>>, vector<32x64xf32>
    %cst_118 = arith.constant dense<0.000000e+00> : vector<16x64xf32>
    %341 = tpu.matmul %339, %340, %cst_118 {dimension_numbers = #tpu.dot_dimension_numbers<[1], [0], [0], [1], [0, 0, 1, 1], [], []>} : vector<16x32xf32>, vector<32x64xf32>, vector<16x64xf32> -> vector<16x64xf32>
    %c29 = arith.constant 29 : index
    %c0_119 = arith.constant 0 : index
    %342 = vector.load %arg2[%c29, %c0_119] : memref<45x128xf32, #tpu.memory_space<vmem>>, vector<1x64xf32>
    %343 = vector.broadcast %342 : vector<1x64xf32> to vector<16x64xf32>
    %344 = arith.addf %341, %343 : vector<16x64xf32>
    %cst_120 = arith.constant 0.000000e+00 : f32
    %345 = vector.broadcast %cst_120 : f32 to vector<16x64xf32>
    %346 = arith.maximumf %344, %345 : vector<16x64xf32>
    %c552 = arith.constant 552 : index
    %c0_121 = arith.constant 0 : index
    %347 = vector.load %arg1[%c552, %c0_121] : memref<1096x128xf32, #tpu.memory_space<vmem>>, vector<64x32xf32>
    %cst_122 = arith.constant dense<0.000000e+00> : vector<16x32xf32>
    %348 = tpu.matmul %346, %347, %cst_122 {dimension_numbers = #tpu.dot_dimension_numbers<[1], [0], [0], [1], [0, 0, 1, 1], [], []>} : vector<16x64xf32>, vector<64x32xf32>, vector<16x32xf32> -> vector<16x32xf32>
    %c30 = arith.constant 30 : index
    %c0_123 = arith.constant 0 : index
    %349 = vector.load %arg2[%c30, %c0_123] : memref<45x128xf32, #tpu.memory_space<vmem>>, vector<1x32xf32>
    %350 = vector.broadcast %349 : vector<1x32xf32> to vector<16x32xf32>
    %351 = arith.addf %348, %350 : vector<16x32xf32>
    %352 = arith.addf %339, %351 : vector<16x32xf32>
    %cst_124 = arith.constant dense<0.000000e+00> : vector<16xf32>
    %353 = vector.multi_reduction <add>, %352, %cst_124 [1] : vector<16x32xf32> to vector<16xf32>
    %354 = vector.shape_cast %353 : vector<16xf32> to vector<16x1xf32>
    %cst_125 = arith.constant 3.200000e+01 : f32
    %355 = vector.broadcast %cst_125 : f32 to vector<16x1xf32>
    %356 = arith.divf %354, %355 : vector<16x1xf32>
    %357 = vector.broadcast %356 : vector<16x1xf32> to vector<16x32xf32>
    %358 = arith.subf %352, %357 : vector<16x32xf32>
    %359 = arith.mulf %358, %358 : vector<16x32xf32>
    %cst_126 = arith.constant dense<0.000000e+00> : vector<16xf32>
    %360 = vector.multi_reduction <add>, %359, %cst_126 [1] : vector<16x32xf32> to vector<16xf32>
    %361 = vector.shape_cast %360 : vector<16xf32> to vector<16x1xf32>
    %cst_127 = arith.constant 3.200000e+01 : f32
    %362 = vector.broadcast %cst_127 : f32 to vector<16x1xf32>
    %363 = arith.divf %361, %362 : vector<16x1xf32>
    %364 = vector.broadcast %356 : vector<16x1xf32> to vector<16x32xf32>
    %365 = arith.subf %352, %364 : vector<16x32xf32>
    %cst_128 = arith.constant 9.99999974E-6 : f32
    %366 = vector.broadcast %cst_128 : f32 to vector<16x1xf32>
    %367 = arith.addf %363, %366 : vector<16x1xf32>
    %368 = math.rsqrt %367 : vector<16x1xf32>
    %369 = vector.broadcast %368 : vector<16x1xf32> to vector<16x32xf32>
    %370 = arith.mulf %365, %369 : vector<16x32xf32>
    %c27 = arith.constant 27 : index
    %c0_129 = arith.constant 0 : index
    %371 = vector.load %arg2[%c27, %c0_129] : memref<45x128xf32, #tpu.memory_space<vmem>>, vector<1x32xf32>
    %372 = vector.broadcast %371 : vector<1x32xf32> to vector<16x32xf32>
    %373 = arith.mulf %370, %372 : vector<16x32xf32>
    %c28 = arith.constant 28 : index
    %c0_130 = arith.constant 0 : index
    %374 = vector.load %arg2[%c28, %c0_130] : memref<45x128xf32, #tpu.memory_space<vmem>>, vector<1x32xf32>
    %375 = vector.broadcast %374 : vector<1x32xf32> to vector<16x32xf32>
    %376 = arith.addf %373, %375 : vector<16x32xf32>
    %c616 = arith.constant 616 : index
    %c0_131 = arith.constant 0 : index
    %377 = vector.load %arg1[%c616, %c0_131] : memref<1096x128xf32, #tpu.memory_space<vmem>>, vector<32x96xf32>
    %cst_132 = arith.constant dense<0.000000e+00> : vector<16x96xf32>
    %378 = tpu.matmul %376, %377, %cst_132 {dimension_numbers = #tpu.dot_dimension_numbers<[1], [0], [0], [1], [0, 0, 1, 1], [], []>} : vector<16x32xf32>, vector<32x96xf32>, vector<16x96xf32> -> vector<16x96xf32>
    %c31 = arith.constant 31 : index
    %c0_133 = arith.constant 0 : index
    %379 = vector.load %arg2[%c31, %c0_133] : memref<45x128xf32, #tpu.memory_space<vmem>>, vector<1x96xf32>
    %380 = vector.broadcast %379 : vector<1x96xf32> to vector<16x96xf32>
    %381 = arith.addf %378, %380 : vector<16x96xf32>
    %382 = vector.extract_strided_slice %381 {offsets = [0, 0], sizes = [16, 32], strides = [1, 1]} : vector<16x96xf32> to vector<16x32xf32>
    %383 = vector.extract_strided_slice %381 {offsets = [0, 32], sizes = [16, 32], strides = [1, 1]} : vector<16x96xf32> to vector<16x32xf32>
    %384 = vector.extract_strided_slice %381 {offsets = [0, 64], sizes = [16, 32], strides = [1, 1]} : vector<16x96xf32> to vector<16x32xf32>
    %cst_134 = arith.constant dense<0.000000e+00> : vector<64x32xf32>
    %385 = tpu.matmul %2, %382, %cst_134 {dimension_numbers = #tpu.dot_dimension_numbers<[1], [0], [0], [1], [0, 0, 1, 1], [], []>} : vector<64x16xf32>, vector<16x32xf32>, vector<64x32xf32> -> vector<64x32xf32>
    %386 = arith.mulf %385, %0 : vector<64x32xf32>
    %cst_135 = arith.constant dense<0.000000e+00> : vector<64x16xf32>
    %387 = tpu.matmul %386, %383, %cst_135 {dimension_numbers = #tpu.dot_dimension_numbers<[1], [1], [0], [0], [0, 0, 1, 0], [], []>} : vector<64x32xf32>, vector<16x32xf32>, vector<64x16xf32> -> vector<64x16xf32>
    %388 = arith.addf %387, %1 : vector<64x16xf32>
    %cst_136 = arith.constant dense<0xFF800000> : vector<64xf32>
    %389 = vector.multi_reduction <maximumf>, %388, %cst_136 [1] : vector<64x16xf32> to vector<64xf32>
    %390 = vector.shape_cast %389 : vector<64xf32> to vector<64x1xf32>
    %391 = vector.broadcast %390 : vector<64x1xf32> to vector<64x16xf32>
    %392 = arith.subf %388, %391 : vector<64x16xf32>
    %393 = math.exp %392 : vector<64x16xf32>
    %cst_137 = arith.constant dense<0.000000e+00> : vector<64xf32>
    %394 = vector.multi_reduction <add>, %393, %cst_137 [1] : vector<64x16xf32> to vector<64xf32>
    %395 = vector.shape_cast %394 : vector<64xf32> to vector<64x1xf32>
    %396 = tpu.reciprocal %395 {approx = true} : vector<64x1xf32> -> vector<64x1xf32>
    %397 = vector.broadcast %396 : vector<64x1xf32> to vector<64x16xf32>
    %398 = arith.mulf %393, %397 : vector<64x16xf32>
    %cst_138 = arith.constant dense<0.000000e+00> : vector<64x32xf32>
    %399 = tpu.matmul %398, %384, %cst_138 {dimension_numbers = #tpu.dot_dimension_numbers<[1], [0], [0], [1], [0, 0, 1, 1], [], []>} : vector<64x16xf32>, vector<16x32xf32>, vector<64x32xf32> -> vector<64x32xf32>
    %400 = arith.mulf %399, %0 : vector<64x32xf32>
    %401 = vector.extract_strided_slice %400 {offsets = [0, 0], sizes = [16, 32], strides = [1, 1]} : vector<64x32xf32> to vector<16x32xf32>
    %402 = vector.extract_strided_slice %400 {offsets = [16, 0], sizes = [16, 32], strides = [1, 1]} : vector<64x32xf32> to vector<16x32xf32>
    %403 = arith.addf %401, %402 : vector<16x32xf32>
    %404 = vector.extract_strided_slice %400 {offsets = [32, 0], sizes = [16, 32], strides = [1, 1]} : vector<64x32xf32> to vector<16x32xf32>
    %405 = arith.addf %403, %404 : vector<16x32xf32>
    %406 = vector.extract_strided_slice %400 {offsets = [48, 0], sizes = [16, 32], strides = [1, 1]} : vector<64x32xf32> to vector<16x32xf32>
    %407 = arith.addf %405, %406 : vector<16x32xf32>
    %c648 = arith.constant 648 : index
    %c0_139 = arith.constant 0 : index
    %408 = vector.load %arg1[%c648, %c0_139] : memref<1096x128xf32, #tpu.memory_space<vmem>>, vector<32x32xf32>
    %cst_140 = arith.constant dense<0.000000e+00> : vector<16x32xf32>
    %409 = tpu.matmul %407, %408, %cst_140 {dimension_numbers = #tpu.dot_dimension_numbers<[1], [0], [0], [1], [0, 0, 1, 1], [], []>} : vector<16x32xf32>, vector<32x32xf32>, vector<16x32xf32> -> vector<16x32xf32>
    %c32 = arith.constant 32 : index
    %c0_141 = arith.constant 0 : index
    %410 = vector.load %arg2[%c32, %c0_141] : memref<45x128xf32, #tpu.memory_space<vmem>>, vector<1x32xf32>
    %411 = vector.broadcast %410 : vector<1x32xf32> to vector<16x32xf32>
    %412 = arith.addf %409, %411 : vector<16x32xf32>
    %413 = arith.addf %376, %412 : vector<16x32xf32>
    %cst_142 = arith.constant dense<0.000000e+00> : vector<16xf32>
    %414 = vector.multi_reduction <add>, %413, %cst_142 [1] : vector<16x32xf32> to vector<16xf32>
    %415 = vector.shape_cast %414 : vector<16xf32> to vector<16x1xf32>
    %cst_143 = arith.constant 3.200000e+01 : f32
    %416 = vector.broadcast %cst_143 : f32 to vector<16x1xf32>
    %417 = arith.divf %415, %416 : vector<16x1xf32>
    %418 = vector.broadcast %417 : vector<16x1xf32> to vector<16x32xf32>
    %419 = arith.subf %413, %418 : vector<16x32xf32>
    %420 = arith.mulf %419, %419 : vector<16x32xf32>
    %cst_144 = arith.constant dense<0.000000e+00> : vector<16xf32>
    %421 = vector.multi_reduction <add>, %420, %cst_144 [1] : vector<16x32xf32> to vector<16xf32>
    %422 = vector.shape_cast %421 : vector<16xf32> to vector<16x1xf32>
    %cst_145 = arith.constant 3.200000e+01 : f32
    %423 = vector.broadcast %cst_145 : f32 to vector<16x1xf32>
    %424 = arith.divf %422, %423 : vector<16x1xf32>
    %425 = vector.broadcast %417 : vector<16x1xf32> to vector<16x32xf32>
    %426 = arith.subf %413, %425 : vector<16x32xf32>
    %cst_146 = arith.constant 9.99999974E-6 : f32
    %427 = vector.broadcast %cst_146 : f32 to vector<16x1xf32>
    %428 = arith.addf %424, %427 : vector<16x1xf32>
    %429 = math.rsqrt %428 : vector<16x1xf32>
    %430 = vector.broadcast %429 : vector<16x1xf32> to vector<16x32xf32>
    %431 = arith.mulf %426, %430 : vector<16x32xf32>
    %c36 = arith.constant 36 : index
    %c0_147 = arith.constant 0 : index
    %432 = vector.load %arg2[%c36, %c0_147] : memref<45x128xf32, #tpu.memory_space<vmem>>, vector<1x32xf32>
    %433 = vector.broadcast %432 : vector<1x32xf32> to vector<16x32xf32>
    %434 = arith.mulf %431, %433 : vector<16x32xf32>
    %c37 = arith.constant 37 : index
    %c0_148 = arith.constant 0 : index
    %435 = vector.load %arg2[%c37, %c0_148] : memref<45x128xf32, #tpu.memory_space<vmem>>, vector<1x32xf32>
    %436 = vector.broadcast %435 : vector<1x32xf32> to vector<16x32xf32>
    %437 = arith.addf %434, %436 : vector<16x32xf32>
    %c680 = arith.constant 680 : index
    %c0_149 = arith.constant 0 : index
    %438 = vector.load %arg1[%c680, %c0_149] : memref<1096x128xf32, #tpu.memory_space<vmem>>, vector<32x32xf32>
    %cst_150 = arith.constant dense<0.000000e+00> : vector<16x32xf32>
    %439 = tpu.matmul %437, %438, %cst_150 {dimension_numbers = #tpu.dot_dimension_numbers<[1], [0], [0], [1], [0, 0, 1, 1], [], []>} : vector<16x32xf32>, vector<32x32xf32>, vector<16x32xf32> -> vector<16x32xf32>
    %c33 = arith.constant 33 : index
    %c0_151 = arith.constant 0 : index
    %440 = vector.load %arg2[%c33, %c0_151] : memref<45x128xf32, #tpu.memory_space<vmem>>, vector<1x32xf32>
    %441 = vector.broadcast %440 : vector<1x32xf32> to vector<16x32xf32>
    %442 = arith.addf %439, %441 : vector<16x32xf32>
    %c712 = arith.constant 712 : index
    %c0_152 = arith.constant 0 : index
    %443 = vector.load %arg1[%c712, %c0_152] : memref<1096x128xf32, #tpu.memory_space<vmem>>, vector<32x64xf32>
    %cst_153 = arith.constant dense<0.000000e+00> : vector<16x64xf32>
    %444 = tpu.matmul %213, %443, %cst_153 {dimension_numbers = #tpu.dot_dimension_numbers<[1], [0], [0], [1], [0, 0, 1, 1], [], []>} : vector<16x32xf32>, vector<32x64xf32>, vector<16x64xf32> -> vector<16x64xf32>
    %c34 = arith.constant 34 : index
    %c0_154 = arith.constant 0 : index
    %445 = vector.load %arg2[%c34, %c0_154] : memref<45x128xf32, #tpu.memory_space<vmem>>, vector<1x64xf32>
    %446 = vector.broadcast %445 : vector<1x64xf32> to vector<16x64xf32>
    %447 = arith.addf %444, %446 : vector<16x64xf32>
    %448 = vector.extract_strided_slice %447 {offsets = [0, 0], sizes = [16, 32], strides = [1, 1]} : vector<16x64xf32> to vector<16x32xf32>
    %449 = vector.extract_strided_slice %447 {offsets = [0, 32], sizes = [16, 32], strides = [1, 1]} : vector<16x64xf32> to vector<16x32xf32>
    %cst_155 = arith.constant dense<0.000000e+00> : vector<64x32xf32>
    %450 = tpu.matmul %2, %442, %cst_155 {dimension_numbers = #tpu.dot_dimension_numbers<[1], [0], [0], [1], [0, 0, 1, 1], [], []>} : vector<64x16xf32>, vector<16x32xf32>, vector<64x32xf32> -> vector<64x32xf32>
    %451 = arith.mulf %450, %0 : vector<64x32xf32>
    %cst_156 = arith.constant dense<0.000000e+00> : vector<64x16xf32>
    %452 = tpu.matmul %451, %448, %cst_156 {dimension_numbers = #tpu.dot_dimension_numbers<[1], [1], [0], [0], [0, 0, 1, 0], [], []>} : vector<64x32xf32>, vector<16x32xf32>, vector<64x16xf32> -> vector<64x16xf32>
    %453 = arith.addf %452, %1 : vector<64x16xf32>
    %cst_157 = arith.constant dense<0xFF800000> : vector<64xf32>
    %454 = vector.multi_reduction <maximumf>, %453, %cst_157 [1] : vector<64x16xf32> to vector<64xf32>
    %455 = vector.shape_cast %454 : vector<64xf32> to vector<64x1xf32>
    %456 = vector.broadcast %455 : vector<64x1xf32> to vector<64x16xf32>
    %457 = arith.subf %453, %456 : vector<64x16xf32>
    %458 = math.exp %457 : vector<64x16xf32>
    %cst_158 = arith.constant dense<0.000000e+00> : vector<64xf32>
    %459 = vector.multi_reduction <add>, %458, %cst_158 [1] : vector<64x16xf32> to vector<64xf32>
    %460 = vector.shape_cast %459 : vector<64xf32> to vector<64x1xf32>
    %461 = tpu.reciprocal %460 {approx = true} : vector<64x1xf32> -> vector<64x1xf32>
    %462 = vector.broadcast %461 : vector<64x1xf32> to vector<64x16xf32>
    %463 = arith.mulf %458, %462 : vector<64x16xf32>
    %cst_159 = arith.constant dense<0.000000e+00> : vector<64x32xf32>
    %464 = tpu.matmul %463, %449, %cst_159 {dimension_numbers = #tpu.dot_dimension_numbers<[1], [0], [0], [1], [0, 0, 1, 1], [], []>} : vector<64x16xf32>, vector<16x32xf32>, vector<64x32xf32> -> vector<64x32xf32>
    %465 = arith.mulf %464, %0 : vector<64x32xf32>
    %466 = vector.extract_strided_slice %465 {offsets = [0, 0], sizes = [16, 32], strides = [1, 1]} : vector<64x32xf32> to vector<16x32xf32>
    %467 = vector.extract_strided_slice %465 {offsets = [16, 0], sizes = [16, 32], strides = [1, 1]} : vector<64x32xf32> to vector<16x32xf32>
    %468 = arith.addf %466, %467 : vector<16x32xf32>
    %469 = vector.extract_strided_slice %465 {offsets = [32, 0], sizes = [16, 32], strides = [1, 1]} : vector<64x32xf32> to vector<16x32xf32>
    %470 = arith.addf %468, %469 : vector<16x32xf32>
    %471 = vector.extract_strided_slice %465 {offsets = [48, 0], sizes = [16, 32], strides = [1, 1]} : vector<64x32xf32> to vector<16x32xf32>
    %472 = arith.addf %470, %471 : vector<16x32xf32>
    %c744 = arith.constant 744 : index
    %c0_160 = arith.constant 0 : index
    %473 = vector.load %arg1[%c744, %c0_160] : memref<1096x128xf32, #tpu.memory_space<vmem>>, vector<32x32xf32>
    %cst_161 = arith.constant dense<0.000000e+00> : vector<16x32xf32>
    %474 = tpu.matmul %472, %473, %cst_161 {dimension_numbers = #tpu.dot_dimension_numbers<[1], [0], [0], [1], [0, 0, 1, 1], [], []>} : vector<16x32xf32>, vector<32x32xf32>, vector<16x32xf32> -> vector<16x32xf32>
    %c35 = arith.constant 35 : index
    %c0_162 = arith.constant 0 : index
    %475 = vector.load %arg2[%c35, %c0_162] : memref<45x128xf32, #tpu.memory_space<vmem>>, vector<1x32xf32>
    %476 = vector.broadcast %475 : vector<1x32xf32> to vector<16x32xf32>
    %477 = arith.addf %474, %476 : vector<16x32xf32>
    %478 = arith.addf %437, %477 : vector<16x32xf32>
    %cst_163 = arith.constant dense<0.000000e+00> : vector<16xf32>
    %479 = vector.multi_reduction <add>, %478, %cst_163 [1] : vector<16x32xf32> to vector<16xf32>
    %480 = vector.shape_cast %479 : vector<16xf32> to vector<16x1xf32>
    %cst_164 = arith.constant 3.200000e+01 : f32
    %481 = vector.broadcast %cst_164 : f32 to vector<16x1xf32>
    %482 = arith.divf %480, %481 : vector<16x1xf32>
    %483 = vector.broadcast %482 : vector<16x1xf32> to vector<16x32xf32>
    %484 = arith.subf %478, %483 : vector<16x32xf32>
    %485 = arith.mulf %484, %484 : vector<16x32xf32>
    %cst_165 = arith.constant dense<0.000000e+00> : vector<16xf32>
    %486 = vector.multi_reduction <add>, %485, %cst_165 [1] : vector<16x32xf32> to vector<16xf32>
    %487 = vector.shape_cast %486 : vector<16xf32> to vector<16x1xf32>
    %cst_166 = arith.constant 3.200000e+01 : f32
    %488 = vector.broadcast %cst_166 : f32 to vector<16x1xf32>
    %489 = arith.divf %487, %488 : vector<16x1xf32>
    %490 = vector.broadcast %482 : vector<16x1xf32> to vector<16x32xf32>
    %491 = arith.subf %478, %490 : vector<16x32xf32>
    %cst_167 = arith.constant 9.99999974E-6 : f32
    %492 = vector.broadcast %cst_167 : f32 to vector<16x1xf32>
    %493 = arith.addf %489, %492 : vector<16x1xf32>
    %494 = math.rsqrt %493 : vector<16x1xf32>
    %495 = vector.broadcast %494 : vector<16x1xf32> to vector<16x32xf32>
    %496 = arith.mulf %491, %495 : vector<16x32xf32>
    %c38 = arith.constant 38 : index
    %c0_168 = arith.constant 0 : index
    %497 = vector.load %arg2[%c38, %c0_168] : memref<45x128xf32, #tpu.memory_space<vmem>>, vector<1x32xf32>
    %498 = vector.broadcast %497 : vector<1x32xf32> to vector<16x32xf32>
    %499 = arith.mulf %496, %498 : vector<16x32xf32>
    %c39 = arith.constant 39 : index
    %c0_169 = arith.constant 0 : index
    %500 = vector.load %arg2[%c39, %c0_169] : memref<45x128xf32, #tpu.memory_space<vmem>>, vector<1x32xf32>
    %501 = vector.broadcast %500 : vector<1x32xf32> to vector<16x32xf32>
    %502 = arith.addf %499, %501 : vector<16x32xf32>
    %c776 = arith.constant 776 : index
    %c0_170 = arith.constant 0 : index
    %503 = vector.load %arg1[%c776, %c0_170] : memref<1096x128xf32, #tpu.memory_space<vmem>>, vector<32x64xf32>
    %cst_171 = arith.constant dense<0.000000e+00> : vector<16x64xf32>
    %504 = tpu.matmul %502, %503, %cst_171 {dimension_numbers = #tpu.dot_dimension_numbers<[1], [0], [0], [1], [0, 0, 1, 1], [], []>} : vector<16x32xf32>, vector<32x64xf32>, vector<16x64xf32> -> vector<16x64xf32>
    %c42 = arith.constant 42 : index
    %c0_172 = arith.constant 0 : index
    %505 = vector.load %arg2[%c42, %c0_172] : memref<45x128xf32, #tpu.memory_space<vmem>>, vector<1x64xf32>
    %506 = vector.broadcast %505 : vector<1x64xf32> to vector<16x64xf32>
    %507 = arith.addf %504, %506 : vector<16x64xf32>
    %cst_173 = arith.constant 0.000000e+00 : f32
    %508 = vector.broadcast %cst_173 : f32 to vector<16x64xf32>
    %509 = arith.maximumf %507, %508 : vector<16x64xf32>
    %c808 = arith.constant 808 : index
    %c0_174 = arith.constant 0 : index
    %510 = vector.load %arg1[%c808, %c0_174] : memref<1096x128xf32, #tpu.memory_space<vmem>>, vector<64x32xf32>
    %cst_175 = arith.constant dense<0.000000e+00> : vector<16x32xf32>
    %511 = tpu.matmul %509, %510, %cst_175 {dimension_numbers = #tpu.dot_dimension_numbers<[1], [0], [0], [1], [0, 0, 1, 1], [], []>} : vector<16x64xf32>, vector<64x32xf32>, vector<16x32xf32> -> vector<16x32xf32>
    %c43 = arith.constant 43 : index
    %c0_176 = arith.constant 0 : index
    %512 = vector.load %arg2[%c43, %c0_176] : memref<45x128xf32, #tpu.memory_space<vmem>>, vector<1x32xf32>
    %513 = vector.broadcast %512 : vector<1x32xf32> to vector<16x32xf32>
    %514 = arith.addf %511, %513 : vector<16x32xf32>
    %515 = arith.addf %502, %514 : vector<16x32xf32>
    %cst_177 = arith.constant dense<0.000000e+00> : vector<16xf32>
    %516 = vector.multi_reduction <add>, %515, %cst_177 [1] : vector<16x32xf32> to vector<16xf32>
    %517 = vector.shape_cast %516 : vector<16xf32> to vector<16x1xf32>
    %cst_178 = arith.constant 3.200000e+01 : f32
    %518 = vector.broadcast %cst_178 : f32 to vector<16x1xf32>
    %519 = arith.divf %517, %518 : vector<16x1xf32>
    %520 = vector.broadcast %519 : vector<16x1xf32> to vector<16x32xf32>
    %521 = arith.subf %515, %520 : vector<16x32xf32>
    %522 = arith.mulf %521, %521 : vector<16x32xf32>
    %cst_179 = arith.constant dense<0.000000e+00> : vector<16xf32>
    %523 = vector.multi_reduction <add>, %522, %cst_179 [1] : vector<16x32xf32> to vector<16xf32>
    %524 = vector.shape_cast %523 : vector<16xf32> to vector<16x1xf32>
    %cst_180 = arith.constant 3.200000e+01 : f32
    %525 = vector.broadcast %cst_180 : f32 to vector<16x1xf32>
    %526 = arith.divf %524, %525 : vector<16x1xf32>
    %527 = vector.broadcast %519 : vector<16x1xf32> to vector<16x32xf32>
    %528 = arith.subf %515, %527 : vector<16x32xf32>
    %cst_181 = arith.constant 9.99999974E-6 : f32
    %529 = vector.broadcast %cst_181 : f32 to vector<16x1xf32>
    %530 = arith.addf %526, %529 : vector<16x1xf32>
    %531 = math.rsqrt %530 : vector<16x1xf32>
    %532 = vector.broadcast %531 : vector<16x1xf32> to vector<16x32xf32>
    %533 = arith.mulf %528, %532 : vector<16x32xf32>
    %c40_182 = arith.constant 40 : index
    %c0_183 = arith.constant 0 : index
    %534 = vector.load %arg2[%c40_182, %c0_183] : memref<45x128xf32, #tpu.memory_space<vmem>>, vector<1x32xf32>
    %535 = vector.broadcast %534 : vector<1x32xf32> to vector<16x32xf32>
    %536 = arith.mulf %533, %535 : vector<16x32xf32>
    %c41 = arith.constant 41 : index
    %c0_184 = arith.constant 0 : index
    %537 = vector.load %arg2[%c41, %c0_184] : memref<45x128xf32, #tpu.memory_space<vmem>>, vector<1x32xf32>
    %538 = vector.broadcast %537 : vector<1x32xf32> to vector<16x32xf32>
    %539 = arith.addf %536, %538 : vector<16x32xf32>
    %c872 = arith.constant 872 : index
    %c0_185 = arith.constant 0 : index
    %540 = vector.load %arg1[%c872, %c0_185] : memref<1096x128xf32, #tpu.memory_space<vmem>>, vector<32x128xf32>
    %cst_186 = arith.constant dense<0.000000e+00> : vector<16x128xf32>
    %541 = tpu.matmul %539, %540, %cst_186 {dimension_numbers = #tpu.dot_dimension_numbers<[1], [0], [0], [1], [0, 0, 1, 1], [], []>} : vector<16x32xf32>, vector<32x128xf32>, vector<16x128xf32> -> vector<16x128xf32>
    %c44 = arith.constant 44 : index
    %c0_187 = arith.constant 0 : index
    %542 = vector.load %arg2[%c44, %c0_187] : memref<45x128xf32, #tpu.memory_space<vmem>>, vector<1x128xf32>
    %543 = vector.broadcast %542 : vector<1x128xf32> to vector<16x128xf32>
    %544 = arith.addf %541, %543 : vector<16x128xf32>
    %c0_188 = arith.constant 0 : index
    %c0_189 = arith.constant 0 : index
    %545 = vector.load %arg3[%c0_188, %c0_189] : memref<16x128xf32, #tpu.memory_space<vmem>>, vector<16x128xf32>
    tpu.vector_store %arg3[%c0_188, %c0_189], %544 {strides = array<i32>} : memref<16x128xf32, #tpu.memory_space<vmem>>, vector<16x128xf32>,
    return
  }
}

</mosaic_0001>

<llo_original>
// kernel: _lambda_.1
$region0: #{_lambda_.1}
  #allocation0 [shape = 'u32[]', space=smem, size = 0x4, offset = 0x4, fixed_abs, tag = 'smem constant byte address 0x4 - core index']
  #allocation1 [shape = 'u32[144,128]{1,0:T(1,128)}', space=vmem, size = 0x12000, scoped, tag = 'internal scratch']
  %s0 = inlined_call_operand.vmem [shape: f32[16,5], index: 0, kind: input, shape index: {}]
  %s1 = inlined_call_operand.hbm [shape: f32[1096,128], index: 1, kind: input, shape index: {}]
  %s2 = inlined_call_operand.hbm [shape: f32[45,128], index: 2, kind: input, shape index: {}]
  %s3 = inlined_call_operand.vmem [shape: f32[16,128], index: 3, kind: output, shape index: {}]
  %s4 = sld [smem:[#allocation0]]
  $region30: #{_lambda_.1} parent=0
    _
  %s6 = ssub.s32 1, %s4
  %s7 = scalar_select 0, %s6, %s4
  $region1: #{_lambda_.1} parent=0
    #allocation2 [shape = 'u8[561152]{0}', space=vmem, size = 0x89000, scoped, tag = 'input window, operand 1, single buffered']
    #allocation3 [shape = 's32[1]{0}', space=sflag, size = 0x4, scoped, tag = 'scoped memory for _lambda_.1']
    #allocation4 [shape = 'u8[24576]{0}', space=vmem, size = 0x6000, scoped, tag = 'input window, operand 2, single buffered']
    #allocation5 [shape = 's32[1]{0}', space=sflag, size = 0x4, scoped, tag = 'scoped memory for _lambda_.1']
    %8 = vsyncpa [#allocation3], 0
    %9 = vsyncpa [#allocation5], 0
    // Predicated region
    $region2: #{_lambda_.1} parent=1 // pred_check
      _
    $region3: #{_lambda_.1} parent=1 // pred_check_branch
      %11 = sbr.rel (0) target = $region5
    $region4: #{_lambda_.1} parent=1 // pred_region
      _
    $region5: #{_lambda_.1} parent=1 // pred_fallthru
      _
    // Predicated region
    $region6: #{_lambda_.1} parent=1 // pred_check
      _
    $region7: #{_lambda_.1} parent=1 // pred_check_branch
      %13 = sbr.rel (0) target = $region9
    $region8: #{_lambda_.1} parent=1 // pred_region
      %s15 = ssub.s32 17536, 17536
      %16 = vsyncadd [#allocation3], %s15
      %s17 = sshll.u32 [#allocation2], 4
      %s18 = int_to_ptr.vmem [resolvable:$true] %s17
      %23 = dma.hbm_to_vmem [thread:$0]  %s1, 17536, %s18, [#allocation3], 128, 128, 8
    $region9: #{_lambda_.1} parent=1 // pred_fallthru
      _
    // Predicated region
    $region10: #{_lambda_.1} parent=1 // pred_check
      _
    $region11: #{_lambda_.1} parent=1 // pred_check_branch
      %25 = sbr.rel (0) target = $region13
    $region12: #{_lambda_.1} parent=1 // pred_region
      %s27 = ssub.s32 768, 768
      %28 = vsyncadd [#allocation5], %s27
      %s29 = sshll.u32 [#allocation4], 4
      %s30 = int_to_ptr.vmem [resolvable:$true] %s29
      %35 = dma.hbm_to_vmem [thread:$0]  %s2, 768, %s30, [#allocation5], 128, 128, 8
    $region13: #{_lambda_.1} parent=1 // pred_fallthru
      _
    // Predicated region
    $region14: #{_lambda_.1} parent=1 // pred_check
      _
    $region15: #{_lambda_.1} parent=1 // pred_check_branch
      %37 = sbr.rel (0) target = $region17
    $region16: #{_lambda_.1} parent=1 // pred_region
      %38 = dma.done [#allocation3], 17536
    $region17: #{_lambda_.1} parent=1 // pred_fallthru
      _
    // Predicated region
    $region18: #{_lambda_.1} parent=1 // pred_check
      _
    $region19: #{_lambda_.1} parent=1 // pred_check_branch
      %40 = sbr.rel (0) target = $region21
    $region20: #{_lambda_.1} parent=1 // pred_region
      %41 = dma.done [#allocation5], 768
    $region21: #{_lambda_.1} parent=1 // pred_fallthru
      _
    %v42 = vld [vmem:[#allocation2 + $0x388] sm:$0xff]
    %v43 = vld [vmem:[#allocation2 + $0x390] sm:$0xff]
    %v44 = vld [vmem:[#allocation2 + $0x398] sm:$0xff]
    %v45 = vld [vmem:[#allocation2 + $0x3a0] sm:$0xff]
    %v46 = vld [vmem:[#allocation2 + $0x3a8] sm:$0xff]
    %v47 = vld [vmem:[#allocation2 + $0x3b0] sm:$0xff]
    %v48 = vld [vmem:[#allocation2 + $0x3b8] sm:$0xff]
    %v49 = vld [vmem:[#allocation2 + $0x3c0] sm:$0xff]
    %v50 = vld [vmem:[#allocation2 + $0x3c8] sm:$0xff]
    %v51 = vld [vmem:[#allocation2 + $0x3d0] sm:$0xff]
    %v52 = vld [vmem:[#allocation2 + $0x3d8] sm:$0xff]
    %v53 = vld [vmem:[#allocation2 + $0x3e0] sm:$0xff]
    %v54 = vld [vmem:[#allocation2 + $0x3e8] sm:$0xff]
    %v55 = vld [vmem:[#allocation2 + $0x3f0] sm:$0xff]
    %v56 = vld [vmem:[#allocation2 + $0x3f8] sm:$0xff]
    %v57 = vld [vmem:[#allocation2 + $0x400] sm:$0xff]
    %v58 = vld [vmem:[#allocation2 + $0x408] sm:$0xff]
    %v59 = vld [vmem:[#allocation2 + $0x410] sm:$0xff]
    %v60 = vld [vmem:[#allocation2 + $0x418] sm:$0xff]
    %v61 = vld [vmem:[#allocation2 + $0x420] sm:$0xff]
    %v62 = vld [vmem:[#allocation2 + $0x428] sm:$0xff]
    %v63 = vld [vmem:[#allocation2 + $0x430] sm:$0xff]
    %v64 = vld [vmem:[#allocation2 + $0x438] sm:$0xff]
    %v65 = vld [vmem:[#allocation2 + $0x440] sm:$0xff]
    %v66 = vld [vmem:[%s0] sm:$0xff]
    %v67 = vld [vmem:[%s0 + $0x8] sm:$0xff]
    %v68 = vld [vmem:[#allocation2] sm:$0x1f]
    %v69 = vld [vmem:[#allocation4] sm:$0x1]
    %v70 = vlaneseq
    %v71 = vshrl.u32 %v70, 7
    %v72 = vsub.s32 0, %v71
    %v73 = vrot.slane %v69, %v72
    %vm74 = vcmask 39936
    %v76 = vsel %vm74, %v66, 0
    %v79 = vsel %vm74, %v67, 0
    %vm81 = vcmask 1044480
    %v83 = vsel %vm81, %v68, 0
    %85 = vmatprep.subr.mxu0 0.0
    %86 = vmatpush1.msra.mxu0 0.0
    %87 = vmatprep.subr.mxu0 0.0
    %88 = vmatpush1.msra.mxu0 0.0
    %89 = vmatprep.subr.mxu0 0.0
    %90 = vmatpush1.msra.mxu0 0.0
    %91 = vmatprep.subr.mxu0 0.0
    %92 = vmatpush1.msra.mxu0 0.0
    %93 = vmatprep.subr.mxu0 0.0
    %94 = vmatpush1.msra.mxu0 0.0
    %95 = vmatprep.subr.mxu0 0.0
    %96 = vmatpush1.msra.mxu0 0.0
    %97 = vmatprep.subr.mxu0 0.0
    %98 = vmatpush1.msra.mxu0 0.0
    %99 = vmatprep.subr.mxu0 0.0
    %100 = vmatpush1.msra.mxu0 0.0
    %101 = vmatprep.subr.mxu0 0.0
    %102 = vmatpush1.msra.mxu0 0.0
    %103 = vmatprep.subr.mxu0 0.0
    %104 = vmatpush1.msra.mxu0 0.0
    %105 = vmatprep.subr.mxu0 0.0
    %106 = vmatpush1.msra.mxu0 0.0
    %107 = vmatprep.subr.mxu0 0.0
    %108 = vmatpush1.msra.mxu0 0.0
    %109 = vmatprep.subr.mxu0 0.0
    %110 = vmatpush1.msra.mxu0 0.0
    %111 = vmatprep.subr.mxu0 0.0
    %112 = vmatpush1.msra.mxu0 0.0
    %113 = vmatprep.subr.mxu0 0.0
    %114 = vmatpush1.msra.mxu0 0.0
    %115 = vmatprep.subr.mxu0 0.0
    %116 = vmatpush1.msra.mxu0 %v83
    %117 = vmatprep.subr.mxu0 0.0
    %118 = vmatpush2.msra.mxu0 0.0
    %119 = vmatprep.subr.mxu0 0.0
    %120 = vmatpush2.msra.mxu0 0.0
    %121 = vmatprep.subr.mxu0 0.0
    %122 = vmatpush2.msra.mxu0 0.0
    %123 = vmatprep.subr.mxu0 0.0
    %124 = vmatpush2.msra.mxu0 0.0
    %125 = vmatprep.subr.mxu0 0.0
    %126 = vmatpush2.msra.mxu0 0.0
    %127 = vmatprep.subr.mxu0 0.0
    %128 = vmatpush2.msra.mxu0 0.0
    %129 = vmatprep.subr.mxu0 0.0
    %130 = vmatpush2.msra.mxu0 0.0
    %131 = vmatprep.subr.mxu0 0.0
    %132 = vmatpush2.msra.mxu0 0.0
    %133 = vmatprep.subr.mxu0 0.0
    %134 = vmatpush2.msra.mxu0 0.0
    %135 = vmatprep.subr.mxu0 0.0
    %136 = vmatpush2.msra.mxu0 0.0
    %137 = vmatprep.subr.mxu0 0.0
    %138 = vmatpush2.msra.mxu0 0.0
    %139 = vmatprep.subr.mxu0 0.0
    %140 = vmatpush2.msra.mxu0 0.0
    %141 = vmatprep.subr.mxu0 0.0
    %142 = vmatpush2.msra.mxu0 0.0
    %143 = vmatprep.subr.mxu0 0.0
    %144 = vmatpush2.msra.mxu0 0.0
    %145 = vmatprep.subr.mxu0 0.0
    %146 = vmatpush2.msra.mxu0 0.0
    %147 = vmatprep.subr.mxu0 0.0
    %148 = vmatpush2.msra.mxu0 0.0
    %149 = vmatprep.mubr.f32.mxu0 0.0
    %150 = vmatmul.mubr.f32.gmra.mxu0 %v76
    %v151 = vpop.f32.mrf.mxu0
    %v152 = vadd.f32 %v73, %v151
    %v153 = vpop.f32.mrf.mxu0
    %154 = vmatprep.mubr.f32.mxu0 0.0
    %155 = vmatmul.mubr.f32.gmra.mxu0 %v79
    %v156 = vpop.f32.mrf.mxu0
    %v157 = vadd.f32 %v73, %v156
    %v158 = vpop.f32.mrf.mxu0
    %159 = vdwg.mxu0
    %v160 = vmax.f32 %v152, 0.0
    %v161 = vmax.f32 %v157, 0.0
    %v162 = vld [vmem:[#allocation2 + $0x8] sm:$0xff]
    %v163 = vld [vmem:[#allocation2 + $0x10] sm:$0xff]
    %v164 = vld [vmem:[#allocation2 + $0x18] sm:$0xff]
    %v165 = vld [vmem:[#allocation2 + $0x20] sm:$0xff]
    %v166 = vld [vmem:[#allocation4 + $0x1] sm:$0x1]
    %v167 = vlaneseq
    %v168 = vshrl.u32 %v167, 7
    %v169 = vsub.s32 0, %v168
    %v170 = vrot.slane %v166, %v169
    %vm171 = vcmask 261120
    %v173 = vsel %vm171, %v160, 0
    %v176 = vsel %vm171, %v161, 0
    %178 = vmatprep.subr.mxu0 0.0
    %179 = vmatpush1.msra.mxu0 0.0
    %180 = vmatprep.subr.mxu0 0.0
    %181 = vmatpush1.msra.mxu0 0.0
    %182 = vmatprep.subr.mxu0 0.0
    %183 = vmatpush1.msra.mxu0 0.0
    %184 = vmatprep.subr.mxu0 0.0
    %185 = vmatpush1.msra.mxu0 0.0
    %186 = vmatprep.subr.mxu0 0.0
    %187 = vmatpush1.msra.mxu0 0.0
    %188 = vmatprep.subr.mxu0 0.0
    %189 = vmatpush1.msra.mxu0 0.0
    %190 = vmatprep.subr.mxu0 0.0
    %191 = vmatpush1.msra.mxu0 0.0
    %192 = vmatprep.subr.mxu0 0.0
    %193 = vmatpush1.msra.mxu0 0.0
    %194 = vmatprep.subr.mxu0 0.0
    %195 = vmatpush1.msra.mxu0 0.0
    %196 = vmatprep.subr.mxu0 0.0
    %197 = vmatpush1.msra.mxu0 0.0
    %198 = vmatprep.subr.mxu0 0.0
    %199 = vmatpush1.msra.mxu0 0.0
    %200 = vmatprep.subr.mxu0 0.0
    %201 = vmatpush1.msra.mxu0 0.0
    %202 = vmatprep.subr.mxu0 0.0
    %203 = vmatpush1.msra.mxu0 %v165
    %204 = vmatprep.subr.mxu0 0.0
    %205 = vmatpush1.msra.mxu0 %v164
    %206 = vmatprep.subr.mxu0 0.0
    %207 = vmatpush1.msra.mxu0 %v163
    %208 = vmatprep.subr.mxu0 0.0
    %209 = vmatpush1.msra.mxu0 %v162
    %210 = vmatprep.subr.mxu0 0.0
    %211 = vmatpush2.msra.mxu0 0.0
    %212 = vmatprep.subr.mxu0 0.0
    %213 = vmatpush2.msra.mxu0 0.0
    %214 = vmatprep.subr.mxu0 0.0
    %215 = vmatpush2.msra.mxu0 0.0
    %216 = vmatprep.subr.mxu0 0.0
    %217 = vmatpush2.msra.mxu0 0.0
    %218 = vmatprep.subr.mxu0 0.0
    %219 = vmatpush2.msra.mxu0 0.0
    %220 = vmatprep.subr.mxu0 0.0
    %221 = vmatpush2.msra.mxu0 0.0
    %222 = vmatprep.subr.mxu0 0.0
    %223 = vmatpush2.msra.mxu0 0.0
    %224 = vmatprep.subr.mxu0 0.0
    %225 = vmatpush2.msra.mxu0 0.0
    %226 = vmatprep.subr.mxu0 0.0
    %227 = vmatpush2.msra.mxu0 0.0
    %228 = vmatprep.subr.mxu0 0.0
    %229 = vmatpush2.msra.mxu0 0.0
    %230 = vmatprep.subr.mxu0 0.0
    %231 = vmatpush2.msra.mxu0 0.0
    %232 = vmatprep.subr.mxu0 0.0
    %233 = vmatpush2.msra.mxu0 0.0
    %234 = vmatprep.subr.mxu0 0.0
    %235 = vmatpush2.msra.mxu0 0.0
    %236 = vmatprep.subr.mxu0 0.0
    %237 = vmatpush2.msra.mxu0 0.0
    %238 = vmatprep.subr.mxu0 0.0
    %239 = vmatpush2.msra.mxu0 0.0
    %240 = vmatprep.subr.mxu0 0.0
    %241 = vmatpush2.msra.mxu0 0.0
    %242 = vmatprep.mubr.f32.mxu0 0.0
    %243 = vmatmul.mubr.f32.gmra.mxu0 %v173
    %v244 = vpop.f32.mrf.mxu0
    %v245 = vadd.f32 %v170, %v244
    %v246 = vpop.f32.mrf.mxu0
    %247 = vmatprep.mubr.f32.mxu0 0.0
    %248 = vmatmul.mubr.f32.gmra.mxu0 %v176
    %v249 = vpop.f32.mrf.mxu0
    %v250 = vadd.f32 %v170, %v249
    %v251 = vpop.f32.mrf.mxu0
    %252 = vdwg.mxu0
    %v253 = vmax.f32 %v245, 0.0
    %v254 = vmax.f32 %v250, 0.0
    %v255 = vld [vmem:[#allocation2 + $0x28] sm:$0xff]
    %v256 = vld [vmem:[#allocation2 + $0x30] sm:$0xff]
    %v257 = vld [vmem:[#allocation2 + $0x38] sm:$0xff]
    %v258 = vld [vmem:[#allocation2 + $0x40] sm:$0xff]
    %v259 = vld [vmem:[#allocation4 + $0x2] sm:$0x1]
    %v260 = vlaneseq
    %v261 = vshrl.u32 %v260, 7
    %v262 = vsub.s32 0, %v261
    %v263 = vrot.slane %v259, %v262
    %v265 = vsel %vm171, %v253, 0
    %v268 = vsel %vm171, %v254, 0
    %270 = vmatprep.subr.mxu0 0.0
    %271 = vmatpush1.msra.mxu0 0.0
    %272 = vmatprep.subr.mxu0 0.0
    %273 = vmatpush1.msra.mxu0 0.0
    %274 = vmatprep.subr.mxu0 0.0
    %275 = vmatpush1.msra.mxu0 0.0
    %276 = vmatprep.subr.mxu0 0.0
    %277 = vmatpush1.msra.mxu0 0.0
    %278 = vmatprep.subr.mxu0 0.0
    %279 = vmatpush1.msra.mxu0 0.0
    %280 = vmatprep.subr.mxu0 0.0
    %281 = vmatpush1.msra.mxu0 0.0
    %282 = vmatprep.subr.mxu0 0.0
    %283 = vmatpush1.msra.mxu0 0.0
    %284 = vmatprep.subr.mxu0 0.0
    %285 = vmatpush1.msra.mxu0 0.0
    %286 = vmatprep.subr.mxu0 0.0
    %287 = vmatpush1.msra.mxu0 0.0
    %288 = vmatprep.subr.mxu0 0.0
    %289 = vmatpush1.msra.mxu0 0.0
    %290 = vmatprep.subr.mxu0 0.0
    %291 = vmatpush1.msra.mxu0 0.0
    %292 = vmatprep.subr.mxu0 0.0
    %293 = vmatpush1.msra.mxu0 0.0
    %294 = vmatprep.subr.mxu0 0.0
    %295 = vmatpush1.msra.mxu0 %v258
    %296 = vmatprep.subr.mxu0 0.0
    %297 = vmatpush1.msra.mxu0 %v257
    %298 = vmatprep.subr.mxu0 0.0
    %299 = vmatpush1.msra.mxu0 %v256
    %300 = vmatprep.subr.mxu0 0.0
    %301 = vmatpush1.msra.mxu0 %v255
    %302 = vmatprep.subr.mxu0 0.0
    %303 = vmatpush2.msra.mxu0 0.0
    %304 = vmatprep.subr.mxu0 0.0
    %305 = vmatpush2.msra.mxu0 0.0
    %306 = vmatprep.subr.mxu0 0.0
    %307 = vmatpush2.msra.mxu0 0.0
    %308 = vmatprep.subr.mxu0 0.0
    %309 = vmatpush2.msra.mxu0 0.0
    %310 = vmatprep.subr.mxu0 0.0
    %311 = vmatpush2.msra.mxu0 0.0
    %312 = vmatprep.subr.mxu0 0.0
    %313 = vmatpush2.msra.mxu0 0.0
    %314 = vmatprep.subr.mxu0 0.0
    %315 = vmatpush2.msra.mxu0 0.0
    %316 = vmatprep.subr.mxu0 0.0
    %317 = vmatpush2.msra.mxu0 0.0
    %318 = vmatprep.subr.mxu0 0.0
    %319 = vmatpush2.msra.mxu0 0.0
    %320 = vmatprep.subr.mxu0 0.0
    %321 = vmatpush2.msra.mxu0 0.0
    %322 = vmatprep.subr.mxu0 0.0
    %323 = vmatpush2.msra.mxu0 0.0
    %324 = vmatprep.subr.mxu0 0.0
    %325 = vmatpush2.msra.mxu0 0.0
    %326 = vmatprep.subr.mxu0 0.0
    %327 = vmatpush2.msra.mxu0 0.0
    %328 = vmatprep.subr.mxu0 0.0
    %329 = vmatpush2.msra.mxu0 0.0
    %330 = vmatprep.subr.mxu0 0.0
    %331 = vmatpush2.msra.mxu0 0.0
    %332 = vmatprep.subr.mxu0 0.0
    %333 = vmatpush2.msra.mxu0 0.0
    %334 = vmatprep.mubr.f32.mxu0 0.0
    %335 = vmatmul.mubr.f32.gmra.mxu0 %v265
    %v336 = vpop.f32.mrf.mxu0
    %v337 = vadd.f32 %v263, %v336
    %v338 = vpop.f32.mrf.mxu0
    %339 = vmatprep.mubr.f32.mxu0 0.0
    %340 = vmatmul.mubr.f32.gmra.mxu0 %v268
    %v341 = vpop.f32.mrf.mxu0
    %v342 = vadd.f32 %v263, %v341
    %v343 = vpop.f32.mrf.mxu0
    %344 = vdwg.mxu0
    %vm345 = vcmask 130048
    %v347 = vsel %vm345, %v58, 0
    %v350 = vsel %vm345, %v59, 0
    %v353 = vsel %vm345, %v60, 0
    %v356 = vsel %vm345, %v61, 0
    %v359 = vsel %vm345, %v62, 0
    %v362 = vsel %vm345, %v63, 0
    %v365 = vsel %vm345, %v64, 0
    %v368 = vsel %vm345, %v65, 0
    %370 = vmatprep.subr.mxu0 0.0
    %371 = vmatpush1.msra.mxu0 0.0
    %372 = vmatprep.subr.mxu0 0.0
    %373 = vmatpush1.msra.mxu0 0.0
    %374 = vmatprep.subr.mxu0 0.0
    %375 = vmatpush1.msra.mxu0 0.0
    %376 = vmatprep.subr.mxu0 0.0
    %377 = vmatpush1.msra.mxu0 0.0
    %378 = vmatprep.subr.mxu0 0.0
    %379 = vmatpush1.msra.mxu0 0.0
    %380 = vmatprep.subr.mxu0 0.0
    %381 = vmatpush1.msra.mxu0 0.0
    %382 = vmatprep.subr.mxu0 0.0
    %383 = vmatpush1.msra.mxu0 0.0
    %384 = vmatprep.subr.mxu0 0.0
    %385 = vmatpush1.msra.mxu0 0.0
    %386 = vmatprep.subr.mxu0 0.0
    %387 = vmatpush1.msra.mxu0 0.0
    %388 = vmatprep.subr.mxu0 0.0
    %389 = vmatpush1.msra.mxu0 0.0
    %390 = vmatprep.subr.mxu0 0.0
    %391 = vmatpush1.msra.mxu0 0.0
    %392 = vmatprep.subr.mxu0 0.0
    %393 = vmatpush1.msra.mxu0 0.0
    %394 = vmatprep.subr.mxu0 0.0
    %395 = vmatpush1.msra.mxu0 0.0
    %396 = vmatprep.subr.mxu0 0.0
    %397 = vmatpush1.msra.mxu0 0.0
    %398 = vmatprep.subr.mxu0 0.0
    %399 = vmatpush1.msra.mxu0 %v342
    %400 = vmatprep.subr.mxu0 0.0
    %401 = vmatpush1.msra.mxu0 %v337
    %402 = vmatprep.subr.mxu0 0.0
    %403 = vmatpush2.msra.mxu0 0.0
    %404 = vmatprep.subr.mxu0 0.0
    %405 = vmatpush2.msra.mxu0 0.0
    %406 = vmatprep.subr.mxu0 0.0
    %407 = vmatpush2.msra.mxu0 0.0
    %408 = vmatprep.subr.mxu0 0.0
    %409 = vmatpush2.msra.mxu0 0.0
    %410 = vmatprep.subr.mxu0 0.0
    %411 = vmatpush2.msra.mxu0 0.0
    %412 = vmatprep.subr.mxu0 0.0
    %413 = vmatpush2.msra.mxu0 0.0
    %414 = vmatprep.subr.mxu0 0.0
    %415 = vmatpush2.msra.mxu0 0.0
    %416 = vmatprep.subr.mxu0 0.0
    %417 = vmatpush2.msra.mxu0 0.0
    %418 = vmatprep.subr.mxu0 0.0
    %419 = vmatpush2.msra.mxu0 0.0
    %420 = vmatprep.subr.mxu0 0.0
    %421 = vmatpush2.msra.mxu0 0.0
    %422 = vmatprep.subr.mxu0 0.0
    %423 = vmatpush2.msra.mxu0 0.0
    %424 = vmatprep.subr.mxu0 0.0
    %425 = vmatpush2.msra.mxu0 0.0
    %426 = vmatprep.subr.mxu0 0.0
    %427 = vmatpush2.msra.mxu0 0.0
    %428 = vmatprep.subr.mxu0 0.0
    %429 = vmatpush2.msra.mxu0 0.0
    %430 = vmatprep.subr.mxu0 0.0
    %431 = vmatpush2.msra.mxu0 0.0
    %432 = vmatprep.subr.mxu0 0.0
    %433 = vmatpush2.msra.mxu0 0.0
    %434 = vmatprep.mubr.f32.mxu0 0.0
    %435 = vmatmul.mubr.f32.gmra.mxu0 %v347
    %v436 = vpop.f32.mrf.mxu0
    %v437 = vadd.f32 0.0, %v436
    %v438 = vpop.f32.mrf.mxu0
    %439 = vmatprep.mubr.f32.mxu0 0.0
    %440 = vmatmul.mubr.f32.gmra.mxu0 %v350
    %v441 = vpop.f32.mrf.mxu0
    %v442 = vadd.f32 0.0, %v441
    %v443 = vpop.f32.mrf.mxu0
    %444 = vmatprep.mubr.f32.mxu0 0.0
    %445 = vmatmul.mubr.f32.gmra.mxu0 %v353
    %v446 = vpop.f32.mrf.mxu0
    %v447 = vadd.f32 0.0, %v446
    %v448 = vpop.f32.mrf.mxu0
    %449 = vmatprep.mubr.f32.mxu0 0.0
    %450 = vmatmul.mubr.f32.gmra.mxu0 %v356
    %v451 = vpop.f32.mrf.mxu0
    %v452 = vadd.f32 0.0, %v451
    %v453 = vpop.f32.mrf.mxu0
    %454 = vmatprep.mubr.f32.mxu0 0.0
    %455 = vmatmul.mubr.f32.gmra.mxu0 %v359
    %v456 = vpop.f32.mrf.mxu0
    %v457 = vadd.f32 0.0, %v456
    %v458 = vpop.f32.mrf.mxu0
    %459 = vmatprep.mubr.f32.mxu0 0.0
    %460 = vmatmul.mubr.f32.gmra.mxu0 %v362
    %v461 = vpop.f32.mrf.mxu0
    %v462 = vadd.f32 0.0, %v461
    %v463 = vpop.f32.mrf.mxu0
    %464 = vmatprep.mubr.f32.mxu0 0.0
    %465 = vmatmul.mubr.f32.gmra.mxu0 %v365
    %v466 = vpop.f32.mrf.mxu0
    %v467 = vadd.f32 0.0, %v466
    %v468 = vpop.f32.mrf.mxu0
    %469 = vmatprep.mubr.f32.mxu0 0.0
    %470 = vmatmul.mubr.f32.gmra.mxu0 %v368
    %v471 = vpop.f32.mrf.mxu0
    %v472 = vadd.f32 0.0, %v471
    %v473 = vpop.f32.mrf.mxu0
    %474 = vdwg.mxu0
    %v475 = vmul.f32 %v437, %v42
    %v476 = vmul.f32 %v442, %v43
    %v477 = vmul.f32 %v447, %v44
    %v478 = vmul.f32 %v452, %v45
    %v479 = vmul.f32 %v457, %v46
    %v480 = vmul.f32 %v462, %v47
    %v481 = vmul.f32 %v467, %v48
    %v482 = vmul.f32 %v472, %v49
    %485 = vrot.lane.b32.xlu0 %v337, 96
    %v486 = vpop.permute.xlu0 %485
    %487 = vrot.lane.b32.xlu0 %v342, 96
    %v488 = vpop.permute.xlu0 %487
    %v490 = vsel %vm171, %v475, 0
    %v493 = vsel %vm171, %v476, 0
    %v496 = vsel %vm171, %v477, 0
    %v499 = vsel %vm171, %v478, 0
    %v502 = vsel %vm171, %v479, 0
    %v505 = vsel %vm171, %v480, 0
    %v508 = vsel %vm171, %v481, 0
    %v511 = vsel %vm171, %v482, 0
    %v513 = vsel %vm171, %v486, 0
    %v515 = vsel %vm171, %v488, 0
    %517 = vmatprep.subr.mxu0 0.0
    %518 = vmatpush1.xpose.msra.mxu0 0.0
    %519 = vmatprep.subr.mxu0 0.0
    %520 = vmatpush1.xpose.msra.mxu0 0.0
    %521 = vmatprep.subr.mxu0 0.0
    %522 = vmatpush1.xpose.msra.mxu0 0.0
    %523 = vmatprep.subr.mxu0 0.0
    %524 = vmatpush1.xpose.msra.mxu0 0.0
    %525 = vmatprep.subr.mxu0 0.0
    %526 = vmatpush1.xpose.msra.mxu0 0.0
    %527 = vmatprep.subr.mxu0 0.0
    %528 = vmatpush1.xpose.msra.mxu0 0.0
    %529 = vmatprep.subr.mxu0 0.0
    %530 = vmatpush1.xpose.msra.mxu0 0.0
    %531 = vmatprep.subr.mxu0 0.0
    %532 = vmatpush1.xpose.msra.mxu0 0.0
    %533 = vmatprep.subr.mxu0 0.0
    %534 = vmatpush1.xpose.msra.mxu0 0.0
    %535 = vmatprep.subr.mxu0 0.0
    %536 = vmatpush1.xpose.msra.mxu0 0.0
    %537 = vmatprep.subr.mxu0 0.0
    %538 = vmatpush1.xpose.msra.mxu0 0.0
    %539 = vmatprep.subr.mxu0 0.0
    %540 = vmatpush1.xpose.msra.mxu0 0.0
    %541 = vmatprep.subr.mxu0 0.0
    %542 = vmatpush1.xpose.msra.mxu0 0.0
    %543 = vmatprep.subr.mxu0 0.0
    %544 = vmatpush1.xpose.msra.mxu0 0.0
    %545 = vmatprep.subr.mxu0 0.0
    %546 = vmatpush1.xpose.msra.mxu0 %v515
    %547 = vmatprep.subr.mxu0 0.0
    %548 = vmatpush1.xpose.msra.mxu0 %v513
    %549 = vmatprep.subr.mxu0 0.0
    %550 = vmatpush2.xpose.msra.mxu0 0.0
    %551 = vmatprep.subr.mxu0 0.0
    %552 = vmatpush2.xpose.msra.mxu0 0.0
    %553 = vmatprep.subr.mxu0 0.0
    %554 = vmatpush2.xpose.msra.mxu0 0.0
    %555 = vmatprep.subr.mxu0 0.0
    %556 = vmatpush2.xpose.msra.mxu0 0.0
    %557 = vmatprep.subr.mxu0 0.0
    %558 = vmatpush2.xpose.msra.mxu0 0.0
    %559 = vmatprep.subr.mxu0 0.0
    %560 = vmatpush2.xpose.msra.mxu0 0.0
    %561 = vmatprep.subr.mxu0 0.0
    %562 = vmatpush2.xpose.msra.mxu0 0.0
    %563 = vmatprep.subr.mxu0 0.0
    %564 = vmatpush2.xpose.msra.mxu0 0.0
    %565 = vmatprep.subr.mxu0 0.0
    %566 = vmatpush2.xpose.msra.mxu0 0.0
    %567 = vmatprep.subr.mxu0 0.0
    %568 = vmatpush2.xpose.msra.mxu0 0.0
    %569 = vmatprep.subr.mxu0 0.0
    %570 = vmatpush2.xpose.msra.mxu0 0.0
    %571 = vmatprep.subr.mxu0 0.0
    %572 = vmatpush2.xpose.msra.mxu0 0.0
    %573 = vmatprep.subr.mxu0 0.0
    %574 = vmatpush2.xpose.msra.mxu0 0.0
    %575 = vmatprep.subr.mxu0 0.0
    %576 = vmatpush2.xpose.msra.mxu0 0.0
    %577 = vmatprep.subr.mxu0 0.0
    %578 = vmatpush2.xpose.msra.mxu0 0.0
    %579 = vmatprep.subr.mxu0 0.0
    %580 = vmatpush2.xpose.msra.mxu0 0.0
    %581 = vmatprep.mubr.f32.mxu0 0.0
    %582 = vmatmul.mubr.f32.gmra.mxu0 %v490
    %v583 = vpop.f32.mrf.mxu0
    %v584 = vadd.f32 %v50, %v583
    %v585 = vpop.f32.mrf.mxu0
    %586 = vmatprep.mubr.f32.mxu0 0.0
    %587 = vmatmul.mubr.f32.gmra.mxu0 %v493
    %v588 = vpop.f32.mrf.mxu0
    %v589 = vadd.f32 %v51, %v588
    %v590 = vpop.f32.mrf.mxu0
    %591 = vmatprep.mubr.f32.mxu0 0.0
    %592 = vmatmul.mubr.f32.gmra.mxu0 %v496
    %v593 = vpop.f32.mrf.mxu0
    %v594 = vadd.f32 %v52, %v593
    %v595 = vpop.f32.mrf.mxu0
    %596 = vmatprep.mubr.f32.mxu0 0.0
    %597 = vmatmul.mubr.f32.gmra.mxu0 %v499
    %v598 = vpop.f32.mrf.mxu0
    %v599 = vadd.f32 %v53, %v598
    %v600 = vpop.f32.mrf.mxu0
    %601 = vmatprep.mubr.f32.mxu0 0.0
    %602 = vmatmul.mubr.f32.gmra.mxu0 %v502
    %v603 = vpop.f32.mrf.mxu0
    %v604 = vadd.f32 %v54, %v603
    %v605 = vpop.f32.mrf.mxu0
    %606 = vmatprep.mubr.f32.mxu0 0.0
    %607 = vmatmul.mubr.f32.gmra.mxu0 %v505
    %v608 = vpop.f32.mrf.mxu0
    %v609 = vadd.f32 %v55, %v608
    %v610 = vpop.f32.mrf.mxu0
    %611 = vmatprep.mubr.f32.mxu0 0.0
    %612 = vmatmul.mubr.f32.gmra.mxu0 %v508
    %v613 = vpop.f32.mrf.mxu0
    %v614 = vadd.f32 %v56, %v613
    %v615 = vpop.f32.mrf.mxu0
    %616 = vmatprep.mubr.f32.mxu0 0.0
    %617 = vmatmul.mubr.f32.gmra.mxu0 %v511
    %v618 = vpop.f32.mrf.mxu0
    %v619 = vadd.f32 %v57, %v618
    %v620 = vpop.f32.mrf.mxu0
    %621 = vdwg.mxu0
    %v622 = vsel %vm345, %v584, -inf
    %623 = vmax.xlane.f32.xlu0 %v622
    %v624 = vpop.xlane.xlu0 %623
    %v625 = vsel %vm345, %v589, -inf
    %626 = vmax.xlane.f32.xlu0 %v625
    %v627 = vpop.xlane.xlu0 %626
    %v628 = vsel %vm345, %v594, -inf
    %629 = vmax.xlane.f32.xlu0 %v628
    %v630 = vpop.xlane.xlu0 %629
    %v631 = vsel %vm345, %v599, -inf
    %632 = vmax.xlane.f32.xlu0 %v631
    %v633 = vpop.xlane.xlu0 %632
    %v634 = vsel %vm345, %v604, -inf
    %635 = vmax.xlane.f32.xlu0 %v634
    %v636 = vpop.xlane.xlu0 %635
    %v637 = vsel %vm345, %v609, -inf
    %638 = vmax.xlane.f32.xlu0 %v637
    %v639 = vpop.xlane.xlu0 %638
    %v640 = vsel %vm345, %v614, -inf
    %641 = vmax.xlane.f32.xlu0 %v640
    %v642 = vpop.xlane.xlu0 %641
    %v643 = vsel %vm345, %v619, -inf
    %644 = vmax.xlane.f32.xlu0 %v643
    %v645 = vpop.xlane.xlu0 %644
    %v646 = vsub.f32 %v584, %v624
    %v647 = vsub.f32 %v589, %v627
    %v648 = vsub.f32 %v594, %v630
    %v649 = vsub.f32 %v599, %v633
    %v650 = vsub.f32 %v604, %v636
    %v651 = vsub.f32 %v609, %v639
    %v652 = vsub.f32 %v614, %v642
    %v653 = vsub.f32 %v619, %v645
    %v654 = vmul.f32 %v646, 1.442695
    %v655 = vpow.pop %v654
    %v656 = vmul.f32 %v647, 1.442695
    %v657 = vpow.pop %v656
    %v658 = vmul.f32 %v648, 1.442695
    %v659 = vpow.pop %v658
    %v660 = vmul.f32 %v649, 1.442695
    %v661 = vpow.pop %v660
    %v662 = vmul.f32 %v650, 1.442695
    %v663 = vpow.pop %v662
    %v664 = vmul.f32 %v651, 1.442695
    %v665 = vpow.pop %v664
    %v666 = vmul.f32 %v652, 1.442695
    %v667 = vpow.pop %v666
    %v668 = vmul.f32 %v653, 1.442695
    %v669 = vpow.pop %v668
    %v670 = vsel %vm345, %v655, 0.0
    %671 = vadd.xlane.f32.xlu0 %v670
    %v672 = vpop.xlane.xlu0 %671
    %v673 = vsel %vm345, %v657, 0.0
    %674 = vadd.xlane.f32.xlu0 %v673
    %v675 = vpop.xlane.xlu0 %674
    %v676 = vsel %vm345, %v659, 0.0
    %677 = vadd.xlane.f32.xlu0 %v676
    %v678 = vpop.xlane.xlu0 %677
    %v679 = vsel %vm345, %v661, 0.0
    %680 = vadd.xlane.f32.xlu0 %v679
    %v681 = vpop.xlane.xlu0 %680
    %v682 = vsel %vm345, %v663, 0.0
    %683 = vadd.xlane.f32.xlu0 %v682
    %v684 = vpop.xlane.xlu0 %683
    %v685 = vsel %vm345, %v665, 0.0
    %686 = vadd.xlane.f32.xlu0 %v685
    %v687 = vpop.xlane.xlu0 %686
    %v688 = vsel %vm345, %v667, 0.0
    %689 = vadd.xlane.f32.xlu0 %v688
    %v690 = vpop.xlane.xlu0 %689
    %v691 = vsel %vm345, %v669, 0.0
    %692 = vadd.xlane.f32.xlu0 %v691
    %v693 = vpop.xlane.xlu0 %692
    %v694 = vrcp.pop %v672
    %v695 = vrcp.pop %v675
    %v696 = vrcp.pop %v678
    %v697 = vrcp.pop %v681
    %v698 = vrcp.pop %v684
    %v699 = vrcp.pop %v687
    %v700 = vrcp.pop %v690
    %v701 = vrcp.pop %v693
    %v702 = vmul.f32 %v655, %v694
    %v703 = vmul.f32 %v657, %v695
    %v704 = vmul.f32 %v659, %v696
    %v705 = vmul.f32 %v661, %v697
    %v706 = vmul.f32 %v663, %v698
    %v707 = vmul.f32 %v665, %v699
    %v708 = vmul.f32 %v667, %v700
    %v709 = vmul.f32 %v669, %v701
    %710 = vrot.lane.b32.xlu0 %v337, 64
    %v711 = vpop.permute.xlu0 %710
    %712 = vrot.lane.b32.xlu0 %v342, 64
    %v713 = vpop.permute.xlu0 %712
    %v717 = vsel %vm345, %v702, 0
    %v720 = vsel %vm345, %v703, 0
    %v723 = vsel %vm345, %v704, 0
    %v726 = vsel %vm345, %v705, 0
    %v729 = vsel %vm345, %v706, 0
    %v732 = vsel %vm345, %v707, 0
    %v735 = vsel %vm345, %v708, 0
    %v738 = vsel %vm345, %v709, 0
    %740 = vmatprep.subr.mxu0 0.0
    %741 = vmatpush1.msra.mxu0 0.0
    %742 = vmatprep.subr.mxu0 0.0
    %743 = vmatpush1.msra.mxu0 0.0
    %744 = vmatprep.subr.mxu0 0.0
    %745 = vmatpush1.msra.mxu0 0.0
    %746 = vmatprep.subr.mxu0 0.0
    %747 = vmatpush1.msra.mxu0 0.0
    %748 = vmatprep.subr.mxu0 0.0
    %749 = vmatpush1.msra.mxu0 0.0
    %750 = vmatprep.subr.mxu0 0.0
    %751 = vmatpush1.msra.mxu0 0.0
    %752 = vmatprep.subr.mxu0 0.0
    %753 = vmatpush1.msra.mxu0 0.0
    %754 = vmatprep.subr.mxu0 0.0
    %755 = vmatpush1.msra.mxu0 0.0
    %756 = vmatprep.subr.mxu0 0.0
    %757 = vmatpush1.msra.mxu0 0.0
    %758 = vmatprep.subr.mxu0 0.0
    %759 = vmatpush1.msra.mxu0 0.0
    %760 = vmatprep.subr.mxu0 0.0
    %761 = vmatpush1.msra.mxu0 0.0
    %762 = vmatprep.subr.mxu0 0.0
    %763 = vmatpush1.msra.mxu0 0.0
    %764 = vmatprep.subr.mxu0 0.0
    %765 = vmatpush1.msra.mxu0 0.0
    %766 = vmatprep.subr.mxu0 0.0
    %767 = vmatpush1.msra.mxu0 0.0
    %768 = vmatprep.subr.mxu0 0.0
    %769 = vmatpush1.msra.mxu0 %v713
    %770 = vmatprep.subr.mxu0 0.0
    %771 = vmatpush1.msra.mxu0 %v711
    %772 = vmatprep.subr.mxu0 0.0
    %773 = vmatpush2.msra.mxu0 0.0
    %774 = vmatprep.subr.mxu0 0.0
    %775 = vmatpush2.msra.mxu0 0.0
    %776 = vmatprep.subr.mxu0 0.0
    %777 = vmatpush2.msra.mxu0 0.0
    %778 = vmatprep.subr.mxu0 0.0
    %779 = vmatpush2.msra.mxu0 0.0
    %780 = vmatprep.subr.mxu0 0.0
    %781 = vmatpush2.msra.mxu0 0.0
    %782 = vmatprep.subr.mxu0 0.0
    %783 = vmatpush2.msra.mxu0 0.0
    %784 = vmatprep.subr.mxu0 0.0
    %785 = vmatpush2.msra.mxu0 0.0
    %786 = vmatprep.subr.mxu0 0.0
    %787 = vmatpush2.msra.mxu0 0.0
    %788 = vmatprep.subr.mxu0 0.0
    %789 = vmatpush2.msra.mxu0 0.0
    %790 = vmatprep.subr.mxu0 0.0
    %791 = vmatpush2.msra.mxu0 0.0
    %792 = vmatprep.subr.mxu0 0.0
    %793 = vmatpush2.msra.mxu0 0.0
    %794 = vmatprep.subr.mxu0 0.0
    %795 = vmatpush2.msra.mxu0 0.0
    %796 = vmatprep.subr.mxu0 0.0
    %797 = vmatpush2.msra.mxu0 0.0
    %798 = vmatprep.subr.mxu0 0.0
    %799 = vmatpush2.msra.mxu0 0.0
    %800 = vmatprep.subr.mxu0 0.0
    %801 = vmatpush2.msra.mxu0 0.0
    %802 = vmatprep.subr.mxu0 0.0
    %803 = vmatpush2.msra.mxu0 0.0
    %804 = vmatprep.mubr.f32.mxu0 0.0
    %805 = vmatmul.mubr.f32.gmra.mxu0 %v717
    %v806 = vpop.f32.mrf.mxu0
    %v807 = vadd.f32 0.0, %v806
    %v808 = vpop.f32.mrf.mxu0
    %809 = vmatprep.mubr.f32.mxu0 0.0
    %810 = vmatmul.mubr.f32.gmra.mxu0 %v720
    %v811 = vpop.f32.mrf.mxu0
    %v812 = vadd.f32 0.0, %v811
    %v813 = vpop.f32.mrf.mxu0
    %814 = vmatprep.mubr.f32.mxu0 0.0
    %815 = vmatmul.mubr.f32.gmra.mxu0 %v723
    %v816 = vpop.f32.mrf.mxu0
    %v817 = vadd.f32 0.0, %v816
    %v818 = vpop.f32.mrf.mxu0
    %819 = vmatprep.mubr.f32.mxu0 0.0
    %820 = vmatmul.mubr.f32.gmra.mxu0 %v726
    %v821 = vpop.f32.mrf.mxu0
    %v822 = vadd.f32 0.0, %v821
    %v823 = vpop.f32.mrf.mxu0
    %824 = vmatprep.mubr.f32.mxu0 0.0
    %825 = vmatmul.mubr.f32.gmra.mxu0 %v729
    %v826 = vpop.f32.mrf.mxu0
    %v827 = vadd.f32 0.0, %v826
    %v828 = vpop.f32.mrf.mxu0
    %829 = vmatprep.mubr.f32.mxu0 0.0
    %830 = vmatmul.mubr.f32.gmra.mxu0 %v732
    %v831 = vpop.f32.mrf.mxu0
    %v832 = vadd.f32 0.0, %v831
    %v833 = vpop.f32.mrf.mxu0
    %834 = vmatprep.mubr.f32.mxu0 0.0
    %835 = vmatmul.mubr.f32.gmra.mxu0 %v735
    %v836 = vpop.f32.mrf.mxu0
    %v837 = vadd.f32 0.0, %v836
    %v838 = vpop.f32.mrf.mxu0
    %839 = vmatprep.mubr.f32.mxu0 0.0
    %840 = vmatmul.mubr.f32.gmra.mxu0 %v738
    %v841 = vpop.f32.mrf.mxu0
    %v842 = vadd.f32 0.0, %v841
    %v843 = vpop.f32.mrf.mxu0
    %844 = vdwg.mxu0
    %v845 = vmul.f32 %v807, %v42
    %v846 = vmul.f32 %v812, %v43
    %v847 = vmul.f32 %v817, %v44
    %v848 = vmul.f32 %v822, %v45
    %v849 = vmul.f32 %v827, %v46
    %v850 = vmul.f32 %v832, %v47
    %v851 = vmul.f32 %v837, %v48
    %v852 = vmul.f32 %v842, %v49
    %v853 = vadd.f32 %v845, %v847
    %v854 = vadd.f32 %v846, %v848
    %v855 = vadd.f32 %v853, %v849
    %v856 = vadd.f32 %v854, %v850
    %v857 = vadd.f32 %v855, %v851
    %v858 = vadd.f32 %v856, %v852
    %v859 = vld [vmem:[#allocation2 + $0x48] sm:$0xff]
    %v860 = vld [vmem:[#allocation2 + $0x50] sm:$0xff]
    %v861 = vld [vmem:[#allocation2 + $0x58] sm:$0xff]
    %v862 = vld [vmem:[#allocation2 + $0x60] sm:$0xff]
    %v863 = vld [vmem:[#allocation4 + $0x3] sm:$0x1]
    %v864 = vlaneseq
    %v865 = vshrl.u32 %v864, 7
    %v866 = vsub.s32 0, %v865
    %v867 = vrot.slane %v863, %v866
    %v869 = vsel %vm171, %v857, 0
    %v872 = vsel %vm171, %v858, 0
    %874 = vmatprep.subr.mxu0 0.0
    %875 = vmatpush1.msra.mxu0 0.0
    %876 = vmatprep.subr.mxu0 0.0
    %877 = vmatpush1.msra.mxu0 0.0
    %878 = vmatprep.subr.mxu0 0.0
    %879 = vmatpush1.msra.mxu0 0.0
    %880 = vmatprep.subr.mxu0 0.0
    %881 = vmatpush1.msra.mxu0 0.0
    %882 = vmatprep.subr.mxu0 0.0
    %883 = vmatpush1.msra.mxu0 0.0
    %884 = vmatprep.subr.mxu0 0.0
    %885 = vmatpush1.msra.mxu0 0.0
    %886 = vmatprep.subr.mxu0 0.0
    %887 = vmatpush1.msra.mxu0 0.0
    %888 = vmatprep.subr.mxu0 0.0
    %889 = vmatpush1.msra.mxu0 0.0
    %890 = vmatprep.subr.mxu0 0.0
    %891 = vmatpush1.msra.mxu0 0.0
    %892 = vmatprep.subr.mxu0 0.0
    %893 = vmatpush1.msra.mxu0 0.0
    %894 = vmatprep.subr.mxu0 0.0
    %895 = vmatpush1.msra.mxu0 0.0
    %896 = vmatprep.subr.mxu0 0.0
    %897 = vmatpush1.msra.mxu0 0.0
    %898 = vmatprep.subr.mxu0 0.0
    %899 = vmatpush1.msra.mxu0 %v862
    %900 = vmatprep.subr.mxu0 0.0
    %901 = vmatpush1.msra.mxu0 %v861
    %902 = vmatprep.subr.mxu0 0.0
    %903 = vmatpush1.msra.mxu0 %v860
    %904 = vmatprep.subr.mxu0 0.0
    %905 = vmatpush1.msra.mxu0 %v859
    %906 = vmatprep.subr.mxu0 0.0
    %907 = vmatpush2.msra.mxu0 0.0
    %908 = vmatprep.subr.mxu0 0.0
    %909 = vmatpush2.msra.mxu0 0.0
    %910 = vmatprep.subr.mxu0 0.0
    %911 = vmatpush2.msra.mxu0 0.0
    %912 = vmatprep.subr.mxu0 0.0
    %913 = vmatpush2.msra.mxu0 0.0
    %914 = vmatprep.subr.mxu0 0.0
    %915 = vmatpush2.msra.mxu0 0.0
    %916 = vmatprep.subr.mxu0 0.0
    %917 = vmatpush2.msra.mxu0 0.0
    %918 = vmatprep.subr.mxu0 0.0
    %919 = vmatpush2.msra.mxu0 0.0
    %920 = vmatprep.subr.mxu0 0.0
    %921 = vmatpush2.msra.mxu0 0.0
    %922 = vmatprep.subr.mxu0 0.0
    %923 = vmatpush2.msra.mxu0 0.0
    %924 = vmatprep.subr.mxu0 0.0
    %925 = vmatpush2.msra.mxu0 0.0
    %926 = vmatprep.subr.mxu0 0.0
    %927 = vmatpush2.msra.mxu0 0.0
    %928 = vmatprep.subr.mxu0 0.0
    %929 = vmatpush2.msra.mxu0 0.0
    %930 = vmatprep.subr.mxu0 0.0
    %931 = vmatpush2.msra.mxu0 0.0
    %932 = vmatprep.subr.mxu0 0.0
    %933 = vmatpush2.msra.mxu0 0.0
    %934 = vmatprep.subr.mxu0 0.0
    %935 = vmatpush2.msra.mxu0 0.0
    %936 = vmatprep.subr.mxu0 0.0
    %937 = vmatpush2.msra.mxu0 0.0
    %938 = vmatprep.mubr.f32.mxu0 0.0
    %939 = vmatmul.mubr.f32.gmra.mxu0 %v869
    %v940 = vpop.f32.mrf.mxu0
    %v941 = vadd.f32 %v867, %v940
    %v942 = vpop.f32.mrf.mxu0
    %943 = vmatprep.mubr.f32.mxu0 0.0
    %944 = vmatmul.mubr.f32.gmra.mxu0 %v872
    %v945 = vpop.f32.mrf.mxu0
    %v946 = vadd.f32 %v867, %v945
    %v947 = vpop.f32.mrf.mxu0
    %948 = vdwg.mxu0
    %v949 = vadd.f32 %v253, %v941
    %v950 = vadd.f32 %v254, %v946
    %v951 = vsel %vm171, %v949, 0.0
    %952 = vadd.xlane.f32.xlu0 %v951
    %v953 = vpop.xlane.xlu0 %952
    %v954 = vsel %vm171, %v950, 0.0
    %955 = vadd.xlane.f32.xlu0 %v954
    %v956 = vpop.xlane.xlu0 %955
    %v957 = vrcp.pop 32.0
    %v958 = vmul.f32 %v953, %v957
    %v959 = vmul.f32 %v956, %v957
    %v960 = vsub.f32 %v949, %v958
    %v961 = vsub.f32 %v950, %v959
    %v962 = vmul.f32 %v960, %v960
    %v963 = vmul.f32 %v961, %v961
    %v964 = vsel %vm171, %v962, 0.0
    %965 = vadd.xlane.f32.xlu0 %v964
    %v966 = vpop.xlane.xlu0 %965
    %v967 = vsel %vm171, %v963, 0.0
    %968 = vadd.xlane.f32.xlu0 %v967
    %v969 = vpop.xlane.xlu0 %968
    %v970 = vmul.f32 %v966, %v957
    %v971 = vmul.f32 %v969, %v957
    %v972 = vadd.f32 %v970, 1e-05
    %v973 = vadd.f32 %v971, 1e-05
    %v974 = vrsqrt.pop %v972
    %v975 = vrsqrt.pop %v973
    %v976 = vmul.f32 %v960, %v974
    %v977 = vmul.f32 %v961, %v975
    %v978 = vld [vmem:[#allocation4 + $0x4] sm:$0x1]
    %v979 = vlaneseq
    %v980 = vshrl.u32 %v979, 7
    %v981 = vsub.s32 0, %v980
    %v982 = vrot.slane %v978, %v981
    %v983 = vmul.f32 %v976, %v982
    %v984 = vmul.f32 %v977, %v982
    %v985 = vld [vmem:[#allocation4 + $0x5] sm:$0x1]
    %v986 = vlaneseq
    %v987 = vshrl.u32 %v986, 7
    %v988 = vsub.s32 0, %v987
    %v989 = vrot.slane %v985, %v988
    %v990 = vadd.f32 %v983, %v989
    %v991 = vadd.f32 %v984, %v989
    %v992 = vld [vmem:[#allocation2 + $0x68] sm:$0xff]
    %v993 = vld [vmem:[#allocation2 + $0x70] sm:$0xff]
    %v994 = vld [vmem:[#allocation2 + $0x78] sm:$0xff]
    %v995 = vld [vmem:[#allocation2 + $0x80] sm:$0xff]
    %v996 = vld [vmem:[#allocation4 + $0x8] sm:$0x1]
    %v997 = vlaneseq
    %v998 = vshrl.u32 %v997, 7
    %v999 = vsub.s32 0, %v998
    %v1000 = vrot.slane %v996, %v999
    %v1002 = vsel %vm171, %v990, 0
    %v1005 = vsel %vm171, %v991, 0
    %1007 = vmatprep.subr.mxu0 0.0
    %1008 = vmatpush1.msra.mxu0 0.0
    %1009 = vmatprep.subr.mxu0 0.0
    %1010 = vmatpush1.msra.mxu0 0.0
    %1011 = vmatprep.subr.mxu0 0.0
    %1012 = vmatpush1.msra.mxu0 0.0
    %1013 = vmatprep.subr.mxu0 0.0
    %1014 = vmatpush1.msra.mxu0 0.0
    %1015 = vmatprep.subr.mxu0 0.0
    %1016 = vmatpush1.msra.mxu0 0.0
    %1017 = vmatprep.subr.mxu0 0.0
    %1018 = vmatpush1.msra.mxu0 0.0
    %1019 = vmatprep.subr.mxu0 0.0
    %1020 = vmatpush1.msra.mxu0 0.0
    %1021 = vmatprep.subr.mxu0 0.0
    %1022 = vmatpush1.msra.mxu0 0.0
    %1023 = vmatprep.subr.mxu0 0.0
    %1024 = vmatpush1.msra.mxu0 0.0
    %1025 = vmatprep.subr.mxu0 0.0
    %1026 = vmatpush1.msra.mxu0 0.0
    %1027 = vmatprep.subr.mxu0 0.0
    %1028 = vmatpush1.msra.mxu0 0.0
    %1029 = vmatprep.subr.mxu0 0.0
    %1030 = vmatpush1.msra.mxu0 0.0
    %1031 = vmatprep.subr.mxu0 0.0
    %1032 = vmatpush1.msra.mxu0 %v995
    %1033 = vmatprep.subr.mxu0 0.0
    %1034 = vmatpush1.msra.mxu0 %v994
    %1035 = vmatprep.subr.mxu0 0.0
    %1036 = vmatpush1.msra.mxu0 %v993
    %1037 = vmatprep.subr.mxu0 0.0
    %1038 = vmatpush1.msra.mxu0 %v992
    %1039 = vmatprep.subr.mxu0 0.0
    %1040 = vmatpush2.msra.mxu0 0.0
    %1041 = vmatprep.subr.mxu0 0.0
    %1042 = vmatpush2.msra.mxu0 0.0
    %1043 = vmatprep.subr.mxu0 0.0
    %1044 = vmatpush2.msra.mxu0 0.0
    %1045 = vmatprep.subr.mxu0 0.0
    %1046 = vmatpush2.msra.mxu0 0.0
    %1047 = vmatprep.subr.mxu0 0.0
    %1048 = vmatpush2.msra.mxu0 0.0
    %1049 = vmatprep.subr.mxu0 0.0
    %1050 = vmatpush2.msra.mxu0 0.0
    %1051 = vmatprep.subr.mxu0 0.0
    %1052 = vmatpush2.msra.mxu0 0.0
    %1053 = vmatprep.subr.mxu0 0.0
    %1054 = vmatpush2.msra.mxu0 0.0
    %1055 = vmatprep.subr.mxu0 0.0
    %1056 = vmatpush2.msra.mxu0 0.0
    %1057 = vmatprep.subr.mxu0 0.0
    %1058 = vmatpush2.msra.mxu0 0.0
    %1059 = vmatprep.subr.mxu0 0.0
    %1060 = vmatpush2.msra.mxu0 0.0
    %1061 = vmatprep.subr.mxu0 0.0
    %1062 = vmatpush2.msra.mxu0 0.0
    %1063 = vmatprep.subr.mxu0 0.0
    %1064 = vmatpush2.msra.mxu0 0.0
    %1065 = vmatprep.subr.mxu0 0.0
    %1066 = vmatpush2.msra.mxu0 0.0
    %1067 = vmatprep.subr.mxu0 0.0
    %1068 = vmatpush2.msra.mxu0 0.0
    %1069 = vmatprep.subr.mxu0 0.0
    %1070 = vmatpush2.msra.mxu0 0.0
    %1071 = vmatprep.mubr.f32.mxu0 0.0
    %1072 = vmatmul.mubr.f32.gmra.mxu0 %v1002
    %v1073 = vpop.f32.mrf.mxu0
    %v1074 = vadd.f32 %v1000, %v1073
    %v1075 = vpop.f32.mrf.mxu0
    %1076 = vmatprep.mubr.f32.mxu0 0.0
    %1077 = vmatmul.mubr.f32.gmra.mxu0 %v1005
    %v1078 = vpop.f32.mrf.mxu0
    %v1079 = vadd.f32 %v1000, %v1078
    %v1080 = vpop.f32.mrf.mxu0
    %1081 = vdwg.mxu0
    %v1082 = vmax.f32 %v1074, 0.0
    %v1083 = vmax.f32 %v1079, 0.0
    %v1084 = vld [vmem:[#allocation2 + $0x88] sm:$0xff]
    %v1085 = vld [vmem:[#allocation2 + $0x90] sm:$0xff]
    %v1086 = vld [vmem:[#allocation2 + $0x98] sm:$0xff]
    %v1087 = vld [vmem:[#allocation2 + $0xa0] sm:$0xff]
    %v1088 = vld [vmem:[#allocation2 + $0xa8] sm:$0xff]
    %v1089 = vld [vmem:[#allocation2 + $0xb0] sm:$0xff]
    %v1090 = vld [vmem:[#allocation2 + $0xb8] sm:$0xff]
    %v1091 = vld [vmem:[#allocation2 + $0xc0] sm:$0xff]
    %v1092 = vld [vmem:[#allocation4 + $0x9] sm:$0x1]
    %v1093 = vlaneseq
    %v1094 = vshrl.u32 %v1093, 7
    %v1095 = vsub.s32 0, %v1094
    %v1096 = vrot.slane %v1092, %v1095
    %vm1097 = vcmask 523264
    %v1099 = vsel %vm1097, %v1082, 0
    %v1102 = vsel %vm1097, %v1083, 0
    %1104 = vmatprep.subr.mxu0 0.0
    %1105 = vmatpush1.msra.mxu0 0.0
    %1106 = vmatprep.subr.mxu0 0.0
    %1107 = vmatpush1.msra.mxu0 0.0
    %1108 = vmatprep.subr.mxu0 0.0
    %1109 = vmatpush1.msra.mxu0 0.0
    %1110 = vmatprep.subr.mxu0 0.0
    %1111 = vmatpush1.msra.mxu0 0.0
    %1112 = vmatprep.subr.mxu0 0.0
    %1113 = vmatpush1.msra.mxu0 0.0
    %1114 = vmatprep.subr.mxu0 0.0
    %1115 = vmatpush1.msra.mxu0 0.0
    %1116 = vmatprep.subr.mxu0 0.0
    %1117 = vmatpush1.msra.mxu0 0.0
    %1118 = vmatprep.subr.mxu0 0.0
    %1119 = vmatpush1.msra.mxu0 0.0
    %1120 = vmatprep.subr.mxu0 0.0
    %1121 = vmatpush1.msra.mxu0 %v1091
    %1122 = vmatprep.subr.mxu0 0.0
    %1123 = vmatpush1.msra.mxu0 %v1090
    %1124 = vmatprep.subr.mxu0 0.0
    %1125 = vmatpush1.msra.mxu0 %v1089
    %1126 = vmatprep.subr.mxu0 0.0
    %1127 = vmatpush1.msra.mxu0 %v1088
    %1128 = vmatprep.subr.mxu0 0.0
    %1129 = vmatpush1.msra.mxu0 %v1087
    %1130 = vmatprep.subr.mxu0 0.0
    %1131 = vmatpush1.msra.mxu0 %v1086
    %1132 = vmatprep.subr.mxu0 0.0
    %1133 = vmatpush1.msra.mxu0 %v1085
    %1134 = vmatprep.subr.mxu0 0.0
    %1135 = vmatpush1.msra.mxu0 %v1084
    %1136 = vmatprep.subr.mxu0 0.0
    %1137 = vmatpush2.msra.mxu0 0.0
    %1138 = vmatprep.subr.mxu0 0.0
    %1139 = vmatpush2.msra.mxu0 0.0
    %1140 = vmatprep.subr.mxu0 0.0
    %1141 = vmatpush2.msra.mxu0 0.0
    %1142 = vmatprep.subr.mxu0 0.0
    %1143 = vmatpush2.msra.mxu0 0.0
    %1144 = vmatprep.subr.mxu0 0.0
    %1145 = vmatpush2.msra.mxu0 0.0
    %1146 = vmatprep.subr.mxu0 0.0
    %1147 = vmatpush2.msra.mxu0 0.0
    %1148 = vmatprep.subr.mxu0 0.0
    %1149 = vmatpush2.msra.mxu0 0.0
    %1150 = vmatprep.subr.mxu0 0.0
    %1151 = vmatpush2.msra.mxu0 0.0
    %1152 = vmatprep.subr.mxu0 0.0
    %1153 = vmatpush2.msra.mxu0 0.0
    %1154 = vmatprep.subr.mxu0 0.0
    %1155 = vmatpush2.msra.mxu0 0.0
    %1156 = vmatprep.subr.mxu0 0.0
    %1157 = vmatpush2.msra.mxu0 0.0
    %1158 = vmatprep.subr.mxu0 0.0
    %1159 = vmatpush2.msra.mxu0 0.0
    %1160 = vmatprep.subr.mxu0 0.0
    %1161 = vmatpush2.msra.mxu0 0.0
    %1162 = vmatprep.subr.mxu0 0.0
    %1163 = vmatpush2.msra.mxu0 0.0
    %1164 = vmatprep.subr.mxu0 0.0
    %1165 = vmatpush2.msra.mxu0 0.0
    %1166 = vmatprep.subr.mxu0 0.0
    %1167 = vmatpush2.msra.mxu0 0.0
    %1168 = vmatprep.mubr.f32.mxu0 0.0
    %1169 = vmatmul.mubr.f32.gmra.mxu0 %v1099
    %v1170 = vpop.f32.mrf.mxu0
    %v1171 = vadd.f32 %v1096, %v1170
    %v1172 = vpop.f32.mrf.mxu0
    %1173 = vmatprep.mubr.f32.mxu0 0.0
    %1174 = vmatmul.mubr.f32.gmra.mxu0 %v1102
    %v1175 = vpop.f32.mrf.mxu0
    %v1176 = vadd.f32 %v1096, %v1175
    %v1177 = vpop.f32.mrf.mxu0
    %1178 = vdwg.mxu0
    %v1179 = vadd.f32 %v990, %v1171
    %v1180 = vadd.f32 %v991, %v1176
    %v1181 = vsel %vm171, %v1179, 0.0
    %1182 = vadd.xlane.f32.xlu0 %v1181
    %v1183 = vpop.xlane.xlu0 %1182
    %v1184 = vsel %vm171, %v1180, 0.0
    %1185 = vadd.xlane.f32.xlu0 %v1184
    %v1186 = vpop.xlane.xlu0 %1185
    %v1187 = vmul.f32 %v1183, %v957
    %v1188 = vmul.f32 %v1186, %v957
    %v1189 = vsub.f32 %v1179, %v1187
    %v1190 = vsub.f32 %v1180, %v1188
    %v1191 = vmul.f32 %v1189, %v1189
    %v1192 = vmul.f32 %v1190, %v1190
    %v1193 = vsel %vm171, %v1191, 0.0
    %1194 = vadd.xlane.f32.xlu0 %v1193
    %v1195 = vpop.xlane.xlu0 %1194
    %v1196 = vsel %vm171, %v1192, 0.0
    %1197 = vadd.xlane.f32.xlu0 %v1196
    %v1198 = vpop.xlane.xlu0 %1197
    %v1199 = vmul.f32 %v1195, %v957
    %v1200 = vmul.f32 %v1198, %v957
    %v1201 = vadd.f32 %v1199, 1e-05
    %v1202 = vadd.f32 %v1200, 1e-05
    %v1203 = vrsqrt.pop %v1201
    %v1204 = vrsqrt.pop %v1202
    %v1205 = vmul.f32 %v1189, %v1203
    %v1206 = vmul.f32 %v1190, %v1204
    %v1207 = vld [vmem:[#allocation4 + $0x6] sm:$0x1]
    %v1208 = vlaneseq
    %v1209 = vshrl.u32 %v1208, 7
    %v1210 = vsub.s32 0, %v1209
    %v1211 = vrot.slane %v1207, %v1210
    %v1212 = vmul.f32 %v1205, %v1211
    %v1213 = vmul.f32 %v1206, %v1211
    %v1214 = vld [vmem:[#allocation4 + $0x7] sm:$0x1]
    %v1215 = vlaneseq
    %v1216 = vshrl.u32 %v1215, 7
    %v1217 = vsub.s32 0, %v1216
    %v1218 = vrot.slane %v1214, %v1217
    %v1219 = vadd.f32 %v1212, %v1218
    %v1220 = vadd.f32 %v1213, %v1218
    %v1221 = vld [vmem:[#allocation2 + $0xc8] sm:$0xff]
    %v1222 = vld [vmem:[#allocation2 + $0xd0] sm:$0xff]
    %v1223 = vld [vmem:[#allocation2 + $0xd8] sm:$0xff]
    %v1224 = vld [vmem:[#allocation2 + $0xe0] sm:$0xff]
    %v1225 = vld [vmem:[#allocation4 + $0xa] sm:$0x1]
    %v1226 = vlaneseq
    %v1227 = vshrl.u32 %v1226, 7
    %v1228 = vsub.s32 0, %v1227
    %v1229 = vrot.slane %v1225, %v1228
    %v1231 = vsel %vm171, %v1219, 0
    %v1234 = vsel %vm171, %v1220, 0
    %1236 = vmatprep.subr.mxu0 0.0
    %1237 = vmatpush1.msra.mxu0 0.0
    %1238 = vmatprep.subr.mxu0 0.0
    %1239 = vmatpush1.msra.mxu0 0.0
    %1240 = vmatprep.subr.mxu0 0.0
    %1241 = vmatpush1.msra.mxu0 0.0
    %1242 = vmatprep.subr.mxu0 0.0
    %1243 = vmatpush1.msra.mxu0 0.0
    %1244 = vmatprep.subr.mxu0 0.0
    %1245 = vmatpush1.msra.mxu0 0.0
    %1246 = vmatprep.subr.mxu0 0.0
    %1247 = vmatpush1.msra.mxu0 0.0
    %1248 = vmatprep.subr.mxu0 0.0
    %1249 = vmatpush1.msra.mxu0 0.0
    %1250 = vmatprep.subr.mxu0 0.0
    %1251 = vmatpush1.msra.mxu0 0.0
    %1252 = vmatprep.subr.mxu0 0.0
    %1253 = vmatpush1.msra.mxu0 0.0
    %1254 = vmatprep.subr.mxu0 0.0
    %1255 = vmatpush1.msra.mxu0 0.0
    %1256 = vmatprep.subr.mxu0 0.0
    %1257 = vmatpush1.msra.mxu0 0.0
    %1258 = vmatprep.subr.mxu0 0.0
    %1259 = vmatpush1.msra.mxu0 0.0
    %1260 = vmatprep.subr.mxu0 0.0
    %1261 = vmatpush1.msra.mxu0 %v1224
    %1262 = vmatprep.subr.mxu0 0.0
    %1263 = vmatpush1.msra.mxu0 %v1223
    %1264 = vmatprep.subr.mxu0 0.0
    %1265 = vmatpush1.msra.mxu0 %v1222
    %1266 = vmatprep.subr.mxu0 0.0
    %1267 = vmatpush1.msra.mxu0 %v1221
    %1268 = vmatprep.subr.mxu0 0.0
    %1269 = vmatpush2.msra.mxu0 0.0
    %1270 = vmatprep.subr.mxu0 0.0
    %1271 = vmatpush2.msra.mxu0 0.0
    %1272 = vmatprep.subr.mxu0 0.0
    %1273 = vmatpush2.msra.mxu0 0.0
    %1274 = vmatprep.subr.mxu0 0.0
    %1275 = vmatpush2.msra.mxu0 0.0
    %1276 = vmatprep.subr.mxu0 0.0
    %1277 = vmatpush2.msra.mxu0 0.0
    %1278 = vmatprep.subr.mxu0 0.0
    %1279 = vmatpush2.msra.mxu0 0.0
    %1280 = vmatprep.subr.mxu0 0.0
    %1281 = vmatpush2.msra.mxu0 0.0
    %1282 = vmatprep.subr.mxu0 0.0
    %1283 = vmatpush2.msra.mxu0 0.0
    %1284 = vmatprep.subr.mxu0 0.0
    %1285 = vmatpush2.msra.mxu0 0.0
    %1286 = vmatprep.subr.mxu0 0.0
    %1287 = vmatpush2.msra.mxu0 0.0
    %1288 = vmatprep.subr.mxu0 0.0
    %1289 = vmatpush2.msra.mxu0 0.0
    %1290 = vmatprep.subr.mxu0 0.0
    %1291 = vmatpush2.msra.mxu0 0.0
    %1292 = vmatprep.subr.mxu0 0.0
    %1293 = vmatpush2.msra.mxu0 0.0
    %1294 = vmatprep.subr.mxu0 0.0
    %1295 = vmatpush2.msra.mxu0 0.0
    %1296 = vmatprep.subr.mxu0 0.0
    %1297 = vmatpush2.msra.mxu0 0.0
    %1298 = vmatprep.subr.mxu0 0.0
    %1299 = vmatpush2.msra.mxu0 0.0
    %1300 = vmatprep.mubr.f32.mxu0 0.0
    %1301 = vmatmul.mubr.f32.gmra.mxu0 %v1231
    %v1302 = vpop.f32.mrf.mxu0
    %v1303 = vadd.f32 %v1229, %v1302
    %v1304 = vpop.f32.mrf.mxu0
    %1305 = vmatprep.mubr.f32.mxu0 0.0
    %1306 = vmatmul.mubr.f32.gmra.mxu0 %v1234
    %v1307 = vpop.f32.mrf.mxu0
    %v1308 = vadd.f32 %v1229, %v1307
    %v1309 = vpop.f32.mrf.mxu0
    %1310 = vdwg.mxu0
    %1311 = vmatprep.subr.mxu0 0.0
    %1312 = vmatpush1.msra.mxu0 0.0
    %1313 = vmatprep.subr.mxu0 0.0
    %1314 = vmatpush1.msra.mxu0 0.0
    %1315 = vmatprep.subr.mxu0 0.0
    %1316 = vmatpush1.msra.mxu0 0.0
    %1317 = vmatprep.subr.mxu0 0.0
    %1318 = vmatpush1.msra.mxu0 0.0
    %1319 = vmatprep.subr.mxu0 0.0
    %1320 = vmatpush1.msra.mxu0 0.0
    %1321 = vmatprep.subr.mxu0 0.0
    %1322 = vmatpush1.msra.mxu0 0.0
    %1323 = vmatprep.subr.mxu0 0.0
    %1324 = vmatpush1.msra.mxu0 0.0
    %1325 = vmatprep.subr.mxu0 0.0
    %1326 = vmatpush1.msra.mxu0 0.0
    %1327 = vmatprep.subr.mxu0 0.0
    %1328 = vmatpush1.msra.mxu0 0.0
    %1329 = vmatprep.subr.mxu0 0.0
    %1330 = vmatpush1.msra.mxu0 0.0
    %1331 = vmatprep.subr.mxu0 0.0
    %1332 = vmatpush1.msra.mxu0 0.0
    %1333 = vmatprep.subr.mxu0 0.0
    %1334 = vmatpush1.msra.mxu0 0.0
    %1335 = vmatprep.subr.mxu0 0.0
    %1336 = vmatpush1.msra.mxu0 0.0
    %1337 = vmatprep.subr.mxu0 0.0
    %1338 = vmatpush1.msra.mxu0 0.0
    %1339 = vmatprep.subr.mxu0 0.0
    %1340 = vmatpush1.msra.mxu0 %v1308
    %1341 = vmatprep.subr.mxu0 0.0
    %1342 = vmatpush1.msra.mxu0 %v1303
    %1343 = vmatprep.subr.mxu0 0.0
    %1344 = vmatpush2.msra.mxu0 0.0
    %1345 = vmatprep.subr.mxu0 0.0
    %1346 = vmatpush2.msra.mxu0 0.0
    %1347 = vmatprep.subr.mxu0 0.0
    %1348 = vmatpush2.msra.mxu0 0.0
    %1349 = vmatprep.subr.mxu0 0.0
    %1350 = vmatpush2.msra.mxu0 0.0
    %1351 = vmatprep.subr.mxu0 0.0
    %1352 = vmatpush2.msra.mxu0 0.0
    %1353 = vmatprep.subr.mxu0 0.0
    %1354 = vmatpush2.msra.mxu0 0.0
    %1355 = vmatprep.subr.mxu0 0.0
    %1356 = vmatpush2.msra.mxu0 0.0
    %1357 = vmatprep.subr.mxu0 0.0
    %1358 = vmatpush2.msra.mxu0 0.0
    %1359 = vmatprep.subr.mxu0 0.0
    %1360 = vmatpush2.msra.mxu0 0.0
    %1361 = vmatprep.subr.mxu0 0.0
    %1362 = vmatpush2.msra.mxu0 0.0
    %1363 = vmatprep.subr.mxu0 0.0
    %1364 = vmatpush2.msra.mxu0 0.0
    %1365 = vmatprep.subr.mxu0 0.0
    %1366 = vmatpush2.msra.mxu0 0.0
    %1367 = vmatprep.subr.mxu0 0.0
    %1368 = vmatpush2.msra.mxu0 0.0
    %1369 = vmatprep.subr.mxu0 0.0
    %1370 = vmatpush2.msra.mxu0 0.0
    %1371 = vmatprep.subr.mxu0 0.0
    %1372 = vmatpush2.msra.mxu0 0.0
    %1373 = vmatprep.subr.mxu0 0.0
    %1374 = vmatpush2.msra.mxu0 0.0
    %1375 = vmatprep.mubr.f32.mxu0 0.0
    %1376 = vmatmul.mubr.f32.gmra.mxu0 %v347
    %v1377 = vpop.f32.mrf.mxu0
    %v1378 = vadd.f32 0.0, %v1377
    %v1379 = vpop.f32.mrf.mxu0
    %1380 = vmatprep.mubr.f32.mxu0 0.0
    %1381 = vmatmul.mubr.f32.gmra.mxu0 %v350
    %v1382 = vpop.f32.mrf.mxu0
    %v1383 = vadd.f32 0.0, %v1382
    %v1384 = vpop.f32.mrf.mxu0
    %1385 = vmatprep.mubr.f32.mxu0 0.0
    %1386 = vmatmul.mubr.f32.gmra.mxu0 %v353
    %v1387 = vpop.f32.mrf.mxu0
    %v1388 = vadd.f32 0.0, %v1387
    %v1389 = vpop.f32.mrf.mxu0
    %1390 = vmatprep.mubr.f32.mxu0 0.0
    %1391 = vmatmul.mubr.f32.gmra.mxu0 %v356
    %v1392 = vpop.f32.mrf.mxu0
    %v1393 = vadd.f32 0.0, %v1392
    %v1394 = vpop.f32.mrf.mxu0
    %1395 = vmatprep.mubr.f32.mxu0 0.0
    %1396 = vmatmul.mubr.f32.gmra.mxu0 %v359
    %v1397 = vpop.f32.mrf.mxu0
    %v1398 = vadd.f32 0.0, %v1397
    %v1399 = vpop.f32.mrf.mxu0
    %1400 = vmatprep.mubr.f32.mxu0 0.0
    %1401 = vmatmul.mubr.f32.gmra.mxu0 %v362
    %v1402 = vpop.f32.mrf.mxu0
    %v1403 = vadd.f32 0.0, %v1402
    %v1404 = vpop.f32.mrf.mxu0
    %1405 = vmatprep.mubr.f32.mxu0 0.0
    %1406 = vmatmul.mubr.f32.gmra.mxu0 %v365
    %v1407 = vpop.f32.mrf.mxu0
    %v1408 = vadd.f32 0.0, %v1407
    %v1409 = vpop.f32.mrf.mxu0
    %1410 = vmatprep.mubr.f32.mxu0 0.0
    %1411 = vmatmul.mubr.f32.gmra.mxu0 %v368
    %v1412 = vpop.f32.mrf.mxu0
    %v1413 = vadd.f32 0.0, %v1412
    %v1414 = vpop.f32.mrf.mxu0
    %1415 = vdwg.mxu0
    %v1416 = vmul.f32 %v1378, %v42
    %v1417 = vmul.f32 %v1383, %v43
    %v1418 = vmul.f32 %v1388, %v44
    %v1419 = vmul.f32 %v1393, %v45
    %v1420 = vmul.f32 %v1398, %v46
    %v1421 = vmul.f32 %v1403, %v47
    %v1422 = vmul.f32 %v1408, %v48
    %v1423 = vmul.f32 %v1413, %v49
    %1426 = vrot.lane.b32.xlu0 %v1303, 96
    %v1427 = vpop.permute.xlu0 %1426
    %1428 = vrot.lane.b32.xlu0 %v1308, 96
    %v1429 = vpop.permute.xlu0 %1428
    %v1431 = vsel %vm171, %v1416, 0
    %v1434 = vsel %vm171, %v1417, 0
    %v1437 = vsel %vm171, %v1418, 0
    %v1440 = vsel %vm171, %v1419, 0
    %v1443 = vsel %vm171, %v1420, 0
    %v1446 = vsel %vm171, %v1421, 0
    %v1449 = vsel %vm171, %v1422, 0
    %v1452 = vsel %vm171, %v1423, 0
    %v1454 = vsel %vm171, %v1427, 0
    %v1456 = vsel %vm171, %v1429, 0
    %1458 = vmatprep.subr.mxu0 0.0
    %1459 = vmatpush1.xpose.msra.mxu0 0.0
    %1460 = vmatprep.subr.mxu0 0.0
    %1461 = vmatpush1.xpose.msra.mxu0 0.0
    %1462 = vmatprep.subr.mxu0 0.0
    %1463 = vmatpush1.xpose.msra.mxu0 0.0
    %1464 = vmatprep.subr.mxu0 0.0
    %1465 = vmatpush1.xpose.msra.mxu0 0.0
    %1466 = vmatprep.subr.mxu0 0.0
    %1467 = vmatpush1.xpose.msra.mxu0 0.0
    %1468 = vmatprep.subr.mxu0 0.0
    %1469 = vmatpush1.xpose.msra.mxu0 0.0
    %1470 = vmatprep.subr.mxu0 0.0
    %1471 = vmatpush1.xpose.msra.mxu0 0.0
    %1472 = vmatprep.subr.mxu0 0.0
    %1473 = vmatpush1.xpose.msra.mxu0 0.0
    %1474 = vmatprep.subr.mxu0 0.0
    %1475 = vmatpush1.xpose.msra.mxu0 0.0
    %1476 = vmatprep.subr.mxu0 0.0
    %1477 = vmatpush1.xpose.msra.mxu0 0.0
    %1478 = vmatprep.subr.mxu0 0.0
    %1479 = vmatpush1.xpose.msra.mxu0 0.0
    %1480 = vmatprep.subr.mxu0 0.0
    %1481 = vmatpush1.xpose.msra.mxu0 0.0
    %1482 = vmatprep.subr.mxu0 0.0
    %1483 = vmatpush1.xpose.msra.mxu0 0.0
    %1484 = vmatprep.subr.mxu0 0.0
    %1485 = vmatpush1.xpose.msra.mxu0 0.0
    %1486 = vmatprep.subr.mxu0 0.0
    %1487 = vmatpush1.xpose.msra.mxu0 %v1456
    %1488 = vmatprep.subr.mxu0 0.0
    %1489 = vmatpush1.xpose.msra.mxu0 %v1454
    %1490 = vmatprep.subr.mxu0 0.0
    %1491 = vmatpush2.xpose.msra.mxu0 0.0
    %1492 = vmatprep.subr.mxu0 0.0
    %1493 = vmatpush2.xpose.msra.mxu0 0.0
    %1494 = vmatprep.subr.mxu0 0.0
    %1495 = vmatpush2.xpose.msra.mxu0 0.0
    %1496 = vmatprep.subr.mxu0 0.0
    %1497 = vmatpush2.xpose.msra.mxu0 0.0
    %1498 = vmatprep.subr.mxu0 0.0
    %1499 = vmatpush2.xpose.msra.mxu0 0.0
    %1500 = vmatprep.subr.mxu0 0.0
    %1501 = vmatpush2.xpose.msra.mxu0 0.0
    %1502 = vmatprep.subr.mxu0 0.0
    %1503 = vmatpush2.xpose.msra.mxu0 0.0
    %1504 = vmatprep.subr.mxu0 0.0
    %1505 = vmatpush2.xpose.msra.mxu0 0.0
    %1506 = vmatprep.subr.mxu0 0.0
    %1507 = vmatpush2.xpose.msra.mxu0 0.0
    %1508 = vmatprep.subr.mxu0 0.0
    %1509 = vmatpush2.xpose.msra.mxu0 0.0
    %1510 = vmatprep.subr.mxu0 0.0
    %1511 = vmatpush2.xpose.msra.mxu0 0.0
    %1512 = vmatprep.subr.mxu0 0.0
    %1513 = vmatpush2.xpose.msra.mxu0 0.0
    %1514 = vmatprep.subr.mxu0 0.0
    %1515 = vmatpush2.xpose.msra.mxu0 0.0
    %1516 = vmatprep.subr.mxu0 0.0
    %1517 = vmatpush2.xpose.msra.mxu0 0.0
    %1518 = vmatprep.subr.mxu0 0.0
    %1519 = vmatpush2.xpose.msra.mxu0 0.0
    %1520 = vmatprep.subr.mxu0 0.0
    %1521 = vmatpush2.xpose.msra.mxu0 0.0
    %1522 = vmatprep.mubr.f32.mxu0 0.0
    %1523 = vmatmul.mubr.f32.gmra.mxu0 %v1431
    %v1524 = vpop.f32.mrf.mxu0
    %v1525 = vadd.f32 %v50, %v1524
    %v1526 = vpop.f32.mrf.mxu0
    %1527 = vmatprep.mubr.f32.mxu0 0.0
    %1528 = vmatmul.mubr.f32.gmra.mxu0 %v1434
    %v1529 = vpop.f32.mrf.mxu0
    %v1530 = vadd.f32 %v51, %v1529
    %v1531 = vpop.f32.mrf.mxu0
    %1532 = vmatprep.mubr.f32.mxu0 0.0
    %1533 = vmatmul.mubr.f32.gmra.mxu0 %v1437
    %v1534 = vpop.f32.mrf.mxu0
    %v1535 = vadd.f32 %v52, %v1534
    %v1536 = vpop.f32.mrf.mxu0
    %1537 = vmatprep.mubr.f32.mxu0 0.0
    %1538 = vmatmul.mubr.f32.gmra.mxu0 %v1440
    %v1539 = vpop.f32.mrf.mxu0
    %v1540 = vadd.f32 %v53, %v1539
    %v1541 = vpop.f32.mrf.mxu0
    %1542 = vmatprep.mubr.f32.mxu0 0.0
    %1543 = vmatmul.mubr.f32.gmra.mxu0 %v1443
    %v1544 = vpop.f32.mrf.mxu0
    %v1545 = vadd.f32 %v54, %v1544
    %v1546 = vpop.f32.mrf.mxu0
    %1547 = vmatprep.mubr.f32.mxu0 0.0
    %1548 = vmatmul.mubr.f32.gmra.mxu0 %v1446
    %v1549 = vpop.f32.mrf.mxu0
    %v1550 = vadd.f32 %v55, %v1549
    %v1551 = vpop.f32.mrf.mxu0
    %1552 = vmatprep.mubr.f32.mxu0 0.0
    %1553 = vmatmul.mubr.f32.gmra.mxu0 %v1449
    %v1554 = vpop.f32.mrf.mxu0
    %v1555 = vadd.f32 %v56, %v1554
    %v1556 = vpop.f32.mrf.mxu0
    %1557 = vmatprep.mubr.f32.mxu0 0.0
    %1558 = vmatmul.mubr.f32.gmra.mxu0 %v1452
    %v1559 = vpop.f32.mrf.mxu0
    %v1560 = vadd.f32 %v57, %v1559
    %v1561 = vpop.f32.mrf.mxu0
    %1562 = vdwg.mxu0
    %v1563 = vsel %vm345, %v1525, -inf
    %1564 = vmax.xlane.f32.xlu0 %v1563
    %v1565 = vpop.xlane.xlu0 %1564
    %v1566 = vsel %vm345, %v1530, -inf
    %1567 = vmax.xlane.f32.xlu0 %v1566
    %v1568 = vpop.xlane.xlu0 %1567
    %v1569 = vsel %vm345, %v1535, -inf
    %1570 = vmax.xlane.f32.xlu0 %v1569
    %v1571 = vpop.xlane.xlu0 %1570
    %v1572 = vsel %vm345, %v1540, -inf
    %1573 = vmax.xlane.f32.xlu0 %v1572
    %v1574 = vpop.xlane.xlu0 %1573
    %v1575 = vsel %vm345, %v1545, -inf
    %1576 = vmax.xlane.f32.xlu0 %v1575
    %v1577 = vpop.xlane.xlu0 %1576
    %v1578 = vsel %vm345, %v1550, -inf
    %1579 = vmax.xlane.f32.xlu0 %v1578
    %v1580 = vpop.xlane.xlu0 %1579
    %v1581 = vsel %vm345, %v1555, -inf
    %1582 = vmax.xlane.f32.xlu0 %v1581
    %v1583 = vpop.xlane.xlu0 %1582
    %v1584 = vsel %vm345, %v1560, -inf
    %1585 = vmax.xlane.f32.xlu0 %v1584
    %v1586 = vpop.xlane.xlu0 %1585
    %v1587 = vsub.f32 %v1525, %v1565
    %v1588 = vsub.f32 %v1530, %v1568
    %v1589 = vsub.f32 %v1535, %v1571
    %v1590 = vsub.f32 %v1540, %v1574
    %v1591 = vsub.f32 %v1545, %v1577
    %v1592 = vsub.f32 %v1550, %v1580
    %v1593 = vsub.f32 %v1555, %v1583
    %v1594 = vsub.f32 %v1560, %v1586
    %v1595 = vmul.f32 %v1587, 1.442695
    %v1596 = vpow.pop %v1595
    %v1597 = vmul.f32 %v1588, 1.442695
    %v1598 = vpow.pop %v1597
    %v1599 = vmul.f32 %v1589, 1.442695
    %v1600 = vpow.pop %v1599
    %v1601 = vmul.f32 %v1590, 1.442695
    %v1602 = vpow.pop %v1601
    %v1603 = vmul.f32 %v1591, 1.442695
    %v1604 = vpow.pop %v1603
    %v1605 = vmul.f32 %v1592, 1.442695
    %v1606 = vpow.pop %v1605
    %v1607 = vmul.f32 %v1593, 1.442695
    %v1608 = vpow.pop %v1607
    %v1609 = vmul.f32 %v1594, 1.442695
    %v1610 = vpow.pop %v1609
    %v1611 = vsel %vm345, %v1596, 0.0
    %1612 = vadd.xlane.f32.xlu0 %v1611
    %v1613 = vpop.xlane.xlu0 %1612
    %v1614 = vsel %vm345, %v1598, 0.0
    %1615 = vadd.xlane.f32.xlu0 %v1614
    %v1616 = vpop.xlane.xlu0 %1615
    %v1617 = vsel %vm345, %v1600, 0.0
    %1618 = vadd.xlane.f32.xlu0 %v1617
    %v1619 = vpop.xlane.xlu0 %1618
    %v1620 = vsel %vm345, %v1602, 0.0
    %1621 = vadd.xlane.f32.xlu0 %v1620
    %v1622 = vpop.xlane.xlu0 %1621
    %v1623 = vsel %vm345, %v1604, 0.0
    %1624 = vadd.xlane.f32.xlu0 %v1623
    %v1625 = vpop.xlane.xlu0 %1624
    %v1626 = vsel %vm345, %v1606, 0.0
    %1627 = vadd.xlane.f32.xlu0 %v1626
    %v1628 = vpop.xlane.xlu0 %1627
    %v1629 = vsel %vm345, %v1608, 0.0
    %1630 = vadd.xlane.f32.xlu0 %v1629
    %v1631 = vpop.xlane.xlu0 %1630
    %v1632 = vsel %vm345, %v1610, 0.0
    %1633 = vadd.xlane.f32.xlu0 %v1632
    %v1634 = vpop.xlane.xlu0 %1633
    %v1635 = vrcp.pop %v1613
    %v1636 = vrcp.pop %v1616
    %v1637 = vrcp.pop %v1619
    %v1638 = vrcp.pop %v1622
    %v1639 = vrcp.pop %v1625
    %v1640 = vrcp.pop %v1628
    %v1641 = vrcp.pop %v1631
    %v1642 = vrcp.pop %v1634
    %v1643 = vmul.f32 %v1596, %v1635
    %v1644 = vmul.f32 %v1598, %v1636
    %v1645 = vmul.f32 %v1600, %v1637
    %v1646 = vmul.f32 %v1602, %v1638
    %v1647 = vmul.f32 %v1604, %v1639
    %v1648 = vmul.f32 %v1606, %v1640
    %v1649 = vmul.f32 %v1608, %v1641
    %v1650 = vmul.f32 %v1610, %v1642
    %1651 = vrot.lane.b32.xlu0 %v1303, 64
    %v1652 = vpop.permute.xlu0 %1651
    %1653 = vrot.lane.b32.xlu0 %v1308, 64
    %v1654 = vpop.permute.xlu0 %1653
    %v1658 = vsel %vm345, %v1643, 0
    %v1661 = vsel %vm345, %v1644, 0
    %v1664 = vsel %vm345, %v1645, 0
    %v1667 = vsel %vm345, %v1646, 0
    %v1670 = vsel %vm345, %v1647, 0
    %v1673 = vsel %vm345, %v1648, 0
    %v1676 = vsel %vm345, %v1649, 0
    %v1679 = vsel %vm345, %v1650, 0
    %1681 = vmatprep.subr.mxu0 0.0
    %1682 = vmatpush1.msra.mxu0 0.0
    %1683 = vmatprep.subr.mxu0 0.0
    %1684 = vmatpush1.msra.mxu0 0.0
    %1685 = vmatprep.subr.mxu0 0.0
    %1686 = vmatpush1.msra.mxu0 0.0
    %1687 = vmatprep.subr.mxu0 0.0
    %1688 = vmatpush1.msra.mxu0 0.0
    %1689 = vmatprep.subr.mxu0 0.0
    %1690 = vmatpush1.msra.mxu0 0.0
    %1691 = vmatprep.subr.mxu0 0.0
    %1692 = vmatpush1.msra.mxu0 0.0
    %1693 = vmatprep.subr.mxu0 0.0
    %1694 = vmatpush1.msra.mxu0 0.0
    %1695 = vmatprep.subr.mxu0 0.0
    %1696 = vmatpush1.msra.mxu0 0.0
    %1697 = vmatprep.subr.mxu0 0.0
    %1698 = vmatpush1.msra.mxu0 0.0
    %1699 = vmatprep.subr.mxu0 0.0
    %1700 = vmatpush1.msra.mxu0 0.0
    %1701 = vmatprep.subr.mxu0 0.0
    %1702 = vmatpush1.msra.mxu0 0.0
    %1703 = vmatprep.subr.mxu0 0.0
    %1704 = vmatpush1.msra.mxu0 0.0
    %1705 = vmatprep.subr.mxu0 0.0
    %1706 = vmatpush1.msra.mxu0 0.0
    %1707 = vmatprep.subr.mxu0 0.0
    %1708 = vmatpush1.msra.mxu0 0.0
    %1709 = vmatprep.subr.mxu0 0.0
    %1710 = vmatpush1.msra.mxu0 %v1654
    %1711 = vmatprep.subr.mxu0 0.0
    %1712 = vmatpush1.msra.mxu0 %v1652
    %1713 = vmatprep.subr.mxu0 0.0
    %1714 = vmatpush2.msra.mxu0 0.0
    %1715 = vmatprep.subr.mxu0 0.0
    %1716 = vmatpush2.msra.mxu0 0.0
    %1717 = vmatprep.subr.mxu0 0.0
    %1718 = vmatpush2.msra.mxu0 0.0
    %1719 = vmatprep.subr.mxu0 0.0
    %1720 = vmatpush2.msra.mxu0 0.0
    %1721 = vmatprep.subr.mxu0 0.0
    %1722 = vmatpush2.msra.mxu0 0.0
    %1723 = vmatprep.subr.mxu0 0.0
    %1724 = vmatpush2.msra.mxu0 0.0
    %1725 = vmatprep.subr.mxu0 0.0
    %1726 = vmatpush2.msra.mxu0 0.0
    %1727 = vmatprep.subr.mxu0 0.0
    %1728 = vmatpush2.msra.mxu0 0.0
    %1729 = vmatprep.subr.mxu0 0.0
    %1730 = vmatpush2.msra.mxu0 0.0
    %1731 = vmatprep.subr.mxu0 0.0
    %1732 = vmatpush2.msra.mxu0 0.0
    %1733 = vmatprep.subr.mxu0 0.0
    %1734 = vmatpush2.msra.mxu0 0.0
    %1735 = vmatprep.subr.mxu0 0.0
    %1736 = vmatpush2.msra.mxu0 0.0
    %1737 = vmatprep.subr.mxu0 0.0
    %1738 = vmatpush2.msra.mxu0 0.0
    %1739 = vmatprep.subr.mxu0 0.0
    %1740 = vmatpush2.msra.mxu0 0.0
    %1741 = vmatprep.subr.mxu0 0.0
    %1742 = vmatpush2.msra.mxu0 0.0
    %1743 = vmatprep.subr.mxu0 0.0
    %1744 = vmatpush2.msra.mxu0 0.0
    %1745 = vmatprep.mubr.f32.mxu0 0.0
    %1746 = vmatmul.mubr.f32.gmra.mxu0 %v1658
    %v1747 = vpop.f32.mrf.mxu0
    %v1748 = vadd.f32 0.0, %v1747
    %v1749 = vpop.f32.mrf.mxu0
    %1750 = vmatprep.mubr.f32.mxu0 0.0
    %1751 = vmatmul.mubr.f32.gmra.mxu0 %v1661
    %v1752 = vpop.f32.mrf.mxu0
    %v1753 = vadd.f32 0.0, %v1752
    %v1754 = vpop.f32.mrf.mxu0
    %1755 = vmatprep.mubr.f32.mxu0 0.0
    %1756 = vmatmul.mubr.f32.gmra.mxu0 %v1664
    %v1757 = vpop.f32.mrf.mxu0
    %v1758 = vadd.f32 0.0, %v1757
    %v1759 = vpop.f32.mrf.mxu0
    %1760 = vmatprep.mubr.f32.mxu0 0.0
    %1761 = vmatmul.mubr.f32.gmra.mxu0 %v1667
    %v1762 = vpop.f32.mrf.mxu0
    %v1763 = vadd.f32 0.0, %v1762
    %v1764 = vpop.f32.mrf.mxu0
    %1765 = vmatprep.mubr.f32.mxu0 0.0
    %1766 = vmatmul.mubr.f32.gmra.mxu0 %v1670
    %v1767 = vpop.f32.mrf.mxu0
    %v1768 = vadd.f32 0.0, %v1767
    %v1769 = vpop.f32.mrf.mxu0
    %1770 = vmatprep.mubr.f32.mxu0 0.0
    %1771 = vmatmul.mubr.f32.gmra.mxu0 %v1673
    %v1772 = vpop.f32.mrf.mxu0
    %v1773 = vadd.f32 0.0, %v1772
    %v1774 = vpop.f32.mrf.mxu0
    %1775 = vmatprep.mubr.f32.mxu0 0.0
    %1776 = vmatmul.mubr.f32.gmra.mxu0 %v1676
    %v1777 = vpop.f32.mrf.mxu0
    %v1778 = vadd.f32 0.0, %v1777
    %v1779 = vpop.f32.mrf.mxu0
    %1780 = vmatprep.mubr.f32.mxu0 0.0
    %1781 = vmatmul.mubr.f32.gmra.mxu0 %v1679
    %v1782 = vpop.f32.mrf.mxu0
    %v1783 = vadd.f32 0.0, %v1782
    %v1784 = vpop.f32.mrf.mxu0
    %1785 = vdwg.mxu0
    %v1786 = vmul.f32 %v1748, %v42
    %v1787 = vmul.f32 %v1753, %v43
    %v1788 = vmul.f32 %v1758, %v44
    %v1789 = vmul.f32 %v1763, %v45
    %v1790 = vmul.f32 %v1768, %v46
    %v1791 = vmul.f32 %v1773, %v47
    %v1792 = vmul.f32 %v1778, %v48
    %v1793 = vmul.f32 %v1783, %v49
    %v1794 = vadd.f32 %v1786, %v1788
    %v1795 = vadd.f32 %v1787, %v1789
    %v1796 = vadd.f32 %v1794, %v1790
    %v1797 = vadd.f32 %v1795, %v1791
    %v1798 = vadd.f32 %v1796, %v1792
    %v1799 = vadd.f32 %v1797, %v1793
    %v1800 = vld [vmem:[#allocation2 + $0xe8] sm:$0xff]
    %v1801 = vld [vmem:[#allocation2 + $0xf0] sm:$0xff]
    %v1802 = vld [vmem:[#allocation2 + $0xf8] sm:$0xff]
    %v1803 = vld [vmem:[#allocation2 + $0x100] sm:$0xff]
    %v1804 = vld [vmem:[#allocation4 + $0xb] sm:$0x1]
    %v1805 = vlaneseq
    %v1806 = vshrl.u32 %v1805, 7
    %v1807 = vsub.s32 0, %v1806
    %v1808 = vrot.slane %v1804, %v1807
    %v1810 = vsel %vm171, %v1798, 0
    %v1813 = vsel %vm171, %v1799, 0
    %1815 = vmatprep.subr.mxu0 0.0
    %1816 = vmatpush1.msra.mxu0 0.0
    %1817 = vmatprep.subr.mxu0 0.0
    %1818 = vmatpush1.msra.mxu0 0.0
    %1819 = vmatprep.subr.mxu0 0.0
    %1820 = vmatpush1.msra.mxu0 0.0
    %1821 = vmatprep.subr.mxu0 0.0
    %1822 = vmatpush1.msra.mxu0 0.0
    %1823 = vmatprep.subr.mxu0 0.0
    %1824 = vmatpush1.msra.mxu0 0.0
    %1825 = vmatprep.subr.mxu0 0.0
    %1826 = vmatpush1.msra.mxu0 0.0
    %1827 = vmatprep.subr.mxu0 0.0
    %1828 = vmatpush1.msra.mxu0 0.0
    %1829 = vmatprep.subr.mxu0 0.0
    %1830 = vmatpush1.msra.mxu0 0.0
    %1831 = vmatprep.subr.mxu0 0.0
    %1832 = vmatpush1.msra.mxu0 0.0
    %1833 = vmatprep.subr.mxu0 0.0
    %1834 = vmatpush1.msra.mxu0 0.0
    %1835 = vmatprep.subr.mxu0 0.0
    %1836 = vmatpush1.msra.mxu0 0.0
    %1837 = vmatprep.subr.mxu0 0.0
    %1838 = vmatpush1.msra.mxu0 0.0
    %1839 = vmatprep.subr.mxu0 0.0
    %1840 = vmatpush1.msra.mxu0 %v1803
    %1841 = vmatprep.subr.mxu0 0.0
    %1842 = vmatpush1.msra.mxu0 %v1802
    %1843 = vmatprep.subr.mxu0 0.0
    %1844 = vmatpush1.msra.mxu0 %v1801
    %1845 = vmatprep.subr.mxu0 0.0
    %1846 = vmatpush1.msra.mxu0 %v1800
    %1847 = vmatprep.subr.mxu0 0.0
    %1848 = vmatpush2.msra.mxu0 0.0
    %1849 = vmatprep.subr.mxu0 0.0
    %1850 = vmatpush2.msra.mxu0 0.0
    %1851 = vmatprep.subr.mxu0 0.0
    %1852 = vmatpush2.msra.mxu0 0.0
    %1853 = vmatprep.subr.mxu0 0.0
    %1854 = vmatpush2.msra.mxu0 0.0
    %1855 = vmatprep.subr.mxu0 0.0
    %1856 = vmatpush2.msra.mxu0 0.0
    %1857 = vmatprep.subr.mxu0 0.0
    %1858 = vmatpush2.msra.mxu0 0.0
    %1859 = vmatprep.subr.mxu0 0.0
    %1860 = vmatpush2.msra.mxu0 0.0
    %1861 = vmatprep.subr.mxu0 0.0
    %1862 = vmatpush2.msra.mxu0 0.0
    %1863 = vmatprep.subr.mxu0 0.0
    %1864 = vmatpush2.msra.mxu0 0.0
    %1865 = vmatprep.subr.mxu0 0.0
    %1866 = vmatpush2.msra.mxu0 0.0
    %1867 = vmatprep.subr.mxu0 0.0
    %1868 = vmatpush2.msra.mxu0 0.0
    %1869 = vmatprep.subr.mxu0 0.0
    %1870 = vmatpush2.msra.mxu0 0.0
    %1871 = vmatprep.subr.mxu0 0.0
    %1872 = vmatpush2.msra.mxu0 0.0
    %1873 = vmatprep.subr.mxu0 0.0
    %1874 = vmatpush2.msra.mxu0 0.0
    %1875 = vmatprep.subr.mxu0 0.0
    %1876 = vmatpush2.msra.mxu0 0.0
    %1877 = vmatprep.subr.mxu0 0.0
    %1878 = vmatpush2.msra.mxu0 0.0
    %1879 = vmatprep.mubr.f32.mxu0 0.0
    %1880 = vmatmul.mubr.f32.gmra.mxu0 %v1810
    %v1881 = vpop.f32.mrf.mxu0
    %v1882 = vadd.f32 %v1808, %v1881
    %v1883 = vpop.f32.mrf.mxu0
    %1884 = vmatprep.mubr.f32.mxu0 0.0
    %1885 = vmatmul.mubr.f32.gmra.mxu0 %v1813
    %v1886 = vpop.f32.mrf.mxu0
    %v1887 = vadd.f32 %v1808, %v1886
    %v1888 = vpop.f32.mrf.mxu0
    %1889 = vdwg.mxu0
    %v1890 = vadd.f32 %v1219, %v1882
    %v1891 = vadd.f32 %v1220, %v1887
    %v1892 = vsel %vm171, %v1890, 0.0
    %1893 = vadd.xlane.f32.xlu0 %v1892
    %v1894 = vpop.xlane.xlu0 %1893
    %v1895 = vsel %vm171, %v1891, 0.0
    %1896 = vadd.xlane.f32.xlu0 %v1895
    %v1897 = vpop.xlane.xlu0 %1896
    %v1898 = vmul.f32 %v1894, %v957
    %v1899 = vmul.f32 %v1897, %v957
    %v1900 = vsub.f32 %v1890, %v1898
    %v1901 = vsub.f32 %v1891, %v1899
    %v1902 = vmul.f32 %v1900, %v1900
    %v1903 = vmul.f32 %v1901, %v1901
    %v1904 = vsel %vm171, %v1902, 0.0
    %1905 = vadd.xlane.f32.xlu0 %v1904
    %v1906 = vpop.xlane.xlu0 %1905
    %v1907 = vsel %vm171, %v1903, 0.0
    %1908 = vadd.xlane.f32.xlu0 %v1907
    %v1909 = vpop.xlane.xlu0 %1908
    %v1910 = vmul.f32 %v1906, %v957
    %v1911 = vmul.f32 %v1909, %v957
    %v1912 = vadd.f32 %v1910, 1e-05
    %v1913 = vadd.f32 %v1911, 1e-05
    %v1914 = vrsqrt.pop %v1912
    %v1915 = vrsqrt.pop %v1913
    %v1916 = vmul.f32 %v1900, %v1914
    %v1917 = vmul.f32 %v1901, %v1915
    %v1918 = vld [vmem:[#allocation4 + $0xc] sm:$0x1]
    %v1919 = vlaneseq
    %v1920 = vshrl.u32 %v1919, 7
    %v1921 = vsub.s32 0, %v1920
    %v1922 = vrot.slane %v1918, %v1921
    %v1923 = vmul.f32 %v1916, %v1922
    %v1924 = vmul.f32 %v1917, %v1922
    %v1925 = vld [vmem:[#allocation4 + $0xd] sm:$0x1]
    %v1926 = vlaneseq
    %v1927 = vshrl.u32 %v1926, 7
    %v1928 = vsub.s32 0, %v1927
    %v1929 = vrot.slane %v1925, %v1928
    %v1930 = vadd.f32 %v1923, %v1929
    %v1931 = vadd.f32 %v1924, %v1929
    %v1932 = vld [vmem:[#allocation2 + $0x108] sm:$0xff]
    %v1933 = vld [vmem:[#allocation2 + $0x110] sm:$0xff]
    %v1934 = vld [vmem:[#allocation2 + $0x118] sm:$0xff]
    %v1935 = vld [vmem:[#allocation2 + $0x120] sm:$0xff]
    %v1936 = vld [vmem:[#allocation4 + $0x10] sm:$0x1]
    %v1937 = vlaneseq
    %v1938 = vshrl.u32 %v1937, 7
    %v1939 = vsub.s32 0, %v1938
    %v1940 = vrot.slane %v1936, %v1939
    %v1942 = vsel %vm171, %v1930, 0
    %v1945 = vsel %vm171, %v1931, 0
    %1947 = vmatprep.subr.mxu0 0.0
    %1948 = vmatpush1.msra.mxu0 0.0
    %1949 = vmatprep.subr.mxu0 0.0
    %1950 = vmatpush1.msra.mxu0 0.0
    %1951 = vmatprep.subr.mxu0 0.0
    %1952 = vmatpush1.msra.mxu0 0.0
    %1953 = vmatprep.subr.mxu0 0.0
    %1954 = vmatpush1.msra.mxu0 0.0
    %1955 = vmatprep.subr.mxu0 0.0
    %1956 = vmatpush1.msra.mxu0 0.0
    %1957 = vmatprep.subr.mxu0 0.0
    %1958 = vmatpush1.msra.mxu0 0.0
    %1959 = vmatprep.subr.mxu0 0.0
    %1960 = vmatpush1.msra.mxu0 0.0
    %1961 = vmatprep.subr.mxu0 0.0
    %1962 = vmatpush1.msra.mxu0 0.0
    %1963 = vmatprep.subr.mxu0 0.0
    %1964 = vmatpush1.msra.mxu0 0.0
    %1965 = vmatprep.subr.mxu0 0.0
    %1966 = vmatpush1.msra.mxu0 0.0
    %1967 = vmatprep.subr.mxu0 0.0
    %1968 = vmatpush1.msra.mxu0 0.0
    %1969 = vmatprep.subr.mxu0 0.0
    %1970 = vmatpush1.msra.mxu0 0.0
    %1971 = vmatprep.subr.mxu0 0.0
    %1972 = vmatpush1.msra.mxu0 %v1935
    %1973 = vmatprep.subr.mxu0 0.0
    %1974 = vmatpush1.msra.mxu0 %v1934
    %1975 = vmatprep.subr.mxu0 0.0
    %1976 = vmatpush1.msra.mxu0 %v1933
    %1977 = vmatprep.subr.mxu0 0.0
    %1978 = vmatpush1.msra.mxu0 %v1932
    %1979 = vmatprep.subr.mxu0 0.0
    %1980 = vmatpush2.msra.mxu0 0.0
    %1981 = vmatprep.subr.mxu0 0.0
    %1982 = vmatpush2.msra.mxu0 0.0
    %1983 = vmatprep.subr.mxu0 0.0
    %1984 = vmatpush2.msra.mxu0 0.0
    %1985 = vmatprep.subr.mxu0 0.0
    %1986 = vmatpush2.msra.mxu0 0.0
    %1987 = vmatprep.subr.mxu0 0.0
    %1988 = vmatpush2.msra.mxu0 0.0
    %1989 = vmatprep.subr.mxu0 0.0
    %1990 = vmatpush2.msra.mxu0 0.0
    %1991 = vmatprep.subr.mxu0 0.0
    %1992 = vmatpush2.msra.mxu0 0.0
    %1993 = vmatprep.subr.mxu0 0.0
    %1994 = vmatpush2.msra.mxu0 0.0
    %1995 = vmatprep.subr.mxu0 0.0
    %1996 = vmatpush2.msra.mxu0 0.0
    %1997 = vmatprep.subr.mxu0 0.0
    %1998 = vmatpush2.msra.mxu0 0.0
    %1999 = vmatprep.subr.mxu0 0.0
    %2000 = vmatpush2.msra.mxu0 0.0
    %2001 = vmatprep.subr.mxu0 0.0
    %2002 = vmatpush2.msra.mxu0 0.0
    %2003 = vmatprep.subr.mxu0 0.0
    %2004 = vmatpush2.msra.mxu0 0.0
    %2005 = vmatprep.subr.mxu0 0.0
    %2006 = vmatpush2.msra.mxu0 0.0
    %2007 = vmatprep.subr.mxu0 0.0
    %2008 = vmatpush2.msra.mxu0 0.0
    %2009 = vmatprep.subr.mxu0 0.0
    %2010 = vmatpush2.msra.mxu0 0.0
    %2011 = vmatprep.mubr.f32.mxu0 0.0
    %2012 = vmatmul.mubr.f32.gmra.mxu0 %v1942
    %v2013 = vpop.f32.mrf.mxu0
    %v2014 = vadd.f32 %v1940, %v2013
    %v2015 = vpop.f32.mrf.mxu0
    %2016 = vmatprep.mubr.f32.mxu0 0.0
    %2017 = vmatmul.mubr.f32.gmra.mxu0 %v1945
    %v2018 = vpop.f32.mrf.mxu0
    %v2019 = vadd.f32 %v1940, %v2018
    %v2020 = vpop.f32.mrf.mxu0
    %2021 = vdwg.mxu0
    %v2022 = vmax.f32 %v2014, 0.0
    %v2023 = vmax.f32 %v2019, 0.0
    %v2024 = vld [vmem:[#allocation2 + $0x128] sm:$0xff]
    %v2025 = vld [vmem:[#allocation2 + $0x130] sm:$0xff]
    %v2026 = vld [vmem:[#allocation2 + $0x138] sm:$0xff]
    %v2027 = vld [vmem:[#allocation2 + $0x140] sm:$0xff]
    %v2028 = vld [vmem:[#allocation2 + $0x148] sm:$0xff]
    %v2029 = vld [vmem:[#allocation2 + $0x150] sm:$0xff]
    %v2030 = vld [vmem:[#allocation2 + $0x158] sm:$0xff]
    %v2031 = vld [vmem:[#allocation2 + $0x160] sm:$0xff]
    %v2032 = vld [vmem:[#allocation4 + $0x11] sm:$0x1]
    %v2033 = vlaneseq
    %v2034 = vshrl.u32 %v2033, 7
    %v2035 = vsub.s32 0, %v2034
    %v2036 = vrot.slane %v2032, %v2035
    %v2038 = vsel %vm1097, %v2022, 0
    %v2041 = vsel %vm1097, %v2023, 0
    %2043 = vmatprep.subr.mxu0 0.0
    %2044 = vmatpush1.msra.mxu0 0.0
    %2045 = vmatprep.subr.mxu0 0.0
    %2046 = vmatpush1.msra.mxu0 0.0
    %2047 = vmatprep.subr.mxu0 0.0
    %2048 = vmatpush1.msra.mxu0 0.0
    %2049 = vmatprep.subr.mxu0 0.0
    %2050 = vmatpush1.msra.mxu0 0.0
    %2051 = vmatprep.subr.mxu0 0.0
    %2052 = vmatpush1.msra.mxu0 0.0
    %2053 = vmatprep.subr.mxu0 0.0
    %2054 = vmatpush1.msra.mxu0 0.0
    %2055 = vmatprep.subr.mxu0 0.0
    %2056 = vmatpush1.msra.mxu0 0.0
    %2057 = vmatprep.subr.mxu0 0.0
    %2058 = vmatpush1.msra.mxu0 0.0
    %2059 = vmatprep.subr.mxu0 0.0
    %2060 = vmatpush1.msra.mxu0 %v2031
    %2061 = vmatprep.subr.mxu0 0.0
    %2062 = vmatpush1.msra.mxu0 %v2030
    %2063 = vmatprep.subr.mxu0 0.0
    %2064 = vmatpush1.msra.mxu0 %v2029
    %2065 = vmatprep.subr.mxu0 0.0
    %2066 = vmatpush1.msra.mxu0 %v2028
    %2067 = vmatprep.subr.mxu0 0.0
    %2068 = vmatpush1.msra.mxu0 %v2027
    %2069 = vmatprep.subr.mxu0 0.0
    %2070 = vmatpush1.msra.mxu0 %v2026
    %2071 = vmatprep.subr.mxu0 0.0
    %2072 = vmatpush1.msra.mxu0 %v2025
    %2073 = vmatprep.subr.mxu0 0.0
    %2074 = vmatpush1.msra.mxu0 %v2024
    %2075 = vmatprep.subr.mxu0 0.0
    %2076 = vmatpush2.msra.mxu0 0.0
    %2077 = vmatprep.subr.mxu0 0.0
    %2078 = vmatpush2.msra.mxu0 0.0
    %2079 = vmatprep.subr.mxu0 0.0
    %2080 = vmatpush2.msra.mxu0 0.0
    %2081 = vmatprep.subr.mxu0 0.0
    %2082 = vmatpush2.msra.mxu0 0.0
    %2083 = vmatprep.subr.mxu0 0.0
    %2084 = vmatpush2.msra.mxu0 0.0
    %2085 = vmatprep.subr.mxu0 0.0
    %2086 = vmatpush2.msra.mxu0 0.0
    %2087 = vmatprep.subr.mxu0 0.0
    %2088 = vmatpush2.msra.mxu0 0.0
    %2089 = vmatprep.subr.mxu0 0.0
    %2090 = vmatpush2.msra.mxu0 0.0
    %2091 = vmatprep.subr.mxu0 0.0
    %2092 = vmatpush2.msra.mxu0 0.0
    %2093 = vmatprep.subr.mxu0 0.0
    %2094 = vmatpush2.msra.mxu0 0.0
    %2095 = vmatprep.subr.mxu0 0.0
    %2096 = vmatpush2.msra.mxu0 0.0
    %2097 = vmatprep.subr.mxu0 0.0
    %2098 = vmatpush2.msra.mxu0 0.0
    %2099 = vmatprep.subr.mxu0 0.0
    %2100 = vmatpush2.msra.mxu0 0.0
    %2101 = vmatprep.subr.mxu0 0.0
    %2102 = vmatpush2.msra.mxu0 0.0
    %2103 = vmatprep.subr.mxu0 0.0
    %2104 = vmatpush2.msra.mxu0 0.0
    %2105 = vmatprep.subr.mxu0 0.0
    %2106 = vmatpush2.msra.mxu0 0.0
    %2107 = vmatprep.mubr.f32.mxu0 0.0
    %2108 = vmatmul.mubr.f32.gmra.mxu0 %v2038
    %v2109 = vpop.f32.mrf.mxu0
    %v2110 = vadd.f32 %v2036, %v2109
    %v2111 = vpop.f32.mrf.mxu0
    %2112 = vmatprep.mubr.f32.mxu0 0.0
    %2113 = vmatmul.mubr.f32.gmra.mxu0 %v2041
    %v2114 = vpop.f32.mrf.mxu0
    %v2115 = vadd.f32 %v2036, %v2114
    %v2116 = vpop.f32.mrf.mxu0
    %2117 = vdwg.mxu0
    %v2118 = vadd.f32 %v1930, %v2110
    %v2119 = vadd.f32 %v1931, %v2115
    %v2120 = vsel %vm171, %v2118, 0.0
    %2121 = vadd.xlane.f32.xlu0 %v2120
    %v2122 = vpop.xlane.xlu0 %2121
    %v2123 = vsel %vm171, %v2119, 0.0
    %2124 = vadd.xlane.f32.xlu0 %v2123
    %v2125 = vpop.xlane.xlu0 %2124
    %v2126 = vmul.f32 %v2122, %v957
    %v2127 = vmul.f32 %v2125, %v957
    %v2128 = vsub.f32 %v2118, %v2126
    %v2129 = vsub.f32 %v2119, %v2127
    %v2130 = vmul.f32 %v2128, %v2128
    %v2131 = vmul.f32 %v2129, %v2129
    %v2132 = vsel %vm171, %v2130, 0.0
    %2133 = vadd.xlane.f32.xlu0 %v2132
    %v2134 = vpop.xlane.xlu0 %2133
    %v2135 = vsel %vm171, %v2131, 0.0
    %2136 = vadd.xlane.f32.xlu0 %v2135
    %v2137 = vpop.xlane.xlu0 %2136
    %v2138 = vmul.f32 %v2134, %v957
    %v2139 = vmul.f32 %v2137, %v957
    %v2140 = vadd.f32 %v2138, 1e-05
    %v2141 = vadd.f32 %v2139, 1e-05
    %v2142 = vrsqrt.pop %v2140
    %v2143 = vrsqrt.pop %v2141
    %v2144 = vmul.f32 %v2128, %v2142
    %v2145 = vmul.f32 %v2129, %v2143
    %v2146 = vld [vmem:[#allocation4 + $0xe] sm:$0x1]
    %v2147 = vlaneseq
    %v2148 = vshrl.u32 %v2147, 7
    %v2149 = vsub.s32 0, %v2148
    %v2150 = vrot.slane %v2146, %v2149
    %v2151 = vmul.f32 %v2144, %v2150
    %v2152 = vmul.f32 %v2145, %v2150
    %v2153 = vld [vmem:[#allocation4 + $0xf] sm:$0x1]
    %v2154 = vlaneseq
    %v2155 = vshrl.u32 %v2154, 7
    %v2156 = vsub.s32 0, %v2155
    %v2157 = vrot.slane %v2153, %v2156
    %v2158 = vadd.f32 %v2151, %v2157
    %v2159 = vadd.f32 %v2152, %v2157
    %v2160 = vld [vmem:[#allocation2 + $0x168] sm:$0xff]
    %v2161 = vld [vmem:[#allocation2 + $0x170] sm:$0xff]
    %v2162 = vld [vmem:[#allocation2 + $0x178] sm:$0xff]
    %v2163 = vld [vmem:[#allocation2 + $0x180] sm:$0xff]
    %v2164 = vld [vmem:[#allocation4 + $0x12] sm:$0x1]
    %v2165 = vlaneseq
    %v2166 = vshrl.u32 %v2165, 7
    %v2167 = vsub.s32 0, %v2166
    %v2168 = vrot.slane %v2164, %v2167
    %v2170 = vsel %vm171, %v2158, 0
    %v2173 = vsel %vm171, %v2159, 0
    %2175 = vmatprep.subr.mxu0 0.0
    %2176 = vmatpush1.msra.mxu0 0.0
    %2177 = vmatprep.subr.mxu0 0.0
    %2178 = vmatpush1.msra.mxu0 0.0
    %2179 = vmatprep.subr.mxu0 0.0
    %2180 = vmatpush1.msra.mxu0 0.0
    %2181 = vmatprep.subr.mxu0 0.0
    %2182 = vmatpush1.msra.mxu0 0.0
    %2183 = vmatprep.subr.mxu0 0.0
    %2184 = vmatpush1.msra.mxu0 0.0
    %2185 = vmatprep.subr.mxu0 0.0
    %2186 = vmatpush1.msra.mxu0 0.0
    %2187 = vmatprep.subr.mxu0 0.0
    %2188 = vmatpush1.msra.mxu0 0.0
    %2189 = vmatprep.subr.mxu0 0.0
    %2190 = vmatpush1.msra.mxu0 0.0
    %2191 = vmatprep.subr.mxu0 0.0
    %2192 = vmatpush1.msra.mxu0 0.0
    %2193 = vmatprep.subr.mxu0 0.0
    %2194 = vmatpush1.msra.mxu0 0.0
    %2195 = vmatprep.subr.mxu0 0.0
    %2196 = vmatpush1.msra.mxu0 0.0
    %2197 = vmatprep.subr.mxu0 0.0
    %2198 = vmatpush1.msra.mxu0 0.0
    %2199 = vmatprep.subr.mxu0 0.0
    %2200 = vmatpush1.msra.mxu0 %v2163
    %2201 = vmatprep.subr.mxu0 0.0
    %2202 = vmatpush1.msra.mxu0 %v2162
    %2203 = vmatprep.subr.mxu0 0.0
    %2204 = vmatpush1.msra.mxu0 %v2161
    %2205 = vmatprep.subr.mxu0 0.0
    %2206 = vmatpush1.msra.mxu0 %v2160
    %2207 = vmatprep.subr.mxu0 0.0
    %2208 = vmatpush2.msra.mxu0 0.0
    %2209 = vmatprep.subr.mxu0 0.0
    %2210 = vmatpush2.msra.mxu0 0.0
    %2211 = vmatprep.subr.mxu0 0.0
    %2212 = vmatpush2.msra.mxu0 0.0
    %2213 = vmatprep.subr.mxu0 0.0
    %2214 = vmatpush2.msra.mxu0 0.0
    %2215 = vmatprep.subr.mxu0 0.0
    %2216 = vmatpush2.msra.mxu0 0.0
    %2217 = vmatprep.subr.mxu0 0.0
    %2218 = vmatpush2.msra.mxu0 0.0
    %2219 = vmatprep.subr.mxu0 0.0
    %2220 = vmatpush2.msra.mxu0 0.0
    %2221 = vmatprep.subr.mxu0 0.0
    %2222 = vmatpush2.msra.mxu0 0.0
    %2223 = vmatprep.subr.mxu0 0.0
    %2224 = vmatpush2.msra.mxu0 0.0
    %2225 = vmatprep.subr.mxu0 0.0
    %2226 = vmatpush2.msra.mxu0 0.0
    %2227 = vmatprep.subr.mxu0 0.0
    %2228 = vmatpush2.msra.mxu0 0.0
    %2229 = vmatprep.subr.mxu0 0.0
    %2230 = vmatpush2.msra.mxu0 0.0
    %2231 = vmatprep.subr.mxu0 0.0
    %2232 = vmatpush2.msra.mxu0 0.0
    %2233 = vmatprep.subr.mxu0 0.0
    %2234 = vmatpush2.msra.mxu0 0.0
    %2235 = vmatprep.subr.mxu0 0.0
    %2236 = vmatpush2.msra.mxu0 0.0
    %2237 = vmatprep.subr.mxu0 0.0
    %2238 = vmatpush2.msra.mxu0 0.0
    %2239 = vmatprep.mubr.f32.mxu0 0.0
    %2240 = vmatmul.mubr.f32.gmra.mxu0 %v2170
    %v2241 = vpop.f32.mrf.mxu0
    %v2242 = vadd.f32 %v2168, %v2241
    %v2243 = vpop.f32.mrf.mxu0
    %2244 = vmatprep.mubr.f32.mxu0 0.0
    %2245 = vmatmul.mubr.f32.gmra.mxu0 %v2173
    %v2246 = vpop.f32.mrf.mxu0
    %v2247 = vadd.f32 %v2168, %v2246
    %v2248 = vpop.f32.mrf.mxu0
    %2249 = vdwg.mxu0
    %2250 = vmatprep.subr.mxu0 0.0
    %2251 = vmatpush1.msra.mxu0 0.0
    %2252 = vmatprep.subr.mxu0 0.0
    %2253 = vmatpush1.msra.mxu0 0.0
    %2254 = vmatprep.subr.mxu0 0.0
    %2255 = vmatpush1.msra.mxu0 0.0
    %2256 = vmatprep.subr.mxu0 0.0
    %2257 = vmatpush1.msra.mxu0 0.0
    %2258 = vmatprep.subr.mxu0 0.0
    %2259 = vmatpush1.msra.mxu0 0.0
    %2260 = vmatprep.subr.mxu0 0.0
    %2261 = vmatpush1.msra.mxu0 0.0
    %2262 = vmatprep.subr.mxu0 0.0
    %2263 = vmatpush1.msra.mxu0 0.0
    %2264 = vmatprep.subr.mxu0 0.0
    %2265 = vmatpush1.msra.mxu0 0.0
    %2266 = vmatprep.subr.mxu0 0.0
    %2267 = vmatpush1.msra.mxu0 0.0
    %2268 = vmatprep.subr.mxu0 0.0
    %2269 = vmatpush1.msra.mxu0 0.0
    %2270 = vmatprep.subr.mxu0 0.0
    %2271 = vmatpush1.msra.mxu0 0.0
    %2272 = vmatprep.subr.mxu0 0.0
    %2273 = vmatpush1.msra.mxu0 0.0
    %2274 = vmatprep.subr.mxu0 0.0
    %2275 = vmatpush1.msra.mxu0 0.0
    %2276 = vmatprep.subr.mxu0 0.0
    %2277 = vmatpush1.msra.mxu0 0.0
    %2278 = vmatprep.subr.mxu0 0.0
    %2279 = vmatpush1.msra.mxu0 %v2247
    %2280 = vmatprep.subr.mxu0 0.0
    %2281 = vmatpush1.msra.mxu0 %v2242
    %2282 = vmatprep.subr.mxu0 0.0
    %2283 = vmatpush2.msra.mxu0 0.0
    %2284 = vmatprep.subr.mxu0 0.0
    %2285 = vmatpush2.msra.mxu0 0.0
    %2286 = vmatprep.subr.mxu0 0.0
    %2287 = vmatpush2.msra.mxu0 0.0
    %2288 = vmatprep.subr.mxu0 0.0
    %2289 = vmatpush2.msra.mxu0 0.0
    %2290 = vmatprep.subr.mxu0 0.0
    %2291 = vmatpush2.msra.mxu0 0.0
    %2292 = vmatprep.subr.mxu0 0.0
    %2293 = vmatpush2.msra.mxu0 0.0
    %2294 = vmatprep.subr.mxu0 0.0
    %2295 = vmatpush2.msra.mxu0 0.0
    %2296 = vmatprep.subr.mxu0 0.0
    %2297 = vmatpush2.msra.mxu0 0.0
    %2298 = vmatprep.subr.mxu0 0.0
    %2299 = vmatpush2.msra.mxu0 0.0
    %2300 = vmatprep.subr.mxu0 0.0
    %2301 = vmatpush2.msra.mxu0 0.0
    %2302 = vmatprep.subr.mxu0 0.0
    %2303 = vmatpush2.msra.mxu0 0.0
    %2304 = vmatprep.subr.mxu0 0.0
    %2305 = vmatpush2.msra.mxu0 0.0
    %2306 = vmatprep.subr.mxu0 0.0
    %2307 = vmatpush2.msra.mxu0 0.0
    %2308 = vmatprep.subr.mxu0 0.0
    %2309 = vmatpush2.msra.mxu0 0.0
    %2310 = vmatprep.subr.mxu0 0.0
    %2311 = vmatpush2.msra.mxu0 0.0
    %2312 = vmatprep.subr.mxu0 0.0
    %2313 = vmatpush2.msra.mxu0 0.0
    %2314 = vmatprep.mubr.f32.mxu0 0.0
    %2315 = vmatmul.mubr.f32.gmra.mxu0 %v347
    %v2316 = vpop.f32.mrf.mxu0
    %v2317 = vadd.f32 0.0, %v2316
    %v2318 = vpop.f32.mrf.mxu0
    %2319 = vmatprep.mubr.f32.mxu0 0.0
    %2320 = vmatmul.mubr.f32.gmra.mxu0 %v350
    %v2321 = vpop.f32.mrf.mxu0
    %v2322 = vadd.f32 0.0, %v2321
    %v2323 = vpop.f32.mrf.mxu0
    %2324 = vmatprep.mubr.f32.mxu0 0.0
    %2325 = vmatmul.mubr.f32.gmra.mxu0 %v353
    %v2326 = vpop.f32.mrf.mxu0
    %v2327 = vadd.f32 0.0, %v2326
    %v2328 = vpop.f32.mrf.mxu0
    %2329 = vmatprep.mubr.f32.mxu0 0.0
    %2330 = vmatmul.mubr.f32.gmra.mxu0 %v356
    %v2331 = vpop.f32.mrf.mxu0
    %v2332 = vadd.f32 0.0, %v2331
    %v2333 = vpop.f32.mrf.mxu0
    %2334 = vmatprep.mubr.f32.mxu0 0.0
    %2335 = vmatmul.mubr.f32.gmra.mxu0 %v359
    %v2336 = vpop.f32.mrf.mxu0
    %v2337 = vadd.f32 0.0, %v2336
    %v2338 = vpop.f32.mrf.mxu0
    %2339 = vmatprep.mubr.f32.mxu0 0.0
    %2340 = vmatmul.mubr.f32.gmra.mxu0 %v362
    %v2341 = vpop.f32.mrf.mxu0
    %v2342 = vadd.f32 0.0, %v2341
    %v2343 = vpop.f32.mrf.mxu0
    %2344 = vmatprep.mubr.f32.mxu0 0.0
    %2345 = vmatmul.mubr.f32.gmra.mxu0 %v365
    %v2346 = vpop.f32.mrf.mxu0
    %v2347 = vadd.f32 0.0, %v2346
    %v2348 = vpop.f32.mrf.mxu0
    %2349 = vmatprep.mubr.f32.mxu0 0.0
    %2350 = vmatmul.mubr.f32.gmra.mxu0 %v368
    %v2351 = vpop.f32.mrf.mxu0
    %v2352 = vadd.f32 0.0, %v2351
    %v2353 = vpop.f32.mrf.mxu0
    %2354 = vdwg.mxu0
    %v2355 = vmul.f32 %v2317, %v42
    %v2356 = vmul.f32 %v2322, %v43
    %v2357 = vmul.f32 %v2327, %v44
    %v2358 = vmul.f32 %v2332, %v45
    %v2359 = vmul.f32 %v2337, %v46
    %v2360 = vmul.f32 %v2342, %v47
    %v2361 = vmul.f32 %v2347, %v48
    %v2362 = vmul.f32 %v2352, %v49
    %2365 = vrot.lane.b32.xlu0 %v2242, 96
    %v2366 = vpop.permute.xlu0 %2365
    %2367 = vrot.lane.b32.xlu0 %v2247, 96
    %v2368 = vpop.permute.xlu0 %2367
    %v2370 = vsel %vm171, %v2355, 0
    %v2373 = vsel %vm171, %v2356, 0
    %v2376 = vsel %vm171, %v2357, 0
    %v2379 = vsel %vm171, %v2358, 0
    %v2382 = vsel %vm171, %v2359, 0
    %v2385 = vsel %vm171, %v2360, 0
    %v2388 = vsel %vm171, %v2361, 0
    %v2391 = vsel %vm171, %v2362, 0
    %v2393 = vsel %vm171, %v2366, 0
    %v2395 = vsel %vm171, %v2368, 0
    %2397 = vmatprep.subr.mxu0 0.0
    %2398 = vmatpush1.xpose.msra.mxu0 0.0
    %2399 = vmatprep.subr.mxu0 0.0
    %2400 = vmatpush1.xpose.msra.mxu0 0.0
    %2401 = vmatprep.subr.mxu0 0.0
    %2402 = vmatpush1.xpose.msra.mxu0 0.0
    %2403 = vmatprep.subr.mxu0 0.0
    %2404 = vmatpush1.xpose.msra.mxu0 0.0
    %2405 = vmatprep.subr.mxu0 0.0
    %2406 = vmatpush1.xpose.msra.mxu0 0.0
    %2407 = vmatprep.subr.mxu0 0.0
    %2408 = vmatpush1.xpose.msra.mxu0 0.0
    %2409 = vmatprep.subr.mxu0 0.0
    %2410 = vmatpush1.xpose.msra.mxu0 0.0
    %2411 = vmatprep.subr.mxu0 0.0
    %2412 = vmatpush1.xpose.msra.mxu0 0.0
    %2413 = vmatprep.subr.mxu0 0.0
    %2414 = vmatpush1.xpose.msra.mxu0 0.0
    %2415 = vmatprep.subr.mxu0 0.0
    %2416 = vmatpush1.xpose.msra.mxu0 0.0
    %2417 = vmatprep.subr.mxu0 0.0
    %2418 = vmatpush1.xpose.msra.mxu0 0.0
    %2419 = vmatprep.subr.mxu0 0.0
    %2420 = vmatpush1.xpose.msra.mxu0 0.0
    %2421 = vmatprep.subr.mxu0 0.0
    %2422 = vmatpush1.xpose.msra.mxu0 0.0
    %2423 = vmatprep.subr.mxu0 0.0
    %2424 = vmatpush1.xpose.msra.mxu0 0.0
    %2425 = vmatprep.subr.mxu0 0.0
    %2426 = vmatpush1.xpose.msra.mxu0 %v2395
    %2427 = vmatprep.subr.mxu0 0.0
    %2428 = vmatpush1.xpose.msra.mxu0 %v2393
    %2429 = vmatprep.subr.mxu0 0.0
    %2430 = vmatpush2.xpose.msra.mxu0 0.0
    %2431 = vmatprep.subr.mxu0 0.0
    %2432 = vmatpush2.xpose.msra.mxu0 0.0
    %2433 = vmatprep.subr.mxu0 0.0
    %2434 = vmatpush2.xpose.msra.mxu0 0.0
    %2435 = vmatprep.subr.mxu0 0.0
    %2436 = vmatpush2.xpose.msra.mxu0 0.0
    %2437 = vmatprep.subr.mxu0 0.0
    %2438 = vmatpush2.xpose.msra.mxu0 0.0
    %2439 = vmatprep.subr.mxu0 0.0
    %2440 = vmatpush2.xpose.msra.mxu0 0.0
    %2441 = vmatprep.subr.mxu0 0.0
    %2442 = vmatpush2.xpose.msra.mxu0 0.0
    %2443 = vmatprep.subr.mxu0 0.0
    %2444 = vmatpush2.xpose.msra.mxu0 0.0
    %2445 = vmatprep.subr.mxu0 0.0
    %2446 = vmatpush2.xpose.msra.mxu0 0.0
    %2447 = vmatprep.subr.mxu0 0.0
    %2448 = vmatpush2.xpose.msra.mxu0 0.0
    %2449 = vmatprep.subr.mxu0 0.0
    %2450 = vmatpush2.xpose.msra.mxu0 0.0
    %2451 = vmatprep.subr.mxu0 0.0
    %2452 = vmatpush2.xpose.msra.mxu0 0.0
    %2453 = vmatprep.subr.mxu0 0.0
    %2454 = vmatpush2.xpose.msra.mxu0 0.0
    %2455 = vmatprep.subr.mxu0 0.0
    %2456 = vmatpush2.xpose.msra.mxu0 0.0
    %2457 = vmatprep.subr.mxu0 0.0
    %2458 = vmatpush2.xpose.msra.mxu0 0.0
    %2459 = vmatprep.subr.mxu0 0.0
    %2460 = vmatpush2.xpose.msra.mxu0 0.0
    %2461 = vmatprep.mubr.f32.mxu0 0.0
    %2462 = vmatmul.mubr.f32.gmra.mxu0 %v2370
    %v2463 = vpop.f32.mrf.mxu0
    %v2464 = vadd.f32 %v50, %v2463
    %v2465 = vpop.f32.mrf.mxu0
    %2466 = vmatprep.mubr.f32.mxu0 0.0
    %2467 = vmatmul.mubr.f32.gmra.mxu0 %v2373
    %v2468 = vpop.f32.mrf.mxu0
    %v2469 = vadd.f32 %v51, %v2468
    %v2470 = vpop.f32.mrf.mxu0
    %2471 = vmatprep.mubr.f32.mxu0 0.0
    %2472 = vmatmul.mubr.f32.gmra.mxu0 %v2376
    %v2473 = vpop.f32.mrf.mxu0
    %v2474 = vadd.f32 %v52, %v2473
    %v2475 = vpop.f32.mrf.mxu0
    %2476 = vmatprep.mubr.f32.mxu0 0.0
    %2477 = vmatmul.mubr.f32.gmra.mxu0 %v2379
    %v2478 = vpop.f32.mrf.mxu0
    %v2479 = vadd.f32 %v53, %v2478
    %v2480 = vpop.f32.mrf.mxu0
    %2481 = vmatprep.mubr.f32.mxu0 0.0
    %2482 = vmatmul.mubr.f32.gmra.mxu0 %v2382
    %v2483 = vpop.f32.mrf.mxu0
    %v2484 = vadd.f32 %v54, %v2483
    %v2485 = vpop.f32.mrf.mxu0
    %2486 = vmatprep.mubr.f32.mxu0 0.0
    %2487 = vmatmul.mubr.f32.gmra.mxu0 %v2385
    %v2488 = vpop.f32.mrf.mxu0
    %v2489 = vadd.f32 %v55, %v2488
    %v2490 = vpop.f32.mrf.mxu0
    %2491 = vmatprep.mubr.f32.mxu0 0.0
    %2492 = vmatmul.mubr.f32.gmra.mxu0 %v2388
    %v2493 = vpop.f32.mrf.mxu0
    %v2494 = vadd.f32 %v56, %v2493
    %v2495 = vpop.f32.mrf.mxu0
    %2496 = vmatprep.mubr.f32.mxu0 0.0
    %2497 = vmatmul.mubr.f32.gmra.mxu0 %v2391
    %v2498 = vpop.f32.mrf.mxu0
    %v2499 = vadd.f32 %v57, %v2498
    %v2500 = vpop.f32.mrf.mxu0
    %2501 = vdwg.mxu0
    %v2502 = vsel %vm345, %v2464, -inf
    %2503 = vmax.xlane.f32.xlu0 %v2502
    %v2504 = vpop.xlane.xlu0 %2503
    %v2505 = vsel %vm345, %v2469, -inf
    %2506 = vmax.xlane.f32.xlu0 %v2505
    %v2507 = vpop.xlane.xlu0 %2506
    %v2508 = vsel %vm345, %v2474, -inf
    %2509 = vmax.xlane.f32.xlu0 %v2508
    %v2510 = vpop.xlane.xlu0 %2509
    %v2511 = vsel %vm345, %v2479, -inf
    %2512 = vmax.xlane.f32.xlu0 %v2511
    %v2513 = vpop.xlane.xlu0 %2512
    %v2514 = vsel %vm345, %v2484, -inf
    %2515 = vmax.xlane.f32.xlu0 %v2514
    %v2516 = vpop.xlane.xlu0 %2515
    %v2517 = vsel %vm345, %v2489, -inf
    %2518 = vmax.xlane.f32.xlu0 %v2517
    %v2519 = vpop.xlane.xlu0 %2518
    %v2520 = vsel %vm345, %v2494, -inf
    %2521 = vmax.xlane.f32.xlu0 %v2520
    %v2522 = vpop.xlane.xlu0 %2521
    %v2523 = vsel %vm345, %v2499, -inf
    %2524 = vmax.xlane.f32.xlu0 %v2523
    %v2525 = vpop.xlane.xlu0 %2524
    %v2526 = vsub.f32 %v2464, %v2504
    %v2527 = vsub.f32 %v2469, %v2507
    %v2528 = vsub.f32 %v2474, %v2510
    %v2529 = vsub.f32 %v2479, %v2513
    %v2530 = vsub.f32 %v2484, %v2516
    %v2531 = vsub.f32 %v2489, %v2519
    %v2532 = vsub.f32 %v2494, %v2522
    %v2533 = vsub.f32 %v2499, %v2525
    %v2534 = vmul.f32 %v2526, 1.442695
    %v2535 = vpow.pop %v2534
    %v2536 = vmul.f32 %v2527, 1.442695
    %v2537 = vpow.pop %v2536
    %v2538 = vmul.f32 %v2528, 1.442695
    %v2539 = vpow.pop %v2538
    %v2540 = vmul.f32 %v2529, 1.442695
    %v2541 = vpow.pop %v2540
    %v2542 = vmul.f32 %v2530, 1.442695
    %v2543 = vpow.pop %v2542
    %v2544 = vmul.f32 %v2531, 1.442695
    %v2545 = vpow.pop %v2544
    %v2546 = vmul.f32 %v2532, 1.442695
    %v2547 = vpow.pop %v2546
    %v2548 = vmul.f32 %v2533, 1.442695
    %v2549 = vpow.pop %v2548
    %v2550 = vsel %vm345, %v2535, 0.0
    %2551 = vadd.xlane.f32.xlu0 %v2550
    %v2552 = vpop.xlane.xlu0 %2551
    %v2553 = vsel %vm345, %v2537, 0.0
    %2554 = vadd.xlane.f32.xlu0 %v2553
    %v2555 = vpop.xlane.xlu0 %2554
    %v2556 = vsel %vm345, %v2539, 0.0
    %2557 = vadd.xlane.f32.xlu0 %v2556
    %v2558 = vpop.xlane.xlu0 %2557
    %v2559 = vsel %vm345, %v2541, 0.0
    %2560 = vadd.xlane.f32.xlu0 %v2559
    %v2561 = vpop.xlane.xlu0 %2560
    %v2562 = vsel %vm345, %v2543, 0.0
    %2563 = vadd.xlane.f32.xlu0 %v2562
    %v2564 = vpop.xlane.xlu0 %2563
    %v2565 = vsel %vm345, %v2545, 0.0
    %2566 = vadd.xlane.f32.xlu0 %v2565
    %v2567 = vpop.xlane.xlu0 %2566
    %v2568 = vsel %vm345, %v2547, 0.0
    %2569 = vadd.xlane.f32.xlu0 %v2568
    %v2570 = vpop.xlane.xlu0 %2569
    %v2571 = vsel %vm345, %v2549, 0.0
    %2572 = vadd.xlane.f32.xlu0 %v2571
    %v2573 = vpop.xlane.xlu0 %2572
    %v2574 = vrcp.pop %v2552
    %v2575 = vrcp.pop %v2555
    %v2576 = vrcp.pop %v2558
    %v2577 = vrcp.pop %v2561
    %v2578 = vrcp.pop %v2564
    %v2579 = vrcp.pop %v2567
    %v2580 = vrcp.pop %v2570
    %v2581 = vrcp.pop %v2573
    %v2582 = vmul.f32 %v2535, %v2574
    %v2583 = vmul.f32 %v2537, %v2575
    %v2584 = vmul.f32 %v2539, %v2576
    %v2585 = vmul.f32 %v2541, %v2577
    %v2586 = vmul.f32 %v2543, %v2578
    %v2587 = vmul.f32 %v2545, %v2579
    %v2588 = vmul.f32 %v2547, %v2580
    %v2589 = vmul.f32 %v2549, %v2581
    %2590 = vrot.lane.b32.xlu0 %v2242, 64
    %v2591 = vpop.permute.xlu0 %2590
    %2592 = vrot.lane.b32.xlu0 %v2247, 64
    %v2593 = vpop.permute.xlu0 %2592
    %v2597 = vsel %vm345, %v2582, 0
    %v2600 = vsel %vm345, %v2583, 0
    %v2603 = vsel %vm345, %v2584, 0
    %v2606 = vsel %vm345, %v2585, 0
    %v2609 = vsel %vm345, %v2586, 0
    %v2612 = vsel %vm345, %v2587, 0
    %v2615 = vsel %vm345, %v2588, 0
    %v2618 = vsel %vm345, %v2589, 0
    %2620 = vmatprep.subr.mxu0 0.0
    %2621 = vmatpush1.msra.mxu0 0.0
    %2622 = vmatprep.subr.mxu0 0.0
    %2623 = vmatpush1.msra.mxu0 0.0
    %2624 = vmatprep.subr.mxu0 0.0
    %2625 = vmatpush1.msra.mxu0 0.0
    %2626 = vmatprep.subr.mxu0 0.0
    %2627 = vmatpush1.msra.mxu0 0.0
    %2628 = vmatprep.subr.mxu0 0.0
    %2629 = vmatpush1.msra.mxu0 0.0
    %2630 = vmatprep.subr.mxu0 0.0
    %2631 = vmatpush1.msra.mxu0 0.0
    %2632 = vmatprep.subr.mxu0 0.0
    %2633 = vmatpush1.msra.mxu0 0.0
    %2634 = vmatprep.subr.mxu0 0.0
    %2635 = vmatpush1.msra.mxu0 0.0
    %2636 = vmatprep.subr.mxu0 0.0
    %2637 = vmatpush1.msra.mxu0 0.0
    %2638 = vmatprep.subr.mxu0 0.0
    %2639 = vmatpush1.msra.mxu0 0.0
    %2640 = vmatprep.subr.mxu0 0.0
    %2641 = vmatpush1.msra.mxu0 0.0
    %2642 = vmatprep.subr.mxu0 0.0
    %2643 = vmatpush1.msra.mxu0 0.0
    %2644 = vmatprep.subr.mxu0 0.0
    %2645 = vmatpush1.msra.mxu0 0.0
    %2646 = vmatprep.subr.mxu0 0.0
    %2647 = vmatpush1.msra.mxu0 0.0
    %2648 = vmatprep.subr.mxu0 0.0
    %2649 = vmatpush1.msra.mxu0 %v2593
    %2650 = vmatprep.subr.mxu0 0.0
    %2651 = vmatpush1.msra.mxu0 %v2591
    %2652 = vmatprep.subr.mxu0 0.0
    %2653 = vmatpush2.msra.mxu0 0.0
    %2654 = vmatprep.subr.mxu0 0.0
    %2655 = vmatpush2.msra.mxu0 0.0
    %2656 = vmatprep.subr.mxu0 0.0
    %2657 = vmatpush2.msra.mxu0 0.0
    %2658 = vmatprep.subr.mxu0 0.0
    %2659 = vmatpush2.msra.mxu0 0.0
    %2660 = vmatprep.subr.mxu0 0.0
    %2661 = vmatpush2.msra.mxu0 0.0
    %2662 = vmatprep.subr.mxu0 0.0
    %2663 = vmatpush2.msra.mxu0 0.0
    %2664 = vmatprep.subr.mxu0 0.0
    %2665 = vmatpush2.msra.mxu0 0.0
    %2666 = vmatprep.subr.mxu0 0.0
    %2667 = vmatpush2.msra.mxu0 0.0
    %2668 = vmatprep.subr.mxu0 0.0
    %2669 = vmatpush2.msra.mxu0 0.0
    %2670 = vmatprep.subr.mxu0 0.0
    %2671 = vmatpush2.msra.mxu0 0.0
    %2672 = vmatprep.subr.mxu0 0.0
    %2673 = vmatpush2.msra.mxu0 0.0
    %2674 = vmatprep.subr.mxu0 0.0
    %2675 = vmatpush2.msra.mxu0 0.0
    %2676 = vmatprep.subr.mxu0 0.0
    %2677 = vmatpush2.msra.mxu0 0.0
    %2678 = vmatprep.subr.mxu0 0.0
    %2679 = vmatpush2.msra.mxu0 0.0
    %2680 = vmatprep.subr.mxu0 0.0
    %2681 = vmatpush2.msra.mxu0 0.0
    %2682 = vmatprep.subr.mxu0 0.0
    %2683 = vmatpush2.msra.mxu0 0.0
    %2684 = vmatprep.mubr.f32.mxu0 0.0
    %2685 = vmatmul.mubr.f32.gmra.mxu0 %v2597
    %v2686 = vpop.f32.mrf.mxu0
    %v2687 = vadd.f32 0.0, %v2686
    %v2688 = vpop.f32.mrf.mxu0
    %2689 = vmatprep.mubr.f32.mxu0 0.0
    %2690 = vmatmul.mubr.f32.gmra.mxu0 %v2600
    %v2691 = vpop.f32.mrf.mxu0
    %v2692 = vadd.f32 0.0, %v2691
    %v2693 = vpop.f32.mrf.mxu0
    %2694 = vmatprep.mubr.f32.mxu0 0.0
    %2695 = vmatmul.mubr.f32.gmra.mxu0 %v2603
    %v2696 = vpop.f32.mrf.mxu0
    %v2697 = vadd.f32 0.0, %v2696
    %v2698 = vpop.f32.mrf.mxu0
    %2699 = vmatprep.mubr.f32.mxu0 0.0
    %2700 = vmatmul.mubr.f32.gmra.mxu0 %v2606
    %v2701 = vpop.f32.mrf.mxu0
    %v2702 = vadd.f32 0.0, %v2701
    %v2703 = vpop.f32.mrf.mxu0
    %2704 = vmatprep.mubr.f32.mxu0 0.0
    %2705 = vmatmul.mubr.f32.gmra.mxu0 %v2609
    %v2706 = vpop.f32.mrf.mxu0
    %v2707 = vadd.f32 0.0, %v2706
    %v2708 = vpop.f32.mrf.mxu0
    %2709 = vmatprep.mubr.f32.mxu0 0.0
    %2710 = vmatmul.mubr.f32.gmra.mxu0 %v2612
    %v2711 = vpop.f32.mrf.mxu0
    %v2712 = vadd.f32 0.0, %v2711
    %v2713 = vpop.f32.mrf.mxu0
    %2714 = vmatprep.mubr.f32.mxu0 0.0
    %2715 = vmatmul.mubr.f32.gmra.mxu0 %v2615
    %v2716 = vpop.f32.mrf.mxu0
    %v2717 = vadd.f32 0.0, %v2716
    %v2718 = vpop.f32.mrf.mxu0
    %2719 = vmatprep.mubr.f32.mxu0 0.0
    %2720 = vmatmul.mubr.f32.gmra.mxu0 %v2618
    %v2721 = vpop.f32.mrf.mxu0
    %v2722 = vadd.f32 0.0, %v2721
    %v2723 = vpop.f32.mrf.mxu0
    %2724 = vdwg.mxu0
    %v2725 = vmul.f32 %v2687, %v42
    %v2726 = vmul.f32 %v2692, %v43
    %v2727 = vmul.f32 %v2697, %v44
    %v2728 = vmul.f32 %v2702, %v45
    %v2729 = vmul.f32 %v2707, %v46
    %v2730 = vmul.f32 %v2712, %v47
    %v2731 = vmul.f32 %v2717, %v48
    %v2732 = vmul.f32 %v2722, %v49
    %v2733 = vadd.f32 %v2725, %v2727
    %v2734 = vadd.f32 %v2726, %v2728
    %v2735 = vadd.f32 %v2733, %v2729
    %v2736 = vadd.f32 %v2734, %v2730
    %v2737 = vadd.f32 %v2735, %v2731
    %v2738 = vadd.f32 %v2736, %v2732
    %v2739 = vld [vmem:[#allocation2 + $0x188] sm:$0xff]
    %v2740 = vld [vmem:[#allocation2 + $0x190] sm:$0xff]
    %v2741 = vld [vmem:[#allocation2 + $0x198] sm:$0xff]
    %v2742 = vld [vmem:[#allocation2 + $0x1a0] sm:$0xff]
    %v2743 = vld [vmem:[#allocation4 + $0x13] sm:$0x1]
    %v2744 = vlaneseq
    %v2745 = vshrl.u32 %v2744, 7
    %v2746 = vsub.s32 0, %v2745
    %v2747 = vrot.slane %v2743, %v2746
    %v2749 = vsel %vm171, %v2737, 0
    %v2752 = vsel %vm171, %v2738, 0
    %2754 = vmatprep.subr.mxu0 0.0
    %2755 = vmatpush1.msra.mxu0 0.0
    %2756 = vmatprep.subr.mxu0 0.0
    %2757 = vmatpush1.msra.mxu0 0.0
    %2758 = vmatprep.subr.mxu0 0.0
    %2759 = vmatpush1.msra.mxu0 0.0
    %2760 = vmatprep.subr.mxu0 0.0
    %2761 = vmatpush1.msra.mxu0 0.0
    %2762 = vmatprep.subr.mxu0 0.0
    %2763 = vmatpush1.msra.mxu0 0.0
    %2764 = vmatprep.subr.mxu0 0.0
    %2765 = vmatpush1.msra.mxu0 0.0
    %2766 = vmatprep.subr.mxu0 0.0
    %2767 = vmatpush1.msra.mxu0 0.0
    %2768 = vmatprep.subr.mxu0 0.0
    %2769 = vmatpush1.msra.mxu0 0.0
    %2770 = vmatprep.subr.mxu0 0.0
    %2771 = vmatpush1.msra.mxu0 0.0
    %2772 = vmatprep.subr.mxu0 0.0
    %2773 = vmatpush1.msra.mxu0 0.0
    %2774 = vmatprep.subr.mxu0 0.0
    %2775 = vmatpush1.msra.mxu0 0.0
    %2776 = vmatprep.subr.mxu0 0.0
    %2777 = vmatpush1.msra.mxu0 0.0
    %2778 = vmatprep.subr.mxu0 0.0
    %2779 = vmatpush1.msra.mxu0 %v2742
    %2780 = vmatprep.subr.mxu0 0.0
    %2781 = vmatpush1.msra.mxu0 %v2741
    %2782 = vmatprep.subr.mxu0 0.0
    %2783 = vmatpush1.msra.mxu0 %v2740
    %2784 = vmatprep.subr.mxu0 0.0
    %2785 = vmatpush1.msra.mxu0 %v2739
    %2786 = vmatprep.subr.mxu0 0.0
    %2787 = vmatpush2.msra.mxu0 0.0
    %2788 = vmatprep.subr.mxu0 0.0
    %2789 = vmatpush2.msra.mxu0 0.0
    %2790 = vmatprep.subr.mxu0 0.0
    %2791 = vmatpush2.msra.mxu0 0.0
    %2792 = vmatprep.subr.mxu0 0.0
    %2793 = vmatpush2.msra.mxu0 0.0
    %2794 = vmatprep.subr.mxu0 0.0
    %2795 = vmatpush2.msra.mxu0 0.0
    %2796 = vmatprep.subr.mxu0 0.0
    %2797 = vmatpush2.msra.mxu0 0.0
    %2798 = vmatprep.subr.mxu0 0.0
    %2799 = vmatpush2.msra.mxu0 0.0
    %2800 = vmatprep.subr.mxu0 0.0
    %2801 = vmatpush2.msra.mxu0 0.0
    %2802 = vmatprep.subr.mxu0 0.0
    %2803 = vmatpush2.msra.mxu0 0.0
    %2804 = vmatprep.subr.mxu0 0.0
    %2805 = vmatpush2.msra.mxu0 0.0
    %2806 = vmatprep.subr.mxu0 0.0
    %2807 = vmatpush2.msra.mxu0 0.0
    %2808 = vmatprep.subr.mxu0 0.0
    %2809 = vmatpush2.msra.mxu0 0.0
    %2810 = vmatprep.subr.mxu0 0.0
    %2811 = vmatpush2.msra.mxu0 0.0
    %2812 = vmatprep.subr.mxu0 0.0
    %2813 = vmatpush2.msra.mxu0 0.0
    %2814 = vmatprep.subr.mxu0 0.0
    %2815 = vmatpush2.msra.mxu0 0.0
    %2816 = vmatprep.subr.mxu0 0.0
    %2817 = vmatpush2.msra.mxu0 0.0
    %2818 = vmatprep.mubr.f32.mxu0 0.0
    %2819 = vmatmul.mubr.f32.gmra.mxu0 %v2749
    %v2820 = vpop.f32.mrf.mxu0
    %v2821 = vadd.f32 %v2747, %v2820
    %v2822 = vpop.f32.mrf.mxu0
    %2823 = vmatprep.mubr.f32.mxu0 0.0
    %2824 = vmatmul.mubr.f32.gmra.mxu0 %v2752
    %v2825 = vpop.f32.mrf.mxu0
    %v2826 = vadd.f32 %v2747, %v2825
    %v2827 = vpop.f32.mrf.mxu0
    %2828 = vdwg.mxu0
    %v2829 = vadd.f32 %v2158, %v2821
    %v2830 = vadd.f32 %v2159, %v2826
    %v2831 = vsel %vm171, %v2829, 0.0
    %2832 = vadd.xlane.f32.xlu0 %v2831
    %v2833 = vpop.xlane.xlu0 %2832
    %v2834 = vsel %vm171, %v2830, 0.0
    %2835 = vadd.xlane.f32.xlu0 %v2834
    %v2836 = vpop.xlane.xlu0 %2835
    %v2837 = vmul.f32 %v2833, %v957
    %v2838 = vmul.f32 %v2836, %v957
    %v2839 = vsub.f32 %v2829, %v2837
    %v2840 = vsub.f32 %v2830, %v2838
    %v2841 = vmul.f32 %v2839, %v2839
    %v2842 = vmul.f32 %v2840, %v2840
    %v2843 = vsel %vm171, %v2841, 0.0
    %2844 = vadd.xlane.f32.xlu0 %v2843
    %v2845 = vpop.xlane.xlu0 %2844
    %v2846 = vsel %vm171, %v2842, 0.0
    %2847 = vadd.xlane.f32.xlu0 %v2846
    %v2848 = vpop.xlane.xlu0 %2847
    %v2849 = vmul.f32 %v2845, %v957
    %v2850 = vmul.f32 %v2848, %v957
    %v2851 = vadd.f32 %v2849, 1e-05
    %v2852 = vadd.f32 %v2850, 1e-05
    %v2853 = vrsqrt.pop %v2851
    %v2854 = vrsqrt.pop %v2852
    %v2855 = vmul.f32 %v2839, %v2853
    %v2856 = vmul.f32 %v2840, %v2854
    %v2857 = vld [vmem:[#allocation4 + $0x17] sm:$0x1]
    %v2858 = vlaneseq
    %v2859 = vshrl.u32 %v2858, 7
    %v2860 = vsub.s32 0, %v2859
    %v2861 = vrot.slane %v2857, %v2860
    %v2862 = vmul.f32 %v2855, %v2861
    %v2863 = vmul.f32 %v2856, %v2861
    %v2864 = vld [vmem:[#allocation4 + $0x18] sm:$0x1]
    %v2865 = vlaneseq
    %v2866 = vshrl.u32 %v2865, 7
    %v2867 = vsub.s32 0, %v2866
    %v2868 = vrot.slane %v2864, %v2867
    %v2869 = vadd.f32 %v2862, %v2868
    %v2870 = vadd.f32 %v2863, %v2868
    %v2871 = vld [vmem:[#allocation2 + $0x1a8] sm:$0xff]
    %v2872 = vld [vmem:[#allocation2 + $0x1b0] sm:$0xff]
    %v2873 = vld [vmem:[#allocation2 + $0x1b8] sm:$0xff]
    %v2874 = vld [vmem:[#allocation2 + $0x1c0] sm:$0xff]
    %v2875 = vld [vmem:[#allocation4 + $0x14] sm:$0x1]
    %v2876 = vlaneseq
    %v2877 = vshrl.u32 %v2876, 7
    %v2878 = vsub.s32 0, %v2877
    %v2879 = vrot.slane %v2875, %v2878
    %v2881 = vsel %vm171, %v2869, 0
    %v2884 = vsel %vm171, %v2870, 0
    %2886 = vmatprep.subr.mxu0 0.0
    %2887 = vmatpush1.msra.mxu0 0.0
    %2888 = vmatprep.subr.mxu0 0.0
    %2889 = vmatpush1.msra.mxu0 0.0
    %2890 = vmatprep.subr.mxu0 0.0
    %2891 = vmatpush1.msra.mxu0 0.0
    %2892 = vmatprep.subr.mxu0 0.0
    %2893 = vmatpush1.msra.mxu0 0.0
    %2894 = vmatprep.subr.mxu0 0.0
    %2895 = vmatpush1.msra.mxu0 0.0
    %2896 = vmatprep.subr.mxu0 0.0
    %2897 = vmatpush1.msra.mxu0 0.0
    %2898 = vmatprep.subr.mxu0 0.0
    %2899 = vmatpush1.msra.mxu0 0.0
    %2900 = vmatprep.subr.mxu0 0.0
    %2901 = vmatpush1.msra.mxu0 0.0
    %2902 = vmatprep.subr.mxu0 0.0
    %2903 = vmatpush1.msra.mxu0 0.0
    %2904 = vmatprep.subr.mxu0 0.0
    %2905 = vmatpush1.msra.mxu0 0.0
    %2906 = vmatprep.subr.mxu0 0.0
    %2907 = vmatpush1.msra.mxu0 0.0
    %2908 = vmatprep.subr.mxu0 0.0
    %2909 = vmatpush1.msra.mxu0 0.0
    %2910 = vmatprep.subr.mxu0 0.0
    %2911 = vmatpush1.msra.mxu0 %v2874
    %2912 = vmatprep.subr.mxu0 0.0
    %2913 = vmatpush1.msra.mxu0 %v2873
    %2914 = vmatprep.subr.mxu0 0.0
    %2915 = vmatpush1.msra.mxu0 %v2872
    %2916 = vmatprep.subr.mxu0 0.0
    %2917 = vmatpush1.msra.mxu0 %v2871
    %2918 = vmatprep.subr.mxu0 0.0
    %2919 = vmatpush2.msra.mxu0 0.0
    %2920 = vmatprep.subr.mxu0 0.0
    %2921 = vmatpush2.msra.mxu0 0.0
    %2922 = vmatprep.subr.mxu0 0.0
    %2923 = vmatpush2.msra.mxu0 0.0
    %2924 = vmatprep.subr.mxu0 0.0
    %2925 = vmatpush2.msra.mxu0 0.0
    %2926 = vmatprep.subr.mxu0 0.0
    %2927 = vmatpush2.msra.mxu0 0.0
    %2928 = vmatprep.subr.mxu0 0.0
    %2929 = vmatpush2.msra.mxu0 0.0
    %2930 = vmatprep.subr.mxu0 0.0
    %2931 = vmatpush2.msra.mxu0 0.0
    %2932 = vmatprep.subr.mxu0 0.0
    %2933 = vmatpush2.msra.mxu0 0.0
    %2934 = vmatprep.subr.mxu0 0.0
    %2935 = vmatpush2.msra.mxu0 0.0
    %2936 = vmatprep.subr.mxu0 0.0
    %2937 = vmatpush2.msra.mxu0 0.0
    %2938 = vmatprep.subr.mxu0 0.0
    %2939 = vmatpush2.msra.mxu0 0.0
    %2940 = vmatprep.subr.mxu0 0.0
    %2941 = vmatpush2.msra.mxu0 0.0
    %2942 = vmatprep.subr.mxu0 0.0
    %2943 = vmatpush2.msra.mxu0 0.0
    %2944 = vmatprep.subr.mxu0 0.0
    %2945 = vmatpush2.msra.mxu0 0.0
    %2946 = vmatprep.subr.mxu0 0.0
    %2947 = vmatpush2.msra.mxu0 0.0
    %2948 = vmatprep.subr.mxu0 0.0
    %2949 = vmatpush2.msra.mxu0 0.0
    %2950 = vmatprep.mubr.f32.mxu0 0.0
    %2951 = vmatmul.mubr.f32.gmra.mxu0 %v2881
    %v2952 = vpop.f32.mrf.mxu0
    %v2953 = vadd.f32 %v2879, %v2952
    %v2954 = vpop.f32.mrf.mxu0
    %2955 = vmatprep.mubr.f32.mxu0 0.0
    %2956 = vmatmul.mubr.f32.gmra.mxu0 %v2884
    %v2957 = vpop.f32.mrf.mxu0
    %v2958 = vadd.f32 %v2879, %v2957
    %v2959 = vpop.f32.mrf.mxu0
    %2960 = vdwg.mxu0
    %v2961 = vld [vmem:[#allocation2 + $0x1c8] sm:$0xff]
    %v2962 = vld [vmem:[#allocation2 + $0x1d0] sm:$0xff]
    %v2963 = vld [vmem:[#allocation2 + $0x1d8] sm:$0xff]
    %v2964 = vld [vmem:[#allocation2 + $0x1e0] sm:$0xff]
    %v2965 = vld [vmem:[#allocation4 + $0x15] sm:$0x1]
    %v2966 = vlaneseq
    %v2967 = vshrl.u32 %v2966, 7
    %v2968 = vsub.s32 0, %v2967
    %v2969 = vrot.slane %v2965, %v2968
    %2970 = vmatprep.subr.mxu0 0.0
    %2971 = vmatpush1.msra.mxu0 0.0
    %2972 = vmatprep.subr.mxu0 0.0
    %2973 = vmatpush1.msra.mxu0 0.0
    %2974 = vmatprep.subr.mxu0 0.0
    %2975 = vmatpush1.msra.mxu0 0.0
    %2976 = vmatprep.subr.mxu0 0.0
    %2977 = vmatpush1.msra.mxu0 0.0
    %2978 = vmatprep.subr.mxu0 0.0
    %2979 = vmatpush1.msra.mxu0 0.0
    %2980 = vmatprep.subr.mxu0 0.0
    %2981 = vmatpush1.msra.mxu0 0.0
    %2982 = vmatprep.subr.mxu0 0.0
    %2983 = vmatpush1.msra.mxu0 0.0
    %2984 = vmatprep.subr.mxu0 0.0
    %2985 = vmatpush1.msra.mxu0 0.0
    %2986 = vmatprep.subr.mxu0 0.0
    %2987 = vmatpush1.msra.mxu0 0.0
    %2988 = vmatprep.subr.mxu0 0.0
    %2989 = vmatpush1.msra.mxu0 0.0
    %2990 = vmatprep.subr.mxu0 0.0
    %2991 = vmatpush1.msra.mxu0 0.0
    %2992 = vmatprep.subr.mxu0 0.0
    %2993 = vmatpush1.msra.mxu0 0.0
    %2994 = vmatprep.subr.mxu0 0.0
    %2995 = vmatpush1.msra.mxu0 %v2964
    %2996 = vmatprep.subr.mxu0 0.0
    %2997 = vmatpush1.msra.mxu0 %v2963
    %2998 = vmatprep.subr.mxu0 0.0
    %2999 = vmatpush1.msra.mxu0 %v2962
    %3000 = vmatprep.subr.mxu0 0.0
    %3001 = vmatpush1.msra.mxu0 %v2961
    %3002 = vmatprep.subr.mxu0 0.0
    %3003 = vmatpush2.msra.mxu0 0.0
    %3004 = vmatprep.subr.mxu0 0.0
    %3005 = vmatpush2.msra.mxu0 0.0
    %3006 = vmatprep.subr.mxu0 0.0
    %3007 = vmatpush2.msra.mxu0 0.0
    %3008 = vmatprep.subr.mxu0 0.0
    %3009 = vmatpush2.msra.mxu0 0.0
    %3010 = vmatprep.subr.mxu0 0.0
    %3011 = vmatpush2.msra.mxu0 0.0
    %3012 = vmatprep.subr.mxu0 0.0
    %3013 = vmatpush2.msra.mxu0 0.0
    %3014 = vmatprep.subr.mxu0 0.0
    %3015 = vmatpush2.msra.mxu0 0.0
    %3016 = vmatprep.subr.mxu0 0.0
    %3017 = vmatpush2.msra.mxu0 0.0
    %3018 = vmatprep.subr.mxu0 0.0
    %3019 = vmatpush2.msra.mxu0 0.0
    %3020 = vmatprep.subr.mxu0 0.0
    %3021 = vmatpush2.msra.mxu0 0.0
    %3022 = vmatprep.subr.mxu0 0.0
    %3023 = vmatpush2.msra.mxu0 0.0
    %3024 = vmatprep.subr.mxu0 0.0
    %3025 = vmatpush2.msra.mxu0 0.0
    %3026 = vmatprep.subr.mxu0 0.0
    %3027 = vmatpush2.msra.mxu0 0.0
    %3028 = vmatprep.subr.mxu0 0.0
    %3029 = vmatpush2.msra.mxu0 0.0
    %3030 = vmatprep.subr.mxu0 0.0
    %3031 = vmatpush2.msra.mxu0 0.0
    %3032 = vmatprep.subr.mxu0 0.0
    %3033 = vmatpush2.msra.mxu0 0.0
    %3034 = vmatprep.mubr.f32.mxu0 0.0
    %3035 = vmatmul.mubr.f32.gmra.mxu0 %v2170
    %v3036 = vpop.f32.mrf.mxu0
    %v3037 = vadd.f32 %v2969, %v3036
    %v3038 = vpop.f32.mrf.mxu0
    %3039 = vmatprep.mubr.f32.mxu0 0.0
    %3040 = vmatmul.mubr.f32.gmra.mxu0 %v2173
    %v3041 = vpop.f32.mrf.mxu0
    %v3042 = vadd.f32 %v2969, %v3041
    %v3043 = vpop.f32.mrf.mxu0
    %3044 = vdwg.mxu0
    %3045 = vmatprep.subr.mxu0 0.0
    %3046 = vmatpush1.msra.mxu0 0.0
    %3047 = vmatprep.subr.mxu0 0.0
    %3048 = vmatpush1.msra.mxu0 0.0
    %3049 = vmatprep.subr.mxu0 0.0
    %3050 = vmatpush1.msra.mxu0 0.0
    %3051 = vmatprep.subr.mxu0 0.0
    %3052 = vmatpush1.msra.mxu0 0.0
    %3053 = vmatprep.subr.mxu0 0.0
    %3054 = vmatpush1.msra.mxu0 0.0
    %3055 = vmatprep.subr.mxu0 0.0
    %3056 = vmatpush1.msra.mxu0 0.0
    %3057 = vmatprep.subr.mxu0 0.0
    %3058 = vmatpush1.msra.mxu0 0.0
    %3059 = vmatprep.subr.mxu0 0.0
    %3060 = vmatpush1.msra.mxu0 0.0
    %3061 = vmatprep.subr.mxu0 0.0
    %3062 = vmatpush1.msra.mxu0 0.0
    %3063 = vmatprep.subr.mxu0 0.0
    %3064 = vmatpush1.msra.mxu0 0.0
    %3065 = vmatprep.subr.mxu0 0.0
    %3066 = vmatpush1.msra.mxu0 0.0
    %3067 = vmatprep.subr.mxu0 0.0
    %3068 = vmatpush1.msra.mxu0 0.0
    %3069 = vmatprep.subr.mxu0 0.0
    %3070 = vmatpush1.msra.mxu0 0.0
    %3071 = vmatprep.subr.mxu0 0.0
    %3072 = vmatpush1.msra.mxu0 0.0
    %3073 = vmatprep.subr.mxu0 0.0
    %3074 = vmatpush1.msra.mxu0 %v2958
    %3075 = vmatprep.subr.mxu0 0.0
    %3076 = vmatpush1.msra.mxu0 %v2953
    %3077 = vmatprep.subr.mxu0 0.0
    %3078 = vmatpush2.msra.mxu0 0.0
    %3079 = vmatprep.subr.mxu0 0.0
    %3080 = vmatpush2.msra.mxu0 0.0
    %3081 = vmatprep.subr.mxu0 0.0
    %3082 = vmatpush2.msra.mxu0 0.0
    %3083 = vmatprep.subr.mxu0 0.0
    %3084 = vmatpush2.msra.mxu0 0.0
    %3085 = vmatprep.subr.mxu0 0.0
    %3086 = vmatpush2.msra.mxu0 0.0
    %3087 = vmatprep.subr.mxu0 0.0
    %3088 = vmatpush2.msra.mxu0 0.0
    %3089 = vmatprep.subr.mxu0 0.0
    %3090 = vmatpush2.msra.mxu0 0.0
    %3091 = vmatprep.subr.mxu0 0.0
    %3092 = vmatpush2.msra.mxu0 0.0
    %3093 = vmatprep.subr.mxu0 0.0
    %3094 = vmatpush2.msra.mxu0 0.0
    %3095 = vmatprep.subr.mxu0 0.0
    %3096 = vmatpush2.msra.mxu0 0.0
    %3097 = vmatprep.subr.mxu0 0.0
    %3098 = vmatpush2.msra.mxu0 0.0
    %3099 = vmatprep.subr.mxu0 0.0
    %3100 = vmatpush2.msra.mxu0 0.0
    %3101 = vmatprep.subr.mxu0 0.0
    %3102 = vmatpush2.msra.mxu0 0.0
    %3103 = vmatprep.subr.mxu0 0.0
    %3104 = vmatpush2.msra.mxu0 0.0
    %3105 = vmatprep.subr.mxu0 0.0
    %3106 = vmatpush2.msra.mxu0 0.0
    %3107 = vmatprep.subr.mxu0 0.0
    %3108 = vmatpush2.msra.mxu0 0.0
    %3109 = vmatprep.mubr.f32.mxu0 0.0
    %3110 = vmatmul.mubr.f32.gmra.mxu0 %v347
    %v3111 = vpop.f32.mrf.mxu0
    %v3112 = vadd.f32 0.0, %v3111
    %v3113 = vpop.f32.mrf.mxu0
    %3114 = vmatprep.mubr.f32.mxu0 0.0
    %3115 = vmatmul.mubr.f32.gmra.mxu0 %v350
    %v3116 = vpop.f32.mrf.mxu0
    %v3117 = vadd.f32 0.0, %v3116
    %v3118 = vpop.f32.mrf.mxu0
    %3119 = vmatprep.mubr.f32.mxu0 0.0
    %3120 = vmatmul.mubr.f32.gmra.mxu0 %v353
    %v3121 = vpop.f32.mrf.mxu0
    %v3122 = vadd.f32 0.0, %v3121
    %v3123 = vpop.f32.mrf.mxu0
    %3124 = vmatprep.mubr.f32.mxu0 0.0
    %3125 = vmatmul.mubr.f32.gmra.mxu0 %v356
    %v3126 = vpop.f32.mrf.mxu0
    %v3127 = vadd.f32 0.0, %v3126
    %v3128 = vpop.f32.mrf.mxu0
    %3129 = vmatprep.mubr.f32.mxu0 0.0
    %3130 = vmatmul.mubr.f32.gmra.mxu0 %v359
    %v3131 = vpop.f32.mrf.mxu0
    %v3132 = vadd.f32 0.0, %v3131
    %v3133 = vpop.f32.mrf.mxu0
    %3134 = vmatprep.mubr.f32.mxu0 0.0
    %3135 = vmatmul.mubr.f32.gmra.mxu0 %v362
    %v3136 = vpop.f32.mrf.mxu0
    %v3137 = vadd.f32 0.0, %v3136
    %v3138 = vpop.f32.mrf.mxu0
    %3139 = vmatprep.mubr.f32.mxu0 0.0
    %3140 = vmatmul.mubr.f32.gmra.mxu0 %v365
    %v3141 = vpop.f32.mrf.mxu0
    %v3142 = vadd.f32 0.0, %v3141
    %v3143 = vpop.f32.mrf.mxu0
    %3144 = vmatprep.mubr.f32.mxu0 0.0
    %3145 = vmatmul.mubr.f32.gmra.mxu0 %v368
    %v3146 = vpop.f32.mrf.mxu0
    %v3147 = vadd.f32 0.0, %v3146
    %v3148 = vpop.f32.mrf.mxu0
    %3149 = vdwg.mxu0
    %v3150 = vmul.f32 %v3112, %v42
    %v3151 = vmul.f32 %v3117, %v43
    %v3152 = vmul.f32 %v3122, %v44
    %v3153 = vmul.f32 %v3127, %v45
    %v3154 = vmul.f32 %v3132, %v46
    %v3155 = vmul.f32 %v3137, %v47
    %v3156 = vmul.f32 %v3142, %v48
    %v3157 = vmul.f32 %v3147, %v49
    %v3159 = vsel %vm171, %v3150, 0
    %v3162 = vsel %vm171, %v3151, 0
    %v3165 = vsel %vm171, %v3152, 0
    %v3168 = vsel %vm171, %v3153, 0
    %v3171 = vsel %vm171, %v3154, 0
    %v3174 = vsel %vm171, %v3155, 0
    %v3177 = vsel %vm171, %v3156, 0
    %v3180 = vsel %vm171, %v3157, 0
    %v3183 = vsel %vm171, %v3037, 0
    %v3186 = vsel %vm171, %v3042, 0
    %3188 = vmatprep.subr.mxu0 0.0
    %3189 = vmatpush1.xpose.msra.mxu0 0.0
    %3190 = vmatprep.subr.mxu0 0.0
    %3191 = vmatpush1.xpose.msra.mxu0 0.0
    %3192 = vmatprep.subr.mxu0 0.0
    %3193 = vmatpush1.xpose.msra.mxu0 0.0
    %3194 = vmatprep.subr.mxu0 0.0
    %3195 = vmatpush1.xpose.msra.mxu0 0.0
    %3196 = vmatprep.subr.mxu0 0.0
    %3197 = vmatpush1.xpose.msra.mxu0 0.0
    %3198 = vmatprep.subr.mxu0 0.0
    %3199 = vmatpush1.xpose.msra.mxu0 0.0
    %3200 = vmatprep.subr.mxu0 0.0
    %3201 = vmatpush1.xpose.msra.mxu0 0.0
    %3202 = vmatprep.subr.mxu0 0.0
    %3203 = vmatpush1.xpose.msra.mxu0 0.0
    %3204 = vmatprep.subr.mxu0 0.0
    %3205 = vmatpush1.xpose.msra.mxu0 0.0
    %3206 = vmatprep.subr.mxu0 0.0
    %3207 = vmatpush1.xpose.msra.mxu0 0.0
    %3208 = vmatprep.subr.mxu0 0.0
    %3209 = vmatpush1.xpose.msra.mxu0 0.0
    %3210 = vmatprep.subr.mxu0 0.0
    %3211 = vmatpush1.xpose.msra.mxu0 0.0
    %3212 = vmatprep.subr.mxu0 0.0
    %3213 = vmatpush1.xpose.msra.mxu0 0.0
    %3214 = vmatprep.subr.mxu0 0.0
    %3215 = vmatpush1.xpose.msra.mxu0 0.0
    %3216 = vmatprep.subr.mxu0 0.0
    %3217 = vmatpush1.xpose.msra.mxu0 %v3186
    %3218 = vmatprep.subr.mxu0 0.0
    %3219 = vmatpush1.xpose.msra.mxu0 %v3183
    %3220 = vmatprep.subr.mxu0 0.0
    %3221 = vmatpush2.xpose.msra.mxu0 0.0
    %3222 = vmatprep.subr.mxu0 0.0
    %3223 = vmatpush2.xpose.msra.mxu0 0.0
    %3224 = vmatprep.subr.mxu0 0.0
    %3225 = vmatpush2.xpose.msra.mxu0 0.0
    %3226 = vmatprep.subr.mxu0 0.0
    %3227 = vmatpush2.xpose.msra.mxu0 0.0
    %3228 = vmatprep.subr.mxu0 0.0
    %3229 = vmatpush2.xpose.msra.mxu0 0.0
    %3230 = vmatprep.subr.mxu0 0.0
    %3231 = vmatpush2.xpose.msra.mxu0 0.0
    %3232 = vmatprep.subr.mxu0 0.0
    %3233 = vmatpush2.xpose.msra.mxu0 0.0
    %3234 = vmatprep.subr.mxu0 0.0
    %3235 = vmatpush2.xpose.msra.mxu0 0.0
    %3236 = vmatprep.subr.mxu0 0.0
    %3237 = vmatpush2.xpose.msra.mxu0 0.0
    %3238 = vmatprep.subr.mxu0 0.0
    %3239 = vmatpush2.xpose.msra.mxu0 0.0
    %3240 = vmatprep.subr.mxu0 0.0
    %3241 = vmatpush2.xpose.msra.mxu0 0.0
    %3242 = vmatprep.subr.mxu0 0.0
    %3243 = vmatpush2.xpose.msra.mxu0 0.0
    %3244 = vmatprep.subr.mxu0 0.0
    %3245 = vmatpush2.xpose.msra.mxu0 0.0
    %3246 = vmatprep.subr.mxu0 0.0
    %3247 = vmatpush2.xpose.msra.mxu0 0.0
    %3248 = vmatprep.subr.mxu0 0.0
    %3249 = vmatpush2.xpose.msra.mxu0 0.0
    %3250 = vmatprep.subr.mxu0 0.0
    %3251 = vmatpush2.xpose.msra.mxu0 0.0
    %3252 = vmatprep.mubr.f32.mxu0 0.0
    %3253 = vmatmul.mubr.f32.gmra.mxu0 %v3159
    %v3254 = vpop.f32.mrf.mxu0
    %v3255 = vadd.f32 %v50, %v3254
    %v3256 = vpop.f32.mrf.mxu0
    %3257 = vmatprep.mubr.f32.mxu0 0.0
    %3258 = vmatmul.mubr.f32.gmra.mxu0 %v3162
    %v3259 = vpop.f32.mrf.mxu0
    %v3260 = vadd.f32 %v51, %v3259
    %v3261 = vpop.f32.mrf.mxu0
    %3262 = vmatprep.mubr.f32.mxu0 0.0
    %3263 = vmatmul.mubr.f32.gmra.mxu0 %v3165
    %v3264 = vpop.f32.mrf.mxu0
    %v3265 = vadd.f32 %v52, %v3264
    %v3266 = vpop.f32.mrf.mxu0
    %3267 = vmatprep.mubr.f32.mxu0 0.0
    %3268 = vmatmul.mubr.f32.gmra.mxu0 %v3168
    %v3269 = vpop.f32.mrf.mxu0
    %v3270 = vadd.f32 %v53, %v3269
    %v3271 = vpop.f32.mrf.mxu0
    %3272 = vmatprep.mubr.f32.mxu0 0.0
    %3273 = vmatmul.mubr.f32.gmra.mxu0 %v3171
    %v3274 = vpop.f32.mrf.mxu0
    %v3275 = vadd.f32 %v54, %v3274
    %v3276 = vpop.f32.mrf.mxu0
    %3277 = vmatprep.mubr.f32.mxu0 0.0
    %3278 = vmatmul.mubr.f32.gmra.mxu0 %v3174
    %v3279 = vpop.f32.mrf.mxu0
    %v3280 = vadd.f32 %v55, %v3279
    %v3281 = vpop.f32.mrf.mxu0
    %3282 = vmatprep.mubr.f32.mxu0 0.0
    %3283 = vmatmul.mubr.f32.gmra.mxu0 %v3177
    %v3284 = vpop.f32.mrf.mxu0
    %v3285 = vadd.f32 %v56, %v3284
    %v3286 = vpop.f32.mrf.mxu0
    %3287 = vmatprep.mubr.f32.mxu0 0.0
    %3288 = vmatmul.mubr.f32.gmra.mxu0 %v3180
    %v3289 = vpop.f32.mrf.mxu0
    %v3290 = vadd.f32 %v57, %v3289
    %v3291 = vpop.f32.mrf.mxu0
    %3292 = vdwg.mxu0
    %v3293 = vsel %vm345, %v3255, -inf
    %3294 = vmax.xlane.f32.xlu0 %v3293
    %v3295 = vpop.xlane.xlu0 %3294
    %v3296 = vsel %vm345, %v3260, -inf
    %3297 = vmax.xlane.f32.xlu0 %v3296
    %v3298 = vpop.xlane.xlu0 %3297
    %v3299 = vsel %vm345, %v3265, -inf
    %3300 = vmax.xlane.f32.xlu0 %v3299
    %v3301 = vpop.xlane.xlu0 %3300
    %v3302 = vsel %vm345, %v3270, -inf
    %3303 = vmax.xlane.f32.xlu0 %v3302
    %v3304 = vpop.xlane.xlu0 %3303
    %v3305 = vsel %vm345, %v3275, -inf
    %3306 = vmax.xlane.f32.xlu0 %v3305
    %v3307 = vpop.xlane.xlu0 %3306
    %v3308 = vsel %vm345, %v3280, -inf
    %3309 = vmax.xlane.f32.xlu0 %v3308
    %v3310 = vpop.xlane.xlu0 %3309
    %v3311 = vsel %vm345, %v3285, -inf
    %3312 = vmax.xlane.f32.xlu0 %v3311
    %v3313 = vpop.xlane.xlu0 %3312
    %v3314 = vsel %vm345, %v3290, -inf
    %3315 = vmax.xlane.f32.xlu0 %v3314
    %v3316 = vpop.xlane.xlu0 %3315
    %v3317 = vsub.f32 %v3255, %v3295
    %v3318 = vsub.f32 %v3260, %v3298
    %v3319 = vsub.f32 %v3265, %v3301
    %v3320 = vsub.f32 %v3270, %v3304
    %v3321 = vsub.f32 %v3275, %v3307
    %v3322 = vsub.f32 %v3280, %v3310
    %v3323 = vsub.f32 %v3285, %v3313
    %v3324 = vsub.f32 %v3290, %v3316
    %v3325 = vmul.f32 %v3317, 1.442695
    %v3326 = vpow.pop %v3325
    %v3327 = vmul.f32 %v3318, 1.442695
    %v3328 = vpow.pop %v3327
    %v3329 = vmul.f32 %v3319, 1.442695
    %v3330 = vpow.pop %v3329
    %v3331 = vmul.f32 %v3320, 1.442695
    %v3332 = vpow.pop %v3331
    %v3333 = vmul.f32 %v3321, 1.442695
    %v3334 = vpow.pop %v3333
    %v3335 = vmul.f32 %v3322, 1.442695
    %v3336 = vpow.pop %v3335
    %v3337 = vmul.f32 %v3323, 1.442695
    %v3338 = vpow.pop %v3337
    %v3339 = vmul.f32 %v3324, 1.442695
    %v3340 = vpow.pop %v3339
    %v3341 = vsel %vm345, %v3326, 0.0
    %3342 = vadd.xlane.f32.xlu0 %v3341
    %v3343 = vpop.xlane.xlu0 %3342
    %v3344 = vsel %vm345, %v3328, 0.0
    %3345 = vadd.xlane.f32.xlu0 %v3344
    %v3346 = vpop.xlane.xlu0 %3345
    %v3347 = vsel %vm345, %v3330, 0.0
    %3348 = vadd.xlane.f32.xlu0 %v3347
    %v3349 = vpop.xlane.xlu0 %3348
    %v3350 = vsel %vm345, %v3332, 0.0
    %3351 = vadd.xlane.f32.xlu0 %v3350
    %v3352 = vpop.xlane.xlu0 %3351
    %v3353 = vsel %vm345, %v3334, 0.0
    %3354 = vadd.xlane.f32.xlu0 %v3353
    %v3355 = vpop.xlane.xlu0 %3354
    %v3356 = vsel %vm345, %v3336, 0.0
    %3357 = vadd.xlane.f32.xlu0 %v3356
    %v3358 = vpop.xlane.xlu0 %3357
    %v3359 = vsel %vm345, %v3338, 0.0
    %3360 = vadd.xlane.f32.xlu0 %v3359
    %v3361 = vpop.xlane.xlu0 %3360
    %v3362 = vsel %vm345, %v3340, 0.0
    %3363 = vadd.xlane.f32.xlu0 %v3362
    %v3364 = vpop.xlane.xlu0 %3363
    %v3365 = vrcp.pop %v3343
    %v3366 = vrcp.pop %v3346
    %v3367 = vrcp.pop %v3349
    %v3368 = vrcp.pop %v3352
    %v3369 = vrcp.pop %v3355
    %v3370 = vrcp.pop %v3358
    %v3371 = vrcp.pop %v3361
    %v3372 = vrcp.pop %v3364
    %v3373 = vmul.f32 %v3326, %v3365
    %v3374 = vmul.f32 %v3328, %v3366
    %v3375 = vmul.f32 %v3330, %v3367
    %v3376 = vmul.f32 %v3332, %v3368
    %v3377 = vmul.f32 %v3334, %v3369
    %v3378 = vmul.f32 %v3336, %v3370
    %v3379 = vmul.f32 %v3338, %v3371
    %v3380 = vmul.f32 %v3340, %v3372
    %3381 = vrot.lane.b32.xlu0 %v3037, 96
    %v3382 = vpop.permute.xlu0 %3381
    %3383 = vrot.lane.b32.xlu0 %v3042, 96
    %v3384 = vpop.permute.xlu0 %3383
    %v3388 = vsel %vm345, %v3373, 0
    %v3391 = vsel %vm345, %v3374, 0
    %v3394 = vsel %vm345, %v3375, 0
    %v3397 = vsel %vm345, %v3376, 0
    %v3400 = vsel %vm345, %v3377, 0
    %v3403 = vsel %vm345, %v3378, 0
    %v3406 = vsel %vm345, %v3379, 0
    %v3409 = vsel %vm345, %v3380, 0
    %3411 = vmatprep.subr.mxu0 0.0
    %3412 = vmatpush1.msra.mxu0 0.0
    %3413 = vmatprep.subr.mxu0 0.0
    %3414 = vmatpush1.msra.mxu0 0.0
    %3415 = vmatprep.subr.mxu0 0.0
    %3416 = vmatpush1.msra.mxu0 0.0
    %3417 = vmatprep.subr.mxu0 0.0
    %3418 = vmatpush1.msra.mxu0 0.0
    %3419 = vmatprep.subr.mxu0 0.0
    %3420 = vmatpush1.msra.mxu0 0.0
    %3421 = vmatprep.subr.mxu0 0.0
    %3422 = vmatpush1.msra.mxu0 0.0
    %3423 = vmatprep.subr.mxu0 0.0
    %3424 = vmatpush1.msra.mxu0 0.0
    %3425 = vmatprep.subr.mxu0 0.0
    %3426 = vmatpush1.msra.mxu0 0.0
    %3427 = vmatprep.subr.mxu0 0.0
    %3428 = vmatpush1.msra.mxu0 0.0
    %3429 = vmatprep.subr.mxu0 0.0
    %3430 = vmatpush1.msra.mxu0 0.0
    %3431 = vmatprep.subr.mxu0 0.0
    %3432 = vmatpush1.msra.mxu0 0.0
    %3433 = vmatprep.subr.mxu0 0.0
    %3434 = vmatpush1.msra.mxu0 0.0
    %3435 = vmatprep.subr.mxu0 0.0
    %3436 = vmatpush1.msra.mxu0 0.0
    %3437 = vmatprep.subr.mxu0 0.0
    %3438 = vmatpush1.msra.mxu0 0.0
    %3439 = vmatprep.subr.mxu0 0.0
    %3440 = vmatpush1.msra.mxu0 %v3384
    %3441 = vmatprep.subr.mxu0 0.0
    %3442 = vmatpush1.msra.mxu0 %v3382
    %3443 = vmatprep.subr.mxu0 0.0
    %3444 = vmatpush2.msra.mxu0 0.0
    %3445 = vmatprep.subr.mxu0 0.0
    %3446 = vmatpush2.msra.mxu0 0.0
    %3447 = vmatprep.subr.mxu0 0.0
    %3448 = vmatpush2.msra.mxu0 0.0
    %3449 = vmatprep.subr.mxu0 0.0
    %3450 = vmatpush2.msra.mxu0 0.0
    %3451 = vmatprep.subr.mxu0 0.0
    %3452 = vmatpush2.msra.mxu0 0.0
    %3453 = vmatprep.subr.mxu0 0.0
    %3454 = vmatpush2.msra.mxu0 0.0
    %3455 = vmatprep.subr.mxu0 0.0
    %3456 = vmatpush2.msra.mxu0 0.0
    %3457 = vmatprep.subr.mxu0 0.0
    %3458 = vmatpush2.msra.mxu0 0.0
    %3459 = vmatprep.subr.mxu0 0.0
    %3460 = vmatpush2.msra.mxu0 0.0
    %3461 = vmatprep.subr.mxu0 0.0
    %3462 = vmatpush2.msra.mxu0 0.0
    %3463 = vmatprep.subr.mxu0 0.0
    %3464 = vmatpush2.msra.mxu0 0.0
    %3465 = vmatprep.subr.mxu0 0.0
    %3466 = vmatpush2.msra.mxu0 0.0
    %3467 = vmatprep.subr.mxu0 0.0
    %3468 = vmatpush2.msra.mxu0 0.0
    %3469 = vmatprep.subr.mxu0 0.0
    %3470 = vmatpush2.msra.mxu0 0.0
    %3471 = vmatprep.subr.mxu0 0.0
    %3472 = vmatpush2.msra.mxu0 0.0
    %3473 = vmatprep.subr.mxu0 0.0
    %3474 = vmatpush2.msra.mxu0 0.0
    %3475 = vmatprep.mubr.f32.mxu0 0.0
    %3476 = vmatmul.mubr.f32.gmra.mxu0 %v3388
    %v3477 = vpop.f32.mrf.mxu0
    %v3478 = vadd.f32 0.0, %v3477
    %v3479 = vpop.f32.mrf.mxu0
    %3480 = vmatprep.mubr.f32.mxu0 0.0
    %3481 = vmatmul.mubr.f32.gmra.mxu0 %v3391
    %v3482 = vpop.f32.mrf.mxu0
    %v3483 = vadd.f32 0.0, %v3482
    %v3484 = vpop.f32.mrf.mxu0
    %3485 = vmatprep.mubr.f32.mxu0 0.0
    %3486 = vmatmul.mubr.f32.gmra.mxu0 %v3394
    %v3487 = vpop.f32.mrf.mxu0
    %v3488 = vadd.f32 0.0, %v3487
    %v3489 = vpop.f32.mrf.mxu0
    %3490 = vmatprep.mubr.f32.mxu0 0.0
    %3491 = vmatmul.mubr.f32.gmra.mxu0 %v3397
    %v3492 = vpop.f32.mrf.mxu0
    %v3493 = vadd.f32 0.0, %v3492
    %v3494 = vpop.f32.mrf.mxu0
    %3495 = vmatprep.mubr.f32.mxu0 0.0
    %3496 = vmatmul.mubr.f32.gmra.mxu0 %v3400
    %v3497 = vpop.f32.mrf.mxu0
    %v3498 = vadd.f32 0.0, %v3497
    %v3499 = vpop.f32.mrf.mxu0
    %3500 = vmatprep.mubr.f32.mxu0 0.0
    %3501 = vmatmul.mubr.f32.gmra.mxu0 %v3403
    %v3502 = vpop.f32.mrf.mxu0
    %v3503 = vadd.f32 0.0, %v3502
    %v3504 = vpop.f32.mrf.mxu0
    %3505 = vmatprep.mubr.f32.mxu0 0.0
    %3506 = vmatmul.mubr.f32.gmra.mxu0 %v3406
    %v3507 = vpop.f32.mrf.mxu0
    %v3508 = vadd.f32 0.0, %v3507
    %v3509 = vpop.f32.mrf.mxu0
    %3510 = vmatprep.mubr.f32.mxu0 0.0
    %3511 = vmatmul.mubr.f32.gmra.mxu0 %v3409
    %v3512 = vpop.f32.mrf.mxu0
    %v3513 = vadd.f32 0.0, %v3512
    %v3514 = vpop.f32.mrf.mxu0
    %3515 = vdwg.mxu0
    %v3516 = vmul.f32 %v3478, %v42
    %v3517 = vmul.f32 %v3483, %v43
    %v3518 = vmul.f32 %v3488, %v44
    %v3519 = vmul.f32 %v3493, %v45
    %v3520 = vmul.f32 %v3498, %v46
    %v3521 = vmul.f32 %v3503, %v47
    %v3522 = vmul.f32 %v3508, %v48
    %v3523 = vmul.f32 %v3513, %v49
    %v3524 = vadd.f32 %v3516, %v3518
    %v3525 = vadd.f32 %v3517, %v3519
    %v3526 = vadd.f32 %v3524, %v3520
    %v3527 = vadd.f32 %v3525, %v3521
    %v3528 = vadd.f32 %v3526, %v3522
    %v3529 = vadd.f32 %v3527, %v3523
    %v3530 = vld [vmem:[#allocation2 + $0x1e8] sm:$0xff]
    %v3531 = vld [vmem:[#allocation2 + $0x1f0] sm:$0xff]
    %v3532 = vld [vmem:[#allocation2 + $0x1f8] sm:$0xff]
    %v3533 = vld [vmem:[#allocation2 + $0x200] sm:$0xff]
    %v3534 = vld [vmem:[#allocation4 + $0x16] sm:$0x1]
    %v3535 = vlaneseq
    %v3536 = vshrl.u32 %v3535, 7
    %v3537 = vsub.s32 0, %v3536
    %v3538 = vrot.slane %v3534, %v3537
    %v3540 = vsel %vm171, %v3528, 0
    %v3543 = vsel %vm171, %v3529, 0
    %3545 = vmatprep.subr.mxu0 0.0
    %3546 = vmatpush1.msra.mxu0 0.0
    %3547 = vmatprep.subr.mxu0 0.0
    %3548 = vmatpush1.msra.mxu0 0.0
    %3549 = vmatprep.subr.mxu0 0.0
    %3550 = vmatpush1.msra.mxu0 0.0
    %3551 = vmatprep.subr.mxu0 0.0
    %3552 = vmatpush1.msra.mxu0 0.0
    %3553 = vmatprep.subr.mxu0 0.0
    %3554 = vmatpush1.msra.mxu0 0.0
    %3555 = vmatprep.subr.mxu0 0.0
    %3556 = vmatpush1.msra.mxu0 0.0
    %3557 = vmatprep.subr.mxu0 0.0
    %3558 = vmatpush1.msra.mxu0 0.0
    %3559 = vmatprep.subr.mxu0 0.0
    %3560 = vmatpush1.msra.mxu0 0.0
    %3561 = vmatprep.subr.mxu0 0.0
    %3562 = vmatpush1.msra.mxu0 0.0
    %3563 = vmatprep.subr.mxu0 0.0
    %3564 = vmatpush1.msra.mxu0 0.0
    %3565 = vmatprep.subr.mxu0 0.0
    %3566 = vmatpush1.msra.mxu0 0.0
    %3567 = vmatprep.subr.mxu0 0.0
    %3568 = vmatpush1.msra.mxu0 0.0
    %3569 = vmatprep.subr.mxu0 0.0
    %3570 = vmatpush1.msra.mxu0 %v3533
    %3571 = vmatprep.subr.mxu0 0.0
    %3572 = vmatpush1.msra.mxu0 %v3532
    %3573 = vmatprep.subr.mxu0 0.0
    %3574 = vmatpush1.msra.mxu0 %v3531
    %3575 = vmatprep.subr.mxu0 0.0
    %3576 = vmatpush1.msra.mxu0 %v3530
    %3577 = vmatprep.subr.mxu0 0.0
    %3578 = vmatpush2.msra.mxu0 0.0
    %3579 = vmatprep.subr.mxu0 0.0
    %3580 = vmatpush2.msra.mxu0 0.0
    %3581 = vmatprep.subr.mxu0 0.0
    %3582 = vmatpush2.msra.mxu0 0.0
    %3583 = vmatprep.subr.mxu0 0.0
    %3584 = vmatpush2.msra.mxu0 0.0
    %3585 = vmatprep.subr.mxu0 0.0
    %3586 = vmatpush2.msra.mxu0 0.0
    %3587 = vmatprep.subr.mxu0 0.0
    %3588 = vmatpush2.msra.mxu0 0.0
    %3589 = vmatprep.subr.mxu0 0.0
    %3590 = vmatpush2.msra.mxu0 0.0
    %3591 = vmatprep.subr.mxu0 0.0
    %3592 = vmatpush2.msra.mxu0 0.0
    %3593 = vmatprep.subr.mxu0 0.0
    %3594 = vmatpush2.msra.mxu0 0.0
    %3595 = vmatprep.subr.mxu0 0.0
    %3596 = vmatpush2.msra.mxu0 0.0
    %3597 = vmatprep.subr.mxu0 0.0
    %3598 = vmatpush2.msra.mxu0 0.0
    %3599 = vmatprep.subr.mxu0 0.0
    %3600 = vmatpush2.msra.mxu0 0.0
    %3601 = vmatprep.subr.mxu0 0.0
    %3602 = vmatpush2.msra.mxu0 0.0
    %3603 = vmatprep.subr.mxu0 0.0
    %3604 = vmatpush2.msra.mxu0 0.0
    %3605 = vmatprep.subr.mxu0 0.0
    %3606 = vmatpush2.msra.mxu0 0.0
    %3607 = vmatprep.subr.mxu0 0.0
    %3608 = vmatpush2.msra.mxu0 0.0
    %3609 = vmatprep.mubr.f32.mxu0 0.0
    %3610 = vmatmul.mubr.f32.gmra.mxu0 %v3540
    %v3611 = vpop.f32.mrf.mxu0
    %v3612 = vadd.f32 %v3538, %v3611
    %v3613 = vpop.f32.mrf.mxu0
    %3614 = vmatprep.mubr.f32.mxu0 0.0
    %3615 = vmatmul.mubr.f32.gmra.mxu0 %v3543
    %v3616 = vpop.f32.mrf.mxu0
    %v3617 = vadd.f32 %v3538, %v3616
    %v3618 = vpop.f32.mrf.mxu0
    %3619 = vdwg.mxu0
    %v3620 = vadd.f32 %v2869, %v3612
    %v3621 = vadd.f32 %v2870, %v3617
    %v3622 = vsel %vm171, %v3620, 0.0
    %3623 = vadd.xlane.f32.xlu0 %v3622
    %v3624 = vpop.xlane.xlu0 %3623
    %v3625 = vsel %vm171, %v3621, 0.0
    %3626 = vadd.xlane.f32.xlu0 %v3625
    %v3627 = vpop.xlane.xlu0 %3626
    %v3628 = vmul.f32 %v3624, %v957
    %v3629 = vmul.f32 %v3627, %v957
    %v3630 = vsub.f32 %v3620, %v3628
    %v3631 = vsub.f32 %v3621, %v3629
    %v3632 = vmul.f32 %v3630, %v3630
    %v3633 = vmul.f32 %v3631, %v3631
    %v3634 = vsel %vm171, %v3632, 0.0
    %3635 = vadd.xlane.f32.xlu0 %v3634
    %v3636 = vpop.xlane.xlu0 %3635
    %v3637 = vsel %vm171, %v3633, 0.0
    %3638 = vadd.xlane.f32.xlu0 %v3637
    %v3639 = vpop.xlane.xlu0 %3638
    %v3640 = vmul.f32 %v3636, %v957
    %v3641 = vmul.f32 %v3639, %v957
    %v3642 = vadd.f32 %v3640, 1e-05
    %v3643 = vadd.f32 %v3641, 1e-05
    %v3644 = vrsqrt.pop %v3642
    %v3645 = vrsqrt.pop %v3643
    %v3646 = vmul.f32 %v3630, %v3644
    %v3647 = vmul.f32 %v3631, %v3645
    %v3648 = vld [vmem:[#allocation4 + $0x19] sm:$0x1]
    %v3649 = vlaneseq
    %v3650 = vshrl.u32 %v3649, 7
    %v3651 = vsub.s32 0, %v3650
    %v3652 = vrot.slane %v3648, %v3651
    %v3653 = vmul.f32 %v3646, %v3652
    %v3654 = vmul.f32 %v3647, %v3652
    %v3655 = vld [vmem:[#allocation4 + $0x1a] sm:$0x1]
    %v3656 = vlaneseq
    %v3657 = vshrl.u32 %v3656, 7
    %v3658 = vsub.s32 0, %v3657
    %v3659 = vrot.slane %v3655, %v3658
    %v3660 = vadd.f32 %v3653, %v3659
    %v3661 = vadd.f32 %v3654, %v3659
    %v3662 = vld [vmem:[#allocation2 + $0x208] sm:$0xff]
    %v3663 = vld [vmem:[#allocation2 + $0x210] sm:$0xff]
    %v3664 = vld [vmem:[#allocation2 + $0x218] sm:$0xff]
    %v3665 = vld [vmem:[#allocation2 + $0x220] sm:$0xff]
    %v3666 = vld [vmem:[#allocation4 + $0x1d] sm:$0x1]
    %v3667 = vlaneseq
    %v3668 = vshrl.u32 %v3667, 7
    %v3669 = vsub.s32 0, %v3668
    %v3670 = vrot.slane %v3666, %v3669
    %v3672 = vsel %vm171, %v3660, 0
    %v3675 = vsel %vm171, %v3661, 0
    %3677 = vmatprep.subr.mxu0 0.0
    %3678 = vmatpush1.msra.mxu0 0.0
    %3679 = vmatprep.subr.mxu0 0.0
    %3680 = vmatpush1.msra.mxu0 0.0
    %3681 = vmatprep.subr.mxu0 0.0
    %3682 = vmatpush1.msra.mxu0 0.0
    %3683 = vmatprep.subr.mxu0 0.0
    %3684 = vmatpush1.msra.mxu0 0.0
    %3685 = vmatprep.subr.mxu0 0.0
    %3686 = vmatpush1.msra.mxu0 0.0
    %3687 = vmatprep.subr.mxu0 0.0
    %3688 = vmatpush1.msra.mxu0 0.0
    %3689 = vmatprep.subr.mxu0 0.0
    %3690 = vmatpush1.msra.mxu0 0.0
    %3691 = vmatprep.subr.mxu0 0.0
    %3692 = vmatpush1.msra.mxu0 0.0
    %3693 = vmatprep.subr.mxu0 0.0
    %3694 = vmatpush1.msra.mxu0 0.0
    %3695 = vmatprep.subr.mxu0 0.0
    %3696 = vmatpush1.msra.mxu0 0.0
    %3697 = vmatprep.subr.mxu0 0.0
    %3698 = vmatpush1.msra.mxu0 0.0
    %3699 = vmatprep.subr.mxu0 0.0
    %3700 = vmatpush1.msra.mxu0 0.0
    %3701 = vmatprep.subr.mxu0 0.0
    %3702 = vmatpush1.msra.mxu0 %v3665
    %3703 = vmatprep.subr.mxu0 0.0
    %3704 = vmatpush1.msra.mxu0 %v3664
    %3705 = vmatprep.subr.mxu0 0.0
    %3706 = vmatpush1.msra.mxu0 %v3663
    %3707 = vmatprep.subr.mxu0 0.0
    %3708 = vmatpush1.msra.mxu0 %v3662
    %3709 = vmatprep.subr.mxu0 0.0
    %3710 = vmatpush2.msra.mxu0 0.0
    %3711 = vmatprep.subr.mxu0 0.0
    %3712 = vmatpush2.msra.mxu0 0.0
    %3713 = vmatprep.subr.mxu0 0.0
    %3714 = vmatpush2.msra.mxu0 0.0
    %3715 = vmatprep.subr.mxu0 0.0
    %3716 = vmatpush2.msra.mxu0 0.0
    %3717 = vmatprep.subr.mxu0 0.0
    %3718 = vmatpush2.msra.mxu0 0.0
    %3719 = vmatprep.subr.mxu0 0.0
    %3720 = vmatpush2.msra.mxu0 0.0
    %3721 = vmatprep.subr.mxu0 0.0
    %3722 = vmatpush2.msra.mxu0 0.0
    %3723 = vmatprep.subr.mxu0 0.0
    %3724 = vmatpush2.msra.mxu0 0.0
    %3725 = vmatprep.subr.mxu0 0.0
    %3726 = vmatpush2.msra.mxu0 0.0
    %3727 = vmatprep.subr.mxu0 0.0
    %3728 = vmatpush2.msra.mxu0 0.0
    %3729 = vmatprep.subr.mxu0 0.0
    %3730 = vmatpush2.msra.mxu0 0.0
    %3731 = vmatprep.subr.mxu0 0.0
    %3732 = vmatpush2.msra.mxu0 0.0
    %3733 = vmatprep.subr.mxu0 0.0
    %3734 = vmatpush2.msra.mxu0 0.0
    %3735 = vmatprep.subr.mxu0 0.0
    %3736 = vmatpush2.msra.mxu0 0.0
    %3737 = vmatprep.subr.mxu0 0.0
    %3738 = vmatpush2.msra.mxu0 0.0
    %3739 = vmatprep.subr.mxu0 0.0
    %3740 = vmatpush2.msra.mxu0 0.0
    %3741 = vmatprep.mubr.f32.mxu0 0.0
    %3742 = vmatmul.mubr.f32.gmra.mxu0 %v3672
    %v3743 = vpop.f32.mrf.mxu0
    %v3744 = vadd.f32 %v3670, %v3743
    %v3745 = vpop.f32.mrf.mxu0
    %3746 = vmatprep.mubr.f32.mxu0 0.0
    %3747 = vmatmul.mubr.f32.gmra.mxu0 %v3675
    %v3748 = vpop.f32.mrf.mxu0
    %v3749 = vadd.f32 %v3670, %v3748
    %v3750 = vpop.f32.mrf.mxu0
    %3751 = vdwg.mxu0
    %v3752 = vmax.f32 %v3744, 0.0
    %v3753 = vmax.f32 %v3749, 0.0
    %v3754 = vld [vmem:[#allocation2 + $0x228] sm:$0xff]
    %v3755 = vld [vmem:[#allocation2 + $0x230] sm:$0xff]
    %v3756 = vld [vmem:[#allocation2 + $0x238] sm:$0xff]
    %v3757 = vld [vmem:[#allocation2 + $0x240] sm:$0xff]
    %v3758 = vld [vmem:[#allocation2 + $0x248] sm:$0xff]
    %v3759 = vld [vmem:[#allocation2 + $0x250] sm:$0xff]
    %v3760 = vld [vmem:[#allocation2 + $0x258] sm:$0xff]
    %v3761 = vld [vmem:[#allocation2 + $0x260] sm:$0xff]
    %v3762 = vld [vmem:[#allocation4 + $0x1e] sm:$0x1]
    %v3763 = vlaneseq
    %v3764 = vshrl.u32 %v3763, 7
    %v3765 = vsub.s32 0, %v3764
    %v3766 = vrot.slane %v3762, %v3765
    %v3768 = vsel %vm1097, %v3752, 0
    %v3771 = vsel %vm1097, %v3753, 0
    %3773 = vmatprep.subr.mxu0 0.0
    %3774 = vmatpush1.msra.mxu0 0.0
    %3775 = vmatprep.subr.mxu0 0.0
    %3776 = vmatpush1.msra.mxu0 0.0
    %3777 = vmatprep.subr.mxu0 0.0
    %3778 = vmatpush1.msra.mxu0 0.0
    %3779 = vmatprep.subr.mxu0 0.0
    %3780 = vmatpush1.msra.mxu0 0.0
    %3781 = vmatprep.subr.mxu0 0.0
    %3782 = vmatpush1.msra.mxu0 0.0
    %3783 = vmatprep.subr.mxu0 0.0
    %3784 = vmatpush1.msra.mxu0 0.0
    %3785 = vmatprep.subr.mxu0 0.0
    %3786 = vmatpush1.msra.mxu0 0.0
    %3787 = vmatprep.subr.mxu0 0.0
    %3788 = vmatpush1.msra.mxu0 0.0
    %3789 = vmatprep.subr.mxu0 0.0
    %3790 = vmatpush1.msra.mxu0 %v3761
    %3791 = vmatprep.subr.mxu0 0.0
    %3792 = vmatpush1.msra.mxu0 %v3760
    %3793 = vmatprep.subr.mxu0 0.0
    %3794 = vmatpush1.msra.mxu0 %v3759
    %3795 = vmatprep.subr.mxu0 0.0
    %3796 = vmatpush1.msra.mxu0 %v3758
    %3797 = vmatprep.subr.mxu0 0.0
    %3798 = vmatpush1.msra.mxu0 %v3757
    %3799 = vmatprep.subr.mxu0 0.0
    %3800 = vmatpush1.msra.mxu0 %v3756
    %3801 = vmatprep.subr.mxu0 0.0
    %3802 = vmatpush1.msra.mxu0 %v3755
    %3803 = vmatprep.subr.mxu0 0.0
    %3804 = vmatpush1.msra.mxu0 %v3754
    %3805 = vmatprep.subr.mxu0 0.0
    %3806 = vmatpush2.msra.mxu0 0.0
    %3807 = vmatprep.subr.mxu0 0.0
    %3808 = vmatpush2.msra.mxu0 0.0
    %3809 = vmatprep.subr.mxu0 0.0
    %3810 = vmatpush2.msra.mxu0 0.0
    %3811 = vmatprep.subr.mxu0 0.0
    %3812 = vmatpush2.msra.mxu0 0.0
    %3813 = vmatprep.subr.mxu0 0.0
    %3814 = vmatpush2.msra.mxu0 0.0
    %3815 = vmatprep.subr.mxu0 0.0
    %3816 = vmatpush2.msra.mxu0 0.0
    %3817 = vmatprep.subr.mxu0 0.0
    %3818 = vmatpush2.msra.mxu0 0.0
    %3819 = vmatprep.subr.mxu0 0.0
    %3820 = vmatpush2.msra.mxu0 0.0
    %3821 = vmatprep.subr.mxu0 0.0
    %3822 = vmatpush2.msra.mxu0 0.0
    %3823 = vmatprep.subr.mxu0 0.0
    %3824 = vmatpush2.msra.mxu0 0.0
    %3825 = vmatprep.subr.mxu0 0.0
    %3826 = vmatpush2.msra.mxu0 0.0
    %3827 = vmatprep.subr.mxu0 0.0
    %3828 = vmatpush2.msra.mxu0 0.0
    %3829 = vmatprep.subr.mxu0 0.0
    %3830 = vmatpush2.msra.mxu0 0.0
    %3831 = vmatprep.subr.mxu0 0.0
    %3832 = vmatpush2.msra.mxu0 0.0
    %3833 = vmatprep.subr.mxu0 0.0
    %3834 = vmatpush2.msra.mxu0 0.0
    %3835 = vmatprep.subr.mxu0 0.0
    %3836 = vmatpush2.msra.mxu0 0.0
    %3837 = vmatprep.mubr.f32.mxu0 0.0
    %3838 = vmatmul.mubr.f32.gmra.mxu0 %v3768
    %v3839 = vpop.f32.mrf.mxu0
    %v3840 = vadd.f32 %v3766, %v3839
    %v3841 = vpop.f32.mrf.mxu0
    %3842 = vmatprep.mubr.f32.mxu0 0.0
    %3843 = vmatmul.mubr.f32.gmra.mxu0 %v3771
    %v3844 = vpop.f32.mrf.mxu0
    %v3845 = vadd.f32 %v3766, %v3844
    %v3846 = vpop.f32.mrf.mxu0
    %3847 = vdwg.mxu0
    %v3848 = vadd.f32 %v3660, %v3840
    %v3849 = vadd.f32 %v3661, %v3845
    %v3850 = vsel %vm171, %v3848, 0.0
    %3851 = vadd.xlane.f32.xlu0 %v3850
    %v3852 = vpop.xlane.xlu0 %3851
    %v3853 = vsel %vm171, %v3849, 0.0
    %3854 = vadd.xlane.f32.xlu0 %v3853
    %v3855 = vpop.xlane.xlu0 %3854
    %v3856 = vmul.f32 %v3852, %v957
    %v3857 = vmul.f32 %v3855, %v957
    %v3858 = vsub.f32 %v3848, %v3856
    %v3859 = vsub.f32 %v3849, %v3857
    %v3860 = vmul.f32 %v3858, %v3858
    %v3861 = vmul.f32 %v3859, %v3859
    %v3862 = vsel %vm171, %v3860, 0.0
    %3863 = vadd.xlane.f32.xlu0 %v3862
    %v3864 = vpop.xlane.xlu0 %3863
    %v3865 = vsel %vm171, %v3861, 0.0
    %3866 = vadd.xlane.f32.xlu0 %v3865
    %v3867 = vpop.xlane.xlu0 %3866
    %v3868 = vmul.f32 %v3864, %v957
    %v3869 = vmul.f32 %v3867, %v957
    %v3870 = vadd.f32 %v3868, 1e-05
    %v3871 = vadd.f32 %v3869, 1e-05
    %v3872 = vrsqrt.pop %v3870
    %v3873 = vrsqrt.pop %v3871
    %v3874 = vmul.f32 %v3858, %v3872
    %v3875 = vmul.f32 %v3859, %v3873
    %v3876 = vld [vmem:[#allocation4 + $0x1b] sm:$0x1]
    %v3877 = vlaneseq
    %v3878 = vshrl.u32 %v3877, 7
    %v3879 = vsub.s32 0, %v3878
    %v3880 = vrot.slane %v3876, %v3879
    %v3881 = vmul.f32 %v3874, %v3880
    %v3882 = vmul.f32 %v3875, %v3880
    %v3883 = vld [vmem:[#allocation4 + $0x1c] sm:$0x1]
    %v3884 = vlaneseq
    %v3885 = vshrl.u32 %v3884, 7
    %v3886 = vsub.s32 0, %v3885
    %v3887 = vrot.slane %v3883, %v3886
    %v3888 = vadd.f32 %v3881, %v3887
    %v3889 = vadd.f32 %v3882, %v3887
    %v3890 = vld [vmem:[#allocation2 + $0x268] sm:$0xff]
    %v3891 = vld [vmem:[#allocation2 + $0x270] sm:$0xff]
    %v3892 = vld [vmem:[#allocation2 + $0x278] sm:$0xff]
    %v3893 = vld [vmem:[#allocation2 + $0x280] sm:$0xff]
    %v3894 = vld [vmem:[#allocation4 + $0x1f] sm:$0x1]
    %v3895 = vlaneseq
    %v3896 = vshrl.u32 %v3895, 7
    %v3897 = vsub.s32 0, %v3896
    %v3898 = vrot.slane %v3894, %v3897
    %v3900 = vsel %vm171, %v3888, 0
    %v3903 = vsel %vm171, %v3889, 0
    %3905 = vmatprep.subr.mxu0 0.0
    %3906 = vmatpush1.msra.mxu0 0.0
    %3907 = vmatprep.subr.mxu0 0.0
    %3908 = vmatpush1.msra.mxu0 0.0
    %3909 = vmatprep.subr.mxu0 0.0
    %3910 = vmatpush1.msra.mxu0 0.0
    %3911 = vmatprep.subr.mxu0 0.0
    %3912 = vmatpush1.msra.mxu0 0.0
    %3913 = vmatprep.subr.mxu0 0.0
    %3914 = vmatpush1.msra.mxu0 0.0
    %3915 = vmatprep.subr.mxu0 0.0
    %3916 = vmatpush1.msra.mxu0 0.0
    %3917 = vmatprep.subr.mxu0 0.0
    %3918 = vmatpush1.msra.mxu0 0.0
    %3919 = vmatprep.subr.mxu0 0.0
    %3920 = vmatpush1.msra.mxu0 0.0
    %3921 = vmatprep.subr.mxu0 0.0
    %3922 = vmatpush1.msra.mxu0 0.0
    %3923 = vmatprep.subr.mxu0 0.0
    %3924 = vmatpush1.msra.mxu0 0.0
    %3925 = vmatprep.subr.mxu0 0.0
    %3926 = vmatpush1.msra.mxu0 0.0
    %3927 = vmatprep.subr.mxu0 0.0
    %3928 = vmatpush1.msra.mxu0 0.0
    %3929 = vmatprep.subr.mxu0 0.0
    %3930 = vmatpush1.msra.mxu0 %v3893
    %3931 = vmatprep.subr.mxu0 0.0
    %3932 = vmatpush1.msra.mxu0 %v3892
    %3933 = vmatprep.subr.mxu0 0.0
    %3934 = vmatpush1.msra.mxu0 %v3891
    %3935 = vmatprep.subr.mxu0 0.0
    %3936 = vmatpush1.msra.mxu0 %v3890
    %3937 = vmatprep.subr.mxu0 0.0
    %3938 = vmatpush2.msra.mxu0 0.0
    %3939 = vmatprep.subr.mxu0 0.0
    %3940 = vmatpush2.msra.mxu0 0.0
    %3941 = vmatprep.subr.mxu0 0.0
    %3942 = vmatpush2.msra.mxu0 0.0
    %3943 = vmatprep.subr.mxu0 0.0
    %3944 = vmatpush2.msra.mxu0 0.0
    %3945 = vmatprep.subr.mxu0 0.0
    %3946 = vmatpush2.msra.mxu0 0.0
    %3947 = vmatprep.subr.mxu0 0.0
    %3948 = vmatpush2.msra.mxu0 0.0
    %3949 = vmatprep.subr.mxu0 0.0
    %3950 = vmatpush2.msra.mxu0 0.0
    %3951 = vmatprep.subr.mxu0 0.0
    %3952 = vmatpush2.msra.mxu0 0.0
    %3953 = vmatprep.subr.mxu0 0.0
    %3954 = vmatpush2.msra.mxu0 0.0
    %3955 = vmatprep.subr.mxu0 0.0
    %3956 = vmatpush2.msra.mxu0 0.0
    %3957 = vmatprep.subr.mxu0 0.0
    %3958 = vmatpush2.msra.mxu0 0.0
    %3959 = vmatprep.subr.mxu0 0.0
    %3960 = vmatpush2.msra.mxu0 0.0
    %3961 = vmatprep.subr.mxu0 0.0
    %3962 = vmatpush2.msra.mxu0 0.0
    %3963 = vmatprep.subr.mxu0 0.0
    %3964 = vmatpush2.msra.mxu0 0.0
    %3965 = vmatprep.subr.mxu0 0.0
    %3966 = vmatpush2.msra.mxu0 0.0
    %3967 = vmatprep.subr.mxu0 0.0
    %3968 = vmatpush2.msra.mxu0 0.0
    %3969 = vmatprep.mubr.f32.mxu0 0.0
    %3970 = vmatmul.mubr.f32.gmra.mxu0 %v3900
    %v3971 = vpop.f32.mrf.mxu0
    %v3972 = vadd.f32 %v3898, %v3971
    %v3973 = vpop.f32.mrf.mxu0
    %3974 = vmatprep.mubr.f32.mxu0 0.0
    %3975 = vmatmul.mubr.f32.gmra.mxu0 %v3903
    %v3976 = vpop.f32.mrf.mxu0
    %v3977 = vadd.f32 %v3898, %v3976
    %v3978 = vpop.f32.mrf.mxu0
    %3979 = vdwg.mxu0
    %3980 = vmatprep.subr.mxu0 0.0
    %3981 = vmatpush1.msra.mxu0 0.0
    %3982 = vmatprep.subr.mxu0 0.0
    %3983 = vmatpush1.msra.mxu0 0.0
    %3984 = vmatprep.subr.mxu0 0.0
    %3985 = vmatpush1.msra.mxu0 0.0
    %3986 = vmatprep.subr.mxu0 0.0
    %3987 = vmatpush1.msra.mxu0 0.0
    %3988 = vmatprep.subr.mxu0 0.0
    %3989 = vmatpush1.msra.mxu0 0.0
    %3990 = vmatprep.subr.mxu0 0.0
    %3991 = vmatpush1.msra.mxu0 0.0
    %3992 = vmatprep.subr.mxu0 0.0
    %3993 = vmatpush1.msra.mxu0 0.0
    %3994 = vmatprep.subr.mxu0 0.0
    %3995 = vmatpush1.msra.mxu0 0.0
    %3996 = vmatprep.subr.mxu0 0.0
    %3997 = vmatpush1.msra.mxu0 0.0
    %3998 = vmatprep.subr.mxu0 0.0
    %3999 = vmatpush1.msra.mxu0 0.0
    %4000 = vmatprep.subr.mxu0 0.0
    %4001 = vmatpush1.msra.mxu0 0.0
    %4002 = vmatprep.subr.mxu0 0.0
    %4003 = vmatpush1.msra.mxu0 0.0
    %4004 = vmatprep.subr.mxu0 0.0
    %4005 = vmatpush1.msra.mxu0 0.0
    %4006 = vmatprep.subr.mxu0 0.0
    %4007 = vmatpush1.msra.mxu0 0.0
    %4008 = vmatprep.subr.mxu0 0.0
    %4009 = vmatpush1.msra.mxu0 %v3977
    %4010 = vmatprep.subr.mxu0 0.0
    %4011 = vmatpush1.msra.mxu0 %v3972
    %4012 = vmatprep.subr.mxu0 0.0
    %4013 = vmatpush2.msra.mxu0 0.0
    %4014 = vmatprep.subr.mxu0 0.0
    %4015 = vmatpush2.msra.mxu0 0.0
    %4016 = vmatprep.subr.mxu0 0.0
    %4017 = vmatpush2.msra.mxu0 0.0
    %4018 = vmatprep.subr.mxu0 0.0
    %4019 = vmatpush2.msra.mxu0 0.0
    %4020 = vmatprep.subr.mxu0 0.0
    %4021 = vmatpush2.msra.mxu0 0.0
    %4022 = vmatprep.subr.mxu0 0.0
    %4023 = vmatpush2.msra.mxu0 0.0
    %4024 = vmatprep.subr.mxu0 0.0
    %4025 = vmatpush2.msra.mxu0 0.0
    %4026 = vmatprep.subr.mxu0 0.0
    %4027 = vmatpush2.msra.mxu0 0.0
    %4028 = vmatprep.subr.mxu0 0.0
    %4029 = vmatpush2.msra.mxu0 0.0
    %4030 = vmatprep.subr.mxu0 0.0
    %4031 = vmatpush2.msra.mxu0 0.0
    %4032 = vmatprep.subr.mxu0 0.0
    %4033 = vmatpush2.msra.mxu0 0.0
    %4034 = vmatprep.subr.mxu0 0.0
    %4035 = vmatpush2.msra.mxu0 0.0
    %4036 = vmatprep.subr.mxu0 0.0
    %4037 = vmatpush2.msra.mxu0 0.0
    %4038 = vmatprep.subr.mxu0 0.0
    %4039 = vmatpush2.msra.mxu0 0.0
    %4040 = vmatprep.subr.mxu0 0.0
    %4041 = vmatpush2.msra.mxu0 0.0
    %4042 = vmatprep.subr.mxu0 0.0
    %4043 = vmatpush2.msra.mxu0 0.0
    %4044 = vmatprep.mubr.f32.mxu0 0.0
    %4045 = vmatmul.mubr.f32.gmra.mxu0 %v347
    %v4046 = vpop.f32.mrf.mxu0
    %v4047 = vadd.f32 0.0, %v4046
    %v4048 = vpop.f32.mrf.mxu0
    %4049 = vmatprep.mubr.f32.mxu0 0.0
    %4050 = vmatmul.mubr.f32.gmra.mxu0 %v350
    %v4051 = vpop.f32.mrf.mxu0
    %v4052 = vadd.f32 0.0, %v4051
    %v4053 = vpop.f32.mrf.mxu0
    %4054 = vmatprep.mubr.f32.mxu0 0.0
    %4055 = vmatmul.mubr.f32.gmra.mxu0 %v353
    %v4056 = vpop.f32.mrf.mxu0
    %v4057 = vadd.f32 0.0, %v4056
    %v4058 = vpop.f32.mrf.mxu0
    %4059 = vmatprep.mubr.f32.mxu0 0.0
    %4060 = vmatmul.mubr.f32.gmra.mxu0 %v356
    %v4061 = vpop.f32.mrf.mxu0
    %v4062 = vadd.f32 0.0, %v4061
    %v4063 = vpop.f32.mrf.mxu0
    %4064 = vmatprep.mubr.f32.mxu0 0.0
    %4065 = vmatmul.mubr.f32.gmra.mxu0 %v359
    %v4066 = vpop.f32.mrf.mxu0
    %v4067 = vadd.f32 0.0, %v4066
    %v4068 = vpop.f32.mrf.mxu0
    %4069 = vmatprep.mubr.f32.mxu0 0.0
    %4070 = vmatmul.mubr.f32.gmra.mxu0 %v362
    %v4071 = vpop.f32.mrf.mxu0
    %v4072 = vadd.f32 0.0, %v4071
    %v4073 = vpop.f32.mrf.mxu0
    %4074 = vmatprep.mubr.f32.mxu0 0.0
    %4075 = vmatmul.mubr.f32.gmra.mxu0 %v365
    %v4076 = vpop.f32.mrf.mxu0
    %v4077 = vadd.f32 0.0, %v4076
    %v4078 = vpop.f32.mrf.mxu0
    %4079 = vmatprep.mubr.f32.mxu0 0.0
    %4080 = vmatmul.mubr.f32.gmra.mxu0 %v368
    %v4081 = vpop.f32.mrf.mxu0
    %v4082 = vadd.f32 0.0, %v4081
    %v4083 = vpop.f32.mrf.mxu0
    %4084 = vdwg.mxu0
    %v4085 = vmul.f32 %v4047, %v42
    %v4086 = vmul.f32 %v4052, %v43
    %v4087 = vmul.f32 %v4057, %v44
    %v4088 = vmul.f32 %v4062, %v45
    %v4089 = vmul.f32 %v4067, %v46
    %v4090 = vmul.f32 %v4072, %v47
    %v4091 = vmul.f32 %v4077, %v48
    %v4092 = vmul.f32 %v4082, %v49
    %4095 = vrot.lane.b32.xlu0 %v3972, 96
    %v4096 = vpop.permute.xlu0 %4095
    %4097 = vrot.lane.b32.xlu0 %v3977, 96
    %v4098 = vpop.permute.xlu0 %4097
    %v4100 = vsel %vm171, %v4085, 0
    %v4103 = vsel %vm171, %v4086, 0
    %v4106 = vsel %vm171, %v4087, 0
    %v4109 = vsel %vm171, %v4088, 0
    %v4112 = vsel %vm171, %v4089, 0
    %v4115 = vsel %vm171, %v4090, 0
    %v4118 = vsel %vm171, %v4091, 0
    %v4121 = vsel %vm171, %v4092, 0
    %v4123 = vsel %vm171, %v4096, 0
    %v4125 = vsel %vm171, %v4098, 0
    %4127 = vmatprep.subr.mxu0 0.0
    %4128 = vmatpush1.xpose.msra.mxu0 0.0
    %4129 = vmatprep.subr.mxu0 0.0
    %4130 = vmatpush1.xpose.msra.mxu0 0.0
    %4131 = vmatprep.subr.mxu0 0.0
    %4132 = vmatpush1.xpose.msra.mxu0 0.0
    %4133 = vmatprep.subr.mxu0 0.0
    %4134 = vmatpush1.xpose.msra.mxu0 0.0
    %4135 = vmatprep.subr.mxu0 0.0
    %4136 = vmatpush1.xpose.msra.mxu0 0.0
    %4137 = vmatprep.subr.mxu0 0.0
    %4138 = vmatpush1.xpose.msra.mxu0 0.0
    %4139 = vmatprep.subr.mxu0 0.0
    %4140 = vmatpush1.xpose.msra.mxu0 0.0
    %4141 = vmatprep.subr.mxu0 0.0
    %4142 = vmatpush1.xpose.msra.mxu0 0.0
    %4143 = vmatprep.subr.mxu0 0.0
    %4144 = vmatpush1.xpose.msra.mxu0 0.0
    %4145 = vmatprep.subr.mxu0 0.0
    %4146 = vmatpush1.xpose.msra.mxu0 0.0
    %4147 = vmatprep.subr.mxu0 0.0
    %4148 = vmatpush1.xpose.msra.mxu0 0.0
    %4149 = vmatprep.subr.mxu0 0.0
    %4150 = vmatpush1.xpose.msra.mxu0 0.0
    %4151 = vmatprep.subr.mxu0 0.0
    %4152 = vmatpush1.xpose.msra.mxu0 0.0
    %4153 = vmatprep.subr.mxu0 0.0
    %4154 = vmatpush1.xpose.msra.mxu0 0.0
    %4155 = vmatprep.subr.mxu0 0.0
    %4156 = vmatpush1.xpose.msra.mxu0 %v4125
    %4157 = vmatprep.subr.mxu0 0.0
    %4158 = vmatpush1.xpose.msra.mxu0 %v4123
    %4159 = vmatprep.subr.mxu0 0.0
    %4160 = vmatpush2.xpose.msra.mxu0 0.0
    %4161 = vmatprep.subr.mxu0 0.0
    %4162 = vmatpush2.xpose.msra.mxu0 0.0
    %4163 = vmatprep.subr.mxu0 0.0
    %4164 = vmatpush2.xpose.msra.mxu0 0.0
    %4165 = vmatprep.subr.mxu0 0.0
    %4166 = vmatpush2.xpose.msra.mxu0 0.0
    %4167 = vmatprep.subr.mxu0 0.0
    %4168 = vmatpush2.xpose.msra.mxu0 0.0
    %4169 = vmatprep.subr.mxu0 0.0
    %4170 = vmatpush2.xpose.msra.mxu0 0.0
    %4171 = vmatprep.subr.mxu0 0.0
    %4172 = vmatpush2.xpose.msra.mxu0 0.0
    %4173 = vmatprep.subr.mxu0 0.0
    %4174 = vmatpush2.xpose.msra.mxu0 0.0
    %4175 = vmatprep.subr.mxu0 0.0
    %4176 = vmatpush2.xpose.msra.mxu0 0.0
    %4177 = vmatprep.subr.mxu0 0.0
    %4178 = vmatpush2.xpose.msra.mxu0 0.0
    %4179 = vmatprep.subr.mxu0 0.0
    %4180 = vmatpush2.xpose.msra.mxu0 0.0
    %4181 = vmatprep.subr.mxu0 0.0
    %4182 = vmatpush2.xpose.msra.mxu0 0.0
    %4183 = vmatprep.subr.mxu0 0.0
    %4184 = vmatpush2.xpose.msra.mxu0 0.0
    %4185 = vmatprep.subr.mxu0 0.0
    %4186 = vmatpush2.xpose.msra.mxu0 0.0
    %4187 = vmatprep.subr.mxu0 0.0
    %4188 = vmatpush2.xpose.msra.mxu0 0.0
    %4189 = vmatprep.subr.mxu0 0.0
    %4190 = vmatpush2.xpose.msra.mxu0 0.0
    %4191 = vmatprep.mubr.f32.mxu0 0.0
    %4192 = vmatmul.mubr.f32.gmra.mxu0 %v4100
    %v4193 = vpop.f32.mrf.mxu0
    %v4194 = vadd.f32 %v50, %v4193
    %v4195 = vpop.f32.mrf.mxu0
    %4196 = vmatprep.mubr.f32.mxu0 0.0
    %4197 = vmatmul.mubr.f32.gmra.mxu0 %v4103
    %v4198 = vpop.f32.mrf.mxu0
    %v4199 = vadd.f32 %v51, %v4198
    %v4200 = vpop.f32.mrf.mxu0
    %4201 = vmatprep.mubr.f32.mxu0 0.0
    %4202 = vmatmul.mubr.f32.gmra.mxu0 %v4106
    %v4203 = vpop.f32.mrf.mxu0
    %v4204 = vadd.f32 %v52, %v4203
    %v4205 = vpop.f32.mrf.mxu0
    %4206 = vmatprep.mubr.f32.mxu0 0.0
    %4207 = vmatmul.mubr.f32.gmra.mxu0 %v4109
    %v4208 = vpop.f32.mrf.mxu0
    %v4209 = vadd.f32 %v53, %v4208
    %v4210 = vpop.f32.mrf.mxu0
    %4211 = vmatprep.mubr.f32.mxu0 0.0
    %4212 = vmatmul.mubr.f32.gmra.mxu0 %v4112
    %v4213 = vpop.f32.mrf.mxu0
    %v4214 = vadd.f32 %v54, %v4213
    %v4215 = vpop.f32.mrf.mxu0
    %4216 = vmatprep.mubr.f32.mxu0 0.0
    %4217 = vmatmul.mubr.f32.gmra.mxu0 %v4115
    %v4218 = vpop.f32.mrf.mxu0
    %v4219 = vadd.f32 %v55, %v4218
    %v4220 = vpop.f32.mrf.mxu0
    %4221 = vmatprep.mubr.f32.mxu0 0.0
    %4222 = vmatmul.mubr.f32.gmra.mxu0 %v4118
    %v4223 = vpop.f32.mrf.mxu0
    %v4224 = vadd.f32 %v56, %v4223
    %v4225 = vpop.f32.mrf.mxu0
    %4226 = vmatprep.mubr.f32.mxu0 0.0
    %4227 = vmatmul.mubr.f32.gmra.mxu0 %v4121
    %v4228 = vpop.f32.mrf.mxu0
    %v4229 = vadd.f32 %v57, %v4228
    %v4230 = vpop.f32.mrf.mxu0
    %4231 = vdwg.mxu0
    %v4232 = vsel %vm345, %v4194, -inf
    %4233 = vmax.xlane.f32.xlu0 %v4232
    %v4234 = vpop.xlane.xlu0 %4233
    %v4235 = vsel %vm345, %v4199, -inf
    %4236 = vmax.xlane.f32.xlu0 %v4235
    %v4237 = vpop.xlane.xlu0 %4236
    %v4238 = vsel %vm345, %v4204, -inf
    %4239 = vmax.xlane.f32.xlu0 %v4238
    %v4240 = vpop.xlane.xlu0 %4239
    %v4241 = vsel %vm345, %v4209, -inf
    %4242 = vmax.xlane.f32.xlu0 %v4241
    %v4243 = vpop.xlane.xlu0 %4242
    %v4244 = vsel %vm345, %v4214, -inf
    %4245 = vmax.xlane.f32.xlu0 %v4244
    %v4246 = vpop.xlane.xlu0 %4245
    %v4247 = vsel %vm345, %v4219, -inf
    %4248 = vmax.xlane.f32.xlu0 %v4247
    %v4249 = vpop.xlane.xlu0 %4248
    %v4250 = vsel %vm345, %v4224, -inf
    %4251 = vmax.xlane.f32.xlu0 %v4250
    %v4252 = vpop.xlane.xlu0 %4251
    %v4253 = vsel %vm345, %v4229, -inf
    %4254 = vmax.xlane.f32.xlu0 %v4253
    %v4255 = vpop.xlane.xlu0 %4254
    %v4256 = vsub.f32 %v4194, %v4234
    %v4257 = vsub.f32 %v4199, %v4237
    %v4258 = vsub.f32 %v4204, %v4240
    %v4259 = vsub.f32 %v4209, %v4243
    %v4260 = vsub.f32 %v4214, %v4246
    %v4261 = vsub.f32 %v4219, %v4249
    %v4262 = vsub.f32 %v4224, %v4252
    %v4263 = vsub.f32 %v4229, %v4255
    %v4264 = vmul.f32 %v4256, 1.442695
    %v4265 = vpow.pop %v4264
    %v4266 = vmul.f32 %v4257, 1.442695
    %v4267 = vpow.pop %v4266
    %v4268 = vmul.f32 %v4258, 1.442695
    %v4269 = vpow.pop %v4268
    %v4270 = vmul.f32 %v4259, 1.442695
    %v4271 = vpow.pop %v4270
    %v4272 = vmul.f32 %v4260, 1.442695
    %v4273 = vpow.pop %v4272
    %v4274 = vmul.f32 %v4261, 1.442695
    %v4275 = vpow.pop %v4274
    %v4276 = vmul.f32 %v4262, 1.442695
    %v4277 = vpow.pop %v4276
    %v4278 = vmul.f32 %v4263, 1.442695
    %v4279 = vpow.pop %v4278
    %v4280 = vsel %vm345, %v4265, 0.0
    %4281 = vadd.xlane.f32.xlu0 %v4280
    %v4282 = vpop.xlane.xlu0 %4281
    %v4283 = vsel %vm345, %v4267, 0.0
    %4284 = vadd.xlane.f32.xlu0 %v4283
    %v4285 = vpop.xlane.xlu0 %4284
    %v4286 = vsel %vm345, %v4269, 0.0
    %4287 = vadd.xlane.f32.xlu0 %v4286
    %v4288 = vpop.xlane.xlu0 %4287
    %v4289 = vsel %vm345, %v4271, 0.0
    %4290 = vadd.xlane.f32.xlu0 %v4289
    %v4291 = vpop.xlane.xlu0 %4290
    %v4292 = vsel %vm345, %v4273, 0.0
    %4293 = vadd.xlane.f32.xlu0 %v4292
    %v4294 = vpop.xlane.xlu0 %4293
    %v4295 = vsel %vm345, %v4275, 0.0
    %4296 = vadd.xlane.f32.xlu0 %v4295
    %v4297 = vpop.xlane.xlu0 %4296
    %v4298 = vsel %vm345, %v4277, 0.0
    %4299 = vadd.xlane.f32.xlu0 %v4298
    %v4300 = vpop.xlane.xlu0 %4299
    %v4301 = vsel %vm345, %v4279, 0.0
    %4302 = vadd.xlane.f32.xlu0 %v4301
    %v4303 = vpop.xlane.xlu0 %4302
    %v4304 = vrcp.pop %v4282
    %v4305 = vrcp.pop %v4285
    %v4306 = vrcp.pop %v4288
    %v4307 = vrcp.pop %v4291
    %v4308 = vrcp.pop %v4294
    %v4309 = vrcp.pop %v4297
    %v4310 = vrcp.pop %v4300
    %v4311 = vrcp.pop %v4303
    %v4312 = vmul.f32 %v4265, %v4304
    %v4313 = vmul.f32 %v4267, %v4305
    %v4314 = vmul.f32 %v4269, %v4306
    %v4315 = vmul.f32 %v4271, %v4307
    %v4316 = vmul.f32 %v4273, %v4308
    %v4317 = vmul.f32 %v4275, %v4309
    %v4318 = vmul.f32 %v4277, %v4310
    %v4319 = vmul.f32 %v4279, %v4311
    %4320 = vrot.lane.b32.xlu0 %v3972, 64
    %v4321 = vpop.permute.xlu0 %4320
    %4322 = vrot.lane.b32.xlu0 %v3977, 64
    %v4323 = vpop.permute.xlu0 %4322
    %v4327 = vsel %vm345, %v4312, 0
    %v4330 = vsel %vm345, %v4313, 0
    %v4333 = vsel %vm345, %v4314, 0
    %v4336 = vsel %vm345, %v4315, 0
    %v4339 = vsel %vm345, %v4316, 0
    %v4342 = vsel %vm345, %v4317, 0
    %v4345 = vsel %vm345, %v4318, 0
    %v4348 = vsel %vm345, %v4319, 0
    %4350 = vmatprep.subr.mxu0 0.0
    %4351 = vmatpush1.msra.mxu0 0.0
    %4352 = vmatprep.subr.mxu0 0.0
    %4353 = vmatpush1.msra.mxu0 0.0
    %4354 = vmatprep.subr.mxu0 0.0
    %4355 = vmatpush1.msra.mxu0 0.0
    %4356 = vmatprep.subr.mxu0 0.0
    %4357 = vmatpush1.msra.mxu0 0.0
    %4358 = vmatprep.subr.mxu0 0.0
    %4359 = vmatpush1.msra.mxu0 0.0
    %4360 = vmatprep.subr.mxu0 0.0
    %4361 = vmatpush1.msra.mxu0 0.0
    %4362 = vmatprep.subr.mxu0 0.0
    %4363 = vmatpush1.msra.mxu0 0.0
    %4364 = vmatprep.subr.mxu0 0.0
    %4365 = vmatpush1.msra.mxu0 0.0
    %4366 = vmatprep.subr.mxu0 0.0
    %4367 = vmatpush1.msra.mxu0 0.0
    %4368 = vmatprep.subr.mxu0 0.0
    %4369 = vmatpush1.msra.mxu0 0.0
    %4370 = vmatprep.subr.mxu0 0.0
    %4371 = vmatpush1.msra.mxu0 0.0
    %4372 = vmatprep.subr.mxu0 0.0
    %4373 = vmatpush1.msra.mxu0 0.0
    %4374 = vmatprep.subr.mxu0 0.0
    %4375 = vmatpush1.msra.mxu0 0.0
    %4376 = vmatprep.subr.mxu0 0.0
    %4377 = vmatpush1.msra.mxu0 0.0
    %4378 = vmatprep.subr.mxu0 0.0
    %4379 = vmatpush1.msra.mxu0 %v4323
    %4380 = vmatprep.subr.mxu0 0.0
    %4381 = vmatpush1.msra.mxu0 %v4321
    %4382 = vmatprep.subr.mxu0 0.0
    %4383 = vmatpush2.msra.mxu0 0.0
    %4384 = vmatprep.subr.mxu0 0.0
    %4385 = vmatpush2.msra.mxu0 0.0
    %4386 = vmatprep.subr.mxu0 0.0
    %4387 = vmatpush2.msra.mxu0 0.0
    %4388 = vmatprep.subr.mxu0 0.0
    %4389 = vmatpush2.msra.mxu0 0.0
    %4390 = vmatprep.subr.mxu0 0.0
    %4391 = vmatpush2.msra.mxu0 0.0
    %4392 = vmatprep.subr.mxu0 0.0
    %4393 = vmatpush2.msra.mxu0 0.0
    %4394 = vmatprep.subr.mxu0 0.0
    %4395 = vmatpush2.msra.mxu0 0.0
    %4396 = vmatprep.subr.mxu0 0.0
    %4397 = vmatpush2.msra.mxu0 0.0
    %4398 = vmatprep.subr.mxu0 0.0
    %4399 = vmatpush2.msra.mxu0 0.0
    %4400 = vmatprep.subr.mxu0 0.0
    %4401 = vmatpush2.msra.mxu0 0.0
    %4402 = vmatprep.subr.mxu0 0.0
    %4403 = vmatpush2.msra.mxu0 0.0
    %4404 = vmatprep.subr.mxu0 0.0
    %4405 = vmatpush2.msra.mxu0 0.0
    %4406 = vmatprep.subr.mxu0 0.0
    %4407 = vmatpush2.msra.mxu0 0.0
    %4408 = vmatprep.subr.mxu0 0.0
    %4409 = vmatpush2.msra.mxu0 0.0
    %4410 = vmatprep.subr.mxu0 0.0
    %4411 = vmatpush2.msra.mxu0 0.0
    %4412 = vmatprep.subr.mxu0 0.0
    %4413 = vmatpush2.msra.mxu0 0.0
    %4414 = vmatprep.mubr.f32.mxu0 0.0
    %4415 = vmatmul.mubr.f32.gmra.mxu0 %v4327
    %v4416 = vpop.f32.mrf.mxu0
    %v4417 = vadd.f32 0.0, %v4416
    %v4418 = vpop.f32.mrf.mxu0
    %4419 = vmatprep.mubr.f32.mxu0 0.0
    %4420 = vmatmul.mubr.f32.gmra.mxu0 %v4330
    %v4421 = vpop.f32.mrf.mxu0
    %v4422 = vadd.f32 0.0, %v4421
    %v4423 = vpop.f32.mrf.mxu0
    %4424 = vmatprep.mubr.f32.mxu0 0.0
    %4425 = vmatmul.mubr.f32.gmra.mxu0 %v4333
    %v4426 = vpop.f32.mrf.mxu0
    %v4427 = vadd.f32 0.0, %v4426
    %v4428 = vpop.f32.mrf.mxu0
    %4429 = vmatprep.mubr.f32.mxu0 0.0
    %4430 = vmatmul.mubr.f32.gmra.mxu0 %v4336
    %v4431 = vpop.f32.mrf.mxu0
    %v4432 = vadd.f32 0.0, %v4431
    %v4433 = vpop.f32.mrf.mxu0
    %4434 = vmatprep.mubr.f32.mxu0 0.0
    %4435 = vmatmul.mubr.f32.gmra.mxu0 %v4339
    %v4436 = vpop.f32.mrf.mxu0
    %v4437 = vadd.f32 0.0, %v4436
    %v4438 = vpop.f32.mrf.mxu0
    %4439 = vmatprep.mubr.f32.mxu0 0.0
    %4440 = vmatmul.mubr.f32.gmra.mxu0 %v4342
    %v4441 = vpop.f32.mrf.mxu0
    %v4442 = vadd.f32 0.0, %v4441
    %v4443 = vpop.f32.mrf.mxu0
    %4444 = vmatprep.mubr.f32.mxu0 0.0
    %4445 = vmatmul.mubr.f32.gmra.mxu0 %v4345
    %v4446 = vpop.f32.mrf.mxu0
    %v4447 = vadd.f32 0.0, %v4446
    %v4448 = vpop.f32.mrf.mxu0
    %4449 = vmatprep.mubr.f32.mxu0 0.0
    %4450 = vmatmul.mubr.f32.gmra.mxu0 %v4348
    %v4451 = vpop.f32.mrf.mxu0
    %v4452 = vadd.f32 0.0, %v4451
    %v4453 = vpop.f32.mrf.mxu0
    %4454 = vdwg.mxu0
    %v4455 = vmul.f32 %v4417, %v42
    %v4456 = vmul.f32 %v4422, %v43
    %v4457 = vmul.f32 %v4427, %v44
    %v4458 = vmul.f32 %v4432, %v45
    %v4459 = vmul.f32 %v4437, %v46
    %v4460 = vmul.f32 %v4442, %v47
    %v4461 = vmul.f32 %v4447, %v48
    %v4462 = vmul.f32 %v4452, %v49
    %v4463 = vadd.f32 %v4455, %v4457
    %v4464 = vadd.f32 %v4456, %v4458
    %v4465 = vadd.f32 %v4463, %v4459
    %v4466 = vadd.f32 %v4464, %v4460
    %v4467 = vadd.f32 %v4465, %v4461
    %v4468 = vadd.f32 %v4466, %v4462
    %v4469 = vld [vmem:[#allocation2 + $0x288] sm:$0xff]
    %v4470 = vld [vmem:[#allocation2 + $0x290] sm:$0xff]
    %v4471 = vld [vmem:[#allocation2 + $0x298] sm:$0xff]
    %v4472 = vld [vmem:[#allocation2 + $0x2a0] sm:$0xff]
    %v4473 = vld [vmem:[#allocation4 + $0x20] sm:$0x1]
    %v4474 = vlaneseq
    %v4475 = vshrl.u32 %v4474, 7
    %v4476 = vsub.s32 0, %v4475
    %v4477 = vrot.slane %v4473, %v4476
    %v4479 = vsel %vm171, %v4467, 0
    %v4482 = vsel %vm171, %v4468, 0
    %4484 = vmatprep.subr.mxu0 0.0
    %4485 = vmatpush1.msra.mxu0 0.0
    %4486 = vmatprep.subr.mxu0 0.0
    %4487 = vmatpush1.msra.mxu0 0.0
    %4488 = vmatprep.subr.mxu0 0.0
    %4489 = vmatpush1.msra.mxu0 0.0
    %4490 = vmatprep.subr.mxu0 0.0
    %4491 = vmatpush1.msra.mxu0 0.0
    %4492 = vmatprep.subr.mxu0 0.0
    %4493 = vmatpush1.msra.mxu0 0.0
    %4494 = vmatprep.subr.mxu0 0.0
    %4495 = vmatpush1.msra.mxu0 0.0
    %4496 = vmatprep.subr.mxu0 0.0
    %4497 = vmatpush1.msra.mxu0 0.0
    %4498 = vmatprep.subr.mxu0 0.0
    %4499 = vmatpush1.msra.mxu0 0.0
    %4500 = vmatprep.subr.mxu0 0.0
    %4501 = vmatpush1.msra.mxu0 0.0
    %4502 = vmatprep.subr.mxu0 0.0
    %4503 = vmatpush1.msra.mxu0 0.0
    %4504 = vmatprep.subr.mxu0 0.0
    %4505 = vmatpush1.msra.mxu0 0.0
    %4506 = vmatprep.subr.mxu0 0.0
    %4507 = vmatpush1.msra.mxu0 0.0
    %4508 = vmatprep.subr.mxu0 0.0
    %4509 = vmatpush1.msra.mxu0 %v4472
    %4510 = vmatprep.subr.mxu0 0.0
    %4511 = vmatpush1.msra.mxu0 %v4471
    %4512 = vmatprep.subr.mxu0 0.0
    %4513 = vmatpush1.msra.mxu0 %v4470
    %4514 = vmatprep.subr.mxu0 0.0
    %4515 = vmatpush1.msra.mxu0 %v4469
    %4516 = vmatprep.subr.mxu0 0.0
    %4517 = vmatpush2.msra.mxu0 0.0
    %4518 = vmatprep.subr.mxu0 0.0
    %4519 = vmatpush2.msra.mxu0 0.0
    %4520 = vmatprep.subr.mxu0 0.0
    %4521 = vmatpush2.msra.mxu0 0.0
    %4522 = vmatprep.subr.mxu0 0.0
    %4523 = vmatpush2.msra.mxu0 0.0
    %4524 = vmatprep.subr.mxu0 0.0
    %4525 = vmatpush2.msra.mxu0 0.0
    %4526 = vmatprep.subr.mxu0 0.0
    %4527 = vmatpush2.msra.mxu0 0.0
    %4528 = vmatprep.subr.mxu0 0.0
    %4529 = vmatpush2.msra.mxu0 0.0
    %4530 = vmatprep.subr.mxu0 0.0
    %4531 = vmatpush2.msra.mxu0 0.0
    %4532 = vmatprep.subr.mxu0 0.0
    %4533 = vmatpush2.msra.mxu0 0.0
    %4534 = vmatprep.subr.mxu0 0.0
    %4535 = vmatpush2.msra.mxu0 0.0
    %4536 = vmatprep.subr.mxu0 0.0
    %4537 = vmatpush2.msra.mxu0 0.0
    %4538 = vmatprep.subr.mxu0 0.0
    %4539 = vmatpush2.msra.mxu0 0.0
    %4540 = vmatprep.subr.mxu0 0.0
    %4541 = vmatpush2.msra.mxu0 0.0
    %4542 = vmatprep.subr.mxu0 0.0
    %4543 = vmatpush2.msra.mxu0 0.0
    %4544 = vmatprep.subr.mxu0 0.0
    %4545 = vmatpush2.msra.mxu0 0.0
    %4546 = vmatprep.subr.mxu0 0.0
    %4547 = vmatpush2.msra.mxu0 0.0
    %4548 = vmatprep.mubr.f32.mxu0 0.0
    %4549 = vmatmul.mubr.f32.gmra.mxu0 %v4479
    %v4550 = vpop.f32.mrf.mxu0
    %v4551 = vadd.f32 %v4477, %v4550
    %v4552 = vpop.f32.mrf.mxu0
    %4553 = vmatprep.mubr.f32.mxu0 0.0
    %4554 = vmatmul.mubr.f32.gmra.mxu0 %v4482
    %v4555 = vpop.f32.mrf.mxu0
    %v4556 = vadd.f32 %v4477, %v4555
    %v4557 = vpop.f32.mrf.mxu0
    %4558 = vdwg.mxu0
    %v4559 = vadd.f32 %v3888, %v4551
    %v4560 = vadd.f32 %v3889, %v4556
    %v4561 = vsel %vm171, %v4559, 0.0
    %4562 = vadd.xlane.f32.xlu0 %v4561
    %v4563 = vpop.xlane.xlu0 %4562
    %v4564 = vsel %vm171, %v4560, 0.0
    %4565 = vadd.xlane.f32.xlu0 %v4564
    %v4566 = vpop.xlane.xlu0 %4565
    %v4567 = vmul.f32 %v4563, %v957
    %v4568 = vmul.f32 %v4566, %v957
    %v4569 = vsub.f32 %v4559, %v4567
    %v4570 = vsub.f32 %v4560, %v4568
    %v4571 = vmul.f32 %v4569, %v4569
    %v4572 = vmul.f32 %v4570, %v4570
    %v4573 = vsel %vm171, %v4571, 0.0
    %4574 = vadd.xlane.f32.xlu0 %v4573
    %v4575 = vpop.xlane.xlu0 %4574
    %v4576 = vsel %vm171, %v4572, 0.0
    %4577 = vadd.xlane.f32.xlu0 %v4576
    %v4578 = vpop.xlane.xlu0 %4577
    %v4579 = vmul.f32 %v4575, %v957
    %v4580 = vmul.f32 %v4578, %v957
    %v4581 = vadd.f32 %v4579, 1e-05
    %v4582 = vadd.f32 %v4580, 1e-05
    %v4583 = vrsqrt.pop %v4581
    %v4584 = vrsqrt.pop %v4582
    %v4585 = vmul.f32 %v4569, %v4583
    %v4586 = vmul.f32 %v4570, %v4584
    %v4587 = vld [vmem:[#allocation4 + $0x24] sm:$0x1]
    %v4588 = vlaneseq
    %v4589 = vshrl.u32 %v4588, 7
    %v4590 = vsub.s32 0, %v4589
    %v4591 = vrot.slane %v4587, %v4590
    %v4592 = vmul.f32 %v4585, %v4591
    %v4593 = vmul.f32 %v4586, %v4591
    %v4594 = vld [vmem:[#allocation4 + $0x25] sm:$0x1]
    %v4595 = vlaneseq
    %v4596 = vshrl.u32 %v4595, 7
    %v4597 = vsub.s32 0, %v4596
    %v4598 = vrot.slane %v4594, %v4597
    %v4599 = vadd.f32 %v4592, %v4598
    %v4600 = vadd.f32 %v4593, %v4598
    %v4601 = vld [vmem:[#allocation2 + $0x2a8] sm:$0xff]
    %v4602 = vld [vmem:[#allocation2 + $0x2b0] sm:$0xff]
    %v4603 = vld [vmem:[#allocation2 + $0x2b8] sm:$0xff]
    %v4604 = vld [vmem:[#allocation2 + $0x2c0] sm:$0xff]
    %v4605 = vld [vmem:[#allocation4 + $0x21] sm:$0x1]
    %v4606 = vlaneseq
    %v4607 = vshrl.u32 %v4606, 7
    %v4608 = vsub.s32 0, %v4607
    %v4609 = vrot.slane %v4605, %v4608
    %v4611 = vsel %vm171, %v4599, 0
    %v4614 = vsel %vm171, %v4600, 0
    %4616 = vmatprep.subr.mxu0 0.0
    %4617 = vmatpush1.msra.mxu0 0.0
    %4618 = vmatprep.subr.mxu0 0.0
    %4619 = vmatpush1.msra.mxu0 0.0
    %4620 = vmatprep.subr.mxu0 0.0
    %4621 = vmatpush1.msra.mxu0 0.0
    %4622 = vmatprep.subr.mxu0 0.0
    %4623 = vmatpush1.msra.mxu0 0.0
    %4624 = vmatprep.subr.mxu0 0.0
    %4625 = vmatpush1.msra.mxu0 0.0
    %4626 = vmatprep.subr.mxu0 0.0
    %4627 = vmatpush1.msra.mxu0 0.0
    %4628 = vmatprep.subr.mxu0 0.0
    %4629 = vmatpush1.msra.mxu0 0.0
    %4630 = vmatprep.subr.mxu0 0.0
    %4631 = vmatpush1.msra.mxu0 0.0
    %4632 = vmatprep.subr.mxu0 0.0
    %4633 = vmatpush1.msra.mxu0 0.0
    %4634 = vmatprep.subr.mxu0 0.0
    %4635 = vmatpush1.msra.mxu0 0.0
    %4636 = vmatprep.subr.mxu0 0.0
    %4637 = vmatpush1.msra.mxu0 0.0
    %4638 = vmatprep.subr.mxu0 0.0
    %4639 = vmatpush1.msra.mxu0 0.0
    %4640 = vmatprep.subr.mxu0 0.0
    %4641 = vmatpush1.msra.mxu0 %v4604
    %4642 = vmatprep.subr.mxu0 0.0
    %4643 = vmatpush1.msra.mxu0 %v4603
    %4644 = vmatprep.subr.mxu0 0.0
    %4645 = vmatpush1.msra.mxu0 %v4602
    %4646 = vmatprep.subr.mxu0 0.0
    %4647 = vmatpush1.msra.mxu0 %v4601
    %4648 = vmatprep.subr.mxu0 0.0
    %4649 = vmatpush2.msra.mxu0 0.0
    %4650 = vmatprep.subr.mxu0 0.0
    %4651 = vmatpush2.msra.mxu0 0.0
    %4652 = vmatprep.subr.mxu0 0.0
    %4653 = vmatpush2.msra.mxu0 0.0
    %4654 = vmatprep.subr.mxu0 0.0
    %4655 = vmatpush2.msra.mxu0 0.0
    %4656 = vmatprep.subr.mxu0 0.0
    %4657 = vmatpush2.msra.mxu0 0.0
    %4658 = vmatprep.subr.mxu0 0.0
    %4659 = vmatpush2.msra.mxu0 0.0
    %4660 = vmatprep.subr.mxu0 0.0
    %4661 = vmatpush2.msra.mxu0 0.0
    %4662 = vmatprep.subr.mxu0 0.0
    %4663 = vmatpush2.msra.mxu0 0.0
    %4664 = vmatprep.subr.mxu0 0.0
    %4665 = vmatpush2.msra.mxu0 0.0
    %4666 = vmatprep.subr.mxu0 0.0
    %4667 = vmatpush2.msra.mxu0 0.0
    %4668 = vmatprep.subr.mxu0 0.0
    %4669 = vmatpush2.msra.mxu0 0.0
    %4670 = vmatprep.subr.mxu0 0.0
    %4671 = vmatpush2.msra.mxu0 0.0
    %4672 = vmatprep.subr.mxu0 0.0
    %4673 = vmatpush2.msra.mxu0 0.0
    %4674 = vmatprep.subr.mxu0 0.0
    %4675 = vmatpush2.msra.mxu0 0.0
    %4676 = vmatprep.subr.mxu0 0.0
    %4677 = vmatpush2.msra.mxu0 0.0
    %4678 = vmatprep.subr.mxu0 0.0
    %4679 = vmatpush2.msra.mxu0 0.0
    %4680 = vmatprep.mubr.f32.mxu0 0.0
    %4681 = vmatmul.mubr.f32.gmra.mxu0 %v4611
    %v4682 = vpop.f32.mrf.mxu0
    %v4683 = vadd.f32 %v4609, %v4682
    %v4684 = vpop.f32.mrf.mxu0
    %4685 = vmatprep.mubr.f32.mxu0 0.0
    %4686 = vmatmul.mubr.f32.gmra.mxu0 %v4614
    %v4687 = vpop.f32.mrf.mxu0
    %v4688 = vadd.f32 %v4609, %v4687
    %v4689 = vpop.f32.mrf.mxu0
    %4690 = vdwg.mxu0
    %v4691 = vld [vmem:[#allocation2 + $0x2c8] sm:$0xff]
    %v4692 = vld [vmem:[#allocation2 + $0x2d0] sm:$0xff]
    %v4693 = vld [vmem:[#allocation2 + $0x2d8] sm:$0xff]
    %v4694 = vld [vmem:[#allocation2 + $0x2e0] sm:$0xff]
    %v4695 = vld [vmem:[#allocation4 + $0x22] sm:$0x1]
    %v4696 = vlaneseq
    %v4697 = vshrl.u32 %v4696, 7
    %v4698 = vsub.s32 0, %v4697
    %v4699 = vrot.slane %v4695, %v4698
    %4700 = vmatprep.subr.mxu0 0.0
    %4701 = vmatpush1.msra.mxu0 0.0
    %4702 = vmatprep.subr.mxu0 0.0
    %4703 = vmatpush1.msra.mxu0 0.0
    %4704 = vmatprep.subr.mxu0 0.0
    %4705 = vmatpush1.msra.mxu0 0.0
    %4706 = vmatprep.subr.mxu0 0.0
    %4707 = vmatpush1.msra.mxu0 0.0
    %4708 = vmatprep.subr.mxu0 0.0
    %4709 = vmatpush1.msra.mxu0 0.0
    %4710 = vmatprep.subr.mxu0 0.0
    %4711 = vmatpush1.msra.mxu0 0.0
    %4712 = vmatprep.subr.mxu0 0.0
    %4713 = vmatpush1.msra.mxu0 0.0
    %4714 = vmatprep.subr.mxu0 0.0
    %4715 = vmatpush1.msra.mxu0 0.0
    %4716 = vmatprep.subr.mxu0 0.0
    %4717 = vmatpush1.msra.mxu0 0.0
    %4718 = vmatprep.subr.mxu0 0.0
    %4719 = vmatpush1.msra.mxu0 0.0
    %4720 = vmatprep.subr.mxu0 0.0
    %4721 = vmatpush1.msra.mxu0 0.0
    %4722 = vmatprep.subr.mxu0 0.0
    %4723 = vmatpush1.msra.mxu0 0.0
    %4724 = vmatprep.subr.mxu0 0.0
    %4725 = vmatpush1.msra.mxu0 %v4694
    %4726 = vmatprep.subr.mxu0 0.0
    %4727 = vmatpush1.msra.mxu0 %v4693
    %4728 = vmatprep.subr.mxu0 0.0
    %4729 = vmatpush1.msra.mxu0 %v4692
    %4730 = vmatprep.subr.mxu0 0.0
    %4731 = vmatpush1.msra.mxu0 %v4691
    %4732 = vmatprep.subr.mxu0 0.0
    %4733 = vmatpush2.msra.mxu0 0.0
    %4734 = vmatprep.subr.mxu0 0.0
    %4735 = vmatpush2.msra.mxu0 0.0
    %4736 = vmatprep.subr.mxu0 0.0
    %4737 = vmatpush2.msra.mxu0 0.0
    %4738 = vmatprep.subr.mxu0 0.0
    %4739 = vmatpush2.msra.mxu0 0.0
    %4740 = vmatprep.subr.mxu0 0.0
    %4741 = vmatpush2.msra.mxu0 0.0
    %4742 = vmatprep.subr.mxu0 0.0
    %4743 = vmatpush2.msra.mxu0 0.0
    %4744 = vmatprep.subr.mxu0 0.0
    %4745 = vmatpush2.msra.mxu0 0.0
    %4746 = vmatprep.subr.mxu0 0.0
    %4747 = vmatpush2.msra.mxu0 0.0
    %4748 = vmatprep.subr.mxu0 0.0
    %4749 = vmatpush2.msra.mxu0 0.0
    %4750 = vmatprep.subr.mxu0 0.0
    %4751 = vmatpush2.msra.mxu0 0.0
    %4752 = vmatprep.subr.mxu0 0.0
    %4753 = vmatpush2.msra.mxu0 0.0
    %4754 = vmatprep.subr.mxu0 0.0
    %4755 = vmatpush2.msra.mxu0 0.0
    %4756 = vmatprep.subr.mxu0 0.0
    %4757 = vmatpush2.msra.mxu0 0.0
    %4758 = vmatprep.subr.mxu0 0.0
    %4759 = vmatpush2.msra.mxu0 0.0
    %4760 = vmatprep.subr.mxu0 0.0
    %4761 = vmatpush2.msra.mxu0 0.0
    %4762 = vmatprep.subr.mxu0 0.0
    %4763 = vmatpush2.msra.mxu0 0.0
    %4764 = vmatprep.mubr.f32.mxu0 0.0
    %4765 = vmatmul.mubr.f32.gmra.mxu0 %v2170
    %v4766 = vpop.f32.mrf.mxu0
    %v4767 = vadd.f32 %v4699, %v4766
    %v4768 = vpop.f32.mrf.mxu0
    %4769 = vmatprep.mubr.f32.mxu0 0.0
    %4770 = vmatmul.mubr.f32.gmra.mxu0 %v2173
    %v4771 = vpop.f32.mrf.mxu0
    %v4772 = vadd.f32 %v4699, %v4771
    %v4773 = vpop.f32.mrf.mxu0
    %4774 = vdwg.mxu0
    %4775 = vmatprep.subr.mxu0 0.0
    %4776 = vmatpush1.msra.mxu0 0.0
    %4777 = vmatprep.subr.mxu0 0.0
    %4778 = vmatpush1.msra.mxu0 0.0
    %4779 = vmatprep.subr.mxu0 0.0
    %4780 = vmatpush1.msra.mxu0 0.0
    %4781 = vmatprep.subr.mxu0 0.0
    %4782 = vmatpush1.msra.mxu0 0.0
    %4783 = vmatprep.subr.mxu0 0.0
    %4784 = vmatpush1.msra.mxu0 0.0
    %4785 = vmatprep.subr.mxu0 0.0
    %4786 = vmatpush1.msra.mxu0 0.0
    %4787 = vmatprep.subr.mxu0 0.0
    %4788 = vmatpush1.msra.mxu0 0.0
    %4789 = vmatprep.subr.mxu0 0.0
    %4790 = vmatpush1.msra.mxu0 0.0
    %4791 = vmatprep.subr.mxu0 0.0
    %4792 = vmatpush1.msra.mxu0 0.0
    %4793 = vmatprep.subr.mxu0 0.0
    %4794 = vmatpush1.msra.mxu0 0.0
    %4795 = vmatprep.subr.mxu0 0.0
    %4796 = vmatpush1.msra.mxu0 0.0
    %4797 = vmatprep.subr.mxu0 0.0
    %4798 = vmatpush1.msra.mxu0 0.0
    %4799 = vmatprep.subr.mxu0 0.0
    %4800 = vmatpush1.msra.mxu0 0.0
    %4801 = vmatprep.subr.mxu0 0.0
    %4802 = vmatpush1.msra.mxu0 0.0
    %4803 = vmatprep.subr.mxu0 0.0
    %4804 = vmatpush1.msra.mxu0 %v4688
    %4805 = vmatprep.subr.mxu0 0.0
    %4806 = vmatpush1.msra.mxu0 %v4683
    %4807 = vmatprep.subr.mxu0 0.0
    %4808 = vmatpush2.msra.mxu0 0.0
    %4809 = vmatprep.subr.mxu0 0.0
    %4810 = vmatpush2.msra.mxu0 0.0
    %4811 = vmatprep.subr.mxu0 0.0
    %4812 = vmatpush2.msra.mxu0 0.0
    %4813 = vmatprep.subr.mxu0 0.0
    %4814 = vmatpush2.msra.mxu0 0.0
    %4815 = vmatprep.subr.mxu0 0.0
    %4816 = vmatpush2.msra.mxu0 0.0
    %4817 = vmatprep.subr.mxu0 0.0
    %4818 = vmatpush2.msra.mxu0 0.0
    %4819 = vmatprep.subr.mxu0 0.0
    %4820 = vmatpush2.msra.mxu0 0.0
    %4821 = vmatprep.subr.mxu0 0.0
    %4822 = vmatpush2.msra.mxu0 0.0
    %4823 = vmatprep.subr.mxu0 0.0
    %4824 = vmatpush2.msra.mxu0 0.0
    %4825 = vmatprep.subr.mxu0 0.0
    %4826 = vmatpush2.msra.mxu0 0.0
    %4827 = vmatprep.subr.mxu0 0.0
    %4828 = vmatpush2.msra.mxu0 0.0
    %4829 = vmatprep.subr.mxu0 0.0
    %4830 = vmatpush2.msra.mxu0 0.0
    %4831 = vmatprep.subr.mxu0 0.0
    %4832 = vmatpush2.msra.mxu0 0.0
    %4833 = vmatprep.subr.mxu0 0.0
    %4834 = vmatpush2.msra.mxu0 0.0
    %4835 = vmatprep.subr.mxu0 0.0
    %4836 = vmatpush2.msra.mxu0 0.0
    %4837 = vmatprep.subr.mxu0 0.0
    %4838 = vmatpush2.msra.mxu0 0.0
    %4839 = vmatprep.mubr.f32.mxu0 0.0
    %4840 = vmatmul.mubr.f32.gmra.mxu0 %v347
    %v4841 = vpop.f32.mrf.mxu0
    %v4842 = vadd.f32 0.0, %v4841
    %v4843 = vpop.f32.mrf.mxu0
    %4844 = vmatprep.mubr.f32.mxu0 0.0
    %4845 = vmatmul.mubr.f32.gmra.mxu0 %v350
    %v4846 = vpop.f32.mrf.mxu0
    %v4847 = vadd.f32 0.0, %v4846
    %v4848 = vpop.f32.mrf.mxu0
    %4849 = vmatprep.mubr.f32.mxu0 0.0
    %4850 = vmatmul.mubr.f32.gmra.mxu0 %v353
    %v4851 = vpop.f32.mrf.mxu0
    %v4852 = vadd.f32 0.0, %v4851
    %v4853 = vpop.f32.mrf.mxu0
    %4854 = vmatprep.mubr.f32.mxu0 0.0
    %4855 = vmatmul.mubr.f32.gmra.mxu0 %v356
    %v4856 = vpop.f32.mrf.mxu0
    %v4857 = vadd.f32 0.0, %v4856
    %v4858 = vpop.f32.mrf.mxu0
    %4859 = vmatprep.mubr.f32.mxu0 0.0
    %4860 = vmatmul.mubr.f32.gmra.mxu0 %v359
    %v4861 = vpop.f32.mrf.mxu0
    %v4862 = vadd.f32 0.0, %v4861
    %v4863 = vpop.f32.mrf.mxu0
    %4864 = vmatprep.mubr.f32.mxu0 0.0
    %4865 = vmatmul.mubr.f32.gmra.mxu0 %v362
    %v4866 = vpop.f32.mrf.mxu0
    %v4867 = vadd.f32 0.0, %v4866
    %v4868 = vpop.f32.mrf.mxu0
    %4869 = vmatprep.mubr.f32.mxu0 0.0
    %4870 = vmatmul.mubr.f32.gmra.mxu0 %v365
    %v4871 = vpop.f32.mrf.mxu0
    %v4872 = vadd.f32 0.0, %v4871
    %v4873 = vpop.f32.mrf.mxu0
    %4874 = vmatprep.mubr.f32.mxu0 0.0
    %4875 = vmatmul.mubr.f32.gmra.mxu0 %v368
    %v4876 = vpop.f32.mrf.mxu0
    %v4877 = vadd.f32 0.0, %v4876
    %v4878 = vpop.f32.mrf.mxu0
    %4879 = vdwg.mxu0
    %v4880 = vmul.f32 %v4842, %v42
    %v4881 = vmul.f32 %v4847, %v43
    %v4882 = vmul.f32 %v4852, %v44
    %v4883 = vmul.f32 %v4857, %v45
    %v4884 = vmul.f32 %v4862, %v46
    %v4885 = vmul.f32 %v4867, %v47
    %v4886 = vmul.f32 %v4872, %v48
    %v4887 = vmul.f32 %v4877, %v49
    %v4889 = vsel %vm171, %v4880, 0
    %v4892 = vsel %vm171, %v4881, 0
    %v4895 = vsel %vm171, %v4882, 0
    %v4898 = vsel %vm171, %v4883, 0
    %v4901 = vsel %vm171, %v4884, 0
    %v4904 = vsel %vm171, %v4885, 0
    %v4907 = vsel %vm171, %v4886, 0
    %v4910 = vsel %vm171, %v4887, 0
    %v4913 = vsel %vm171, %v4767, 0
    %v4916 = vsel %vm171, %v4772, 0
    %4918 = vmatprep.subr.mxu0 0.0
    %4919 = vmatpush1.xpose.msra.mxu0 0.0
    %4920 = vmatprep.subr.mxu0 0.0
    %4921 = vmatpush1.xpose.msra.mxu0 0.0
    %4922 = vmatprep.subr.mxu0 0.0
    %4923 = vmatpush1.xpose.msra.mxu0 0.0
    %4924 = vmatprep.subr.mxu0 0.0
    %4925 = vmatpush1.xpose.msra.mxu0 0.0
    %4926 = vmatprep.subr.mxu0 0.0
    %4927 = vmatpush1.xpose.msra.mxu0 0.0
    %4928 = vmatprep.subr.mxu0 0.0
    %4929 = vmatpush1.xpose.msra.mxu0 0.0
    %4930 = vmatprep.subr.mxu0 0.0
    %4931 = vmatpush1.xpose.msra.mxu0 0.0
    %4932 = vmatprep.subr.mxu0 0.0
    %4933 = vmatpush1.xpose.msra.mxu0 0.0
    %4934 = vmatprep.subr.mxu0 0.0
    %4935 = vmatpush1.xpose.msra.mxu0 0.0
    %4936 = vmatprep.subr.mxu0 0.0
    %4937 = vmatpush1.xpose.msra.mxu0 0.0
    %4938 = vmatprep.subr.mxu0 0.0
    %4939 = vmatpush1.xpose.msra.mxu0 0.0
    %4940 = vmatprep.subr.mxu0 0.0
    %4941 = vmatpush1.xpose.msra.mxu0 0.0
    %4942 = vmatprep.subr.mxu0 0.0
    %4943 = vmatpush1.xpose.msra.mxu0 0.0
    %4944 = vmatprep.subr.mxu0 0.0
    %4945 = vmatpush1.xpose.msra.mxu0 0.0
    %4946 = vmatprep.subr.mxu0 0.0
    %4947 = vmatpush1.xpose.msra.mxu0 %v4916
    %4948 = vmatprep.subr.mxu0 0.0
    %4949 = vmatpush1.xpose.msra.mxu0 %v4913
    %4950 = vmatprep.subr.mxu0 0.0
    %4951 = vmatpush2.xpose.msra.mxu0 0.0
    %4952 = vmatprep.subr.mxu0 0.0
    %4953 = vmatpush2.xpose.msra.mxu0 0.0
    %4954 = vmatprep.subr.mxu0 0.0
    %4955 = vmatpush2.xpose.msra.mxu0 0.0
    %4956 = vmatprep.subr.mxu0 0.0
    %4957 = vmatpush2.xpose.msra.mxu0 0.0
    %4958 = vmatprep.subr.mxu0 0.0
    %4959 = vmatpush2.xpose.msra.mxu0 0.0
    %4960 = vmatprep.subr.mxu0 0.0
    %4961 = vmatpush2.xpose.msra.mxu0 0.0
    %4962 = vmatprep.subr.mxu0 0.0
    %4963 = vmatpush2.xpose.msra.mxu0 0.0
    %4964 = vmatprep.subr.mxu0 0.0
    %4965 = vmatpush2.xpose.msra.mxu0 0.0
    %4966 = vmatprep.subr.mxu0 0.0
    %4967 = vmatpush2.xpose.msra.mxu0 0.0
    %4968 = vmatprep.subr.mxu0 0.0
    %4969 = vmatpush2.xpose.msra.mxu0 0.0
    %4970 = vmatprep.subr.mxu0 0.0
    %4971 = vmatpush2.xpose.msra.mxu0 0.0
    %4972 = vmatprep.subr.mxu0 0.0
    %4973 = vmatpush2.xpose.msra.mxu0 0.0
    %4974 = vmatprep.subr.mxu0 0.0
    %4975 = vmatpush2.xpose.msra.mxu0 0.0
    %4976 = vmatprep.subr.mxu0 0.0
    %4977 = vmatpush2.xpose.msra.mxu0 0.0
    %4978 = vmatprep.subr.mxu0 0.0
    %4979 = vmatpush2.xpose.msra.mxu0 0.0
    %4980 = vmatprep.subr.mxu0 0.0
    %4981 = vmatpush2.xpose.msra.mxu0 0.0
    %4982 = vmatprep.mubr.f32.mxu0 0.0
    %4983 = vmatmul.mubr.f32.gmra.mxu0 %v4889
    %v4984 = vpop.f32.mrf.mxu0
    %v4985 = vadd.f32 %v50, %v4984
    %v4986 = vpop.f32.mrf.mxu0
    %4987 = vmatprep.mubr.f32.mxu0 0.0
    %4988 = vmatmul.mubr.f32.gmra.mxu0 %v4892
    %v4989 = vpop.f32.mrf.mxu0
    %v4990 = vadd.f32 %v51, %v4989
    %v4991 = vpop.f32.mrf.mxu0
    %4992 = vmatprep.mubr.f32.mxu0 0.0
    %4993 = vmatmul.mubr.f32.gmra.mxu0 %v4895
    %v4994 = vpop.f32.mrf.mxu0
    %v4995 = vadd.f32 %v52, %v4994
    %v4996 = vpop.f32.mrf.mxu0
    %4997 = vmatprep.mubr.f32.mxu0 0.0
    %4998 = vmatmul.mubr.f32.gmra.mxu0 %v4898
    %v4999 = vpop.f32.mrf.mxu0
    %v5000 = vadd.f32 %v53, %v4999
    %v5001 = vpop.f32.mrf.mxu0
    %5002 = vmatprep.mubr.f32.mxu0 0.0
    %5003 = vmatmul.mubr.f32.gmra.mxu0 %v4901
    %v5004 = vpop.f32.mrf.mxu0
    %v5005 = vadd.f32 %v54, %v5004
    %v5006 = vpop.f32.mrf.mxu0
    %5007 = vmatprep.mubr.f32.mxu0 0.0
    %5008 = vmatmul.mubr.f32.gmra.mxu0 %v4904
    %v5009 = vpop.f32.mrf.mxu0
    %v5010 = vadd.f32 %v55, %v5009
    %v5011 = vpop.f32.mrf.mxu0
    %5012 = vmatprep.mubr.f32.mxu0 0.0
    %5013 = vmatmul.mubr.f32.gmra.mxu0 %v4907
    %v5014 = vpop.f32.mrf.mxu0
    %v5015 = vadd.f32 %v56, %v5014
    %v5016 = vpop.f32.mrf.mxu0
    %5017 = vmatprep.mubr.f32.mxu0 0.0
    %5018 = vmatmul.mubr.f32.gmra.mxu0 %v4910
    %v5019 = vpop.f32.mrf.mxu0
    %v5020 = vadd.f32 %v57, %v5019
    %v5021 = vpop.f32.mrf.mxu0
    %5022 = vdwg.mxu0
    %v5023 = vsel %vm345, %v4985, -inf
    %5024 = vmax.xlane.f32.xlu0 %v5023
    %v5025 = vpop.xlane.xlu0 %5024
    %v5026 = vsel %vm345, %v4990, -inf
    %5027 = vmax.xlane.f32.xlu0 %v5026
    %v5028 = vpop.xlane.xlu0 %5027
    %v5029 = vsel %vm345, %v4995, -inf
    %5030 = vmax.xlane.f32.xlu0 %v5029
    %v5031 = vpop.xlane.xlu0 %5030
    %v5032 = vsel %vm345, %v5000, -inf
    %5033 = vmax.xlane.f32.xlu0 %v5032
    %v5034 = vpop.xlane.xlu0 %5033
    %v5035 = vsel %vm345, %v5005, -inf
    %5036 = vmax.xlane.f32.xlu0 %v5035
    %v5037 = vpop.xlane.xlu0 %5036
    %v5038 = vsel %vm345, %v5010, -inf
    %5039 = vmax.xlane.f32.xlu0 %v5038
    %v5040 = vpop.xlane.xlu0 %5039
    %v5041 = vsel %vm345, %v5015, -inf
    %5042 = vmax.xlane.f32.xlu0 %v5041
    %v5043 = vpop.xlane.xlu0 %5042
    %v5044 = vsel %vm345, %v5020, -inf
    %5045 = vmax.xlane.f32.xlu0 %v5044
    %v5046 = vpop.xlane.xlu0 %5045
    %v5047 = vsub.f32 %v4985, %v5025
    %v5048 = vsub.f32 %v4990, %v5028
    %v5049 = vsub.f32 %v4995, %v5031
    %v5050 = vsub.f32 %v5000, %v5034
    %v5051 = vsub.f32 %v5005, %v5037
    %v5052 = vsub.f32 %v5010, %v5040
    %v5053 = vsub.f32 %v5015, %v5043
    %v5054 = vsub.f32 %v5020, %v5046
    %v5055 = vmul.f32 %v5047, 1.442695
    %v5056 = vpow.pop %v5055
    %v5057 = vmul.f32 %v5048, 1.442695
    %v5058 = vpow.pop %v5057
    %v5059 = vmul.f32 %v5049, 1.442695
    %v5060 = vpow.pop %v5059
    %v5061 = vmul.f32 %v5050, 1.442695
    %v5062 = vpow.pop %v5061
    %v5063 = vmul.f32 %v5051, 1.442695
    %v5064 = vpow.pop %v5063
    %v5065 = vmul.f32 %v5052, 1.442695
    %v5066 = vpow.pop %v5065
    %v5067 = vmul.f32 %v5053, 1.442695
    %v5068 = vpow.pop %v5067
    %v5069 = vmul.f32 %v5054, 1.442695
    %v5070 = vpow.pop %v5069
    %v5071 = vsel %vm345, %v5056, 0.0
    %5072 = vadd.xlane.f32.xlu0 %v5071
    %v5073 = vpop.xlane.xlu0 %5072
    %v5074 = vsel %vm345, %v5058, 0.0
    %5075 = vadd.xlane.f32.xlu0 %v5074
    %v5076 = vpop.xlane.xlu0 %5075
    %v5077 = vsel %vm345, %v5060, 0.0
    %5078 = vadd.xlane.f32.xlu0 %v5077
    %v5079 = vpop.xlane.xlu0 %5078
    %v5080 = vsel %vm345, %v5062, 0.0
    %5081 = vadd.xlane.f32.xlu0 %v5080
    %v5082 = vpop.xlane.xlu0 %5081
    %v5083 = vsel %vm345, %v5064, 0.0
    %5084 = vadd.xlane.f32.xlu0 %v5083
    %v5085 = vpop.xlane.xlu0 %5084
    %v5086 = vsel %vm345, %v5066, 0.0
    %5087 = vadd.xlane.f32.xlu0 %v5086
    %v5088 = vpop.xlane.xlu0 %5087
    %v5089 = vsel %vm345, %v5068, 0.0
    %5090 = vadd.xlane.f32.xlu0 %v5089
    %v5091 = vpop.xlane.xlu0 %5090
    %v5092 = vsel %vm345, %v5070, 0.0
    %5093 = vadd.xlane.f32.xlu0 %v5092
    %v5094 = vpop.xlane.xlu0 %5093
    %v5095 = vrcp.pop %v5073
    %v5096 = vrcp.pop %v5076
    %v5097 = vrcp.pop %v5079
    %v5098 = vrcp.pop %v5082
    %v5099 = vrcp.pop %v5085
    %v5100 = vrcp.pop %v5088
    %v5101 = vrcp.pop %v5091
    %v5102 = vrcp.pop %v5094
    %v5103 = vmul.f32 %v5056, %v5095
    %v5104 = vmul.f32 %v5058, %v5096
    %v5105 = vmul.f32 %v5060, %v5097
    %v5106 = vmul.f32 %v5062, %v5098
    %v5107 = vmul.f32 %v5064, %v5099
    %v5108 = vmul.f32 %v5066, %v5100
    %v5109 = vmul.f32 %v5068, %v5101
    %v5110 = vmul.f32 %v5070, %v5102
    %5111 = vrot.lane.b32.xlu0 %v4767, 96
    %v5112 = vpop.permute.xlu0 %5111
    %5113 = vrot.lane.b32.xlu0 %v4772, 96
    %v5114 = vpop.permute.xlu0 %5113
    %v5118 = vsel %vm345, %v5103, 0
    %v5121 = vsel %vm345, %v5104, 0
    %v5124 = vsel %vm345, %v5105, 0
    %v5127 = vsel %vm345, %v5106, 0
    %v5130 = vsel %vm345, %v5107, 0
    %v5133 = vsel %vm345, %v5108, 0
    %v5136 = vsel %vm345, %v5109, 0
    %v5139 = vsel %vm345, %v5110, 0
    %5141 = vmatprep.subr.mxu0 0.0
    %5142 = vmatpush1.msra.mxu0 0.0
    %5143 = vmatprep.subr.mxu0 0.0
    %5144 = vmatpush1.msra.mxu0 0.0
    %5145 = vmatprep.subr.mxu0 0.0
    %5146 = vmatpush1.msra.mxu0 0.0
    %5147 = vmatprep.subr.mxu0 0.0
    %5148 = vmatpush1.msra.mxu0 0.0
    %5149 = vmatprep.subr.mxu0 0.0
    %5150 = vmatpush1.msra.mxu0 0.0
    %5151 = vmatprep.subr.mxu0 0.0
    %5152 = vmatpush1.msra.mxu0 0.0
    %5153 = vmatprep.subr.mxu0 0.0
    %5154 = vmatpush1.msra.mxu0 0.0
    %5155 = vmatprep.subr.mxu0 0.0
    %5156 = vmatpush1.msra.mxu0 0.0
    %5157 = vmatprep.subr.mxu0 0.0
    %5158 = vmatpush1.msra.mxu0 0.0
    %5159 = vmatprep.subr.mxu0 0.0
    %5160 = vmatpush1.msra.mxu0 0.0
    %5161 = vmatprep.subr.mxu0 0.0
    %5162 = vmatpush1.msra.mxu0 0.0
    %5163 = vmatprep.subr.mxu0 0.0
    %5164 = vmatpush1.msra.mxu0 0.0
    %5165 = vmatprep.subr.mxu0 0.0
    %5166 = vmatpush1.msra.mxu0 0.0
    %5167 = vmatprep.subr.mxu0 0.0
    %5168 = vmatpush1.msra.mxu0 0.0
    %5169 = vmatprep.subr.mxu0 0.0
    %5170 = vmatpush1.msra.mxu0 %v5114
    %5171 = vmatprep.subr.mxu0 0.0
    %5172 = vmatpush1.msra.mxu0 %v5112
    %5173 = vmatprep.subr.mxu0 0.0
    %5174 = vmatpush2.msra.mxu0 0.0
    %5175 = vmatprep.subr.mxu0 0.0
    %5176 = vmatpush2.msra.mxu0 0.0
    %5177 = vmatprep.subr.mxu0 0.0
    %5178 = vmatpush2.msra.mxu0 0.0
    %5179 = vmatprep.subr.mxu0 0.0
    %5180 = vmatpush2.msra.mxu0 0.0
    %5181 = vmatprep.subr.mxu0 0.0
    %5182 = vmatpush2.msra.mxu0 0.0
    %5183 = vmatprep.subr.mxu0 0.0
    %5184 = vmatpush2.msra.mxu0 0.0
    %5185 = vmatprep.subr.mxu0 0.0
    %5186 = vmatpush2.msra.mxu0 0.0
    %5187 = vmatprep.subr.mxu0 0.0
    %5188 = vmatpush2.msra.mxu0 0.0
    %5189 = vmatprep.subr.mxu0 0.0
    %5190 = vmatpush2.msra.mxu0 0.0
    %5191 = vmatprep.subr.mxu0 0.0
    %5192 = vmatpush2.msra.mxu0 0.0
    %5193 = vmatprep.subr.mxu0 0.0
    %5194 = vmatpush2.msra.mxu0 0.0
    %5195 = vmatprep.subr.mxu0 0.0
    %5196 = vmatpush2.msra.mxu0 0.0
    %5197 = vmatprep.subr.mxu0 0.0
    %5198 = vmatpush2.msra.mxu0 0.0
    %5199 = vmatprep.subr.mxu0 0.0
    %5200 = vmatpush2.msra.mxu0 0.0
    %5201 = vmatprep.subr.mxu0 0.0
    %5202 = vmatpush2.msra.mxu0 0.0
    %5203 = vmatprep.subr.mxu0 0.0
    %5204 = vmatpush2.msra.mxu0 0.0
    %5205 = vmatprep.mubr.f32.mxu0 0.0
    %5206 = vmatmul.mubr.f32.gmra.mxu0 %v5118
    %v5207 = vpop.f32.mrf.mxu0
    %v5208 = vadd.f32 0.0, %v5207
    %v5209 = vpop.f32.mrf.mxu0
    %5210 = vmatprep.mubr.f32.mxu0 0.0
    %5211 = vmatmul.mubr.f32.gmra.mxu0 %v5121
    %v5212 = vpop.f32.mrf.mxu0
    %v5213 = vadd.f32 0.0, %v5212
    %v5214 = vpop.f32.mrf.mxu0
    %5215 = vmatprep.mubr.f32.mxu0 0.0
    %5216 = vmatmul.mubr.f32.gmra.mxu0 %v5124
    %v5217 = vpop.f32.mrf.mxu0
    %v5218 = vadd.f32 0.0, %v5217
    %v5219 = vpop.f32.mrf.mxu0
    %5220 = vmatprep.mubr.f32.mxu0 0.0
    %5221 = vmatmul.mubr.f32.gmra.mxu0 %v5127
    %v5222 = vpop.f32.mrf.mxu0
    %v5223 = vadd.f32 0.0, %v5222
    %v5224 = vpop.f32.mrf.mxu0
    %5225 = vmatprep.mubr.f32.mxu0 0.0
    %5226 = vmatmul.mubr.f32.gmra.mxu0 %v5130
    %v5227 = vpop.f32.mrf.mxu0
    %v5228 = vadd.f32 0.0, %v5227
    %v5229 = vpop.f32.mrf.mxu0
    %5230 = vmatprep.mubr.f32.mxu0 0.0
    %5231 = vmatmul.mubr.f32.gmra.mxu0 %v5133
    %v5232 = vpop.f32.mrf.mxu0
    %v5233 = vadd.f32 0.0, %v5232
    %v5234 = vpop.f32.mrf.mxu0
    %5235 = vmatprep.mubr.f32.mxu0 0.0
    %5236 = vmatmul.mubr.f32.gmra.mxu0 %v5136
    %v5237 = vpop.f32.mrf.mxu0
    %v5238 = vadd.f32 0.0, %v5237
    %v5239 = vpop.f32.mrf.mxu0
    %5240 = vmatprep.mubr.f32.mxu0 0.0
    %5241 = vmatmul.mubr.f32.gmra.mxu0 %v5139
    %v5242 = vpop.f32.mrf.mxu0
    %v5243 = vadd.f32 0.0, %v5242
    %v5244 = vpop.f32.mrf.mxu0
    %5245 = vdwg.mxu0
    %v5246 = vmul.f32 %v5208, %v42
    %v5247 = vmul.f32 %v5213, %v43
    %v5248 = vmul.f32 %v5218, %v44
    %v5249 = vmul.f32 %v5223, %v45
    %v5250 = vmul.f32 %v5228, %v46
    %v5251 = vmul.f32 %v5233, %v47
    %v5252 = vmul.f32 %v5238, %v48
    %v5253 = vmul.f32 %v5243, %v49
    %v5254 = vadd.f32 %v5246, %v5248
    %v5255 = vadd.f32 %v5247, %v5249
    %v5256 = vadd.f32 %v5254, %v5250
    %v5257 = vadd.f32 %v5255, %v5251
    %v5258 = vadd.f32 %v5256, %v5252
    %v5259 = vadd.f32 %v5257, %v5253
    %v5260 = vld [vmem:[#allocation2 + $0x2e8] sm:$0xff]
    %v5261 = vld [vmem:[#allocation2 + $0x2f0] sm:$0xff]
    %v5262 = vld [vmem:[#allocation2 + $0x2f8] sm:$0xff]
    %v5263 = vld [vmem:[#allocation2 + $0x300] sm:$0xff]
    %v5264 = vld [vmem:[#allocation4 + $0x23] sm:$0x1]
    %v5265 = vlaneseq
    %v5266 = vshrl.u32 %v5265, 7
    %v5267 = vsub.s32 0, %v5266
    %v5268 = vrot.slane %v5264, %v5267
    %v5270 = vsel %vm171, %v5258, 0
    %v5273 = vsel %vm171, %v5259, 0
    %5275 = vmatprep.subr.mxu0 0.0
    %5276 = vmatpush1.msra.mxu0 0.0
    %5277 = vmatprep.subr.mxu0 0.0
    %5278 = vmatpush1.msra.mxu0 0.0
    %5279 = vmatprep.subr.mxu0 0.0
    %5280 = vmatpush1.msra.mxu0 0.0
    %5281 = vmatprep.subr.mxu0 0.0
    %5282 = vmatpush1.msra.mxu0 0.0
    %5283 = vmatprep.subr.mxu0 0.0
    %5284 = vmatpush1.msra.mxu0 0.0
    %5285 = vmatprep.subr.mxu0 0.0
    %5286 = vmatpush1.msra.mxu0 0.0
    %5287 = vmatprep.subr.mxu0 0.0
    %5288 = vmatpush1.msra.mxu0 0.0
    %5289 = vmatprep.subr.mxu0 0.0
    %5290 = vmatpush1.msra.mxu0 0.0
    %5291 = vmatprep.subr.mxu0 0.0
    %5292 = vmatpush1.msra.mxu0 0.0
    %5293 = vmatprep.subr.mxu0 0.0
    %5294 = vmatpush1.msra.mxu0 0.0
    %5295 = vmatprep.subr.mxu0 0.0
    %5296 = vmatpush1.msra.mxu0 0.0
    %5297 = vmatprep.subr.mxu0 0.0
    %5298 = vmatpush1.msra.mxu0 0.0
    %5299 = vmatprep.subr.mxu0 0.0
    %5300 = vmatpush1.msra.mxu0 %v5263
    %5301 = vmatprep.subr.mxu0 0.0
    %5302 = vmatpush1.msra.mxu0 %v5262
    %5303 = vmatprep.subr.mxu0 0.0
    %5304 = vmatpush1.msra.mxu0 %v5261
    %5305 = vmatprep.subr.mxu0 0.0
    %5306 = vmatpush1.msra.mxu0 %v5260
    %5307 = vmatprep.subr.mxu0 0.0
    %5308 = vmatpush2.msra.mxu0 0.0
    %5309 = vmatprep.subr.mxu0 0.0
    %5310 = vmatpush2.msra.mxu0 0.0
    %5311 = vmatprep.subr.mxu0 0.0
    %5312 = vmatpush2.msra.mxu0 0.0
    %5313 = vmatprep.subr.mxu0 0.0
    %5314 = vmatpush2.msra.mxu0 0.0
    %5315 = vmatprep.subr.mxu0 0.0
    %5316 = vmatpush2.msra.mxu0 0.0
    %5317 = vmatprep.subr.mxu0 0.0
    %5318 = vmatpush2.msra.mxu0 0.0
    %5319 = vmatprep.subr.mxu0 0.0
    %5320 = vmatpush2.msra.mxu0 0.0
    %5321 = vmatprep.subr.mxu0 0.0
    %5322 = vmatpush2.msra.mxu0 0.0
    %5323 = vmatprep.subr.mxu0 0.0
    %5324 = vmatpush2.msra.mxu0 0.0
    %5325 = vmatprep.subr.mxu0 0.0
    %5326 = vmatpush2.msra.mxu0 0.0
    %5327 = vmatprep.subr.mxu0 0.0
    %5328 = vmatpush2.msra.mxu0 0.0
    %5329 = vmatprep.subr.mxu0 0.0
    %5330 = vmatpush2.msra.mxu0 0.0
    %5331 = vmatprep.subr.mxu0 0.0
    %5332 = vmatpush2.msra.mxu0 0.0
    %5333 = vmatprep.subr.mxu0 0.0
    %5334 = vmatpush2.msra.mxu0 0.0
    %5335 = vmatprep.subr.mxu0 0.0
    %5336 = vmatpush2.msra.mxu0 0.0
    %5337 = vmatprep.subr.mxu0 0.0
    %5338 = vmatpush2.msra.mxu0 0.0
    %5339 = vmatprep.mubr.f32.mxu0 0.0
    %5340 = vmatmul.mubr.f32.gmra.mxu0 %v5270
    %v5341 = vpop.f32.mrf.mxu0
    %v5342 = vadd.f32 %v5268, %v5341
    %v5343 = vpop.f32.mrf.mxu0
    %5344 = vmatprep.mubr.f32.mxu0 0.0
    %5345 = vmatmul.mubr.f32.gmra.mxu0 %v5273
    %v5346 = vpop.f32.mrf.mxu0
    %v5347 = vadd.f32 %v5268, %v5346
    %v5348 = vpop.f32.mrf.mxu0
    %5349 = vdwg.mxu0
    %v5350 = vadd.f32 %v4599, %v5342
    %v5351 = vadd.f32 %v4600, %v5347
    %v5352 = vsel %vm171, %v5350, 0.0
    %5353 = vadd.xlane.f32.xlu0 %v5352
    %v5354 = vpop.xlane.xlu0 %5353
    %v5355 = vsel %vm171, %v5351, 0.0
    %5356 = vadd.xlane.f32.xlu0 %v5355
    %v5357 = vpop.xlane.xlu0 %5356
    %v5358 = vmul.f32 %v5354, %v957
    %v5359 = vmul.f32 %v5357, %v957
    %v5360 = vsub.f32 %v5350, %v5358
    %v5361 = vsub.f32 %v5351, %v5359
    %v5362 = vmul.f32 %v5360, %v5360
    %v5363 = vmul.f32 %v5361, %v5361
    %v5364 = vsel %vm171, %v5362, 0.0
    %5365 = vadd.xlane.f32.xlu0 %v5364
    %v5366 = vpop.xlane.xlu0 %5365
    %v5367 = vsel %vm171, %v5363, 0.0
    %5368 = vadd.xlane.f32.xlu0 %v5367
    %v5369 = vpop.xlane.xlu0 %5368
    %v5370 = vmul.f32 %v5366, %v957
    %v5371 = vmul.f32 %v5369, %v957
    %v5372 = vadd.f32 %v5370, 1e-05
    %v5373 = vadd.f32 %v5371, 1e-05
    %v5374 = vrsqrt.pop %v5372
    %v5375 = vrsqrt.pop %v5373
    %v5376 = vmul.f32 %v5360, %v5374
    %v5377 = vmul.f32 %v5361, %v5375
    %v5378 = vld [vmem:[#allocation4 + $0x26] sm:$0x1]
    %v5379 = vlaneseq
    %v5380 = vshrl.u32 %v5379, 7
    %v5381 = vsub.s32 0, %v5380
    %v5382 = vrot.slane %v5378, %v5381
    %v5383 = vmul.f32 %v5376, %v5382
    %v5384 = vmul.f32 %v5377, %v5382
    %v5385 = vld [vmem:[#allocation4 + $0x27] sm:$0x1]
    %v5386 = vlaneseq
    %v5387 = vshrl.u32 %v5386, 7
    %v5388 = vsub.s32 0, %v5387
    %v5389 = vrot.slane %v5385, %v5388
    %v5390 = vadd.f32 %v5383, %v5389
    %v5391 = vadd.f32 %v5384, %v5389
    %v5392 = vld [vmem:[#allocation2 + $0x308] sm:$0xff]
    %v5393 = vld [vmem:[#allocation2 + $0x310] sm:$0xff]
    %v5394 = vld [vmem:[#allocation2 + $0x318] sm:$0xff]
    %v5395 = vld [vmem:[#allocation2 + $0x320] sm:$0xff]
    %v5396 = vld [vmem:[#allocation4 + $0x2a] sm:$0x1]
    %v5397 = vlaneseq
    %v5398 = vshrl.u32 %v5397, 7
    %v5399 = vsub.s32 0, %v5398
    %v5400 = vrot.slane %v5396, %v5399
    %v5402 = vsel %vm171, %v5390, 0
    %v5405 = vsel %vm171, %v5391, 0
    %5407 = vmatprep.subr.mxu0 0.0
    %5408 = vmatpush1.msra.mxu0 0.0
    %5409 = vmatprep.subr.mxu0 0.0
    %5410 = vmatpush1.msra.mxu0 0.0
    %5411 = vmatprep.subr.mxu0 0.0
    %5412 = vmatpush1.msra.mxu0 0.0
    %5413 = vmatprep.subr.mxu0 0.0
    %5414 = vmatpush1.msra.mxu0 0.0
    %5415 = vmatprep.subr.mxu0 0.0
    %5416 = vmatpush1.msra.mxu0 0.0
    %5417 = vmatprep.subr.mxu0 0.0
    %5418 = vmatpush1.msra.mxu0 0.0
    %5419 = vmatprep.subr.mxu0 0.0
    %5420 = vmatpush1.msra.mxu0 0.0
    %5421 = vmatprep.subr.mxu0 0.0
    %5422 = vmatpush1.msra.mxu0 0.0
    %5423 = vmatprep.subr.mxu0 0.0
    %5424 = vmatpush1.msra.mxu0 0.0
    %5425 = vmatprep.subr.mxu0 0.0
    %5426 = vmatpush1.msra.mxu0 0.0
    %5427 = vmatprep.subr.mxu0 0.0
    %5428 = vmatpush1.msra.mxu0 0.0
    %5429 = vmatprep.subr.mxu0 0.0
    %5430 = vmatpush1.msra.mxu0 0.0
    %5431 = vmatprep.subr.mxu0 0.0
    %5432 = vmatpush1.msra.mxu0 %v5395
    %5433 = vmatprep.subr.mxu0 0.0
    %5434 = vmatpush1.msra.mxu0 %v5394
    %5435 = vmatprep.subr.mxu0 0.0
    %5436 = vmatpush1.msra.mxu0 %v5393
    %5437 = vmatprep.subr.mxu0 0.0
    %5438 = vmatpush1.msra.mxu0 %v5392
    %5439 = vmatprep.subr.mxu0 0.0
    %5440 = vmatpush2.msra.mxu0 0.0
    %5441 = vmatprep.subr.mxu0 0.0
    %5442 = vmatpush2.msra.mxu0 0.0
    %5443 = vmatprep.subr.mxu0 0.0
    %5444 = vmatpush2.msra.mxu0 0.0
    %5445 = vmatprep.subr.mxu0 0.0
    %5446 = vmatpush2.msra.mxu0 0.0
    %5447 = vmatprep.subr.mxu0 0.0
    %5448 = vmatpush2.msra.mxu0 0.0
    %5449 = vmatprep.subr.mxu0 0.0
    %5450 = vmatpush2.msra.mxu0 0.0
    %5451 = vmatprep.subr.mxu0 0.0
    %5452 = vmatpush2.msra.mxu0 0.0
    %5453 = vmatprep.subr.mxu0 0.0
    %5454 = vmatpush2.msra.mxu0 0.0
    %5455 = vmatprep.subr.mxu0 0.0
    %5456 = vmatpush2.msra.mxu0 0.0
    %5457 = vmatprep.subr.mxu0 0.0
    %5458 = vmatpush2.msra.mxu0 0.0
    %5459 = vmatprep.subr.mxu0 0.0
    %5460 = vmatpush2.msra.mxu0 0.0
    %5461 = vmatprep.subr.mxu0 0.0
    %5462 = vmatpush2.msra.mxu0 0.0
    %5463 = vmatprep.subr.mxu0 0.0
    %5464 = vmatpush2.msra.mxu0 0.0
    %5465 = vmatprep.subr.mxu0 0.0
    %5466 = vmatpush2.msra.mxu0 0.0
    %5467 = vmatprep.subr.mxu0 0.0
    %5468 = vmatpush2.msra.mxu0 0.0
    %5469 = vmatprep.subr.mxu0 0.0
    %5470 = vmatpush2.msra.mxu0 0.0
    %5471 = vmatprep.mubr.f32.mxu0 0.0
    %5472 = vmatmul.mubr.f32.gmra.mxu0 %v5402
    %v5473 = vpop.f32.mrf.mxu0
    %v5474 = vadd.f32 %v5400, %v5473
    %v5475 = vpop.f32.mrf.mxu0
    %5476 = vmatprep.mubr.f32.mxu0 0.0
    %5477 = vmatmul.mubr.f32.gmra.mxu0 %v5405
    %v5478 = vpop.f32.mrf.mxu0
    %v5479 = vadd.f32 %v5400, %v5478
    %v5480 = vpop.f32.mrf.mxu0
    %5481 = vdwg.mxu0
    %v5482 = vmax.f32 %v5474, 0.0
    %v5483 = vmax.f32 %v5479, 0.0
    %v5484 = vld [vmem:[#allocation2 + $0x328] sm:$0xff]
    %v5485 = vld [vmem:[#allocation2 + $0x330] sm:$0xff]
    %v5486 = vld [vmem:[#allocation2 + $0x338] sm:$0xff]
    %v5487 = vld [vmem:[#allocation2 + $0x340] sm:$0xff]
    %v5488 = vld [vmem:[#allocation2 + $0x348] sm:$0xff]
    %v5489 = vld [vmem:[#allocation2 + $0x350] sm:$0xff]
    %v5490 = vld [vmem:[#allocation2 + $0x358] sm:$0xff]
    %v5491 = vld [vmem:[#allocation2 + $0x360] sm:$0xff]
    %v5492 = vld [vmem:[#allocation4 + $0x2b] sm:$0x1]
    %v5493 = vlaneseq
    %v5494 = vshrl.u32 %v5493, 7
    %v5495 = vsub.s32 0, %v5494
    %v5496 = vrot.slane %v5492, %v5495
    %v5498 = vsel %vm1097, %v5482, 0
    %v5501 = vsel %vm1097, %v5483, 0
    %5503 = vmatprep.subr.mxu0 0.0
    %5504 = vmatpush1.msra.mxu0 0.0
    %5505 = vmatprep.subr.mxu0 0.0
    %5506 = vmatpush1.msra.mxu0 0.0
    %5507 = vmatprep.subr.mxu0 0.0
    %5508 = vmatpush1.msra.mxu0 0.0
    %5509 = vmatprep.subr.mxu0 0.0
    %5510 = vmatpush1.msra.mxu0 0.0
    %5511 = vmatprep.subr.mxu0 0.0
    %5512 = vmatpush1.msra.mxu0 0.0
    %5513 = vmatprep.subr.mxu0 0.0
    %5514 = vmatpush1.msra.mxu0 0.0
    %5515 = vmatprep.subr.mxu0 0.0
    %5516 = vmatpush1.msra.mxu0 0.0
    %5517 = vmatprep.subr.mxu0 0.0
    %5518 = vmatpush1.msra.mxu0 0.0
    %5519 = vmatprep.subr.mxu0 0.0
    %5520 = vmatpush1.msra.mxu0 %v5491
    %5521 = vmatprep.subr.mxu0 0.0
    %5522 = vmatpush1.msra.mxu0 %v5490
    %5523 = vmatprep.subr.mxu0 0.0
    %5524 = vmatpush1.msra.mxu0 %v5489
    %5525 = vmatprep.subr.mxu0 0.0
    %5526 = vmatpush1.msra.mxu0 %v5488
    %5527 = vmatprep.subr.mxu0 0.0
    %5528 = vmatpush1.msra.mxu0 %v5487
    %5529 = vmatprep.subr.mxu0 0.0
    %5530 = vmatpush1.msra.mxu0 %v5486
    %5531 = vmatprep.subr.mxu0 0.0
    %5532 = vmatpush1.msra.mxu0 %v5485
    %5533 = vmatprep.subr.mxu0 0.0
    %5534 = vmatpush1.msra.mxu0 %v5484
    %5535 = vmatprep.subr.mxu0 0.0
    %5536 = vmatpush2.msra.mxu0 0.0
    %5537 = vmatprep.subr.mxu0 0.0
    %5538 = vmatpush2.msra.mxu0 0.0
    %5539 = vmatprep.subr.mxu0 0.0
    %5540 = vmatpush2.msra.mxu0 0.0
    %5541 = vmatprep.subr.mxu0 0.0
    %5542 = vmatpush2.msra.mxu0 0.0
    %5543 = vmatprep.subr.mxu0 0.0
    %5544 = vmatpush2.msra.mxu0 0.0
    %5545 = vmatprep.subr.mxu0 0.0
    %5546 = vmatpush2.msra.mxu0 0.0
    %5547 = vmatprep.subr.mxu0 0.0
    %5548 = vmatpush2.msra.mxu0 0.0
    %5549 = vmatprep.subr.mxu0 0.0
    %5550 = vmatpush2.msra.mxu0 0.0
    %5551 = vmatprep.subr.mxu0 0.0
    %5552 = vmatpush2.msra.mxu0 0.0
    %5553 = vmatprep.subr.mxu0 0.0
    %5554 = vmatpush2.msra.mxu0 0.0
    %5555 = vmatprep.subr.mxu0 0.0
    %5556 = vmatpush2.msra.mxu0 0.0
    %5557 = vmatprep.subr.mxu0 0.0
    %5558 = vmatpush2.msra.mxu0 0.0
    %5559 = vmatprep.subr.mxu0 0.0
    %5560 = vmatpush2.msra.mxu0 0.0
    %5561 = vmatprep.subr.mxu0 0.0
    %5562 = vmatpush2.msra.mxu0 0.0
    %5563 = vmatprep.subr.mxu0 0.0
    %5564 = vmatpush2.msra.mxu0 0.0
    %5565 = vmatprep.subr.mxu0 0.0
    %5566 = vmatpush2.msra.mxu0 0.0
    %5567 = vmatprep.mubr.f32.mxu0 0.0
    %5568 = vmatmul.mubr.f32.gmra.mxu0 %v5498
    %v5569 = vpop.f32.mrf.mxu0
    %v5570 = vadd.f32 %v5496, %v5569
    %v5571 = vpop.f32.mrf.mxu0
    %5572 = vmatprep.mubr.f32.mxu0 0.0
    %5573 = vmatmul.mubr.f32.gmra.mxu0 %v5501
    %v5574 = vpop.f32.mrf.mxu0
    %v5575 = vadd.f32 %v5496, %v5574
    %v5576 = vpop.f32.mrf.mxu0
    %5577 = vdwg.mxu0
    %v5578 = vadd.f32 %v5390, %v5570
    %v5579 = vadd.f32 %v5391, %v5575
    %v5580 = vsel %vm171, %v5578, 0.0
    %5581 = vadd.xlane.f32.xlu0 %v5580
    %v5582 = vpop.xlane.xlu0 %5581
    %v5583 = vsel %vm171, %v5579, 0.0
    %5584 = vadd.xlane.f32.xlu0 %v5583
    %v5585 = vpop.xlane.xlu0 %5584
    %v5586 = vmul.f32 %v5582, %v957
    %v5587 = vmul.f32 %v5585, %v957
    %v5588 = vsub.f32 %v5578, %v5586
    %v5589 = vsub.f32 %v5579, %v5587
    %v5590 = vmul.f32 %v5588, %v5588
    %v5591 = vmul.f32 %v5589, %v5589
    %v5592 = vsel %vm171, %v5590, 0.0
    %5593 = vadd.xlane.f32.xlu0 %v5592
    %v5594 = vpop.xlane.xlu0 %5593
    %v5595 = vsel %vm171, %v5591, 0.0
    %5596 = vadd.xlane.f32.xlu0 %v5595
    %v5597 = vpop.xlane.xlu0 %5596
    %v5598 = vmul.f32 %v5594, %v957
    %v5599 = vmul.f32 %v5597, %v957
    %v5600 = vadd.f32 %v5598, 1e-05
    %v5601 = vadd.f32 %v5599, 1e-05
    %v5602 = vrsqrt.pop %v5600
    %v5603 = vrsqrt.pop %v5601
    %v5604 = vmul.f32 %v5588, %v5602
    %v5605 = vmul.f32 %v5589, %v5603
    %v5606 = vld [vmem:[#allocation4 + $0x28] sm:$0x1]
    %v5607 = vlaneseq
    %v5608 = vshrl.u32 %v5607, 7
    %v5609 = vsub.s32 0, %v5608
    %v5610 = vrot.slane %v5606, %v5609
    %v5611 = vmul.f32 %v5604, %v5610
    %v5612 = vmul.f32 %v5605, %v5610
    %v5613 = vld [vmem:[#allocation4 + $0x29] sm:$0x1]
    %v5614 = vlaneseq
    %v5615 = vshrl.u32 %v5614, 7
    %v5616 = vsub.s32 0, %v5615
    %v5617 = vrot.slane %v5613, %v5616
    %v5618 = vadd.f32 %v5611, %v5617
    %v5619 = vadd.f32 %v5612, %v5617
    %v5620 = vld [vmem:[#allocation2 + $0x368] sm:$0xff]
    %v5621 = vld [vmem:[#allocation2 + $0x370] sm:$0xff]
    %v5622 = vld [vmem:[#allocation2 + $0x378] sm:$0xff]
    %v5623 = vld [vmem:[#allocation2 + $0x380] sm:$0xff]
    %v5624 = vld [vmem:[#allocation4 + $0x2c] sm:$0x1]
    %v5625 = vlaneseq
    %v5626 = vshrl.u32 %v5625, 7
    %v5627 = vsub.s32 0, %v5626
    %v5628 = vrot.slane %v5624, %v5627
    %v5630 = vsel %vm171, %v5618, 0
    %v5633 = vsel %vm171, %v5619, 0
    %5635 = vmatprep.subr.mxu0 0.0
    %5636 = vmatpush1.msra.mxu0 0.0
    %5637 = vmatprep.subr.mxu0 0.0
    %5638 = vmatpush1.msra.mxu0 0.0
    %5639 = vmatprep.subr.mxu0 0.0
    %5640 = vmatpush1.msra.mxu0 0.0
    %5641 = vmatprep.subr.mxu0 0.0
    %5642 = vmatpush1.msra.mxu0 0.0
    %5643 = vmatprep.subr.mxu0 0.0
    %5644 = vmatpush1.msra.mxu0 0.0
    %5645 = vmatprep.subr.mxu0 0.0
    %5646 = vmatpush1.msra.mxu0 0.0
    %5647 = vmatprep.subr.mxu0 0.0
    %5648 = vmatpush1.msra.mxu0 0.0
    %5649 = vmatprep.subr.mxu0 0.0
    %5650 = vmatpush1.msra.mxu0 0.0
    %5651 = vmatprep.subr.mxu0 0.0
    %5652 = vmatpush1.msra.mxu0 0.0
    %5653 = vmatprep.subr.mxu0 0.0
    %5654 = vmatpush1.msra.mxu0 0.0
    %5655 = vmatprep.subr.mxu0 0.0
    %5656 = vmatpush1.msra.mxu0 0.0
    %5657 = vmatprep.subr.mxu0 0.0
    %5658 = vmatpush1.msra.mxu0 0.0
    %5659 = vmatprep.subr.mxu0 0.0
    %5660 = vmatpush1.msra.mxu0 %v5623
    %5661 = vmatprep.subr.mxu0 0.0
    %5662 = vmatpush1.msra.mxu0 %v5622
    %5663 = vmatprep.subr.mxu0 0.0
    %5664 = vmatpush1.msra.mxu0 %v5621
    %5665 = vmatprep.subr.mxu0 0.0
    %5666 = vmatpush1.msra.mxu0 %v5620
    %5667 = vmatprep.subr.mxu0 0.0
    %5668 = vmatpush2.msra.mxu0 0.0
    %5669 = vmatprep.subr.mxu0 0.0
    %5670 = vmatpush2.msra.mxu0 0.0
    %5671 = vmatprep.subr.mxu0 0.0
    %5672 = vmatpush2.msra.mxu0 0.0
    %5673 = vmatprep.subr.mxu0 0.0
    %5674 = vmatpush2.msra.mxu0 0.0
    %5675 = vmatprep.subr.mxu0 0.0
    %5676 = vmatpush2.msra.mxu0 0.0
    %5677 = vmatprep.subr.mxu0 0.0
    %5678 = vmatpush2.msra.mxu0 0.0
    %5679 = vmatprep.subr.mxu0 0.0
    %5680 = vmatpush2.msra.mxu0 0.0
    %5681 = vmatprep.subr.mxu0 0.0
    %5682 = vmatpush2.msra.mxu0 0.0
    %5683 = vmatprep.subr.mxu0 0.0
    %5684 = vmatpush2.msra.mxu0 0.0
    %5685 = vmatprep.subr.mxu0 0.0
    %5686 = vmatpush2.msra.mxu0 0.0
    %5687 = vmatprep.subr.mxu0 0.0
    %5688 = vmatpush2.msra.mxu0 0.0
    %5689 = vmatprep.subr.mxu0 0.0
    %5690 = vmatpush2.msra.mxu0 0.0
    %5691 = vmatprep.subr.mxu0 0.0
    %5692 = vmatpush2.msra.mxu0 0.0
    %5693 = vmatprep.subr.mxu0 0.0
    %5694 = vmatpush2.msra.mxu0 0.0
    %5695 = vmatprep.subr.mxu0 0.0
    %5696 = vmatpush2.msra.mxu0 0.0
    %5697 = vmatprep.subr.mxu0 0.0
    %5698 = vmatpush2.msra.mxu0 0.0
    %5699 = vmatprep.mubr.f32.mxu0 0.0
    %5700 = vmatmul.mubr.f32.gmra.mxu0 %v5630
    %v5701 = vpop.f32.mrf.mxu0
    %v5702 = vadd.f32 %v5628, %v5701
    %v5703 = vpop.f32.mrf.mxu0
    %5704 = vmatprep.mubr.f32.mxu0 0.0
    %5705 = vmatmul.mubr.f32.gmra.mxu0 %v5633
    %v5706 = vpop.f32.mrf.mxu0
    %v5707 = vadd.f32 %v5628, %v5706
    %v5708 = vpop.f32.mrf.mxu0
    %5709 = vdwg.mxu0
    %5710 = vst [vmem:[%s3] sm:$0xff] %v5702
    %5711 = vst [vmem:[%s3 + $0x8] sm:$0xff] %v5707
    // Predicated region
    $region22: #{_lambda_.1} parent=1 // pred_check
      _
    $region23: #{_lambda_.1} parent=1 // pred_check_branch
      %5713 = sbr.rel (0) target = $region25
    $region24: #{_lambda_.1} parent=1 // pred_region
      _
    $region25: #{_lambda_.1} parent=1 // pred_fallthru
      _
    // Predicated region
    $region26: #{_lambda_.1} parent=1 // pred_check
      _
    $region27: #{_lambda_.1} parent=1 // pred_check_branch
      %5715 = sbr.rel (0) target = $region29
    $region28: #{_lambda_.1} parent=1 // pred_region
      _
    $region29: #{_lambda_.1} parent=1 // pred_fallthru
      _
    %5716 = vsyncpa [#allocation3], 1
    %5717 = vsyncpa [#allocation5], 1

</llo_original>
